<compile_context>
chip_gen: v5e
topology: v5e:2x2
jax: 0.10.0
libtpu: 0.0.40
codegen_flags: <defaults>
</compile_context>

<pallas_src>
import functools

import jax
import jax.numpy as jnp
from jax.experimental import pallas as pl
from jax.experimental.pallas import tpu as pltpu


# ----------------------------------------------------------------------------
# Generation-aware VMEM budgets
# ----------------------------------------------------------------------------
def _vmem_capacity_bytes():
    try:
        info = pltpu.get_tpu_info()
        cap = getattr(info, "vmem_capacity_bytes", None)
        if cap:
            return int(cap)
    except Exception:
        pass
    return 64 * 1024 * 1024  # conservative default (v7x-sized)


_VMEM_CAP = _vmem_capacity_bytes()
_VMEM_LIMIT = min(int(_VMEM_CAP * 0.75), 112 * 1024 * 1024)
_FUSED_BUDGET = int(_VMEM_CAP * 0.60)
_ROW_CAP = 2048          # row-tile cap (also keeps the v5e fallback in budget)


def _tile_rows(m, cap=_ROW_CAP, min_grid=1):
    """Largest divisor of m <= cap, preferring multiples of 8.

    Never silently returns an unbounded tile: worst case it degrades to a
    smaller divisor rather than blowing VMEM.
    """
    if m <= 8:
        return m
    cap = min(cap, m)
    if min_grid > 1:
        cap = min(cap, max(8, m // min_grid))
    cap = max(cap, 1)
    best_any = None
    for t in range(cap, 0, -1):
        if m % t == 0:
            if t % 8 == 0:
                return t
            if best_any is None:
                best_any = t
    return best_any if best_any is not None else m


def _fused_fits(rows_r, k2, m, tile_c):
    """VMEM estimate for the single-pass fused BN kernel (double-buffered
    inputs/outputs + f32 intermediates)."""
    in_bytes = 2 * (2 * rows_r * k2 * 2 + 4 * k2 * tile_c * 2)
    out_bytes = 2 * m * tile_c * 2
    inter_bytes = 3 * m * tile_c * 4
    return in_bytes + out_bytes + inter_bytes <= _FUSED_BUDGET


# ----------------------------------------------------------------------------
# Pallas kernels
#
# Conv formulation: activations are flattened HNWC rows.  r0/r1 hold the
# W-grouped patches of the even/odd padded input rows; the contribution of
# kernel row kh = 2*a + p is a contiguous row window [a*nwo, a*nwo + m) of
# phase p, matmul'd with weight block w_ref[kh].
# ----------------------------------------------------------------------------
def _conv_y(r0_ref, r1_ref, w_ref, start0, m):
    def contrib(a, p):
        rref = r0_ref if p == 0 else r1_ref
        lhs = rref[pl.ds(start0(a), m), :]
        return jnp.dot(lhs, w_ref[2 * a + p], preferred_element_type=jnp.float32)

    return contrib(0, 0) + contrib(0, 1) + contrib(1, 0) + contrib(1, 1)


def _bn_fold(y, g, b, m_real, eps):
    inv_m = 1.0 / m_real
    mean = jnp.sum(y, axis=0, keepdims=True) * inv_m
    var = jnp.maximum(jnp.sum(y * y, axis=0, keepdims=True) * inv_m - mean * mean, 0.0)
    scale = g * jax.lax.rsqrt(var + eps)
    bias = b - mean * scale
    return y * scale + bias


def _conv_lrelu_kernel(r0_ref, r1_ref, w_ref, o_ref, *, nwo, tm):
    """Layer 1: conv (kh-accumulated) + LeakyReLU(0.2), row-tiled."""
    base = pl.program_id(0) * tm
    if tm % 8 == 0:
        base = pl.multiple_of(base, 8)
    y = _conv_y(r0_ref, r1_ref, w_ref, lambda a: base + a * nwo, tm)
    o_ref[...] = jnp.maximum(y, 0.2 * y).astype(o_ref.dtype)


def _conv_bn_lrelu_kernel(r0_ref, r1_ref, w_ref, g_ref, b_ref, o_ref, *, nwo, m, eps):
    """Fused conv + batch-stat BN + LeakyReLU for one output-channel slice."""
    y = _conv_y(r0_ref, r1_ref, w_ref, lambda a: a * nwo, m)
    z = _bn_fold(y, g_ref[...], b_ref[...], float(m), eps)
    o_ref[...] = jnp.maximum(z, 0.2 * z).astype(o_ref.dtype)


def _conv_bn_lrelu_head_kernel(r0_ref, r1_ref, w_ref, g_ref, b_ref, w5_ref, o_ref,
                               *, nwo, m, eps):
    """Layer 4 (conv+BN+LeakyReLU) fused with the final 4x4 conv head.

    Emits per-row partial head dot-products for this channel slice; the
    layer-4 activation never leaves VMEM.
    """
    y = _conv_y(r0_ref, r1_ref, w_ref, lambda a: a * nwo, m)
    z = _bn_fold(y, g_ref[...], b_ref[...], float(m), eps)
    z = jnp.maximum(z, 0.2 * z)
    u = jnp.sum(z * w5_ref[...], axis=1, keepdims=True)     # (m, 1) f32
    o_ref[0] = u


def _conv_stats_kernel(r0_ref, r1_ref, w_ref, y_ref, s_ref, q_ref, *, nwo, tm):
    """Fallback pass 1: row-tiled conv matmul + resident channel-stat accum.

    The row grid axis MUST stay "arbitrary": s_ref/q_ref are accumulators
    carried across grid steps (a "parallel" axis would race on megacore).
    """
    i = pl.program_id(0)

    @pl.when(i == 0)
    def _():
        s_ref[...] = jnp.zeros_like(s_ref)
        q_ref[...] = jnp.zeros_like(q_ref)

    base = i * tm
    if tm % 8 == 0:
        base = pl.multiple_of(base, 8)
    y = _conv_y(r0_ref, r1_ref, w_ref, lambda a: base + a * nwo, tm)
    y_ref[...] = y.astype(y_ref.dtype)                        # bf16 round trip
    s_ref[...] += jnp.sum(y, axis=0, keepdims=True)
    q_ref[...] += jnp.sum(y * y, axis=0, keepdims=True)


def _bn_lrelu_kernel(y_ref, s_ref, q_ref, g_ref, b_ref, o_ref, *, m, eps):
    """Fallback pass 2: BN scale/bias recomputed in-kernel + LeakyReLU(0.2)."""
    inv_m = 1.0 / m
    mean = s_ref[...] * inv_m
    var = jnp.maximum(q_ref[...] * inv_m - mean * mean, 0.0)
    scale = g_ref[...] * jax.lax.rsqrt(var + eps)
    bias = b_ref[...] - mean * scale
    z = y_ref[...].astype(jnp.float32) * scale + bias
    o_ref[...] = jnp.maximum(z, 0.2 * z).astype(o_ref.dtype)


# ----------------------------------------------------------------------------
# Pallas wrappers
# ----------------------------------------------------------------------------
def conv_lrelu(r0, r1, w, m, nwo):
    """Layer 1: conv + LeakyReLU -> (m, Cout) bf16, row-tiled "parallel"."""
    rows_r, k2 = r0.shape
    cout = w.shape[-1]
    tm = _tile_rows(m, min_grid=2)
    kern = functools.partial(_conv_lrelu_kernel, nwo=nwo, tm=tm)
    return pl.pallas_call(
        kern,
        out_shape=jax.ShapeDtypeStruct((m, cout), jnp.bfloat16),
        grid_spec=pltpu.PrefetchScalarGridSpec(
            num_scalar_prefetch=0,
            grid=(m // tm,),
            in_specs=[
                pl.BlockSpec((rows_r, k2), lambda i: (0, 0)),
                pl.BlockSpec((rows_r, k2), lambda i: (0, 0)),
                pl.BlockSpec((4, k2, cout), lambda i: (0, 0, 0)),
            ],
            out_specs=pl.BlockSpec((tm, cout), lambda i: (i, 0)),
        ),
        compiler_params=pltpu.CompilerParams(
            dimension_semantics=("parallel",),
            vmem_limit_bytes=_VMEM_LIMIT),
    )(r0, r1, w)


def conv_bn_lrelu(r0, r1, w, gamma, beta, m, nwo, *, eps, force_two_pass=False):
    """Fused conv + BatchNorm(batch stats) + LeakyReLU for layers 2-4."""
    rows_r, k2 = r0.shape
    cout = w.shape[-1]
    tile_c = 128 if cout % 128 == 0 else cout

    if (not force_two_pass) and _fused_fits(rows_r, k2, m, tile_c):
        kern = functools.partial(_conv_bn_lrelu_kernel, nwo=nwo, m=m, eps=eps)
        return pl.pallas_call(
            kern,
            out_shape=jax.ShapeDtypeStruct((m, cout), jnp.bfloat16),
            grid_spec=pltpu.PrefetchScalarGridSpec(
                num_scalar_prefetch=0,
                grid=(cout // tile_c,),
                in_specs=[
                    pl.BlockSpec((rows_r, k2), lambda c: (0, 0)),
                    pl.BlockSpec((rows_r, k2), lambda c: (0, 0)),
                    pl.BlockSpec((4, k2, tile_c), lambda c: (0, 0, c)),
                    pl.BlockSpec((1, tile_c), lambda c: (0, c)),
                    pl.BlockSpec((1, tile_c), lambda c: (0, c)),
                ],
                out_specs=pl.BlockSpec((m, tile_c), lambda c: (0, c)),
            ),
            compiler_params=pltpu.CompilerParams(
                dimension_semantics=("parallel",),
                vmem_limit_bytes=_VMEM_LIMIT),
        )(r0, r1, w, gamma, beta)

    # ---- large-M fallback: two fused passes -------------------------------
    tm = _tile_rows(m, min_grid=2)
    kern1 = functools.partial(_conv_stats_kernel, nwo=nwo, tm=tm)
    y, s, q = pl.pallas_call(
        kern1,
        out_shape=(
            jax.ShapeDtypeStruct((m, cout), jnp.bfloat16),
            jax.ShapeDtypeStruct((1, cout), jnp.float32),
            jax.ShapeDtypeStruct((1, cout), jnp.float32),
        ),
        grid_spec=pltpu.PrefetchScalarGridSpec(
            num_scalar_prefetch=0,
            grid=(m // tm,),
            in_specs=[
                pl.BlockSpec((rows_r, k2), lambda i: (0, 0)),
                pl.BlockSpec((rows_r, k2), lambda i: (0, 0)),
                pl.BlockSpec((4, k2, cout), lambda i: (0, 0, 0)),
            ],
            out_specs=(
                pl.BlockSpec((tm, cout), lambda i: (i, 0)),
                pl.BlockSpec((1, cout), lambda i: (0, 0)),
                pl.BlockSpec((1, cout), lambda i: (0, 0)),
            ),
        ),
        compiler_params=pltpu.CompilerParams(
            dimension_semantics=("arbitrary",),   # stat accumulators: keep serial
            vmem_limit_bytes=_VMEM_LIMIT),
    )(r0, r1, w)

    kern2 = functools.partial(_bn_lrelu_kernel, m=float(m), eps=eps)
    return pl.pallas_call(
        kern2,
        out_shape=jax.ShapeDtypeStruct((m, cout), jnp.bfloat16),
        grid_spec=pltpu.PrefetchScalarGridSpec(
            num_scalar_prefetch=0,
            grid=(m // tm,),
            in_specs=[
                pl.BlockSpec((tm, cout), lambda i: (i, 0)),
                pl.BlockSpec((1, cout), lambda i: (0, 0)),
                pl.BlockSpec((1, cout), lambda i: (0, 0)),
                pl.BlockSpec((1, cout), lambda i: (0, 0)),
                pl.BlockSpec((1, cout), lambda i: (0, 0)),
            ],
            out_specs=pl.BlockSpec((tm, cout), lambda i: (i, 0)),
        ),
        compiler_params=pltpu.CompilerParams(
            dimension_semantics=("parallel",),
            vmem_limit_bytes=_VMEM_LIMIT),
    )(y, s, q, gamma, beta)


def conv_bn_lrelu_head(r0, r1, w, gamma, beta, w5e, m, nwo, n, *, eps,
                       force_two_pass=False):
    """Layer 4 (conv+BN+LeakyReLU) fused with the final conv + sigmoid head."""
    rows_r, k2 = r0.shape
    cout = w.shape[-1]
    tile_c = 128 if cout % 128 == 0 else cout
    c_steps = cout // tile_c

    if (not force_two_pass) and _fused_fits(rows_r, k2, m, tile_c):
        kern = functools.partial(_conv_bn_lrelu_head_kernel, nwo=nwo, m=m, eps=eps)
        partial_u = pl.pallas_call(
            kern,
            out_shape=jax.ShapeDtypeStruct((c_steps, m, 1), jnp.float32),
            grid_spec=pltpu.PrefetchScalarGridSpec(
                num_scalar_prefetch=0,
                grid=(c_steps,),
                in_specs=[
                    pl.BlockSpec((rows_r, k2), lambda c: (0, 0)),
                    pl.BlockSpec((rows_r, k2), lambda c: (0, 0)),
                    pl.BlockSpec((4, k2, tile_c), lambda c: (0, 0, c)),
                    pl.BlockSpec((1, tile_c), lambda c: (0, c)),
                    pl.BlockSpec((1, tile_c), lambda c: (0, c)),
                    pl.BlockSpec((m, tile_c), lambda c: (0, c)),
                ],
                out_specs=pl.BlockSpec((1, m, 1), lambda c: (c, 0, 0)),
            ),
            compiler_params=pltpu.CompilerParams(
                dimension_semantics=("parallel",),
                vmem_limit_bytes=_VMEM_LIMIT),
        )(r0, r1, w, gamma, beta, w5e)
        per_row = jnp.sum(partial_u, axis=0)[:, 0]            # (m,)
        logits = per_row.reshape(4, n, 4).sum(axis=(0, 2))    # rows are (i, n, j)
        return jax.nn.sigmoid(logits).reshape(n, 1)

    # Fallback: two-pass BN layer, then the tiny (N x 16C) head in JAX.
    act = conv_bn_lrelu(r0, r1, w, gamma, beta, m, nwo, eps=eps,
                        force_two_pass=force_two_pass)         # (m, cout) bf16
    u = jnp.sum(act.astype(jnp.float32) * w5e, axis=1)         # (m,)
    logits = u.reshape(4, n, 4).sum(axis=(0, 2))
    return jax.nn.sigmoid(logits).reshape(n, 1)


# ----------------------------------------------------------------------------
# Glue: conv operand prep (HNWC layout), weight layout, init, forward pass
# ----------------------------------------------------------------------------
def conv_prep(x_hnwc):
    """4x4 / stride-2 / pad-1 conv prep: W-grouping + H-parity split.

    x: (H, N, W, C)  ->  r0, r1 each ((Ho+1)*N*Wo, 4*C) (row order (h, n, w)),
    plus (Ho, Wo).  No 4x im2col inflation; only ~2x from the W grouping.
    """
    H, N, W, C = x_hnwc.shape
    assert H % 2 == 0 and W % 2 == 0, (H, W)
    Ho, Wo = H // 2, W // 2
    xp = jnp.pad(x_hnwc, ((1, 1), (0, 0), (1, 1), (0, 0)))
    cols = jnp.stack([xp[:, :, kw: kw + 2 * Wo: 2, :] for kw in range(4)], axis=3)
    cols = cols.reshape(H + 2, N, Wo, 4 * C)                  # columns = (kw, ci)
    r0 = cols[0::2].reshape((Ho + 1) * N * Wo, 4 * C)         # even padded rows
    r1 = cols[1::2].reshape((Ho + 1) * N * Wo, 4 * C)         # odd padded rows
    return r0, r1, Ho, Wo


def init_params(key, nc, nfd):
    """Deterministic synthetic weights (normal * 0.02, DCGAN-style)."""
    shapes = [
        (nfd, nc, 4, 4),
        (nfd * 2, nfd, 4, 4),
        (nfd * 4, nfd * 2, 4, 4),
        (nfd * 8, nfd * 4, 4, 4),
        (1, nfd * 8, 4, 4),
    ]
    keys = jax.random.split(key, len(shapes))
    conv, conv_raw = [], []
    for k, s in zip(keys[:4], shapes[:4]):
        w = jax.random.normal(k, s, dtype=jnp.float32) * 0.02
        w_bf = w.astype(jnp.bfloat16)
        conv_raw.append(w_bf.astype(jnp.float32))              # for the reference
        # (Cout, Cin, kh, kw) -> (kh, kw*Cin, Cout); rows of block kh are (kw, ci)
        conv.append(jnp.transpose(w_bf, (2, 3, 1, 0)).reshape(4, 4 * s[1], s[0]))
    w5 = jax.random.normal(keys[4], shapes[4], dtype=jnp.float32) * 0.02
    conv_raw.append(w5)
    head = jnp.transpose(w5, (2, 3, 1, 0)).reshape(16, nfd * 8)   # rows = kh*4+kw
    bn = [(jnp.ones((1, c), jnp.float32), jnp.zeros((1, c), jnp.float32))
          for c in (nfd * 2, nfd * 4, nfd * 8)]
    return {"conv": conv, "conv_raw": conv_raw, "head": head, "bn": bn}


def discriminator_forward(x_nchw, params, *, force_two_pass=False):
    """x_nchw: (N, nc, 64, 64) float32 -> (N, 1, 1, 1) float32."""
    eps = 1e-5
    N = x_nchw.shape[0]
    # HNWC internal layout so flattened rows are ordered (h, n, w) and the
    # in-kernel kh windows are contiguous row ranges.
    x = jnp.transpose(x_nchw, (2, 0, 3, 1)).astype(jnp.bfloat16)   # (H, N, W, nc)

    # Layer 1: Conv + LeakyReLU.
    r0, r1, Ho, Wo = conv_prep(x)
    m, nwo = Ho * N * Wo, N * Wo
    y = conv_lrelu(r0, r1, params["conv"][0], m, nwo)
    x = y.reshape(Ho, N, Wo, -1)

    # Layers 2-3: fused Conv + BatchNorm(batch stats) + LeakyReLU.
    for layer in range(2):
        gamma, beta = params["bn"][layer]
        r0, r1, Ho, Wo = conv_prep(x)
        m, nwo = Ho * N * Wo, N * Wo
        y = conv_bn_lrelu(r0, r1, params["conv"][layer + 1], gamma, beta, m, nwo,
                          eps=eps, force_two_pass=force_two_pass)
        x = y.reshape(Ho, N, Wo, -1)

    # Layer 4 + final Conv(4,1,0) + Sigmoid head.
    gamma, beta = params["bn"][2]
    r0, r1, Ho, Wo = conv_prep(x)
    assert Ho == 4 and Wo == 4, "Discriminator expects 64x64 inputs"
    m, nwo = Ho * N * Wo, N * Wo
    r_idx = jnp.arange(m)
    pos = (r_idx // nwo) * 4 + (r_idx % Wo)                    # kh*4 + kw per row
    w5e = params["head"][pos]                                  # (m, 8*nfd) f32
    out = conv_bn_lrelu_head(r0, r1, params["conv"][3], gamma, beta, w5e,
                             m, nwo, N, eps=eps, force_two_pass=force_two_pass)
    return out.reshape(N, 1, 1, 1)


def _reference_forward(x_nchw, params, eps=1e-5):
    """Pure-XLA f32 reference (same bf16-rounded weights / input as the kernels)."""
    x = x_nchw.astype(jnp.bfloat16).astype(jnp.float32)

    def conv(v, w, stride, pad):
        return jax.lax.conv_general_dilated(
            v, w, window_strides=(stride, stride), padding=((pad, pad), (pad, pad)),
            dimension_numbers=("NCHW", "OIHW", "NCHW"))

    def lrelu(v):
        return jnp.maximum(v, 0.2 * v)

    def bn(v):
        mean = jnp.mean(v, axis=(0, 2, 3), keepdims=True)
        var = jnp.mean((v - mean) ** 2, axis=(0, 2, 3), keepdims=True)
        return (v - mean) * jax.lax.rsqrt(var + eps)

    w = params["conv_raw"]
    x = lrelu(conv(x, w[0], 2, 1))
    x = lrelu(bn(conv(x, w[1], 2, 1)))
    x = lrelu(bn(conv(x, w[2], 2, 1)))
    x = lrelu(bn(conv(x, w[3], 2, 1)))
    x = conv(x, w[4], 1, 0)
    return jax.nn.sigmoid(x)


if __name__ == "__main__":
    # Spatial 64 is required so the final 4x4 / stride-1 / pad-0 conv collapses
    # to 1x1 (64 -> 32 -> 16 -> 8 -> 4 -> 1).
    N, nc, nfd, H = 2, 3, 8, 64

    key = jax.random.PRNGKey(0)
    k_in, k_w = jax.random.split(key)
    x = jax.random.normal(k_in, (N, nc, H, H), dtype=jnp.float32)
    params = init_params(k_w, nc, nfd)

    fwd = jax.jit(functools.partial(discriminator_forward, force_two_pass=False))
    out = jax.block_until_ready(fwd(x, params))
    assert out.shape == (N, 1, 1, 1), out.shape
    assert bool(jnp.all(jnp.isfinite(out)))
    assert bool(jnp.all((out >= 0.0) & (out <= 1.0)))

    # Numerics vs. a pure-XLA f32 reference (bf16 activations => loose-ish tol).
    ref = jax.block_until_ready(jax.jit(_reference_forward)(x, params))
    assert bool(jnp.allclose(out, ref, atol=5e-2)), (out.ravel(), ref.ravel())

    # Exercise the large-M two-pass fallback path as well.
    fwd_fb = jax.jit(functools.partial(discriminator_forward, force_two_pass=True))
    out_fb = jax.block_until_ready(fwd_fb(x, params))
    assert bool(jnp.all(jnp.isfinite(out_fb)))
    assert bool(jnp.allclose(out, out_fb, atol=5e-2))

    print("KERNEL_OK")
</pallas_src>

<mosaic_0001>
module attributes {stable_mosaic.version = 11 : i64} {
  func.func @_conv_lrelu_kernel(%arg0: i32, %arg1: memref<2112x12xbf16, #tpu.memory_space<vmem>>, %arg2: memref<2112x12xbf16, #tpu.memory_space<vmem>>, %arg3: memref<4x12x8xbf16, #tpu.memory_space<vmem>>, %arg4: memref<1024x8xbf16, #tpu.memory_space<vmem>>) attributes {dimension_semantics = [#tpu.dimension_semantics<parallel>], iteration_bounds = array<i64: 2>, scalar_prefetch = 0 : i64, scratch_operands = 0 : i64, tpu.core_type = #tpu.core_type<tc>, window_params = [{pipeline_mode = #tpu.pipeline_mode<synchronous>, transform_indices = @transform_0, window_bounds = array<i64: 2112, 12>}, {pipeline_mode = #tpu.pipeline_mode<synchronous>, transform_indices = @transform_1, window_bounds = array<i64: 2112, 12>}, {pipeline_mode = #tpu.pipeline_mode<synchronous>, transform_indices = @transform_2, window_bounds = array<i64: 4, 12, 8>}, {transform_indices = @transform_3, window_bounds = array<i64: 1024, 8>}]} {
    %c1024_i32 = arith.constant 1024 : i32
    %0 = arith.muli %arg0, %c1024_i32 : i32
    %1 = tpu.assume_multiple %0, 8 : i32
    %c0_i32 = arith.constant 0 : i32
    %2 = arith.addi %1, %c0_i32 : i32
    %3 = arith.index_cast %2 : i32 to index
    %c0 = arith.constant 0 : index
    %4 = vector.load %arg1[%3, %c0] : memref<2112x12xbf16, #tpu.memory_space<vmem>>, vector<1024x12xbf16>
    %c0_0 = arith.constant 0 : index
    %c0_1 = arith.constant 0 : index
    %c0_2 = arith.constant 0 : index
    %5 = vector.load %arg3[%c0_0, %c0_1, %c0_2] : memref<4x12x8xbf16, #tpu.memory_space<vmem>>, vector<1x12x8xbf16>
    %6 = vector.shape_cast %5 : vector<1x12x8xbf16> to vector<12x8xbf16>
    %cst = arith.constant dense<0.000000e+00> : vector<1024x8xf32>
    %7 = tpu.matmul %4, %6, %cst {dimension_numbers = #tpu.dot_dimension_numbers<[1], [0], [0], [1], [0, 0, 1, 1], [], []>} : vector<1024x12xbf16>, vector<12x8xbf16>, vector<1024x8xf32> -> vector<1024x8xf32>
    %c0_i32_3 = arith.constant 0 : i32
    %8 = arith.addi %1, %c0_i32_3 : i32
    %9 = arith.index_cast %8 : i32 to index
    %c0_4 = arith.constant 0 : index
    %10 = vector.load %arg2[%9, %c0_4] : memref<2112x12xbf16, #tpu.memory_space<vmem>>, vector<1024x12xbf16>
    %c1 = arith.constant 1 : index
    %c0_5 = arith.constant 0 : index
    %c0_6 = arith.constant 0 : index
    %11 = vector.load %arg3[%c1, %c0_5, %c0_6] : memref<4x12x8xbf16, #tpu.memory_space<vmem>>, vector<1x12x8xbf16>
    %12 = vector.shape_cast %11 : vector<1x12x8xbf16> to vector<12x8xbf16>
    %cst_7 = arith.constant dense<0.000000e+00> : vector<1024x8xf32>
    %13 = tpu.matmul %10, %12, %cst_7 {dimension_numbers = #tpu.dot_dimension_numbers<[1], [0], [0], [1], [0, 0, 1, 1], [], []>} : vector<1024x12xbf16>, vector<12x8xbf16>, vector<1024x8xf32> -> vector<1024x8xf32>
    %14 = arith.addf %7, %13 : vector<1024x8xf32>
    %c64_i32 = arith.constant 64 : i32
    %15 = arith.addi %1, %c64_i32 : i32
    %16 = arith.index_cast %15 : i32 to index
    %c0_8 = arith.constant 0 : index
    %17 = vector.load %arg1[%16, %c0_8] : memref<2112x12xbf16, #tpu.memory_space<vmem>>, vector<1024x12xbf16>
    %c2 = arith.constant 2 : index
    %c0_9 = arith.constant 0 : index
    %c0_10 = arith.constant 0 : index
    %18 = vector.load %arg3[%c2, %c0_9, %c0_10] : memref<4x12x8xbf16, #tpu.memory_space<vmem>>, vector<1x12x8xbf16>
    %19 = vector.shape_cast %18 : vector<1x12x8xbf16> to vector<12x8xbf16>
    %cst_11 = arith.constant dense<0.000000e+00> : vector<1024x8xf32>
    %20 = tpu.matmul %17, %19, %cst_11 {dimension_numbers = #tpu.dot_dimension_numbers<[1], [0], [0], [1], [0, 0, 1, 1], [], []>} : vector<1024x12xbf16>, vector<12x8xbf16>, vector<1024x8xf32> -> vector<1024x8xf32>
    %21 = arith.addf %14, %20 : vector<1024x8xf32>
    %c64_i32_12 = arith.constant 64 : i32
    %22 = arith.addi %1, %c64_i32_12 : i32
    %23 = arith.index_cast %22 : i32 to index
    %c0_13 = arith.constant 0 : index
    %24 = vector.load %arg2[%23, %c0_13] : memref<2112x12xbf16, #tpu.memory_space<vmem>>, vector<1024x12xbf16>
    %c3 = arith.constant 3 : index
    %c0_14 = arith.constant 0 : index
    %c0_15 = arith.constant 0 : index
    %25 = vector.load %arg3[%c3, %c0_14, %c0_15] : memref<4x12x8xbf16, #tpu.memory_space<vmem>>, vector<1x12x8xbf16>
    %26 = vector.shape_cast %25 : vector<1x12x8xbf16> to vector<12x8xbf16>
    %cst_16 = arith.constant dense<0.000000e+00> : vector<1024x8xf32>
    %27 = tpu.matmul %24, %26, %cst_16 {dimension_numbers = #tpu.dot_dimension_numbers<[1], [0], [0], [1], [0, 0, 1, 1], [], []>} : vector<1024x12xbf16>, vector<12x8xbf16>, vector<1024x8xf32> -> vector<1024x8xf32>
    %28 = arith.addf %21, %27 : vector<1024x8xf32>
    %cst_17 = arith.constant 2.000000e-01 : f32
    %29 = vector.broadcast %cst_17 : f32 to vector<1024x8xf32>
    %30 = arith.mulf %29, %28 : vector<1024x8xf32>
    %31 = arith.maximumf %28, %30 : vector<1024x8xf32>
    %32 = arith.truncf %31 : vector<1024x8xf32> to vector<1024x8xbf16>
    %c0_18 = arith.constant 0 : index
    %c0_19 = arith.constant 0 : index
    %33 = vector.load %arg4[%c0_18, %c0_19] : memref<1024x8xbf16, #tpu.memory_space<vmem>>, vector<1024x8xbf16>
    tpu.vector_store %arg4[%c0_18, %c0_19], %32 {strides = array<i32>} : memref<1024x8xbf16, #tpu.memory_space<vmem>>, vector<1024x8xbf16>,
    return
  }
  func.func @transform_0(%arg0: i32) -> (i32, i32) {
    %c0_i32 = arith.constant 0 : i32
    %c0_i32_0 = arith.constant 0 : i32
    %c0_i32_1 = arith.constant 0 : i32
    return %c0_i32, %c0_i32_0 : i32, i32
  }
  func.func @transform_1(%arg0: i32) -> (i32, i32) {
    %c0_i32 = arith.constant 0 : i32
    %c0_i32_0 = arith.constant 0 : i32
    %c0_i32_1 = arith.constant 0 : i32
    return %c0_i32, %c0_i32_0 : i32, i32
  }
  func.func @transform_2(%arg0: i32) -> (i32, i32, i32) {
    %c0_i32 = arith.constant 0 : i32
    %c0_i32_0 = arith.constant 0 : i32
    %c0_i32_1 = arith.constant 0 : i32
    %c0_i32_2 = arith.constant 0 : i32
    return %c0_i32, %c0_i32_0, %c0_i32_1 : i32, i32, i32
  }
  func.func @transform_3(%arg0: i32) -> (i32, i32) {
    %c0_i32 = arith.constant 0 : i32
    %c0_i32_0 = arith.constant 0 : i32
    return %arg0, %c0_i32 : i32, i32
  }
}

module attributes {stable_mosaic.version = 11 : i64} {
  func.func @_conv_bn_lrelu_kernel(%arg0: i32, %arg1: memref<544x32xbf16, #tpu.memory_space<vmem>>, %arg2: memref<544x32xbf16, #tpu.memory_space<vmem>>, %arg3: memref<4x32x16xbf16, #tpu.memory_space<vmem>>, %arg4: memref<1x16xf32, #tpu.memory_space<vmem>>, %arg5: memref<1x16xf32, #tpu.memory_space<vmem>>, %arg6: memref<512x16xbf16, #tpu.memory_space<vmem>>) attributes {dimension_semantics = [#tpu.dimension_semantics<parallel>], iteration_bounds = array<i64: 1>, scalar_prefetch = 0 : i64, scratch_operands = 0 : i64, tpu.core_type = #tpu.core_type<tc>, window_params = [{pipeline_mode = #tpu.pipeline_mode<synchronous>, transform_indices = @transform_0, window_bounds = array<i64: 544, 32>}, {pipeline_mode = #tpu.pipeline_mode<synchronous>, transform_indices = @transform_1, window_bounds = array<i64: 544, 32>}, {transform_indices = @transform_2, window_bounds = array<i64: 4, 32, 16>}, {transform_indices = @transform_3, window_bounds = array<i64: 1, 16>}, {transform_indices = @transform_4, window_bounds = array<i64: 1, 16>}, {transform_indices = @transform_5, window_bounds = array<i64: 512, 16>}]} {
    %c0 = arith.constant 0 : index
    %c0_0 = arith.constant 0 : index
    %0 = vector.load %arg1[%c0, %c0_0] : memref<544x32xbf16, #tpu.memory_space<vmem>>, vector<512x32xbf16>
    %c0_1 = arith.constant 0 : index
    %c0_2 = arith.constant 0 : index
    %c0_3 = arith.constant 0 : index
    %1 = vector.load %arg3[%c0_1, %c0_2, %c0_3] : memref<4x32x16xbf16, #tpu.memory_space<vmem>>, vector<1x32x16xbf16>
    %2 = vector.shape_cast %1 : vector<1x32x16xbf16> to vector<32x16xbf16>
    %cst = arith.constant dense<0.000000e+00> : vector<512x16xf32>
    %3 = tpu.matmul %0, %2, %cst {dimension_numbers = #tpu.dot_dimension_numbers<[1], [0], [0], [1], [0, 0, 1, 1], [], []>} : vector<512x32xbf16>, vector<32x16xbf16>, vector<512x16xf32> -> vector<512x16xf32>
    %c0_4 = arith.constant 0 : index
    %c0_5 = arith.constant 0 : index
    %4 = vector.load %arg2[%c0_4, %c0_5] : memref<544x32xbf16, #tpu.memory_space<vmem>>, vector<512x32xbf16>
    %c1 = arith.constant 1 : index
    %c0_6 = arith.constant 0 : index
    %c0_7 = arith.constant 0 : index
    %5 = vector.load %arg3[%c1, %c0_6, %c0_7] : memref<4x32x16xbf16, #tpu.memory_space<vmem>>, vector<1x32x16xbf16>
    %6 = vector.shape_cast %5 : vector<1x32x16xbf16> to vector<32x16xbf16>
    %cst_8 = arith.constant dense<0.000000e+00> : vector<512x16xf32>
    %7 = tpu.matmul %4, %6, %cst_8 {dimension_numbers = #tpu.dot_dimension_numbers<[1], [0], [0], [1], [0, 0, 1, 1], [], []>} : vector<512x32xbf16>, vector<32x16xbf16>, vector<512x16xf32> -> vector<512x16xf32>
    %8 = arith.addf %3, %7 : vector<512x16xf32>
    %c32 = arith.constant 32 : index
    %c0_9 = arith.constant 0 : index
    %9 = vector.load %arg1[%c32, %c0_9] : memref<544x32xbf16, #tpu.memory_space<vmem>>, vector<512x32xbf16>
    %c2 = arith.constant 2 : index
    %c0_10 = arith.constant 0 : index
    %c0_11 = arith.constant 0 : index
    %10 = vector.load %arg3[%c2, %c0_10, %c0_11] : memref<4x32x16xbf16, #tpu.memory_space<vmem>>, vector<1x32x16xbf16>
    %11 = vector.shape_cast %10 : vector<1x32x16xbf16> to vector<32x16xbf16>
    %cst_12 = arith.constant dense<0.000000e+00> : vector<512x16xf32>
    %12 = tpu.matmul %9, %11, %cst_12 {dimension_numbers = #tpu.dot_dimension_numbers<[1], [0], [0], [1], [0, 0, 1, 1], [], []>} : vector<512x32xbf16>, vector<32x16xbf16>, vector<512x16xf32> -> vector<512x16xf32>
    %13 = arith.addf %8, %12 : vector<512x16xf32>
    %c32_13 = arith.constant 32 : index
    %c0_14 = arith.constant 0 : index
    %14 = vector.load %arg2[%c32_13, %c0_14] : memref<544x32xbf16, #tpu.memory_space<vmem>>, vector<512x32xbf16>
    %c3 = arith.constant 3 : index
    %c0_15 = arith.constant 0 : index
    %c0_16 = arith.constant 0 : index
    %15 = vector.load %arg3[%c3, %c0_15, %c0_16] : memref<4x32x16xbf16, #tpu.memory_space<vmem>>, vector<1x32x16xbf16>
    %16 = vector.shape_cast %15 : vector<1x32x16xbf16> to vector<32x16xbf16>
    %cst_17 = arith.constant dense<0.000000e+00> : vector<512x16xf32>
    %17 = tpu.matmul %14, %16, %cst_17 {dimension_numbers = #tpu.dot_dimension_numbers<[1], [0], [0], [1], [0, 0, 1, 1], [], []>} : vector<512x32xbf16>, vector<32x16xbf16>, vector<512x16xf32> -> vector<512x16xf32>
    %18 = arith.addf %13, %17 : vector<512x16xf32>
    %c0_18 = arith.constant 0 : index
    %c0_19 = arith.constant 0 : index
    %19 = vector.load %arg4[%c0_18, %c0_19] : memref<1x16xf32, #tpu.memory_space<vmem>>, vector<1x16xf32>
    %c0_20 = arith.constant 0 : index
    %c0_21 = arith.constant 0 : index
    %20 = vector.load %arg5[%c0_20, %c0_21] : memref<1x16xf32, #tpu.memory_space<vmem>>, vector<1x16xf32>
    %cst_22 = arith.constant dense<0.000000e+00> : vector<16xf32>
    %21 = vector.multi_reduction <add>, %18, %cst_22 [0] : vector<512x16xf32> to vector<16xf32>
    %22 = vector.shape_cast %21 : vector<16xf32> to vector<1x16xf32>
    %cst_23 = arith.constant 0.001953125 : f32
    %23 = vector.broadcast %cst_23 : f32 to vector<1x16xf32>
    %24 = arith.mulf %22, %23 : vector<1x16xf32>
    %25 = arith.mulf %18, %18 : vector<512x16xf32>
    %cst_24 = arith.constant dense<0.000000e+00> : vector<16xf32>
    %26 = vector.multi_reduction <add>, %25, %cst_24 [0] : vector<512x16xf32> to vector<16xf32>
    %27 = vector.shape_cast %26 : vector<16xf32> to vector<1x16xf32>
    %cst_25 = arith.constant 0.001953125 : f32
    %28 = vector.broadcast %cst_25 : f32 to vector<1x16xf32>
    %29 = arith.mulf %27, %28 : vector<1x16xf32>
    %30 = arith.mulf %24, %24 : vector<1x16xf32>
    %31 = arith.subf %29, %30 : vector<1x16xf32>
    %cst_26 = arith.constant 0.000000e+00 : f32
    %32 = vector.broadcast %cst_26 : f32 to vector<1x16xf32>
    %33 = arith.maximumf %31, %32 : vector<1x16xf32>
    %cst_27 = arith.constant 9.99999974E-6 : f32
    %34 = vector.broadcast %cst_27 : f32 to vector<1x16xf32>
    %35 = arith.addf %33, %34 : vector<1x16xf32>
    %36 = math.rsqrt %35 : vector<1x16xf32>
    %37 = arith.mulf %19, %36 : vector<1x16xf32>
    %38 = arith.mulf %24, %37 : vector<1x16xf32>
    %39 = arith.subf %20, %38 : vector<1x16xf32>
    %40 = vector.broadcast %37 : vector<1x16xf32> to vector<512x16xf32>
    %41 = arith.mulf %18, %40 : vector<512x16xf32>
    %42 = vector.broadcast %39 : vector<1x16xf32> to vector<512x16xf32>
    %43 = arith.addf %41, %42 : vector<512x16xf32>
    %cst_28 = arith.constant 2.000000e-01 : f32
    %44 = vector.broadcast %cst_28 : f32 to vector<512x16xf32>
    %45 = arith.mulf %44, %43 : vector<512x16xf32>
    %46 = arith.maximumf %43, %45 : vector<512x16xf32>
    %47 = arith.truncf %46 : vector<512x16xf32> to vector<512x16xbf16>
    %c0_29 = arith.constant 0 : index
    %c0_30 = arith.constant 0 : index
    %48 = vector.load %arg6[%c0_29, %c0_30] : memref<512x16xbf16, #tpu.memory_space<vmem>>, vector<512x16xbf16>
    tpu.vector_store %arg6[%c0_29, %c0_30], %47 {strides = array<i32>} : memref<512x16xbf16, #tpu.memory_space<vmem>>, vector<512x16xbf16>,
    return
  }
  func.func @transform_0(%arg0: i32) -> (i32, i32) {
    %c0_i32 = arith.constant 0 : i32
    %c0_i32_0 = arith.constant 0 : i32
    %c0_i32_1 = arith.constant 0 : i32
    return %c0_i32, %c0_i32_0 : i32, i32
  }
  func.func @transform_1(%arg0: i32) -> (i32, i32) {
    %c0_i32 = arith.constant 0 : i32
    %c0_i32_0 = arith.constant 0 : i32
    %c0_i32_1 = arith.constant 0 : i32
    return %c0_i32, %c0_i32_0 : i32, i32
  }
  func.func @transform_2(%arg0: i32) -> (i32, i32, i32) {
    %c0_i32 = arith.constant 0 : i32
    %c0_i32_0 = arith.constant 0 : i32
    %c0_i32_1 = arith.constant 0 : i32
    return %c0_i32, %c0_i32_0, %arg0 : i32, i32, i32
  }
  func.func @transform_3(%arg0: i32) -> (i32, i32) {
    %c0_i32 = arith.constant 0 : i32
    %c0_i32_0 = arith.constant 0 : i32
    return %c0_i32, %arg0 : i32, i32
  }
  func.func @transform_4(%arg0: i32) -> (i32, i32) {
    %c0_i32 = arith.constant 0 : i32
    %c0_i32_0 = arith.constant 0 : i32
    return %c0_i32, %arg0 : i32, i32
  }
  func.func @transform_5(%arg0: i32) -> (i32, i32) {
    %c0_i32 = arith.constant 0 : i32
    %c0_i32_0 = arith.constant 0 : i32
    return %c0_i32, %arg0 : i32, i32
  }
}

module attributes {stable_mosaic.version = 11 : i64} {
  func.func @_conv_bn_lrelu_kernel(%arg0: i32, %arg1: memref<144x64xbf16, #tpu.memory_space<vmem>>, %arg2: memref<144x64xbf16, #tpu.memory_space<vmem>>, %arg3: memref<4x64x32xbf16, #tpu.memory_space<vmem>>, %arg4: memref<1x32xf32, #tpu.memory_space<vmem>>, %arg5: memref<1x32xf32, #tpu.memory_space<vmem>>, %arg6: memref<128x32xbf16, #tpu.memory_space<vmem>>) attributes {dimension_semantics = [#tpu.dimension_semantics<parallel>], iteration_bounds = array<i64: 1>, scalar_prefetch = 0 : i64, scratch_operands = 0 : i64, tpu.core_type = #tpu.core_type<tc>, window_params = [{pipeline_mode = #tpu.pipeline_mode<synchronous>, transform_indices = @transform_0, window_bounds = array<i64: 144, 64>}, {pipeline_mode = #tpu.pipeline_mode<synchronous>, transform_indices = @transform_1, window_bounds = array<i64: 144, 64>}, {transform_indices = @transform_2, window_bounds = array<i64: 4, 64, 32>}, {transform_indices = @transform_3, window_bounds = array<i64: 1, 32>}, {transform_indices = @transform_4, window_bounds = array<i64: 1, 32>}, {transform_indices = @transform_5, window_bounds = array<i64: 128, 32>}]} {
    %c0 = arith.constant 0 : index
    %c0_0 = arith.constant 0 : index
    %0 = vector.load %arg1[%c0, %c0_0] : memref<144x64xbf16, #tpu.memory_space<vmem>>, vector<128x64xbf16>
    %c0_1 = arith.constant 0 : index
    %c0_2 = arith.constant 0 : index
    %c0_3 = arith.constant 0 : index
    %1 = vector.load %arg3[%c0_1, %c0_2, %c0_3] : memref<4x64x32xbf16, #tpu.memory_space<vmem>>, vector<1x64x32xbf16>
    %2 = vector.shape_cast %1 : vector<1x64x32xbf16> to vector<64x32xbf16>
    %cst = arith.constant dense<0.000000e+00> : vector<128x32xf32>
    %3 = tpu.matmul %0, %2, %cst {dimension_numbers = #tpu.dot_dimension_numbers<[1], [0], [0], [1], [0, 0, 1, 1], [], []>} : vector<128x64xbf16>, vector<64x32xbf16>, vector<128x32xf32> -> vector<128x32xf32>
    %c0_4 = arith.constant 0 : index
    %c0_5 = arith.constant 0 : index
    %4 = vector.load %arg2[%c0_4, %c0_5] : memref<144x64xbf16, #tpu.memory_space<vmem>>, vector<128x64xbf16>
    %c1 = arith.constant 1 : index
    %c0_6 = arith.constant 0 : index
    %c0_7 = arith.constant 0 : index
    %5 = vector.load %arg3[%c1, %c0_6, %c0_7] : memref<4x64x32xbf16, #tpu.memory_space<vmem>>, vector<1x64x32xbf16>
    %6 = vector.shape_cast %5 : vector<1x64x32xbf16> to vector<64x32xbf16>
    %cst_8 = arith.constant dense<0.000000e+00> : vector<128x32xf32>
    %7 = tpu.matmul %4, %6, %cst_8 {dimension_numbers = #tpu.dot_dimension_numbers<[1], [0], [0], [1], [0, 0, 1, 1], [], []>} : vector<128x64xbf16>, vector<64x32xbf16>, vector<128x32xf32> -> vector<128x32xf32>
    %8 = arith.addf %3, %7 : vector<128x32xf32>
    %c16 = arith.constant 16 : index
    %c0_9 = arith.constant 0 : index
    %9 = vector.load %arg1[%c16, %c0_9] : memref<144x64xbf16, #tpu.memory_space<vmem>>, vector<128x64xbf16>
    %c2 = arith.constant 2 : index
    %c0_10 = arith.constant 0 : index
    %c0_11 = arith.constant 0 : index
    %10 = vector.load %arg3[%c2, %c0_10, %c0_11] : memref<4x64x32xbf16, #tpu.memory_space<vmem>>, vector<1x64x32xbf16>
    %11 = vector.shape_cast %10 : vector<1x64x32xbf16> to vector<64x32xbf16>
    %cst_12 = arith.constant dense<0.000000e+00> : vector<128x32xf32>
    %12 = tpu.matmul %9, %11, %cst_12 {dimension_numbers = #tpu.dot_dimension_numbers<[1], [0], [0], [1], [0, 0, 1, 1], [], []>} : vector<128x64xbf16>, vector<64x32xbf16>, vector<128x32xf32> -> vector<128x32xf32>
    %13 = arith.addf %8, %12 : vector<128x32xf32>
    %c16_13 = arith.constant 16 : index
    %c0_14 = arith.constant 0 : index
    %14 = vector.load %arg2[%c16_13, %c0_14] : memref<144x64xbf16, #tpu.memory_space<vmem>>, vector<128x64xbf16>
    %c3 = arith.constant 3 : index
    %c0_15 = arith.constant 0 : index
    %c0_16 = arith.constant 0 : index
    %15 = vector.load %arg3[%c3, %c0_15, %c0_16] : memref<4x64x32xbf16, #tpu.memory_space<vmem>>, vector<1x64x32xbf16>
    %16 = vector.shape_cast %15 : vector<1x64x32xbf16> to vector<64x32xbf16>
    %cst_17 = arith.constant dense<0.000000e+00> : vector<128x32xf32>
    %17 = tpu.matmul %14, %16, %cst_17 {dimension_numbers = #tpu.dot_dimension_numbers<[1], [0], [0], [1], [0, 0, 1, 1], [], []>} : vector<128x64xbf16>, vector<64x32xbf16>, vector<128x32xf32> -> vector<128x32xf32>
    %18 = arith.addf %13, %17 : vector<128x32xf32>
    %c0_18 = arith.constant 0 : index
    %c0_19 = arith.constant 0 : index
    %19 = vector.load %arg4[%c0_18, %c0_19] : memref<1x32xf32, #tpu.memory_space<vmem>>, vector<1x32xf32>
    %c0_20 = arith.constant 0 : index
    %c0_21 = arith.constant 0 : index
    %20 = vector.load %arg5[%c0_20, %c0_21] : memref<1x32xf32, #tpu.memory_space<vmem>>, vector<1x32xf32>
    %cst_22 = arith.constant dense<0.000000e+00> : vector<32xf32>
    %21 = vector.multi_reduction <add>, %18, %cst_22 [0] : vector<128x32xf32> to vector<32xf32>
    %22 = vector.shape_cast %21 : vector<32xf32> to vector<1x32xf32>
    %cst_23 = arith.constant 7.812500e-03 : f32
    %23 = vector.broadcast %cst_23 : f32 to vector<1x32xf32>
    %24 = arith.mulf %22, %23 : vector<1x32xf32>
    %25 = arith.mulf %18, %18 : vector<128x32xf32>
    %cst_24 = arith.constant dense<0.000000e+00> : vector<32xf32>
    %26 = vector.multi_reduction <add>, %25, %cst_24 [0] : vector<128x32xf32> to vector<32xf32>
    %27 = vector.shape_cast %26 : vector<32xf32> to vector<1x32xf32>
    %cst_25 = arith.constant 7.812500e-03 : f32
    %28 = vector.broadcast %cst_25 : f32 to vector<1x32xf32>
    %29 = arith.mulf %27, %28 : vector<1x32xf32>
    %30 = arith.mulf %24, %24 : vector<1x32xf32>
    %31 = arith.subf %29, %30 : vector<1x32xf32>
    %cst_26 = arith.constant 0.000000e+00 : f32
    %32 = vector.broadcast %cst_26 : f32 to vector<1x32xf32>
    %33 = arith.maximumf %31, %32 : vector<1x32xf32>
    %cst_27 = arith.constant 9.99999974E-6 : f32
    %34 = vector.broadcast %cst_27 : f32 to vector<1x32xf32>
    %35 = arith.addf %33, %34 : vector<1x32xf32>
    %36 = math.rsqrt %35 : vector<1x32xf32>
    %37 = arith.mulf %19, %36 : vector<1x32xf32>
    %38 = arith.mulf %24, %37 : vector<1x32xf32>
    %39 = arith.subf %20, %38 : vector<1x32xf32>
    %40 = vector.broadcast %37 : vector<1x32xf32> to vector<128x32xf32>
    %41 = arith.mulf %18, %40 : vector<128x32xf32>
    %42 = vector.broadcast %39 : vector<1x32xf32> to vector<128x32xf32>
    %43 = arith.addf %41, %42 : vector<128x32xf32>
    %cst_28 = arith.constant 2.000000e-01 : f32
    %44 = vector.broadcast %cst_28 : f32 to vector<128x32xf32>
    %45 = arith.mulf %44, %43 : vector<128x32xf32>
    %46 = arith.maximumf %43, %45 : vector<128x32xf32>
    %47 = arith.truncf %46 : vector<128x32xf32> to vector<128x32xbf16>
    %c0_29 = arith.constant 0 : index
    %c0_30 = arith.constant 0 : index
    %48 = vector.load %arg6[%c0_29, %c0_30] : memref<128x32xbf16, #tpu.memory_space<vmem>>, vector<128x32xbf16>
    tpu.vector_store %arg6[%c0_29, %c0_30], %47 {strides = array<i32>} : memref<128x32xbf16, #tpu.memory_space<vmem>>, vector<128x32xbf16>,
    return
  }
  func.func @transform_0(%arg0: i32) -> (i32, i32) {
    %c0_i32 = arith.constant 0 : i32
    %c0_i32_0 = arith.constant 0 : i32
    %c0_i32_1 = arith.constant 0 : i32
    return %c0_i32, %c0_i32_0 : i32, i32
  }
  func.func @transform_1(%arg0: i32) -> (i32, i32) {
    %c0_i32 = arith.constant 0 : i32
    %c0_i32_0 = arith.constant 0 : i32
    %c0_i32_1 = arith.constant 0 : i32
    return %c0_i32, %c0_i32_0 : i32, i32
  }
  func.func @transform_2(%arg0: i32) -> (i32, i32, i32) {
    %c0_i32 = arith.constant 0 : i32
    %c0_i32_0 = arith.constant 0 : i32
    %c0_i32_1 = arith.constant 0 : i32
    return %c0_i32, %c0_i32_0, %arg0 : i32, i32, i32
  }
  func.func @transform_3(%arg0: i32) -> (i32, i32) {
    %c0_i32 = arith.constant 0 : i32
    %c0_i32_0 = arith.constant 0 : i32
    return %c0_i32, %arg0 : i32, i32
  }
  func.func @transform_4(%arg0: i32) -> (i32, i32) {
    %c0_i32 = arith.constant 0 : i32
    %c0_i32_0 = arith.constant 0 : i32
    return %c0_i32, %arg0 : i32, i32
  }
  func.func @transform_5(%arg0: i32) -> (i32, i32) {
    %c0_i32 = arith.constant 0 : i32
    %c0_i32_0 = arith.constant 0 : i32
    return %c0_i32, %arg0 : i32, i32
  }
}

module attributes {stable_mosaic.version = 11 : i64} {
  func.func @_conv_bn_lrelu_head_kernel(%arg0: i32, %arg1: memref<40x128xbf16, #tpu.memory_space<vmem>>, %arg2: memref<40x128xbf16, #tpu.memory_space<vmem>>, %arg3: memref<4x128x64xbf16, #tpu.memory_space<vmem>>, %arg4: memref<1x64xf32, #tpu.memory_space<vmem>>, %arg5: memref<1x64xf32, #tpu.memory_space<vmem>>, %arg6: memref<32x64xf32, #tpu.memory_space<vmem>>, %arg7: memref<1x32x1xf32, #tpu.memory_space<vmem>>) attributes {dimension_semantics = [#tpu.dimension_semantics<parallel>], iteration_bounds = array<i64: 1>, scalar_prefetch = 0 : i64, scratch_operands = 0 : i64, tpu.core_type = #tpu.core_type<tc>, window_params = [{pipeline_mode = #tpu.pipeline_mode<synchronous>, transform_indices = @transform_0, window_bounds = array<i64: 40, 128>}, {pipeline_mode = #tpu.pipeline_mode<synchronous>, transform_indices = @transform_1, window_bounds = array<i64: 40, 128>}, {transform_indices = @transform_2, window_bounds = array<i64: 4, 128, 64>}, {transform_indices = @transform_3, window_bounds = array<i64: 1, 64>}, {transform_indices = @transform_4, window_bounds = array<i64: 1, 64>}, {transform_indices = @transform_5, window_bounds = array<i64: 32, 64>}, {transform_indices = @transform_6, window_bounds = array<i64: 1, 32, 1>}]} {
    %c0 = arith.constant 0 : index
    %c0_0 = arith.constant 0 : index
    %0 = vector.load %arg1[%c0, %c0_0] : memref<40x128xbf16, #tpu.memory_space<vmem>>, vector<32x128xbf16>
    %c0_1 = arith.constant 0 : index
    %c0_2 = arith.constant 0 : index
    %c0_3 = arith.constant 0 : index
    %1 = vector.load %arg3[%c0_1, %c0_2, %c0_3] : memref<4x128x64xbf16, #tpu.memory_space<vmem>>, vector<1x128x64xbf16>
    %2 = vector.shape_cast %1 : vector<1x128x64xbf16> to vector<128x64xbf16>
    %cst = arith.constant dense<0.000000e+00> : vector<32x64xf32>
    %3 = tpu.matmul %0, %2, %cst {dimension_numbers = #tpu.dot_dimension_numbers<[1], [0], [0], [1], [0, 0, 1, 1], [], []>} : vector<32x128xbf16>, vector<128x64xbf16>, vector<32x64xf32> -> vector<32x64xf32>
    %c0_4 = arith.constant 0 : index
    %c0_5 = arith.constant 0 : index
    %4 = vector.load %arg2[%c0_4, %c0_5] : memref<40x128xbf16, #tpu.memory_space<vmem>>, vector<32x128xbf16>
    %c1 = arith.constant 1 : index
    %c0_6 = arith.constant 0 : index
    %c0_7 = arith.constant 0 : index
    %5 = vector.load %arg3[%c1, %c0_6, %c0_7] : memref<4x128x64xbf16, #tpu.memory_space<vmem>>, vector<1x128x64xbf16>
    %6 = vector.shape_cast %5 : vector<1x128x64xbf16> to vector<128x64xbf16>
    %cst_8 = arith.constant dense<0.000000e+00> : vector<32x64xf32>
    %7 = tpu.matmul %4, %6, %cst_8 {dimension_numbers = #tpu.dot_dimension_numbers<[1], [0], [0], [1], [0, 0, 1, 1], [], []>} : vector<32x128xbf16>, vector<128x64xbf16>, vector<32x64xf32> -> vector<32x64xf32>
    %8 = arith.addf %3, %7 : vector<32x64xf32>
    %c8 = arith.constant 8 : index
    %c0_9 = arith.constant 0 : index
    %9 = vector.load %arg1[%c8, %c0_9] : memref<40x128xbf16, #tpu.memory_space<vmem>>, vector<32x128xbf16>
    %c2 = arith.constant 2 : index
    %c0_10 = arith.constant 0 : index
    %c0_11 = arith.constant 0 : index
    %10 = vector.load %arg3[%c2, %c0_10, %c0_11] : memref<4x128x64xbf16, #tpu.memory_space<vmem>>, vector<1x128x64xbf16>
    %11 = vector.shape_cast %10 : vector<1x128x64xbf16> to vector<128x64xbf16>
    %cst_12 = arith.constant dense<0.000000e+00> : vector<32x64xf32>
    %12 = tpu.matmul %9, %11, %cst_12 {dimension_numbers = #tpu.dot_dimension_numbers<[1], [0], [0], [1], [0, 0, 1, 1], [], []>} : vector<32x128xbf16>, vector<128x64xbf16>, vector<32x64xf32> -> vector<32x64xf32>
    %13 = arith.addf %8, %12 : vector<32x64xf32>
    %c8_13 = arith.constant 8 : index
    %c0_14 = arith.constant 0 : index
    %14 = vector.load %arg2[%c8_13, %c0_14] : memref<40x128xbf16, #tpu.memory_space<vmem>>, vector<32x128xbf16>
    %c3 = arith.constant 3 : index
    %c0_15 = arith.constant 0 : index
    %c0_16 = arith.constant 0 : index
    %15 = vector.load %arg3[%c3, %c0_15, %c0_16] : memref<4x128x64xbf16, #tpu.memory_space<vmem>>, vector<1x128x64xbf16>
    %16 = vector.shape_cast %15 : vector<1x128x64xbf16> to vector<128x64xbf16>
    %cst_17 = arith.constant dense<0.000000e+00> : vector<32x64xf32>
    %17 = tpu.matmul %14, %16, %cst_17 {dimension_numbers = #tpu.dot_dimension_numbers<[1], [0], [0], [1], [0, 0, 1, 1], [], []>} : vector<32x128xbf16>, vector<128x64xbf16>, vector<32x64xf32> -> vector<32x64xf32>
    %18 = arith.addf %13, %17 : vector<32x64xf32>
    %c0_18 = arith.constant 0 : index
    %c0_19 = arith.constant 0 : index
    %19 = vector.load %arg4[%c0_18, %c0_19] : memref<1x64xf32, #tpu.memory_space<vmem>>, vector<1x64xf32>
    %c0_20 = arith.constant 0 : index
    %c0_21 = arith.constant 0 : index
    %20 = vector.load %arg5[%c0_20, %c0_21] : memref<1x64xf32, #tpu.memory_space<vmem>>, vector<1x64xf32>
    %cst_22 = arith.constant dense<0.000000e+00> : vector<64xf32>
    %21 = vector.multi_reduction <add>, %18, %cst_22 [0] : vector<32x64xf32> to vector<64xf32>
    %22 = vector.shape_cast %21 : vector<64xf32> to vector<1x64xf32>
    %cst_23 = arith.constant 3.125000e-02 : f32
    %23 = vector.broadcast %cst_23 : f32 to vector<1x64xf32>
    %24 = arith.mulf %22, %23 : vector<1x64xf32>
    %25 = arith.mulf %18, %18 : vector<32x64xf32>
    %cst_24 = arith.constant dense<0.000000e+00> : vector<64xf32>
    %26 = vector.multi_reduction <add>, %25, %cst_24 [0] : vector<32x64xf32> to vector<64xf32>
    %27 = vector.shape_cast %26 : vector<64xf32> to vector<1x64xf32>
    %cst_25 = arith.constant 3.125000e-02 : f32
    %28 = vector.broadcast %cst_25 : f32 to vector<1x64xf32>
    %29 = arith.mulf %27, %28 : vector<1x64xf32>
    %30 = arith.mulf %24, %24 : vector<1x64xf32>
    %31 = arith.subf %29, %30 : vector<1x64xf32>
    %cst_26 = arith.constant 0.000000e+00 : f32
    %32 = vector.broadcast %cst_26 : f32 to vector<1x64xf32>
    %33 = arith.maximumf %31, %32 : vector<1x64xf32>
    %cst_27 = arith.constant 9.99999974E-6 : f32
    %34 = vector.broadcast %cst_27 : f32 to vector<1x64xf32>
    %35 = arith.addf %33, %34 : vector<1x64xf32>
    %36 = math.rsqrt %35 : vector<1x64xf32>
    %37 = arith.mulf %19, %36 : vector<1x64xf32>
    %38 = arith.mulf %24, %37 : vector<1x64xf32>
    %39 = arith.subf %20, %38 : vector<1x64xf32>
    %40 = vector.broadcast %37 : vector<1x64xf32> to vector<32x64xf32>
    %41 = arith.mulf %18, %40 : vector<32x64xf32>
    %42 = vector.broadcast %39 : vector<1x64xf32> to vector<32x64xf32>
    %43 = arith.addf %41, %42 : vector<32x64xf32>
    %cst_28 = arith.constant 2.000000e-01 : f32
    %44 = vector.broadcast %cst_28 : f32 to vector<32x64xf32>
    %45 = arith.mulf %44, %43 : vector<32x64xf32>
    %46 = arith.maximumf %43, %45 : vector<32x64xf32>
    %c0_29 = arith.constant 0 : index
    %c0_30 = arith.constant 0 : index
    %47 = vector.load %arg6[%c0_29, %c0_30] : memref<32x64xf32, #tpu.memory_space<vmem>>, vector<32x64xf32>
    %48 = arith.mulf %46, %47 : vector<32x64xf32>
    %cst_31 = arith.constant dense<0.000000e+00> : vector<32xf32>
    %49 = vector.multi_reduction <add>, %48, %cst_31 [1] : vector<32x64xf32> to vector<32xf32>
    %50 = vector.shape_cast %49 : vector<32xf32> to vector<32x1xf32>
    %c0_32 = arith.constant 0 : index
    %c0_33 = arith.constant 0 : index
    %c0_34 = arith.constant 0 : index
    %51 = vector.load %arg7[%c0_32, %c0_33, %c0_34] : memref<1x32x1xf32, #tpu.memory_space<vmem>>, vector<1x32x1xf32>
    %52 = vector.shape_cast %51 : vector<1x32x1xf32> to vector<32x1xf32>
    %53 = vector.shape_cast %50 : vector<32x1xf32> to vector<1x32x1xf32>
    tpu.vector_store %arg7[%c0_32, %c0_33, %c0_34], %53 {strides = array<i32>} : memref<1x32x1xf32, #tpu.memory_space<vmem>>, vector<1x32x1xf32>,
    return
  }
  func.func @transform_0(%arg0: i32) -> (i32, i32) {
    %c0_i32 = arith.constant 0 : i32
    %c0_i32_0 = arith.constant 0 : i32
    %c0_i32_1 = arith.constant 0 : i32
    return %c0_i32, %c0_i32_0 : i32, i32
  }
  func.func @transform_1(%arg0: i32) -> (i32, i32) {
    %c0_i32 = arith.constant 0 : i32
    %c0_i32_0 = arith.constant 0 : i32
    %c0_i32_1 = arith.constant 0 : i32
    return %c0_i32, %c0_i32_0 : i32, i32
  }
  func.func @transform_2(%arg0: i32) -> (i32, i32, i32) {
    %c0_i32 = arith.constant 0 : i32
    %c0_i32_0 = arith.constant 0 : i32
    %c0_i32_1 = arith.constant 0 : i32
    return %c0_i32, %c0_i32_0, %arg0 : i32, i32, i32
  }
  func.func @transform_3(%arg0: i32) -> (i32, i32) {
    %c0_i32 = arith.constant 0 : i32
    %c0_i32_0 = arith.constant 0 : i32
    return %c0_i32, %arg0 : i32, i32
  }
  func.func @transform_4(%arg0: i32) -> (i32, i32) {
    %c0_i32 = arith.constant 0 : i32
    %c0_i32_0 = arith.constant 0 : i32
    return %c0_i32, %arg0 : i32, i32
  }
  func.func @transform_5(%arg0: i32) -> (i32, i32) {
    %c0_i32 = arith.constant 0 : i32
    %c0_i32_0 = arith.constant 0 : i32
    return %c0_i32, %arg0 : i32, i32
  }
  func.func @transform_6(%arg0: i32) -> (i32, i32, i32) {
    %c0_i32 = arith.constant 0 : i32
    %c0_i32_0 = arith.constant 0 : i32
    %c0_i32_1 = arith.constant 0 : i32
    return %arg0, %c0_i32, %c0_i32_0 : i32, i32, i32
  }
}

</mosaic_0001>

<llo_original>
// kernel: discriminator_forward.4
$region0: #{discriminator_forward.4}
  #allocation0 [shape = 'u32[]', space=smem, size = 0x4, offset = 0x4, fixed_abs, tag = 'smem constant byte address 0x4 - core index']
  #allocation1 [shape = 'u32[72,128]{1,0:T(1,128)}', space=vmem, size = 0x9000, scoped, tag = 'internal scratch']
  %s0 = inlined_call_operand.vmem [shape: bf16[2112,12], index: 0, kind: input, shape index: {}]
  %s1 = inlined_call_operand.vmem [shape: bf16[2112,12], index: 1, kind: input, shape index: {}]
  %s2 = inlined_call_operand.vmem [shape: bf16[4,12,8], index: 2, kind: input, shape index: {}]
  %s3 = inlined_call_operand.vmem [shape: bf16[2048,8], index: 3, kind: output, shape index: {}]
  %s4 = sld [smem:[#allocation0]]
  $region45: #{discriminator_forward.4} parent=0
    _
  %s6 = ssub.s32 1, %s4
  %s7 = scalar_select 0, %s6, %s4
  loop: start=0, step=1, limit=4
  $region2: #{discriminator_forward.4} parent=0 // loop_pre_header
    _
  $region3: #{discriminator_forward.4} parent=0 // loop_header
    %s9 = sphi 0, %s13
    %p10 = scmp.ge.s32.totalorder %s9, 4
    %s17 = sphi 0, %s17
    %s19 = sphi 0, %s17
    %s20 = sphi 0, %s19
    %s34 = sphi 0, %s20
    %s38 = sphi 0, %s38
    %s40 = sphi 0, %s38
    %s41 = sphi 0, %s40
    %s55 = sphi 0, %s41
    %s59 = sphi 0, %s59
    %s61 = sphi 0, %s59
    %s62 = sphi 0, %s61
    %s76 = sphi 0, %s62
    %s82 = sphi 0, %s84
    %s85 = sphi 0, %s82
    %s86 = sphi 0, %s85
    %s102 = sphi 0, %s86
  $region4: #{discriminator_forward.4} parent=0 // loop_header_branch
    %12 = sbr.rel (%p10) target = $region8
  $region5: #{discriminator_forward.4} parent=0 // loop_body
    %s14 = ssub.s32 %s9, 1
    %s15 = ssub.s32 %s9, 2
    %s16 = sadd.s32 %s9, 1
    %s18 = sadd.s32 %s17, 1
    %p21 = scmp.eq.s32.totalorder %s9, 1
    %p22 = scmp.ne.s32.totalorder %s17, %s19
    %p23 = scmp.eq.s32.totalorder %s9, 0
    %p24 = por %p22, %p23
    %p25 = scmp.ne.s32.totalorder %s17, %s19
    %p26 = scmp.eq.s32.totalorder %s14, 1
    %p27 = por %p25, %p26
    %p28 = scmp.ne.s32.totalorder %s19, %s20
    %p29 = scmp.eq.s32.totalorder %s14, 0
    %p30 = por %p28, %p29
    %p31 = scmp.ne.s32.totalorder %s19, %s20
    %p32 = scmp.eq.s32.totalorder %s15, 1
    %p33 = por %p31, %p32
    %p35 = scmp.ne.s32.totalorder %s20, %s34
    %p36 = scmp.eq.s32.totalorder %s15, 0
    %p37 = por %p35, %p36
    %s39 = sadd.s32 %s38, 1
    %p42 = scmp.eq.s32.totalorder %s9, 1
    %p43 = scmp.ne.s32.totalorder %s38, %s40
    %p44 = scmp.eq.s32.totalorder %s9, 0
    %p45 = por %p43, %p44
    %p46 = scmp.ne.s32.totalorder %s38, %s40
    %p47 = scmp.eq.s32.totalorder %s14, 1
    %p48 = por %p46, %p47
    %p49 = scmp.ne.s32.totalorder %s40, %s41
    %p50 = scmp.eq.s32.totalorder %s14, 0
    %p51 = por %p49, %p50
    %p52 = scmp.ne.s32.totalorder %s40, %s41
    %p53 = scmp.eq.s32.totalorder %s15, 1
    %p54 = por %p52, %p53
    %p56 = scmp.ne.s32.totalorder %s41, %s55
    %p57 = scmp.eq.s32.totalorder %s15, 0
    %p58 = por %p56, %p57
    %s60 = sadd.s32 %s59, 1
    %p63 = scmp.eq.s32.totalorder %s9, 1
    %p64 = scmp.ne.s32.totalorder %s59, %s61
    %p65 = scmp.eq.s32.totalorder %s9, 0
    %p66 = por %p64, %p65
    %p67 = scmp.ne.s32.totalorder %s59, %s61
    %p68 = scmp.eq.s32.totalorder %s14, 1
    %p69 = por %p67, %p68
    %p70 = scmp.ne.s32.totalorder %s61, %s62
    %p71 = scmp.eq.s32.totalorder %s14, 0
    %p72 = por %p70, %p71
    %p73 = scmp.ne.s32.totalorder %s61, %s62
    %p74 = scmp.eq.s32.totalorder %s15, 1
    %p75 = por %p73, %p74
    %p77 = scmp.ne.s32.totalorder %s62, %s76
    %p78 = scmp.eq.s32.totalorder %s15, 0
    %p79 = por %p77, %p78
    %s80 = ssub.s32 %s9, %s16
    %p81 = scmp.eq.s32.totalorder %s80, 0
    %s83 = sadd.s32 %s82, 1
    %s84 = scalar_select %p81, %s82, %s83
    %p87 = pneg %p81
    %p88 = scmp.eq.s32.totalorder %s9, 1
    %p89 = por %p87, %p88
    %p90 = scmp.ne.s32.totalorder %s82, %s85
    %p91 = scmp.eq.s32.totalorder %s9, 0
    %p92 = por %p90, %p91
    %p93 = scmp.ne.s32.totalorder %s82, %s85
    %p94 = scmp.eq.s32.totalorder %s14, 1
    %p95 = por %p93, %p94
    %p96 = scmp.ne.s32.totalorder %s85, %s86
    %p97 = scmp.eq.s32.totalorder %s14, 0
    %p98 = por %p96, %p97
    %p99 = scmp.ne.s32.totalorder %s85, %s86
    %p100 = scmp.eq.s32.totalorder %s15, 1
    %p101 = por %p99, %p100
    %p103 = scmp.ne.s32.totalorder %s86, %s102
    %p104 = scmp.eq.s32.totalorder %s15, 0
    %p105 = por %p103, %p104
    %p106 = scmp.le.s32.totalorder 1, %s9
    %p107 = scmp.lt.s32.totalorder %s9, 3
    %p108 = pnand %p106, %p107
    %p109 = pneg %p108
    // Predicated region
    $region9: #{discriminator_forward.4} parent=5 // pred_check
      _
    $region10: #{discriminator_forward.4} parent=5 // pred_check_branch
      %111 = sbr.rel (%p108) target = $region12
    $region11: #{discriminator_forward.4} parent=5 // pred_region
      %s112 = ssub.s32 %s9, 1
      // Predicated region
      $region13: #{discriminator_forward.4} parent=11 // pred_check
        %p113 = pneg %p30
      $region14: #{discriminator_forward.4} parent=11 // pred_check_branch
        %115 = sbr.rel (%p113) target = $region16
      $region15: #{discriminator_forward.4} parent=11 // pred_region
        _
      $region16: #{discriminator_forward.4} parent=11 // pred_fallthru
        _
      // Predicated region
      $region17: #{discriminator_forward.4} parent=11 // pred_check
        %p116 = pneg %p51
      $region18: #{discriminator_forward.4} parent=11 // pred_check_branch
        %118 = sbr.rel (%p116) target = $region20
      $region19: #{discriminator_forward.4} parent=11 // pred_region
        _
      $region20: #{discriminator_forward.4} parent=11 // pred_fallthru
        _
      // Predicated region
      $region21: #{discriminator_forward.4} parent=11 // pred_check
        %p119 = pneg %p72
      $region22: #{discriminator_forward.4} parent=11 // pred_check_branch
        %121 = sbr.rel (%p119) target = $region24
      $region23: #{discriminator_forward.4} parent=11 // pred_region
        _
      $region24: #{discriminator_forward.4} parent=11 // pred_fallthru
        _
    $region12: #{discriminator_forward.4} parent=5 // pred_fallthru
      _
    %p122 = scmp.lt.s32.totalorder %s9, 2
    // Predicated region
    $region25: #{discriminator_forward.4} parent=5 // pred_check
      %p123 = pneg %p122
    $region26: #{discriminator_forward.4} parent=5 // pred_check_branch
      %125 = sbr.rel (%p123) target = $region28
    $region27: #{discriminator_forward.4} parent=5 // pred_region
      _
    $region28: #{discriminator_forward.4} parent=5 // pred_fallthru
      _
    %p126 = scmp.le.s32.totalorder 1, %s9
    %p127 = scmp.lt.s32.totalorder %s9, 3
    %p128 = pnand %p126, %p127
    %p129 = pneg %p128
    // Predicated region
    $region29: #{discriminator_forward.4} parent=5 // pred_check
      _
    $region30: #{discriminator_forward.4} parent=5 // pred_check_branch
      %131 = sbr.rel (%p128) target = $region32
    $region31: #{discriminator_forward.4} parent=5 // pred_region
      %s132 = ssub.s32 %s9, 1
      %p133 = pneg %p30
      %p134 = pneg %p27
      %p135 = pneg %p51
      %p136 = pneg %p48
      %p137 = pneg %p72
      %p138 = pneg %p69
      %p139 = pneg %p98
      %p140 = pneg %p95
      %s141 = smul.u32 128, %s14
      %p142 = scmp.lt.s32.totalorder %s141, 255
      %s143 = scalar_select %p142, %s141, 255
      %s144 = smul.addr %s143, 4
      %s145 = scalar_lea.vmem %s3, %s144
      %s146 = smul.u32 128, %s14
      %p147 = scmp.lt.s32.totalorder %s146, 255
      %s148 = scalar_select %p147, %s146, 255
      %s149 = smul.addr %s148, 4
      %s150 = scalar_lea.vmem %s3, %s149
      %s151 = smul.u32 128, %s14
      %s153 = smul.u32 %s14, 1024
      %s154 = sshra.s32 %s153, 3
      %s155 = sand.u32 %s153, 7
      %s156 = smul.addr %s154, 4
      %s157 = scalar_lea.vmem %s0, %s156
      %v158 = vld [vmem:[%s157] sm:$0xf]
      %v159 = vld [vmem:[%s157 + $0x4] sm:$0xf]
      %v160 = vld [vmem:[%s157 + $0x8] sm:$0xf]
      %v161 = vld [vmem:[%s157 + $0xc] sm:$0xf]
      %v162 = vld [vmem:[%s157 + $0x10] sm:$0xf]
      %v163 = vld [vmem:[%s157 + $0x14] sm:$0xf]
      %v164 = vld [vmem:[%s157 + $0x18] sm:$0xf]
      %v165 = vld [vmem:[%s157 + $0x1c] sm:$0xf]
      %v166 = vld [vmem:[%s157 + $0x20] sm:$0xf]
      %v167 = vld [vmem:[%s157 + $0x24] sm:$0xf]
      %v168 = vld [vmem:[%s157 + $0x28] sm:$0xf]
      %v169 = vld [vmem:[%s157 + $0x2c] sm:$0xf]
      %v170 = vld [vmem:[%s157 + $0x30] sm:$0xf]
      %v171 = vld [vmem:[%s157 + $0x34] sm:$0xf]
      %v172 = vld [vmem:[%s157 + $0x38] sm:$0xf]
      %v173 = vld [vmem:[%s157 + $0x3c] sm:$0xf]
      %v174 = vld [vmem:[%s157 + $0x40] sm:$0xf]
      %v175 = vld [vmem:[%s157 + $0x44] sm:$0xf]
      %v176 = vld [vmem:[%s157 + $0x48] sm:$0xf]
      %v177 = vld [vmem:[%s157 + $0x4c] sm:$0xf]
      %v178 = vld [vmem:[%s157 + $0x50] sm:$0xf]
      %v179 = vld [vmem:[%s157 + $0x54] sm:$0xf]
      %v180 = vld [vmem:[%s157 + $0x58] sm:$0xf]
      %v181 = vld [vmem:[%s157 + $0x5c] sm:$0xf]
      %v182 = vld [vmem:[%s157 + $0x60] sm:$0xf]
      %v183 = vld [vmem:[%s157 + $0x64] sm:$0xf]
      %v184 = vld [vmem:[%s157 + $0x68] sm:$0xf]
      %v185 = vld [vmem:[%s157 + $0x6c] sm:$0xf]
      %v186 = vld [vmem:[%s157 + $0x70] sm:$0xf]
      %v187 = vld [vmem:[%s157 + $0x74] sm:$0xf]
      %v188 = vld [vmem:[%s157 + $0x78] sm:$0xf]
      %v189 = vld [vmem:[%s157 + $0x7c] sm:$0xf]
      %v190 = vld [vmem:[%s157 + $0x80] sm:$0xf]
      %v191 = vld [vmem:[%s157 + $0x84] sm:$0xf]
      %v192 = vld [vmem:[%s157 + $0x88] sm:$0xf]
      %v193 = vld [vmem:[%s157 + $0x8c] sm:$0xf]
      %v194 = vld [vmem:[%s157 + $0x90] sm:$0xf]
      %v195 = vld [vmem:[%s157 + $0x94] sm:$0xf]
      %v196 = vld [vmem:[%s157 + $0x98] sm:$0xf]
      %v197 = vld [vmem:[%s157 + $0x9c] sm:$0xf]
      %v198 = vld [vmem:[%s157 + $0xa0] sm:$0xf]
      %v199 = vld [vmem:[%s157 + $0xa4] sm:$0xf]
      %v200 = vld [vmem:[%s157 + $0xa8] sm:$0xf]
      %v201 = vld [vmem:[%s157 + $0xac] sm:$0xf]
      %v202 = vld [vmem:[%s157 + $0xb0] sm:$0xf]
      %v203 = vld [vmem:[%s157 + $0xb4] sm:$0xf]
      %v204 = vld [vmem:[%s157 + $0xb8] sm:$0xf]
      %v205 = vld [vmem:[%s157 + $0xbc] sm:$0xf]
      %v206 = vld [vmem:[%s157 + $0xc0] sm:$0xf]
      %v207 = vld [vmem:[%s157 + $0xc4] sm:$0xf]
      %v208 = vld [vmem:[%s157 + $0xc8] sm:$0xf]
      %v209 = vld [vmem:[%s157 + $0xcc] sm:$0xf]
      %v210 = vld [vmem:[%s157 + $0xd0] sm:$0xf]
      %v211 = vld [vmem:[%s157 + $0xd4] sm:$0xf]
      %v212 = vld [vmem:[%s157 + $0xd8] sm:$0xf]
      %v213 = vld [vmem:[%s157 + $0xdc] sm:$0xf]
      %v214 = vld [vmem:[%s157 + $0xe0] sm:$0xf]
      %v215 = vld [vmem:[%s157 + $0xe4] sm:$0xf]
      %v216 = vld [vmem:[%s157 + $0xe8] sm:$0xf]
      %v217 = vld [vmem:[%s157 + $0xec] sm:$0xf]
      %v218 = vld [vmem:[%s157 + $0xf0] sm:$0xf]
      %v219 = vld [vmem:[%s157 + $0xf4] sm:$0xf]
      %v220 = vld [vmem:[%s157 + $0xf8] sm:$0xf]
      %v221 = vld [vmem:[%s157 + $0xfc] sm:$0xf]
      %v222 = vld [vmem:[%s157 + $0x100] sm:$0xf]
      %v223 = vld [vmem:[%s157 + $0x104] sm:$0xf]
      %v224 = vld [vmem:[%s157 + $0x108] sm:$0xf]
      %v225 = vld [vmem:[%s157 + $0x10c] sm:$0xf]
      %v226 = vld [vmem:[%s157 + $0x110] sm:$0xf]
      %v227 = vld [vmem:[%s157 + $0x114] sm:$0xf]
      %v228 = vld [vmem:[%s157 + $0x118] sm:$0xf]
      %v229 = vld [vmem:[%s157 + $0x11c] sm:$0xf]
      %v230 = vld [vmem:[%s157 + $0x120] sm:$0xf]
      %v231 = vld [vmem:[%s157 + $0x124] sm:$0xf]
      %v232 = vld [vmem:[%s157 + $0x128] sm:$0xf]
      %v233 = vld [vmem:[%s157 + $0x12c] sm:$0xf]
      %v234 = vld [vmem:[%s157 + $0x130] sm:$0xf]
      %v235 = vld [vmem:[%s157 + $0x134] sm:$0xf]
      %v236 = vld [vmem:[%s157 + $0x138] sm:$0xf]
      %v237 = vld [vmem:[%s157 + $0x13c] sm:$0xf]
      %v238 = vld [vmem:[%s157 + $0x140] sm:$0xf]
      %v239 = vld [vmem:[%s157 + $0x144] sm:$0xf]
      %v240 = vld [vmem:[%s157 + $0x148] sm:$0xf]
      %v241 = vld [vmem:[%s157 + $0x14c] sm:$0xf]
      %v242 = vld [vmem:[%s157 + $0x150] sm:$0xf]
      %v243 = vld [vmem:[%s157 + $0x154] sm:$0xf]
      %v244 = vld [vmem:[%s157 + $0x158] sm:$0xf]
      %v245 = vld [vmem:[%s157 + $0x15c] sm:$0xf]
      %v246 = vld [vmem:[%s157 + $0x160] sm:$0xf]
      %v247 = vld [vmem:[%s157 + $0x164] sm:$0xf]
      %v248 = vld [vmem:[%s157 + $0x168] sm:$0xf]
      %v249 = vld [vmem:[%s157 + $0x16c] sm:$0xf]
      %v250 = vld [vmem:[%s157 + $0x170] sm:$0xf]
      %v251 = vld [vmem:[%s157 + $0x174] sm:$0xf]
      %v252 = vld [vmem:[%s157 + $0x178] sm:$0xf]
      %v253 = vld [vmem:[%s157 + $0x17c] sm:$0xf]
      %v254 = vld [vmem:[%s157 + $0x180] sm:$0xf]
      %v255 = vld [vmem:[%s157 + $0x184] sm:$0xf]
      %v256 = vld [vmem:[%s157 + $0x188] sm:$0xf]
      %v257 = vld [vmem:[%s157 + $0x18c] sm:$0xf]
      %v258 = vld [vmem:[%s157 + $0x190] sm:$0xf]
      %v259 = vld [vmem:[%s157 + $0x194] sm:$0xf]
      %v260 = vld [vmem:[%s157 + $0x198] sm:$0xf]
      %v261 = vld [vmem:[%s157 + $0x19c] sm:$0xf]
      %v262 = vld [vmem:[%s157 + $0x1a0] sm:$0xf]
      %v263 = vld [vmem:[%s157 + $0x1a4] sm:$0xf]
      %v264 = vld [vmem:[%s157 + $0x1a8] sm:$0xf]
      %v265 = vld [vmem:[%s157 + $0x1ac] sm:$0xf]
      %v266 = vld [vmem:[%s157 + $0x1b0] sm:$0xf]
      %v267 = vld [vmem:[%s157 + $0x1b4] sm:$0xf]
      %v268 = vld [vmem:[%s157 + $0x1b8] sm:$0xf]
      %v269 = vld [vmem:[%s157 + $0x1bc] sm:$0xf]
      %v270 = vld [vmem:[%s157 + $0x1c0] sm:$0xf]
      %v271 = vld [vmem:[%s157 + $0x1c4] sm:$0xf]
      %v272 = vld [vmem:[%s157 + $0x1c8] sm:$0xf]
      %v273 = vld [vmem:[%s157 + $0x1cc] sm:$0xf]
      %v274 = vld [vmem:[%s157 + $0x1d0] sm:$0xf]
      %v275 = vld [vmem:[%s157 + $0x1d4] sm:$0xf]
      %v276 = vld [vmem:[%s157 + $0x1d8] sm:$0xf]
      %v277 = vld [vmem:[%s157 + $0x1dc] sm:$0xf]
      %v278 = vld [vmem:[%s157 + $0x1e0] sm:$0xf]
      %v279 = vld [vmem:[%s157 + $0x1e4] sm:$0xf]
      %v280 = vld [vmem:[%s157 + $0x1e8] sm:$0xf]
      %v281 = vld [vmem:[%s157 + $0x1ec] sm:$0xf]
      %v282 = vld [vmem:[%s157 + $0x1f0] sm:$0xf]
      %v283 = vld [vmem:[%s157 + $0x1f4] sm:$0xf]
      %v284 = vld [vmem:[%s157 + $0x1f8] sm:$0xf]
      %v285 = vld [vmem:[%s157 + $0x1fc] sm:$0xf]
      %v286 = vld [vmem:[%s2] sm:$0xf]
      %v287 = vld [vmem:[%s2 + $0x4] sm:$0x3]
      %s288 = smul.addr %s154, 4
      %s289 = scalar_lea.vmem %s1, %s288
      %v290 = vld [vmem:[%s289] sm:$0xf]
      %v291 = vld [vmem:[%s289 + $0x4] sm:$0xf]
      %v292 = vld [vmem:[%s289 + $0x8] sm:$0xf]
      %v293 = vld [vmem:[%s289 + $0xc] sm:$0xf]
      %v294 = vld [vmem:[%s289 + $0x10] sm:$0xf]
      %v295 = vld [vmem:[%s289 + $0x14] sm:$0xf]
      %v296 = vld [vmem:[%s289 + $0x18] sm:$0xf]
      %v297 = vld [vmem:[%s289 + $0x1c] sm:$0xf]
      %v298 = vld [vmem:[%s289 + $0x20] sm:$0xf]
      %v299 = vld [vmem:[%s289 + $0x24] sm:$0xf]
      %v300 = vld [vmem:[%s289 + $0x28] sm:$0xf]
      %v301 = vld [vmem:[%s289 + $0x2c] sm:$0xf]
      %v302 = vld [vmem:[%s289 + $0x30] sm:$0xf]
      %v303 = vld [vmem:[%s289 + $0x34] sm:$0xf]
      %v304 = vld [vmem:[%s289 + $0x38] sm:$0xf]
      %v305 = vld [vmem:[%s289 + $0x3c] sm:$0xf]
      %v306 = vld [vmem:[%s289 + $0x40] sm:$0xf]
      %v307 = vld [vmem:[%s289 + $0x44] sm:$0xf]
      %v308 = vld [vmem:[%s289 + $0x48] sm:$0xf]
      %v309 = vld [vmem:[%s289 + $0x4c] sm:$0xf]
      %v310 = vld [vmem:[%s289 + $0x50] sm:$0xf]
      %v311 = vld [vmem:[%s289 + $0x54] sm:$0xf]
      %v312 = vld [vmem:[%s289 + $0x58] sm:$0xf]
      %v313 = vld [vmem:[%s289 + $0x5c] sm:$0xf]
      %v314 = vld [vmem:[%s289 + $0x60] sm:$0xf]
      %v315 = vld [vmem:[%s289 + $0x64] sm:$0xf]
      %v316 = vld [vmem:[%s289 + $0x68] sm:$0xf]
      %v317 = vld [vmem:[%s289 + $0x6c] sm:$0xf]
      %v318 = vld [vmem:[%s289 + $0x70] sm:$0xf]
      %v319 = vld [vmem:[%s289 + $0x74] sm:$0xf]
      %v320 = vld [vmem:[%s289 + $0x78] sm:$0xf]
      %v321 = vld [vmem:[%s289 + $0x7c] sm:$0xf]
      %v322 = vld [vmem:[%s289 + $0x80] sm:$0xf]
      %v323 = vld [vmem:[%s289 + $0x84] sm:$0xf]
      %v324 = vld [vmem:[%s289 + $0x88] sm:$0xf]
      %v325 = vld [vmem:[%s289 + $0x8c] sm:$0xf]
      %v326 = vld [vmem:[%s289 + $0x90] sm:$0xf]
      %v327 = vld [vmem:[%s289 + $0x94] sm:$0xf]
      %v328 = vld [vmem:[%s289 + $0x98] sm:$0xf]
      %v329 = vld [vmem:[%s289 + $0x9c] sm:$0xf]
      %v330 = vld [vmem:[%s289 + $0xa0] sm:$0xf]
      %v331 = vld [vmem:[%s289 + $0xa4] sm:$0xf]
      %v332 = vld [vmem:[%s289 + $0xa8] sm:$0xf]
      %v333 = vld [vmem:[%s289 + $0xac] sm:$0xf]
      %v334 = vld [vmem:[%s289 + $0xb0] sm:$0xf]
      %v335 = vld [vmem:[%s289 + $0xb4] sm:$0xf]
      %v336 = vld [vmem:[%s289 + $0xb8] sm:$0xf]
      %v337 = vld [vmem:[%s289 + $0xbc] sm:$0xf]
      %v338 = vld [vmem:[%s289 + $0xc0] sm:$0xf]
      %v339 = vld [vmem:[%s289 + $0xc4] sm:$0xf]
      %v340 = vld [vmem:[%s289 + $0xc8] sm:$0xf]
      %v341 = vld [vmem:[%s289 + $0xcc] sm:$0xf]
      %v342 = vld [vmem:[%s289 + $0xd0] sm:$0xf]
      %v343 = vld [vmem:[%s289 + $0xd4] sm:$0xf]
      %v344 = vld [vmem:[%s289 + $0xd8] sm:$0xf]
      %v345 = vld [vmem:[%s289 + $0xdc] sm:$0xf]
      %v346 = vld [vmem:[%s289 + $0xe0] sm:$0xf]
      %v347 = vld [vmem:[%s289 + $0xe4] sm:$0xf]
      %v348 = vld [vmem:[%s289 + $0xe8] sm:$0xf]
      %v349 = vld [vmem:[%s289 + $0xec] sm:$0xf]
      %v350 = vld [vmem:[%s289 + $0xf0] sm:$0xf]
      %v351 = vld [vmem:[%s289 + $0xf4] sm:$0xf]
      %v352 = vld [vmem:[%s289 + $0xf8] sm:$0xf]
      %v353 = vld [vmem:[%s289 + $0xfc] sm:$0xf]
      %v354 = vld [vmem:[%s289 + $0x100] sm:$0xf]
      %v355 = vld [vmem:[%s289 + $0x104] sm:$0xf]
      %v356 = vld [vmem:[%s289 + $0x108] sm:$0xf]
      %v357 = vld [vmem:[%s289 + $0x10c] sm:$0xf]
      %v358 = vld [vmem:[%s289 + $0x110] sm:$0xf]
      %v359 = vld [vmem:[%s289 + $0x114] sm:$0xf]
      %v360 = vld [vmem:[%s289 + $0x118] sm:$0xf]
      %v361 = vld [vmem:[%s289 + $0x11c] sm:$0xf]
      %v362 = vld [vmem:[%s289 + $0x120] sm:$0xf]
      %v363 = vld [vmem:[%s289 + $0x124] sm:$0xf]
      %v364 = vld [vmem:[%s289 + $0x128] sm:$0xf]
      %v365 = vld [vmem:[%s289 + $0x12c] sm:$0xf]
      %v366 = vld [vmem:[%s289 + $0x130] sm:$0xf]
      %v367 = vld [vmem:[%s289 + $0x134] sm:$0xf]
      %v368 = vld [vmem:[%s289 + $0x138] sm:$0xf]
      %v369 = vld [vmem:[%s289 + $0x13c] sm:$0xf]
      %v370 = vld [vmem:[%s289 + $0x140] sm:$0xf]
      %v371 = vld [vmem:[%s289 + $0x144] sm:$0xf]
      %v372 = vld [vmem:[%s289 + $0x148] sm:$0xf]
      %v373 = vld [vmem:[%s289 + $0x14c] sm:$0xf]
      %v374 = vld [vmem:[%s289 + $0x150] sm:$0xf]
      %v375 = vld [vmem:[%s289 + $0x154] sm:$0xf]
      %v376 = vld [vmem:[%s289 + $0x158] sm:$0xf]
      %v377 = vld [vmem:[%s289 + $0x15c] sm:$0xf]
      %v378 = vld [vmem:[%s289 + $0x160] sm:$0xf]
      %v379 = vld [vmem:[%s289 + $0x164] sm:$0xf]
      %v380 = vld [vmem:[%s289 + $0x168] sm:$0xf]
      %v381 = vld [vmem:[%s289 + $0x16c] sm:$0xf]
      %v382 = vld [vmem:[%s289 + $0x170] sm:$0xf]
      %v383 = vld [vmem:[%s289 + $0x174] sm:$0xf]
      %v384 = vld [vmem:[%s289 + $0x178] sm:$0xf]
      %v385 = vld [vmem:[%s289 + $0x17c] sm:$0xf]
      %v386 = vld [vmem:[%s289 + $0x180] sm:$0xf]
      %v387 = vld [vmem:[%s289 + $0x184] sm:$0xf]
      %v388 = vld [vmem:[%s289 + $0x188] sm:$0xf]
      %v389 = vld [vmem:[%s289 + $0x18c] sm:$0xf]
      %v390 = vld [vmem:[%s289 + $0x190] sm:$0xf]
      %v391 = vld [vmem:[%s289 + $0x194] sm:$0xf]
      %v392 = vld [vmem:[%s289 + $0x198] sm:$0xf]
      %v393 = vld [vmem:[%s289 + $0x19c] sm:$0xf]
      %v394 = vld [vmem:[%s289 + $0x1a0] sm:$0xf]
      %v395 = vld [vmem:[%s289 + $0x1a4] sm:$0xf]
      %v396 = vld [vmem:[%s289 + $0x1a8] sm:$0xf]
      %v397 = vld [vmem:[%s289 + $0x1ac] sm:$0xf]
      %v398 = vld [vmem:[%s289 + $0x1b0] sm:$0xf]
      %v399 = vld [vmem:[%s289 + $0x1b4] sm:$0xf]
      %v400 = vld [vmem:[%s289 + $0x1b8] sm:$0xf]
      %v401 = vld [vmem:[%s289 + $0x1bc] sm:$0xf]
      %v402 = vld [vmem:[%s289 + $0x1c0] sm:$0xf]
      %v403 = vld [vmem:[%s289 + $0x1c4] sm:$0xf]
      %v404 = vld [vmem:[%s289 + $0x1c8] sm:$0xf]
      %v405 = vld [vmem:[%s289 + $0x1cc] sm:$0xf]
      %v406 = vld [vmem:[%s289 + $0x1d0] sm:$0xf]
      %v407 = vld [vmem:[%s289 + $0x1d4] sm:$0xf]
      %v408 = vld [vmem:[%s289 + $0x1d8] sm:$0xf]
      %v409 = vld [vmem:[%s289 + $0x1dc] sm:$0xf]
      %v410 = vld [vmem:[%s289 + $0x1e0] sm:$0xf]
      %v411 = vld [vmem:[%s289 + $0x1e4] sm:$0xf]
      %v412 = vld [vmem:[%s289 + $0x1e8] sm:$0xf]
      %v413 = vld [vmem:[%s289 + $0x1ec] sm:$0xf]
      %v414 = vld [vmem:[%s289 + $0x1f0] sm:$0xf]
      %v415 = vld [vmem:[%s289 + $0x1f4] sm:$0xf]
      %v416 = vld [vmem:[%s289 + $0x1f8] sm:$0xf]
      %v417 = vld [vmem:[%s289 + $0x1fc] sm:$0xf]
      %s418 = scalar_lea.vmem %s2, 8
      %v419 = vld [vmem:[%s418] sm:$0xf]
      %v420 = vld [vmem:[%s418 + $0x4] sm:$0x3]
      %v549 = vunpack.c.l.b16 %v290
      %v550 = vunpack.c.l.b16 %v291
      %v551 = vunpack.c.l.b16 %v292
      %v552 = vunpack.c.l.b16 %v293
      %v553 = vunpack.c.l.b16 %v294
      %v554 = vunpack.c.l.b16 %v295
      %v555 = vunpack.c.l.b16 %v296
      %v556 = vunpack.c.l.b16 %v297
      %v557 = vunpack.c.l.b16 %v298
      %v558 = vunpack.c.l.b16 %v299
      %v559 = vunpack.c.l.b16 %v300
      %v560 = vunpack.c.l.b16 %v301
      %v561 = vunpack.c.l.b16 %v302
      %v562 = vunpack.c.l.b16 %v303
      %v563 = vunpack.c.l.b16 %v304
      %v564 = vunpack.c.l.b16 %v305
      %v565 = vunpack.c.l.b16 %v306
      %v566 = vunpack.c.l.b16 %v307
      %v567 = vunpack.c.l.b16 %v308
      %v568 = vunpack.c.l.b16 %v309
      %v569 = vunpack.c.l.b16 %v310
      %v570 = vunpack.c.l.b16 %v311
      %v571 = vunpack.c.l.b16 %v312
      %v572 = vunpack.c.l.b16 %v313
      %v573 = vunpack.c.l.b16 %v314
      %v574 = vunpack.c.l.b16 %v315
      %v575 = vunpack.c.l.b16 %v316
      %v576 = vunpack.c.l.b16 %v317
      %v577 = vunpack.c.l.b16 %v318
      %v578 = vunpack.c.l.b16 %v319
      %v579 = vunpack.c.l.b16 %v320
      %v580 = vunpack.c.l.b16 %v321
      %v581 = vunpack.c.l.b16 %v322
      %v582 = vunpack.c.l.b16 %v323
      %v583 = vunpack.c.l.b16 %v324
      %v584 = vunpack.c.l.b16 %v325
      %v585 = vunpack.c.l.b16 %v326
      %v586 = vunpack.c.l.b16 %v327
      %v587 = vunpack.c.l.b16 %v328
      %v588 = vunpack.c.l.b16 %v329
      %v589 = vunpack.c.l.b16 %v330
      %v590 = vunpack.c.l.b16 %v331
      %v591 = vunpack.c.l.b16 %v332
      %v592 = vunpack.c.l.b16 %v333
      %v593 = vunpack.c.l.b16 %v334
      %v594 = vunpack.c.l.b16 %v335
      %v595 = vunpack.c.l.b16 %v336
      %v596 = vunpack.c.l.b16 %v337
      %v597 = vunpack.c.l.b16 %v338
      %v598 = vunpack.c.l.b16 %v339
      %v599 = vunpack.c.l.b16 %v340
      %v600 = vunpack.c.l.b16 %v341
      %v601 = vunpack.c.l.b16 %v342
      %v602 = vunpack.c.l.b16 %v343
      %v603 = vunpack.c.l.b16 %v344
      %v604 = vunpack.c.l.b16 %v345
      %v605 = vunpack.c.l.b16 %v346
      %v606 = vunpack.c.l.b16 %v347
      %v607 = vunpack.c.l.b16 %v348
      %v608 = vunpack.c.l.b16 %v349
      %v609 = vunpack.c.l.b16 %v350
      %v610 = vunpack.c.l.b16 %v351
      %v611 = vunpack.c.l.b16 %v352
      %v612 = vunpack.c.l.b16 %v353
      %v613 = vunpack.c.l.b16 %v354
      %v614 = vunpack.c.l.b16 %v355
      %v615 = vunpack.c.l.b16 %v356
      %v616 = vunpack.c.l.b16 %v357
      %v617 = vunpack.c.l.b16 %v358
      %v618 = vunpack.c.l.b16 %v359
      %v619 = vunpack.c.l.b16 %v360
      %v620 = vunpack.c.l.b16 %v361
      %v621 = vunpack.c.l.b16 %v362
      %v622 = vunpack.c.l.b16 %v363
      %v623 = vunpack.c.l.b16 %v364
      %v624 = vunpack.c.l.b16 %v365
      %v625 = vunpack.c.l.b16 %v366
      %v626 = vunpack.c.l.b16 %v367
      %v627 = vunpack.c.l.b16 %v368
      %v628 = vunpack.c.l.b16 %v369
      %v629 = vunpack.c.l.b16 %v370
      %v630 = vunpack.c.l.b16 %v371
      %v631 = vunpack.c.l.b16 %v372
      %v632 = vunpack.c.l.b16 %v373
      %v633 = vunpack.c.l.b16 %v374
      %v634 = vunpack.c.l.b16 %v375
      %v635 = vunpack.c.l.b16 %v376
      %v636 = vunpack.c.l.b16 %v377
      %v637 = vunpack.c.l.b16 %v378
      %v638 = vunpack.c.l.b16 %v379
      %v639 = vunpack.c.l.b16 %v380
      %v640 = vunpack.c.l.b16 %v381
      %v641 = vunpack.c.l.b16 %v382
      %v642 = vunpack.c.l.b16 %v383
      %v643 = vunpack.c.l.b16 %v384
      %v644 = vunpack.c.l.b16 %v385
      %v645 = vunpack.c.l.b16 %v386
      %v646 = vunpack.c.l.b16 %v387
      %v647 = vunpack.c.l.b16 %v388
      %v648 = vunpack.c.l.b16 %v389
      %v649 = vunpack.c.l.b16 %v390
      %v650 = vunpack.c.l.b16 %v391
      %v651 = vunpack.c.l.b16 %v392
      %v652 = vunpack.c.l.b16 %v393
      %v653 = vunpack.c.l.b16 %v394
      %v654 = vunpack.c.l.b16 %v395
      %v655 = vunpack.c.l.b16 %v396
      %v656 = vunpack.c.l.b16 %v397
      %v657 = vunpack.c.l.b16 %v398
      %v658 = vunpack.c.l.b16 %v399
      %v659 = vunpack.c.l.b16 %v400
      %v660 = vunpack.c.l.b16 %v401
      %v661 = vunpack.c.l.b16 %v402
      %v662 = vunpack.c.l.b16 %v403
      %v663 = vunpack.c.l.b16 %v404
      %v664 = vunpack.c.l.b16 %v405
      %v665 = vunpack.c.l.b16 %v406
      %v666 = vunpack.c.l.b16 %v407
      %v667 = vunpack.c.l.b16 %v408
      %v668 = vunpack.c.l.b16 %v409
      %v669 = vunpack.c.l.b16 %v410
      %v670 = vunpack.c.l.b16 %v411
      %v671 = vunpack.c.l.b16 %v412
      %v672 = vunpack.c.l.b16 %v413
      %v673 = vunpack.c.l.b16 %v414
      %v674 = vunpack.c.l.b16 %v415
      %v675 = vunpack.c.l.b16 %v416
      %v676 = vunpack.c.l.b16 %v417
      %v677 = vpack.c.b16 %v550, %v549
      %v678 = vpack.c.b16 %v552, %v551
      %v679 = vpack.c.b16 %v554, %v553
      %v680 = vpack.c.b16 %v556, %v555
      %v681 = vpack.c.b16 %v558, %v557
      %v682 = vpack.c.b16 %v560, %v559
      %v683 = vpack.c.b16 %v562, %v561
      %v684 = vpack.c.b16 %v564, %v563
      %v685 = vpack.c.b16 %v566, %v565
      %v686 = vpack.c.b16 %v568, %v567
      %v687 = vpack.c.b16 %v570, %v569
      %v688 = vpack.c.b16 %v572, %v571
      %v689 = vpack.c.b16 %v574, %v573
      %v690 = vpack.c.b16 %v576, %v575
      %v691 = vpack.c.b16 %v578, %v577
      %v692 = vpack.c.b16 %v580, %v579
      %v693 = vpack.c.b16 %v582, %v581
      %v694 = vpack.c.b16 %v584, %v583
      %v695 = vpack.c.b16 %v586, %v585
      %v696 = vpack.c.b16 %v588, %v587
      %v697 = vpack.c.b16 %v590, %v589
      %v698 = vpack.c.b16 %v592, %v591
      %v699 = vpack.c.b16 %v594, %v593
      %v700 = vpack.c.b16 %v596, %v595
      %v701 = vpack.c.b16 %v598, %v597
      %v702 = vpack.c.b16 %v600, %v599
      %v703 = vpack.c.b16 %v602, %v601
      %v704 = vpack.c.b16 %v604, %v603
      %v705 = vpack.c.b16 %v606, %v605
      %v706 = vpack.c.b16 %v608, %v607
      %v707 = vpack.c.b16 %v610, %v609
      %v708 = vpack.c.b16 %v612, %v611
      %v709 = vpack.c.b16 %v614, %v613
      %v710 = vpack.c.b16 %v616, %v615
      %v711 = vpack.c.b16 %v618, %v617
      %v712 = vpack.c.b16 %v620, %v619
      %v713 = vpack.c.b16 %v622, %v621
      %v714 = vpack.c.b16 %v624, %v623
      %v715 = vpack.c.b16 %v626, %v625
      %v716 = vpack.c.b16 %v628, %v627
      %v717 = vpack.c.b16 %v630, %v629
      %v718 = vpack.c.b16 %v632, %v631
      %v719 = vpack.c.b16 %v634, %v633
      %v720 = vpack.c.b16 %v636, %v635
      %v721 = vpack.c.b16 %v638, %v637
      %v722 = vpack.c.b16 %v640, %v639
      %v723 = vpack.c.b16 %v642, %v641
      %v724 = vpack.c.b16 %v644, %v643
      %v725 = vpack.c.b16 %v646, %v645
      %v726 = vpack.c.b16 %v648, %v647
      %v727 = vpack.c.b16 %v650, %v649
      %v728 = vpack.c.b16 %v652, %v651
      %v729 = vpack.c.b16 %v654, %v653
      %v730 = vpack.c.b16 %v656, %v655
      %v731 = vpack.c.b16 %v658, %v657
      %v732 = vpack.c.b16 %v660, %v659
      %v733 = vpack.c.b16 %v662, %v661
      %v734 = vpack.c.b16 %v664, %v663
      %v735 = vpack.c.b16 %v666, %v665
      %v736 = vpack.c.b16 %v668, %v667
      %v737 = vpack.c.b16 %v670, %v669
      %v738 = vpack.c.b16 %v672, %v671
      %v739 = vpack.c.b16 %v674, %v673
      %v740 = vpack.c.b16 %v676, %v675
      %v743 = vunpack.c.l.b16 %v419
      %v744 = vunpack.c.l.b16 %v420
      %v745 = vpack.c.b16 %v744, %v743
      %vm746 = vcmask 97280
      %v748 = vsel %vm746, %v677, 0
      %v751 = vsel %vm746, %v678, 0
      %v754 = vsel %vm746, %v679, 0
      %v757 = vsel %vm746, %v680, 0
      %v760 = vsel %vm746, %v681, 0
      %v763 = vsel %vm746, %v682, 0
      %v766 = vsel %vm746, %v683, 0
      %v769 = vsel %vm746, %v684, 0
      %v772 = vsel %vm746, %v685, 0
      %v775 = vsel %vm746, %v686, 0
      %v778 = vsel %vm746, %v687, 0
      %v781 = vsel %vm746, %v688, 0
      %v784 = vsel %vm746, %v689, 0
      %v787 = vsel %vm746, %v690, 0
      %v790 = vsel %vm746, %v691, 0
      %v793 = vsel %vm746, %v692, 0
      %v796 = vsel %vm746, %v693, 0
      %v799 = vsel %vm746, %v694, 0
      %v802 = vsel %vm746, %v695, 0
      %v805 = vsel %vm746, %v696, 0
      %v808 = vsel %vm746, %v697, 0
      %v811 = vsel %vm746, %v698, 0
      %v814 = vsel %vm746, %v699, 0
      %v817 = vsel %vm746, %v700, 0
      %v820 = vsel %vm746, %v701, 0
      %v823 = vsel %vm746, %v702, 0
      %v826 = vsel %vm746, %v703, 0
      %v829 = vsel %vm746, %v704, 0
      %v832 = vsel %vm746, %v705, 0
      %v835 = vsel %vm746, %v706, 0
      %v838 = vsel %vm746, %v707, 0
      %v841 = vsel %vm746, %v708, 0
      %v844 = vsel %vm746, %v709, 0
      %v847 = vsel %vm746, %v710, 0
      %v850 = vsel %vm746, %v711, 0
      %v853 = vsel %vm746, %v712, 0
      %v856 = vsel %vm746, %v713, 0
      %v859 = vsel %vm746, %v714, 0
      %v862 = vsel %vm746, %v715, 0
      %v865 = vsel %vm746, %v716, 0
      %v868 = vsel %vm746, %v717, 0
      %v871 = vsel %vm746, %v718, 0
      %v874 = vsel %vm746, %v719, 0
      %v877 = vsel %vm746, %v720, 0
      %v880 = vsel %vm746, %v721, 0
      %v883 = vsel %vm746, %v722, 0
      %v886 = vsel %vm746, %v723, 0
      %v889 = vsel %vm746, %v724, 0
      %v892 = vsel %vm746, %v725, 0
      %v895 = vsel %vm746, %v726, 0
      %v898 = vsel %vm746, %v727, 0
      %v901 = vsel %vm746, %v728, 0
      %v904 = vsel %vm746, %v729, 0
      %v907 = vsel %vm746, %v730, 0
      %v910 = vsel %vm746, %v731, 0
      %v913 = vsel %vm746, %v732, 0
      %v916 = vsel %vm746, %v733, 0
      %v919 = vsel %vm746, %v734, 0
      %v922 = vsel %vm746, %v735, 0
      %v925 = vsel %vm746, %v736, 0
      %v928 = vsel %vm746, %v737, 0
      %v931 = vsel %vm746, %v738, 0
      %v934 = vsel %vm746, %v739, 0
      %v937 = vsel %vm746, %v740, 0
      %vm939 = vcmask 1045504
      %v941 = vsel %vm939, %v745, 0
      %943 = vmatpush.bf16.msra.mxu0 0
      %944 = vmatpush.bf16.msra.mxu0 0
      %945 = vmatpush.bf16.msra.mxu0 0
      %946 = vmatpush.bf16.msra.mxu0 0
      %947 = vmatpush.bf16.msra.mxu0 0
      %948 = vmatpush.bf16.msra.mxu0 0
      %949 = vmatpush.bf16.msra.mxu0 0
      %950 = vmatpush.bf16.msra.mxu0 %v941
      %951 = vmatmul.bf16.gmra.mxu0 %v748
      %v952 = vpop.f32.mrf.mxu0
      %v953 = vadd.f32 0.0, %v952
      %v954 = vpop.f32.mrf.mxu0
      %v955 = vadd.f32 0.0, %v954
      %956 = vmatmul.bf16.gmra.mxu0 %v751
      %v957 = vpop.f32.mrf.mxu0
      %v958 = vadd.f32 0.0, %v957
      %v959 = vpop.f32.mrf.mxu0
      %v960 = vadd.f32 0.0, %v959
      %961 = vmatmul.bf16.gmra.mxu0 %v754
      %v962 = vpop.f32.mrf.mxu0
      %v963 = vadd.f32 0.0, %v962
      %v964 = vpop.f32.mrf.mxu0
      %v965 = vadd.f32 0.0, %v964
      %966 = vmatmul.bf16.gmra.mxu0 %v757
      %v967 = vpop.f32.mrf.mxu0
      %v968 = vadd.f32 0.0, %v967
      %v969 = vpop.f32.mrf.mxu0
      %v970 = vadd.f32 0.0, %v969
      %971 = vmatmul.bf16.gmra.mxu0 %v760
      %v972 = vpop.f32.mrf.mxu0
      %v973 = vadd.f32 0.0, %v972
      %v974 = vpop.f32.mrf.mxu0
      %v975 = vadd.f32 0.0, %v974
      %976 = vmatmul.bf16.gmra.mxu0 %v763
      %v977 = vpop.f32.mrf.mxu0
      %v978 = vadd.f32 0.0, %v977
      %v979 = vpop.f32.mrf.mxu0
      %v980 = vadd.f32 0.0, %v979
      %981 = vmatmul.bf16.gmra.mxu0 %v766
      %v982 = vpop.f32.mrf.mxu0
      %v983 = vadd.f32 0.0, %v982
      %v984 = vpop.f32.mrf.mxu0
      %v985 = vadd.f32 0.0, %v984
      %986 = vmatmul.bf16.gmra.mxu0 %v769
      %v987 = vpop.f32.mrf.mxu0
      %v988 = vadd.f32 0.0, %v987
      %v989 = vpop.f32.mrf.mxu0
      %v990 = vadd.f32 0.0, %v989
      %991 = vmatmul.bf16.gmra.mxu0 %v772
      %v992 = vpop.f32.mrf.mxu0
      %v993 = vadd.f32 0.0, %v992
      %v994 = vpop.f32.mrf.mxu0
      %v995 = vadd.f32 0.0, %v994
      %996 = vmatmul.bf16.gmra.mxu0 %v775
      %v997 = vpop.f32.mrf.mxu0
      %v998 = vadd.f32 0.0, %v997
      %v999 = vpop.f32.mrf.mxu0
      %v1000 = vadd.f32 0.0, %v999
      %1001 = vmatmul.bf16.gmra.mxu0 %v778
      %v1002 = vpop.f32.mrf.mxu0
      %v1003 = vadd.f32 0.0, %v1002
      %v1004 = vpop.f32.mrf.mxu0
      %v1005 = vadd.f32 0.0, %v1004
      %1006 = vmatmul.bf16.gmra.mxu0 %v781
      %v1007 = vpop.f32.mrf.mxu0
      %v1008 = vadd.f32 0.0, %v1007
      %v1009 = vpop.f32.mrf.mxu0
      %v1010 = vadd.f32 0.0, %v1009
      %1011 = vmatmul.bf16.gmra.mxu0 %v784
      %v1012 = vpop.f32.mrf.mxu0
      %v1013 = vadd.f32 0.0, %v1012
      %v1014 = vpop.f32.mrf.mxu0
      %v1015 = vadd.f32 0.0, %v1014
      %1016 = vmatmul.bf16.gmra.mxu0 %v787
      %v1017 = vpop.f32.mrf.mxu0
      %v1018 = vadd.f32 0.0, %v1017
      %v1019 = vpop.f32.mrf.mxu0
      %v1020 = vadd.f32 0.0, %v1019
      %1021 = vmatmul.bf16.gmra.mxu0 %v790
      %v1022 = vpop.f32.mrf.mxu0
      %v1023 = vadd.f32 0.0, %v1022
      %v1024 = vpop.f32.mrf.mxu0
      %v1025 = vadd.f32 0.0, %v1024
      %1026 = vmatmul.bf16.gmra.mxu0 %v793
      %v1027 = vpop.f32.mrf.mxu0
      %v1028 = vadd.f32 0.0, %v1027
      %v1029 = vpop.f32.mrf.mxu0
      %v1030 = vadd.f32 0.0, %v1029
      %1031 = vmatmul.bf16.gmra.mxu0 %v796
      %v1032 = vpop.f32.mrf.mxu0
      %v1033 = vadd.f32 0.0, %v1032
      %v1034 = vpop.f32.mrf.mxu0
      %v1035 = vadd.f32 0.0, %v1034
      %1036 = vmatmul.bf16.gmra.mxu0 %v799
      %v1037 = vpop.f32.mrf.mxu0
      %v1038 = vadd.f32 0.0, %v1037
      %v1039 = vpop.f32.mrf.mxu0
      %v1040 = vadd.f32 0.0, %v1039
      %1041 = vmatmul.bf16.gmra.mxu0 %v802
      %v1042 = vpop.f32.mrf.mxu0
      %v1043 = vadd.f32 0.0, %v1042
      %v1044 = vpop.f32.mrf.mxu0
      %v1045 = vadd.f32 0.0, %v1044
      %1046 = vmatmul.bf16.gmra.mxu0 %v805
      %v1047 = vpop.f32.mrf.mxu0
      %v1048 = vadd.f32 0.0, %v1047
      %v1049 = vpop.f32.mrf.mxu0
      %v1050 = vadd.f32 0.0, %v1049
      %1051 = vmatmul.bf16.gmra.mxu0 %v808
      %v1052 = vpop.f32.mrf.mxu0
      %v1053 = vadd.f32 0.0, %v1052
      %v1054 = vpop.f32.mrf.mxu0
      %v1055 = vadd.f32 0.0, %v1054
      %1056 = vmatmul.bf16.gmra.mxu0 %v811
      %v1057 = vpop.f32.mrf.mxu0
      %v1058 = vadd.f32 0.0, %v1057
      %v1059 = vpop.f32.mrf.mxu0
      %v1060 = vadd.f32 0.0, %v1059
      %1061 = vmatmul.bf16.gmra.mxu0 %v814
      %v1062 = vpop.f32.mrf.mxu0
      %v1063 = vadd.f32 0.0, %v1062
      %v1064 = vpop.f32.mrf.mxu0
      %v1065 = vadd.f32 0.0, %v1064
      %1066 = vmatmul.bf16.gmra.mxu0 %v817
      %v1067 = vpop.f32.mrf.mxu0
      %v1068 = vadd.f32 0.0, %v1067
      %v1069 = vpop.f32.mrf.mxu0
      %v1070 = vadd.f32 0.0, %v1069
      %1071 = vmatmul.bf16.gmra.mxu0 %v820
      %v1072 = vpop.f32.mrf.mxu0
      %v1073 = vadd.f32 0.0, %v1072
      %v1074 = vpop.f32.mrf.mxu0
      %v1075 = vadd.f32 0.0, %v1074
      %1076 = vmatmul.bf16.gmra.mxu0 %v823
      %v1077 = vpop.f32.mrf.mxu0
      %v1078 = vadd.f32 0.0, %v1077
      %v1079 = vpop.f32.mrf.mxu0
      %v1080 = vadd.f32 0.0, %v1079
      %1081 = vmatmul.bf16.gmra.mxu0 %v826
      %v1082 = vpop.f32.mrf.mxu0
      %v1083 = vadd.f32 0.0, %v1082
      %v1084 = vpop.f32.mrf.mxu0
      %v1085 = vadd.f32 0.0, %v1084
      %1086 = vmatmul.bf16.gmra.mxu0 %v829
      %v1087 = vpop.f32.mrf.mxu0
      %v1088 = vadd.f32 0.0, %v1087
      %v1089 = vpop.f32.mrf.mxu0
      %v1090 = vadd.f32 0.0, %v1089
      %1091 = vmatmul.bf16.gmra.mxu0 %v832
      %v1092 = vpop.f32.mrf.mxu0
      %v1093 = vadd.f32 0.0, %v1092
      %v1094 = vpop.f32.mrf.mxu0
      %v1095 = vadd.f32 0.0, %v1094
      %1096 = vmatmul.bf16.gmra.mxu0 %v835
      %v1097 = vpop.f32.mrf.mxu0
      %v1098 = vadd.f32 0.0, %v1097
      %v1099 = vpop.f32.mrf.mxu0
      %v1100 = vadd.f32 0.0, %v1099
      %1101 = vmatmul.bf16.gmra.mxu0 %v838
      %v1102 = vpop.f32.mrf.mxu0
      %v1103 = vadd.f32 0.0, %v1102
      %v1104 = vpop.f32.mrf.mxu0
      %v1105 = vadd.f32 0.0, %v1104
      %1106 = vmatmul.bf16.gmra.mxu0 %v841
      %v1107 = vpop.f32.mrf.mxu0
      %v1108 = vadd.f32 0.0, %v1107
      %v1109 = vpop.f32.mrf.mxu0
      %v1110 = vadd.f32 0.0, %v1109
      %1111 = vmatmul.bf16.gmra.mxu0 %v844
      %v1112 = vpop.f32.mrf.mxu0
      %v1113 = vadd.f32 0.0, %v1112
      %v1114 = vpop.f32.mrf.mxu0
      %v1115 = vadd.f32 0.0, %v1114
      %1116 = vmatmul.bf16.gmra.mxu0 %v847
      %v1117 = vpop.f32.mrf.mxu0
      %v1118 = vadd.f32 0.0, %v1117
      %v1119 = vpop.f32.mrf.mxu0
      %v1120 = vadd.f32 0.0, %v1119
      %1121 = vmatmul.bf16.gmra.mxu0 %v850
      %v1122 = vpop.f32.mrf.mxu0
      %v1123 = vadd.f32 0.0, %v1122
      %v1124 = vpop.f32.mrf.mxu0
      %v1125 = vadd.f32 0.0, %v1124
      %1126 = vmatmul.bf16.gmra.mxu0 %v853
      %v1127 = vpop.f32.mrf.mxu0
      %v1128 = vadd.f32 0.0, %v1127
      %v1129 = vpop.f32.mrf.mxu0
      %v1130 = vadd.f32 0.0, %v1129
      %1131 = vmatmul.bf16.gmra.mxu0 %v856
      %v1132 = vpop.f32.mrf.mxu0
      %v1133 = vadd.f32 0.0, %v1132
      %v1134 = vpop.f32.mrf.mxu0
      %v1135 = vadd.f32 0.0, %v1134
      %1136 = vmatmul.bf16.gmra.mxu0 %v859
      %v1137 = vpop.f32.mrf.mxu0
      %v1138 = vadd.f32 0.0, %v1137
      %v1139 = vpop.f32.mrf.mxu0
      %v1140 = vadd.f32 0.0, %v1139
      %1141 = vmatmul.bf16.gmra.mxu0 %v862
      %v1142 = vpop.f32.mrf.mxu0
      %v1143 = vadd.f32 0.0, %v1142
      %v1144 = vpop.f32.mrf.mxu0
      %v1145 = vadd.f32 0.0, %v1144
      %1146 = vmatmul.bf16.gmra.mxu0 %v865
      %v1147 = vpop.f32.mrf.mxu0
      %v1148 = vadd.f32 0.0, %v1147
      %v1149 = vpop.f32.mrf.mxu0
      %v1150 = vadd.f32 0.0, %v1149
      %1151 = vmatmul.bf16.gmra.mxu0 %v868
      %v1152 = vpop.f32.mrf.mxu0
      %v1153 = vadd.f32 0.0, %v1152
      %v1154 = vpop.f32.mrf.mxu0
      %v1155 = vadd.f32 0.0, %v1154
      %1156 = vmatmul.bf16.gmra.mxu0 %v871
      %v1157 = vpop.f32.mrf.mxu0
      %v1158 = vadd.f32 0.0, %v1157
      %v1159 = vpop.f32.mrf.mxu0
      %v1160 = vadd.f32 0.0, %v1159
      %1161 = vmatmul.bf16.gmra.mxu0 %v874
      %v1162 = vpop.f32.mrf.mxu0
      %v1163 = vadd.f32 0.0, %v1162
      %v1164 = vpop.f32.mrf.mxu0
      %v1165 = vadd.f32 0.0, %v1164
      %1166 = vmatmul.bf16.gmra.mxu0 %v877
      %v1167 = vpop.f32.mrf.mxu0
      %v1168 = vadd.f32 0.0, %v1167
      %v1169 = vpop.f32.mrf.mxu0
      %v1170 = vadd.f32 0.0, %v1169
      %1171 = vmatmul.bf16.gmra.mxu0 %v880
      %v1172 = vpop.f32.mrf.mxu0
      %v1173 = vadd.f32 0.0, %v1172
      %v1174 = vpop.f32.mrf.mxu0
      %v1175 = vadd.f32 0.0, %v1174
      %1176 = vmatmul.bf16.gmra.mxu0 %v883
      %v1177 = vpop.f32.mrf.mxu0
      %v1178 = vadd.f32 0.0, %v1177
      %v1179 = vpop.f32.mrf.mxu0
      %v1180 = vadd.f32 0.0, %v1179
      %1181 = vmatmul.bf16.gmra.mxu0 %v886
      %v1182 = vpop.f32.mrf.mxu0
      %v1183 = vadd.f32 0.0, %v1182
      %v1184 = vpop.f32.mrf.mxu0
      %v1185 = vadd.f32 0.0, %v1184
      %1186 = vmatmul.bf16.gmra.mxu0 %v889
      %v1187 = vpop.f32.mrf.mxu0
      %v1188 = vadd.f32 0.0, %v1187
      %v1189 = vpop.f32.mrf.mxu0
      %v1190 = vadd.f32 0.0, %v1189
      %1191 = vmatmul.bf16.gmra.mxu0 %v892
      %v1192 = vpop.f32.mrf.mxu0
      %v1193 = vadd.f32 0.0, %v1192
      %v1194 = vpop.f32.mrf.mxu0
      %v1195 = vadd.f32 0.0, %v1194
      %1196 = vmatmul.bf16.gmra.mxu0 %v895
      %v1197 = vpop.f32.mrf.mxu0
      %v1198 = vadd.f32 0.0, %v1197
      %v1199 = vpop.f32.mrf.mxu0
      %v1200 = vadd.f32 0.0, %v1199
      %1201 = vmatmul.bf16.gmra.mxu0 %v898
      %v1202 = vpop.f32.mrf.mxu0
      %v1203 = vadd.f32 0.0, %v1202
      %v1204 = vpop.f32.mrf.mxu0
      %v1205 = vadd.f32 0.0, %v1204
      %1206 = vmatmul.bf16.gmra.mxu0 %v901
      %v1207 = vpop.f32.mrf.mxu0
      %v1208 = vadd.f32 0.0, %v1207
      %v1209 = vpop.f32.mrf.mxu0
      %v1210 = vadd.f32 0.0, %v1209
      %1211 = vmatmul.bf16.gmra.mxu0 %v904
      %v1212 = vpop.f32.mrf.mxu0
      %v1213 = vadd.f32 0.0, %v1212
      %v1214 = vpop.f32.mrf.mxu0
      %v1215 = vadd.f32 0.0, %v1214
      %1216 = vmatmul.bf16.gmra.mxu0 %v907
      %v1217 = vpop.f32.mrf.mxu0
      %v1218 = vadd.f32 0.0, %v1217
      %v1219 = vpop.f32.mrf.mxu0
      %v1220 = vadd.f32 0.0, %v1219
      %1221 = vmatmul.bf16.gmra.mxu0 %v910
      %v1222 = vpop.f32.mrf.mxu0
      %v1223 = vadd.f32 0.0, %v1222
      %v1224 = vpop.f32.mrf.mxu0
      %v1225 = vadd.f32 0.0, %v1224
      %1226 = vmatmul.bf16.gmra.mxu0 %v913
      %v1227 = vpop.f32.mrf.mxu0
      %v1228 = vadd.f32 0.0, %v1227
      %v1229 = vpop.f32.mrf.mxu0
      %v1230 = vadd.f32 0.0, %v1229
      %1231 = vmatmul.bf16.gmra.mxu0 %v916
      %v1232 = vpop.f32.mrf.mxu0
      %v1233 = vadd.f32 0.0, %v1232
      %v1234 = vpop.f32.mrf.mxu0
      %v1235 = vadd.f32 0.0, %v1234
      %1236 = vmatmul.bf16.gmra.mxu0 %v919
      %v1237 = vpop.f32.mrf.mxu0
      %v1238 = vadd.f32 0.0, %v1237
      %v1239 = vpop.f32.mrf.mxu0
      %v1240 = vadd.f32 0.0, %v1239
      %1241 = vmatmul.bf16.gmra.mxu0 %v922
      %v1242 = vpop.f32.mrf.mxu0
      %v1243 = vadd.f32 0.0, %v1242
      %v1244 = vpop.f32.mrf.mxu0
      %v1245 = vadd.f32 0.0, %v1244
      %1246 = vmatmul.bf16.gmra.mxu0 %v925
      %v1247 = vpop.f32.mrf.mxu0
      %v1248 = vadd.f32 0.0, %v1247
      %v1249 = vpop.f32.mrf.mxu0
      %v1250 = vadd.f32 0.0, %v1249
      %1251 = vmatmul.bf16.gmra.mxu0 %v928
      %v1252 = vpop.f32.mrf.mxu0
      %v1253 = vadd.f32 0.0, %v1252
      %v1254 = vpop.f32.mrf.mxu0
      %v1255 = vadd.f32 0.0, %v1254
      %1256 = vmatmul.bf16.gmra.mxu0 %v931
      %v1257 = vpop.f32.mrf.mxu0
      %v1258 = vadd.f32 0.0, %v1257
      %v1259 = vpop.f32.mrf.mxu0
      %v1260 = vadd.f32 0.0, %v1259
      %1261 = vmatmul.bf16.gmra.mxu0 %v934
      %v1262 = vpop.f32.mrf.mxu0
      %v1263 = vadd.f32 0.0, %v1262
      %v1264 = vpop.f32.mrf.mxu0
      %v1265 = vadd.f32 0.0, %v1264
      %1266 = vmatmul.bf16.gmra.mxu0 %v937
      %v1267 = vpop.f32.mrf.mxu0
      %v1268 = vadd.f32 0.0, %v1267
      %v1269 = vpop.f32.mrf.mxu0
      %v1270 = vadd.f32 0.0, %v1269
      %1271 = vdwg.mxu0
      %v1400 = vunpack.c.l.b16 %v158
      %v1401 = vunpack.c.l.b16 %v159
      %v1402 = vunpack.c.l.b16 %v160
      %v1403 = vunpack.c.l.b16 %v161
      %v1404 = vunpack.c.l.b16 %v162
      %v1405 = vunpack.c.l.b16 %v163
      %v1406 = vunpack.c.l.b16 %v164
      %v1407 = vunpack.c.l.b16 %v165
      %v1408 = vunpack.c.l.b16 %v166
      %v1409 = vunpack.c.l.b16 %v167
      %v1410 = vunpack.c.l.b16 %v168
      %v1411 = vunpack.c.l.b16 %v169
      %v1412 = vunpack.c.l.b16 %v170
      %v1413 = vunpack.c.l.b16 %v171
      %v1414 = vunpack.c.l.b16 %v172
      %v1415 = vunpack.c.l.b16 %v173
      %v1416 = vunpack.c.l.b16 %v174
      %v1417 = vunpack.c.l.b16 %v175
      %v1418 = vunpack.c.l.b16 %v176
      %v1419 = vunpack.c.l.b16 %v177
      %v1420 = vunpack.c.l.b16 %v178
      %v1421 = vunpack.c.l.b16 %v179
      %v1422 = vunpack.c.l.b16 %v180
      %v1423 = vunpack.c.l.b16 %v181
      %v1424 = vunpack.c.l.b16 %v182
      %v1425 = vunpack.c.l.b16 %v183
      %v1426 = vunpack.c.l.b16 %v184
      %v1427 = vunpack.c.l.b16 %v185
      %v1428 = vunpack.c.l.b16 %v186
      %v1429 = vunpack.c.l.b16 %v187
      %v1430 = vunpack.c.l.b16 %v188
      %v1431 = vunpack.c.l.b16 %v189
      %v1432 = vunpack.c.l.b16 %v190
      %v1433 = vunpack.c.l.b16 %v191
      %v1434 = vunpack.c.l.b16 %v192
      %v1435 = vunpack.c.l.b16 %v193
      %v1436 = vunpack.c.l.b16 %v194
      %v1437 = vunpack.c.l.b16 %v195
      %v1438 = vunpack.c.l.b16 %v196
      %v1439 = vunpack.c.l.b16 %v197
      %v1440 = vunpack.c.l.b16 %v198
      %v1441 = vunpack.c.l.b16 %v199
      %v1442 = vunpack.c.l.b16 %v200
      %v1443 = vunpack.c.l.b16 %v201
      %v1444 = vunpack.c.l.b16 %v202
      %v1445 = vunpack.c.l.b16 %v203
      %v1446 = vunpack.c.l.b16 %v204
      %v1447 = vunpack.c.l.b16 %v205
      %v1448 = vunpack.c.l.b16 %v206
      %v1449 = vunpack.c.l.b16 %v207
      %v1450 = vunpack.c.l.b16 %v208
      %v1451 = vunpack.c.l.b16 %v209
      %v1452 = vunpack.c.l.b16 %v210
      %v1453 = vunpack.c.l.b16 %v211
      %v1454 = vunpack.c.l.b16 %v212
      %v1455 = vunpack.c.l.b16 %v213
      %v1456 = vunpack.c.l.b16 %v214
      %v1457 = vunpack.c.l.b16 %v215
      %v1458 = vunpack.c.l.b16 %v216
      %v1459 = vunpack.c.l.b16 %v217
      %v1460 = vunpack.c.l.b16 %v218
      %v1461 = vunpack.c.l.b16 %v219
      %v1462 = vunpack.c.l.b16 %v220
      %v1463 = vunpack.c.l.b16 %v221
      %v1464 = vunpack.c.l.b16 %v222
      %v1465 = vunpack.c.l.b16 %v223
      %v1466 = vunpack.c.l.b16 %v224
      %v1467 = vunpack.c.l.b16 %v225
      %v1468 = vunpack.c.l.b16 %v226
      %v1469 = vunpack.c.l.b16 %v227
      %v1470 = vunpack.c.l.b16 %v228
      %v1471 = vunpack.c.l.b16 %v229
      %v1472 = vunpack.c.l.b16 %v230
      %v1473 = vunpack.c.l.b16 %v231
      %v1474 = vunpack.c.l.b16 %v232
      %v1475 = vunpack.c.l.b16 %v233
      %v1476 = vunpack.c.l.b16 %v234
      %v1477 = vunpack.c.l.b16 %v235
      %v1478 = vunpack.c.l.b16 %v236
      %v1479 = vunpack.c.l.b16 %v237
      %v1480 = vunpack.c.l.b16 %v238
      %v1481 = vunpack.c.l.b16 %v239
      %v1482 = vunpack.c.l.b16 %v240
      %v1483 = vunpack.c.l.b16 %v241
      %v1484 = vunpack.c.l.b16 %v242
      %v1485 = vunpack.c.l.b16 %v243
      %v1486 = vunpack.c.l.b16 %v244
      %v1487 = vunpack.c.l.b16 %v245
      %v1488 = vunpack.c.l.b16 %v246
      %v1489 = vunpack.c.l.b16 %v247
      %v1490 = vunpack.c.l.b16 %v248
      %v1491 = vunpack.c.l.b16 %v249
      %v1492 = vunpack.c.l.b16 %v250
      %v1493 = vunpack.c.l.b16 %v251
      %v1494 = vunpack.c.l.b16 %v252
      %v1495 = vunpack.c.l.b16 %v253
      %v1496 = vunpack.c.l.b16 %v254
      %v1497 = vunpack.c.l.b16 %v255
      %v1498 = vunpack.c.l.b16 %v256
      %v1499 = vunpack.c.l.b16 %v257
      %v1500 = vunpack.c.l.b16 %v258
      %v1501 = vunpack.c.l.b16 %v259
      %v1502 = vunpack.c.l.b16 %v260
      %v1503 = vunpack.c.l.b16 %v261
      %v1504 = vunpack.c.l.b16 %v262
      %v1505 = vunpack.c.l.b16 %v263
      %v1506 = vunpack.c.l.b16 %v264
      %v1507 = vunpack.c.l.b16 %v265
      %v1508 = vunpack.c.l.b16 %v266
      %v1509 = vunpack.c.l.b16 %v267
      %v1510 = vunpack.c.l.b16 %v268
      %v1511 = vunpack.c.l.b16 %v269
      %v1512 = vunpack.c.l.b16 %v270
      %v1513 = vunpack.c.l.b16 %v271
      %v1514 = vunpack.c.l.b16 %v272
      %v1515 = vunpack.c.l.b16 %v273
      %v1516 = vunpack.c.l.b16 %v274
      %v1517 = vunpack.c.l.b16 %v275
      %v1518 = vunpack.c.l.b16 %v276
      %v1519 = vunpack.c.l.b16 %v277
      %v1520 = vunpack.c.l.b16 %v278
      %v1521 = vunpack.c.l.b16 %v279
      %v1522 = vunpack.c.l.b16 %v280
      %v1523 = vunpack.c.l.b16 %v281
      %v1524 = vunpack.c.l.b16 %v282
      %v1525 = vunpack.c.l.b16 %v283
      %v1526 = vunpack.c.l.b16 %v284
      %v1527 = vunpack.c.l.b16 %v285
      %v1528 = vpack.c.b16 %v1401, %v1400
      %v1529 = vpack.c.b16 %v1403, %v1402
      %v1530 = vpack.c.b16 %v1405, %v1404
      %v1531 = vpack.c.b16 %v1407, %v1406
      %v1532 = vpack.c.b16 %v1409, %v1408
      %v1533 = vpack.c.b16 %v1411, %v1410
      %v1534 = vpack.c.b16 %v1413, %v1412
      %v1535 = vpack.c.b16 %v1415, %v1414
      %v1536 = vpack.c.b16 %v1417, %v1416
      %v1537 = vpack.c.b16 %v1419, %v1418
      %v1538 = vpack.c.b16 %v1421, %v1420
      %v1539 = vpack.c.b16 %v1423, %v1422
      %v1540 = vpack.c.b16 %v1425, %v1424
      %v1541 = vpack.c.b16 %v1427, %v1426
      %v1542 = vpack.c.b16 %v1429, %v1428
      %v1543 = vpack.c.b16 %v1431, %v1430
      %v1544 = vpack.c.b16 %v1433, %v1432
      %v1545 = vpack.c.b16 %v1435, %v1434
      %v1546 = vpack.c.b16 %v1437, %v1436
      %v1547 = vpack.c.b16 %v1439, %v1438
      %v1548 = vpack.c.b16 %v1441, %v1440
      %v1549 = vpack.c.b16 %v1443, %v1442
      %v1550 = vpack.c.b16 %v1445, %v1444
      %v1551 = vpack.c.b16 %v1447, %v1446
      %v1552 = vpack.c.b16 %v1449, %v1448
      %v1553 = vpack.c.b16 %v1451, %v1450
      %v1554 = vpack.c.b16 %v1453, %v1452
      %v1555 = vpack.c.b16 %v1455, %v1454
      %v1556 = vpack.c.b16 %v1457, %v1456
      %v1557 = vpack.c.b16 %v1459, %v1458
      %v1558 = vpack.c.b16 %v1461, %v1460
      %v1559 = vpack.c.b16 %v1463, %v1462
      %v1560 = vpack.c.b16 %v1465, %v1464
      %v1561 = vpack.c.b16 %v1467, %v1466
      %v1562 = vpack.c.b16 %v1469, %v1468
      %v1563 = vpack.c.b16 %v1471, %v1470
      %v1564 = vpack.c.b16 %v1473, %v1472
      %v1565 = vpack.c.b16 %v1475, %v1474
      %v1566 = vpack.c.b16 %v1477, %v1476
      %v1567 = vpack.c.b16 %v1479, %v1478
      %v1568 = vpack.c.b16 %v1481, %v1480
      %v1569 = vpack.c.b16 %v1483, %v1482
      %v1570 = vpack.c.b16 %v1485, %v1484
      %v1571 = vpack.c.b16 %v1487, %v1486
      %v1572 = vpack.c.b16 %v1489, %v1488
      %v1573 = vpack.c.b16 %v1491, %v1490
      %v1574 = vpack.c.b16 %v1493, %v1492
      %v1575 = vpack.c.b16 %v1495, %v1494
      %v1576 = vpack.c.b16 %v1497, %v1496
      %v1577 = vpack.c.b16 %v1499, %v1498
      %v1578 = vpack.c.b16 %v1501, %v1500
      %v1579 = vpack.c.b16 %v1503, %v1502
      %v1580 = vpack.c.b16 %v1505, %v1504
      %v1581 = vpack.c.b16 %v1507, %v1506
      %v1582 = vpack.c.b16 %v1509, %v1508
      %v1583 = vpack.c.b16 %v1511, %v1510
      %v1584 = vpack.c.b16 %v1513, %v1512
      %v1585 = vpack.c.b16 %v1515, %v1514
      %v1586 = vpack.c.b16 %v1517, %v1516
      %v1587 = vpack.c.b16 %v1519, %v1518
      %v1588 = vpack.c.b16 %v1521, %v1520
      %v1589 = vpack.c.b16 %v1523, %v1522
      %v1590 = vpack.c.b16 %v1525, %v1524
      %v1591 = vpack.c.b16 %v1527, %v1526
      %v1594 = vunpack.c.l.b16 %v286
      %v1595 = vunpack.c.l.b16 %v287
      %v1596 = vpack.c.b16 %v1595, %v1594
      %v1598 = vsel %vm746, %v1528, 0
      %v1601 = vsel %vm746, %v1529, 0
      %v1604 = vsel %vm746, %v1530, 0
      %v1607 = vsel %vm746, %v1531, 0
      %v1610 = vsel %vm746, %v1532, 0
      %v1613 = vsel %vm746, %v1533, 0
      %v1616 = vsel %vm746, %v1534, 0
      %v1619 = vsel %vm746, %v1535, 0
      %v1622 = vsel %vm746, %v1536, 0
      %v1625 = vsel %vm746, %v1537, 0
      %v1628 = vsel %vm746, %v1538, 0
      %v1631 = vsel %vm746, %v1539, 0
      %v1634 = vsel %vm746, %v1540, 0
      %v1637 = vsel %vm746, %v1541, 0
      %v1640 = vsel %vm746, %v1542, 0
      %v1643 = vsel %vm746, %v1543, 0
      %v1646 = vsel %vm746, %v1544, 0
      %v1649 = vsel %vm746, %v1545, 0
      %v1652 = vsel %vm746, %v1546, 0
      %v1655 = vsel %vm746, %v1547, 0
      %v1658 = vsel %vm746, %v1548, 0
      %v1661 = vsel %vm746, %v1549, 0
      %v1664 = vsel %vm746, %v1550, 0
      %v1667 = vsel %vm746, %v1551, 0
      %v1670 = vsel %vm746, %v1552, 0
      %v1673 = vsel %vm746, %v1553, 0
      %v1676 = vsel %vm746, %v1554, 0
      %v1679 = vsel %vm746, %v1555, 0
      %v1682 = vsel %vm746, %v1556, 0
      %v1685 = vsel %vm746, %v1557, 0
      %v1688 = vsel %vm746, %v1558, 0
      %v1691 = vsel %vm746, %v1559, 0
      %v1694 = vsel %vm746, %v1560, 0
      %v1697 = vsel %vm746, %v1561, 0
      %v1700 = vsel %vm746, %v1562, 0
      %v1703 = vsel %vm746, %v1563, 0
      %v1706 = vsel %vm746, %v1564, 0
      %v1709 = vsel %vm746, %v1565, 0
      %v1712 = vsel %vm746, %v1566, 0
      %v1715 = vsel %vm746, %v1567, 0
      %v1718 = vsel %vm746, %v1568, 0
      %v1721 = vsel %vm746, %v1569, 0
      %v1724 = vsel %vm746, %v1570, 0
      %v1727 = vsel %vm746, %v1571, 0
      %v1730 = vsel %vm746, %v1572, 0
      %v1733 = vsel %vm746, %v1573, 0
      %v1736 = vsel %vm746, %v1574, 0
      %v1739 = vsel %vm746, %v1575, 0
      %v1742 = vsel %vm746, %v1576, 0
      %v1745 = vsel %vm746, %v1577, 0
      %v1748 = vsel %vm746, %v1578, 0
      %v1751 = vsel %vm746, %v1579, 0
      %v1754 = vsel %vm746, %v1580, 0
      %v1757 = vsel %vm746, %v1581, 0
      %v1760 = vsel %vm746, %v1582, 0
      %v1763 = vsel %vm746, %v1583, 0
      %v1766 = vsel %vm746, %v1584, 0
      %v1769 = vsel %vm746, %v1585, 0
      %v1772 = vsel %vm746, %v1586, 0
      %v1775 = vsel %vm746, %v1587, 0
      %v1778 = vsel %vm746, %v1588, 0
      %v1781 = vsel %vm746, %v1589, 0
      %v1784 = vsel %vm746, %v1590, 0
      %v1787 = vsel %vm746, %v1591, 0
      %v1790 = vsel %vm939, %v1596, 0
      %1792 = vmatpush.bf16.msra.mxu0 0
      %1793 = vmatpush.bf16.msra.mxu0 0
      %1794 = vmatpush.bf16.msra.mxu0 0
      %1795 = vmatpush.bf16.msra.mxu0 0
      %1796 = vmatpush.bf16.msra.mxu0 0
      %1797 = vmatpush.bf16.msra.mxu0 0
      %1798 = vmatpush.bf16.msra.mxu0 0
      %1799 = vmatpush.bf16.msra.mxu0 %v1790
      %1800 = vmatmul.bf16.gmra.mxu0 %v1598
      %v1801 = vpop.f32.mrf.mxu0
      %v1802 = vadd.f32 %v953, %v1801
      %v1803 = vpop.f32.mrf.mxu0
      %v1804 = vadd.f32 %v955, %v1803
      %1805 = vmatmul.bf16.gmra.mxu0 %v1601
      %v1806 = vpop.f32.mrf.mxu0
      %v1807 = vadd.f32 %v958, %v1806
      %v1808 = vpop.f32.mrf.mxu0
      %v1809 = vadd.f32 %v960, %v1808
      %1810 = vmatmul.bf16.gmra.mxu0 %v1604
      %v1811 = vpop.f32.mrf.mxu0
      %v1812 = vadd.f32 %v963, %v1811
      %v1813 = vpop.f32.mrf.mxu0
      %v1814 = vadd.f32 %v965, %v1813
      %1815 = vmatmul.bf16.gmra.mxu0 %v1607
      %v1816 = vpop.f32.mrf.mxu0
      %v1817 = vadd.f32 %v968, %v1816
      %v1818 = vpop.f32.mrf.mxu0
      %v1819 = vadd.f32 %v970, %v1818
      %1820 = vmatmul.bf16.gmra.mxu0 %v1610
      %v1821 = vpop.f32.mrf.mxu0
      %v1822 = vadd.f32 %v973, %v1821
      %v1823 = vpop.f32.mrf.mxu0
      %v1824 = vadd.f32 %v975, %v1823
      %1825 = vmatmul.bf16.gmra.mxu0 %v1613
      %v1826 = vpop.f32.mrf.mxu0
      %v1827 = vadd.f32 %v978, %v1826
      %v1828 = vpop.f32.mrf.mxu0
      %v1829 = vadd.f32 %v980, %v1828
      %1830 = vmatmul.bf16.gmra.mxu0 %v1616
      %v1831 = vpop.f32.mrf.mxu0
      %v1832 = vadd.f32 %v983, %v1831
      %v1833 = vpop.f32.mrf.mxu0
      %v1834 = vadd.f32 %v985, %v1833
      %1835 = vmatmul.bf16.gmra.mxu0 %v1619
      %v1836 = vpop.f32.mrf.mxu0
      %v1837 = vadd.f32 %v988, %v1836
      %v1838 = vpop.f32.mrf.mxu0
      %v1839 = vadd.f32 %v990, %v1838
      %1840 = vmatmul.bf16.gmra.mxu0 %v1622
      %v1841 = vpop.f32.mrf.mxu0
      %v1842 = vadd.f32 %v993, %v1841
      %v1843 = vpop.f32.mrf.mxu0
      %v1844 = vadd.f32 %v995, %v1843
      %1845 = vmatmul.bf16.gmra.mxu0 %v1625
      %v1846 = vpop.f32.mrf.mxu0
      %v1847 = vadd.f32 %v998, %v1846
      %v1848 = vpop.f32.mrf.mxu0
      %v1849 = vadd.f32 %v1000, %v1848
      %1850 = vmatmul.bf16.gmra.mxu0 %v1628
      %v1851 = vpop.f32.mrf.mxu0
      %v1852 = vadd.f32 %v1003, %v1851
      %v1853 = vpop.f32.mrf.mxu0
      %v1854 = vadd.f32 %v1005, %v1853
      %1855 = vmatmul.bf16.gmra.mxu0 %v1631
      %v1856 = vpop.f32.mrf.mxu0
      %v1857 = vadd.f32 %v1008, %v1856
      %v1858 = vpop.f32.mrf.mxu0
      %v1859 = vadd.f32 %v1010, %v1858
      %1860 = vmatmul.bf16.gmra.mxu0 %v1634
      %v1861 = vpop.f32.mrf.mxu0
      %v1862 = vadd.f32 %v1013, %v1861
      %v1863 = vpop.f32.mrf.mxu0
      %v1864 = vadd.f32 %v1015, %v1863
      %1865 = vmatmul.bf16.gmra.mxu0 %v1637
      %v1866 = vpop.f32.mrf.mxu0
      %v1867 = vadd.f32 %v1018, %v1866
      %v1868 = vpop.f32.mrf.mxu0
      %v1869 = vadd.f32 %v1020, %v1868
      %1870 = vmatmul.bf16.gmra.mxu0 %v1640
      %v1871 = vpop.f32.mrf.mxu0
      %v1872 = vadd.f32 %v1023, %v1871
      %v1873 = vpop.f32.mrf.mxu0
      %v1874 = vadd.f32 %v1025, %v1873
      %1875 = vmatmul.bf16.gmra.mxu0 %v1643
      %v1876 = vpop.f32.mrf.mxu0
      %v1877 = vadd.f32 %v1028, %v1876
      %v1878 = vpop.f32.mrf.mxu0
      %v1879 = vadd.f32 %v1030, %v1878
      %1880 = vmatmul.bf16.gmra.mxu0 %v1646
      %v1881 = vpop.f32.mrf.mxu0
      %v1882 = vadd.f32 %v1033, %v1881
      %v1883 = vpop.f32.mrf.mxu0
      %v1884 = vadd.f32 %v1035, %v1883
      %1885 = vmatmul.bf16.gmra.mxu0 %v1649
      %v1886 = vpop.f32.mrf.mxu0
      %v1887 = vadd.f32 %v1038, %v1886
      %v1888 = vpop.f32.mrf.mxu0
      %v1889 = vadd.f32 %v1040, %v1888
      %1890 = vmatmul.bf16.gmra.mxu0 %v1652
      %v1891 = vpop.f32.mrf.mxu0
      %v1892 = vadd.f32 %v1043, %v1891
      %v1893 = vpop.f32.mrf.mxu0
      %v1894 = vadd.f32 %v1045, %v1893
      %1895 = vmatmul.bf16.gmra.mxu0 %v1655
      %v1896 = vpop.f32.mrf.mxu0
      %v1897 = vadd.f32 %v1048, %v1896
      %v1898 = vpop.f32.mrf.mxu0
      %v1899 = vadd.f32 %v1050, %v1898
      %1900 = vmatmul.bf16.gmra.mxu0 %v1658
      %v1901 = vpop.f32.mrf.mxu0
      %v1902 = vadd.f32 %v1053, %v1901
      %v1903 = vpop.f32.mrf.mxu0
      %v1904 = vadd.f32 %v1055, %v1903
      %1905 = vmatmul.bf16.gmra.mxu0 %v1661
      %v1906 = vpop.f32.mrf.mxu0
      %v1907 = vadd.f32 %v1058, %v1906
      %v1908 = vpop.f32.mrf.mxu0
      %v1909 = vadd.f32 %v1060, %v1908
      %1910 = vmatmul.bf16.gmra.mxu0 %v1664
      %v1911 = vpop.f32.mrf.mxu0
      %v1912 = vadd.f32 %v1063, %v1911
      %v1913 = vpop.f32.mrf.mxu0
      %v1914 = vadd.f32 %v1065, %v1913
      %1915 = vmatmul.bf16.gmra.mxu0 %v1667
      %v1916 = vpop.f32.mrf.mxu0
      %v1917 = vadd.f32 %v1068, %v1916
      %v1918 = vpop.f32.mrf.mxu0
      %v1919 = vadd.f32 %v1070, %v1918
      %1920 = vmatmul.bf16.gmra.mxu0 %v1670
      %v1921 = vpop.f32.mrf.mxu0
      %v1922 = vadd.f32 %v1073, %v1921
      %v1923 = vpop.f32.mrf.mxu0
      %v1924 = vadd.f32 %v1075, %v1923
      %1925 = vmatmul.bf16.gmra.mxu0 %v1673
      %v1926 = vpop.f32.mrf.mxu0
      %v1927 = vadd.f32 %v1078, %v1926
      %v1928 = vpop.f32.mrf.mxu0
      %v1929 = vadd.f32 %v1080, %v1928
      %1930 = vmatmul.bf16.gmra.mxu0 %v1676
      %v1931 = vpop.f32.mrf.mxu0
      %v1932 = vadd.f32 %v1083, %v1931
      %v1933 = vpop.f32.mrf.mxu0
      %v1934 = vadd.f32 %v1085, %v1933
      %1935 = vmatmul.bf16.gmra.mxu0 %v1679
      %v1936 = vpop.f32.mrf.mxu0
      %v1937 = vadd.f32 %v1088, %v1936
      %v1938 = vpop.f32.mrf.mxu0
      %v1939 = vadd.f32 %v1090, %v1938
      %1940 = vmatmul.bf16.gmra.mxu0 %v1682
      %v1941 = vpop.f32.mrf.mxu0
      %v1942 = vadd.f32 %v1093, %v1941
      %v1943 = vpop.f32.mrf.mxu0
      %v1944 = vadd.f32 %v1095, %v1943
      %1945 = vmatmul.bf16.gmra.mxu0 %v1685
      %v1946 = vpop.f32.mrf.mxu0
      %v1947 = vadd.f32 %v1098, %v1946
      %v1948 = vpop.f32.mrf.mxu0
      %v1949 = vadd.f32 %v1100, %v1948
      %1950 = vmatmul.bf16.gmra.mxu0 %v1688
      %v1951 = vpop.f32.mrf.mxu0
      %v1952 = vadd.f32 %v1103, %v1951
      %v1953 = vpop.f32.mrf.mxu0
      %v1954 = vadd.f32 %v1105, %v1953
      %1955 = vmatmul.bf16.gmra.mxu0 %v1691
      %v1956 = vpop.f32.mrf.mxu0
      %v1957 = vadd.f32 %v1108, %v1956
      %v1958 = vpop.f32.mrf.mxu0
      %v1959 = vadd.f32 %v1110, %v1958
      %1960 = vmatmul.bf16.gmra.mxu0 %v1694
      %v1961 = vpop.f32.mrf.mxu0
      %v1962 = vadd.f32 %v1113, %v1961
      %v1963 = vpop.f32.mrf.mxu0
      %v1964 = vadd.f32 %v1115, %v1963
      %1965 = vmatmul.bf16.gmra.mxu0 %v1697
      %v1966 = vpop.f32.mrf.mxu0
      %v1967 = vadd.f32 %v1118, %v1966
      %v1968 = vpop.f32.mrf.mxu0
      %v1969 = vadd.f32 %v1120, %v1968
      %1970 = vmatmul.bf16.gmra.mxu0 %v1700
      %v1971 = vpop.f32.mrf.mxu0
      %v1972 = vadd.f32 %v1123, %v1971
      %v1973 = vpop.f32.mrf.mxu0
      %v1974 = vadd.f32 %v1125, %v1973
      %1975 = vmatmul.bf16.gmra.mxu0 %v1703
      %v1976 = vpop.f32.mrf.mxu0
      %v1977 = vadd.f32 %v1128, %v1976
      %v1978 = vpop.f32.mrf.mxu0
      %v1979 = vadd.f32 %v1130, %v1978
      %1980 = vmatmul.bf16.gmra.mxu0 %v1706
      %v1981 = vpop.f32.mrf.mxu0
      %v1982 = vadd.f32 %v1133, %v1981
      %v1983 = vpop.f32.mrf.mxu0
      %v1984 = vadd.f32 %v1135, %v1983
      %1985 = vmatmul.bf16.gmra.mxu0 %v1709
      %v1986 = vpop.f32.mrf.mxu0
      %v1987 = vadd.f32 %v1138, %v1986
      %v1988 = vpop.f32.mrf.mxu0
      %v1989 = vadd.f32 %v1140, %v1988
      %1990 = vmatmul.bf16.gmra.mxu0 %v1712
      %v1991 = vpop.f32.mrf.mxu0
      %v1992 = vadd.f32 %v1143, %v1991
      %v1993 = vpop.f32.mrf.mxu0
      %v1994 = vadd.f32 %v1145, %v1993
      %1995 = vmatmul.bf16.gmra.mxu0 %v1715
      %v1996 = vpop.f32.mrf.mxu0
      %v1997 = vadd.f32 %v1148, %v1996
      %v1998 = vpop.f32.mrf.mxu0
      %v1999 = vadd.f32 %v1150, %v1998
      %2000 = vmatmul.bf16.gmra.mxu0 %v1718
      %v2001 = vpop.f32.mrf.mxu0
      %v2002 = vadd.f32 %v1153, %v2001
      %v2003 = vpop.f32.mrf.mxu0
      %v2004 = vadd.f32 %v1155, %v2003
      %2005 = vmatmul.bf16.gmra.mxu0 %v1721
      %v2006 = vpop.f32.mrf.mxu0
      %v2007 = vadd.f32 %v1158, %v2006
      %v2008 = vpop.f32.mrf.mxu0
      %v2009 = vadd.f32 %v1160, %v2008
      %2010 = vmatmul.bf16.gmra.mxu0 %v1724
      %v2011 = vpop.f32.mrf.mxu0
      %v2012 = vadd.f32 %v1163, %v2011
      %v2013 = vpop.f32.mrf.mxu0
      %v2014 = vadd.f32 %v1165, %v2013
      %2015 = vmatmul.bf16.gmra.mxu0 %v1727
      %v2016 = vpop.f32.mrf.mxu0
      %v2017 = vadd.f32 %v1168, %v2016
      %v2018 = vpop.f32.mrf.mxu0
      %v2019 = vadd.f32 %v1170, %v2018
      %2020 = vmatmul.bf16.gmra.mxu0 %v1730
      %v2021 = vpop.f32.mrf.mxu0
      %v2022 = vadd.f32 %v1173, %v2021
      %v2023 = vpop.f32.mrf.mxu0
      %v2024 = vadd.f32 %v1175, %v2023
      %2025 = vmatmul.bf16.gmra.mxu0 %v1733
      %v2026 = vpop.f32.mrf.mxu0
      %v2027 = vadd.f32 %v1178, %v2026
      %v2028 = vpop.f32.mrf.mxu0
      %v2029 = vadd.f32 %v1180, %v2028
      %2030 = vmatmul.bf16.gmra.mxu0 %v1736
      %v2031 = vpop.f32.mrf.mxu0
      %v2032 = vadd.f32 %v1183, %v2031
      %v2033 = vpop.f32.mrf.mxu0
      %v2034 = vadd.f32 %v1185, %v2033
      %2035 = vmatmul.bf16.gmra.mxu0 %v1739
      %v2036 = vpop.f32.mrf.mxu0
      %v2037 = vadd.f32 %v1188, %v2036
      %v2038 = vpop.f32.mrf.mxu0
      %v2039 = vadd.f32 %v1190, %v2038
      %2040 = vmatmul.bf16.gmra.mxu0 %v1742
      %v2041 = vpop.f32.mrf.mxu0
      %v2042 = vadd.f32 %v1193, %v2041
      %v2043 = vpop.f32.mrf.mxu0
      %v2044 = vadd.f32 %v1195, %v2043
      %2045 = vmatmul.bf16.gmra.mxu0 %v1745
      %v2046 = vpop.f32.mrf.mxu0
      %v2047 = vadd.f32 %v1198, %v2046
      %v2048 = vpop.f32.mrf.mxu0
      %v2049 = vadd.f32 %v1200, %v2048
      %2050 = vmatmul.bf16.gmra.mxu0 %v1748
      %v2051 = vpop.f32.mrf.mxu0
      %v2052 = vadd.f32 %v1203, %v2051
      %v2053 = vpop.f32.mrf.mxu0
      %v2054 = vadd.f32 %v1205, %v2053
      %2055 = vmatmul.bf16.gmra.mxu0 %v1751
      %v2056 = vpop.f32.mrf.mxu0
      %v2057 = vadd.f32 %v1208, %v2056
      %v2058 = vpop.f32.mrf.mxu0
      %v2059 = vadd.f32 %v1210, %v2058
      %2060 = vmatmul.bf16.gmra.mxu0 %v1754
      %v2061 = vpop.f32.mrf.mxu0
      %v2062 = vadd.f32 %v1213, %v2061
      %v2063 = vpop.f32.mrf.mxu0
      %v2064 = vadd.f32 %v1215, %v2063
      %2065 = vmatmul.bf16.gmra.mxu0 %v1757
      %v2066 = vpop.f32.mrf.mxu0
      %v2067 = vadd.f32 %v1218, %v2066
      %v2068 = vpop.f32.mrf.mxu0
      %v2069 = vadd.f32 %v1220, %v2068
      %2070 = vmatmul.bf16.gmra.mxu0 %v1760
      %v2071 = vpop.f32.mrf.mxu0
      %v2072 = vadd.f32 %v1223, %v2071
      %v2073 = vpop.f32.mrf.mxu0
      %v2074 = vadd.f32 %v1225, %v2073
      %2075 = vmatmul.bf16.gmra.mxu0 %v1763
      %v2076 = vpop.f32.mrf.mxu0
      %v2077 = vadd.f32 %v1228, %v2076
      %v2078 = vpop.f32.mrf.mxu0
      %v2079 = vadd.f32 %v1230, %v2078
      %2080 = vmatmul.bf16.gmra.mxu0 %v1766
      %v2081 = vpop.f32.mrf.mxu0
      %v2082 = vadd.f32 %v1233, %v2081
      %v2083 = vpop.f32.mrf.mxu0
      %v2084 = vadd.f32 %v1235, %v2083
      %2085 = vmatmul.bf16.gmra.mxu0 %v1769
      %v2086 = vpop.f32.mrf.mxu0
      %v2087 = vadd.f32 %v1238, %v2086
      %v2088 = vpop.f32.mrf.mxu0
      %v2089 = vadd.f32 %v1240, %v2088
      %2090 = vmatmul.bf16.gmra.mxu0 %v1772
      %v2091 = vpop.f32.mrf.mxu0
      %v2092 = vadd.f32 %v1243, %v2091
      %v2093 = vpop.f32.mrf.mxu0
      %v2094 = vadd.f32 %v1245, %v2093
      %2095 = vmatmul.bf16.gmra.mxu0 %v1775
      %v2096 = vpop.f32.mrf.mxu0
      %v2097 = vadd.f32 %v1248, %v2096
      %v2098 = vpop.f32.mrf.mxu0
      %v2099 = vadd.f32 %v1250, %v2098
      %2100 = vmatmul.bf16.gmra.mxu0 %v1778
      %v2101 = vpop.f32.mrf.mxu0
      %v2102 = vadd.f32 %v1253, %v2101
      %v2103 = vpop.f32.mrf.mxu0
      %v2104 = vadd.f32 %v1255, %v2103
      %2105 = vmatmul.bf16.gmra.mxu0 %v1781
      %v2106 = vpop.f32.mrf.mxu0
      %v2107 = vadd.f32 %v1258, %v2106
      %v2108 = vpop.f32.mrf.mxu0
      %v2109 = vadd.f32 %v1260, %v2108
      %2110 = vmatmul.bf16.gmra.mxu0 %v1784
      %v2111 = vpop.f32.mrf.mxu0
      %v2112 = vadd.f32 %v1263, %v2111
      %v2113 = vpop.f32.mrf.mxu0
      %v2114 = vadd.f32 %v1265, %v2113
      %2115 = vmatmul.bf16.gmra.mxu0 %v1787
      %v2116 = vpop.f32.mrf.mxu0
      %v2117 = vadd.f32 %v1268, %v2116
      %v2118 = vpop.f32.mrf.mxu0
      %v2119 = vadd.f32 %v1270, %v2118
      %2120 = vdwg.mxu0
      %s2121 = sadd.s32 %s153, 64
      %s2122 = sshra.s32 %s2121, 3
      %s2123 = sand.u32 %s2121, 7
      %s2124 = smul.addr %s2122, 4
      %s2125 = scalar_lea.vmem %s0, %s2124
      %v2126 = vld [vmem:[%s2125] sm:$0xf]
      %v2127 = vld [vmem:[%s2125 + $0x4] sm:$0xf]
      %v2128 = vld [vmem:[%s2125 + $0x8] sm:$0xf]
      %v2129 = vld [vmem:[%s2125 + $0xc] sm:$0xf]
      %v2130 = vld [vmem:[%s2125 + $0x10] sm:$0xf]
      %v2131 = vld [vmem:[%s2125 + $0x14] sm:$0xf]
      %v2132 = vld [vmem:[%s2125 + $0x18] sm:$0xf]
      %v2133 = vld [vmem:[%s2125 + $0x1c] sm:$0xf]
      %v2134 = vld [vmem:[%s2125 + $0x20] sm:$0xf]
      %v2135 = vld [vmem:[%s2125 + $0x24] sm:$0xf]
      %v2136 = vld [vmem:[%s2125 + $0x28] sm:$0xf]
      %v2137 = vld [vmem:[%s2125 + $0x2c] sm:$0xf]
      %v2138 = vld [vmem:[%s2125 + $0x30] sm:$0xf]
      %v2139 = vld [vmem:[%s2125 + $0x34] sm:$0xf]
      %v2140 = vld [vmem:[%s2125 + $0x38] sm:$0xf]
      %v2141 = vld [vmem:[%s2125 + $0x3c] sm:$0xf]
      %v2142 = vld [vmem:[%s2125 + $0x40] sm:$0xf]
      %v2143 = vld [vmem:[%s2125 + $0x44] sm:$0xf]
      %v2144 = vld [vmem:[%s2125 + $0x48] sm:$0xf]
      %v2145 = vld [vmem:[%s2125 + $0x4c] sm:$0xf]
      %v2146 = vld [vmem:[%s2125 + $0x50] sm:$0xf]
      %v2147 = vld [vmem:[%s2125 + $0x54] sm:$0xf]
      %v2148 = vld [vmem:[%s2125 + $0x58] sm:$0xf]
      %v2149 = vld [vmem:[%s2125 + $0x5c] sm:$0xf]
      %v2150 = vld [vmem:[%s2125 + $0x60] sm:$0xf]
      %v2151 = vld [vmem:[%s2125 + $0x64] sm:$0xf]
      %v2152 = vld [vmem:[%s2125 + $0x68] sm:$0xf]
      %v2153 = vld [vmem:[%s2125 + $0x6c] sm:$0xf]
      %v2154 = vld [vmem:[%s2125 + $0x70] sm:$0xf]
      %v2155 = vld [vmem:[%s2125 + $0x74] sm:$0xf]
      %v2156 = vld [vmem:[%s2125 + $0x78] sm:$0xf]
      %v2157 = vld [vmem:[%s2125 + $0x7c] sm:$0xf]
      %v2158 = vld [vmem:[%s2125 + $0x80] sm:$0xf]
      %v2159 = vld [vmem:[%s2125 + $0x84] sm:$0xf]
      %v2160 = vld [vmem:[%s2125 + $0x88] sm:$0xf]
      %v2161 = vld [vmem:[%s2125 + $0x8c] sm:$0xf]
      %v2162 = vld [vmem:[%s2125 + $0x90] sm:$0xf]
      %v2163 = vld [vmem:[%s2125 + $0x94] sm:$0xf]
      %v2164 = vld [vmem:[%s2125 + $0x98] sm:$0xf]
      %v2165 = vld [vmem:[%s2125 + $0x9c] sm:$0xf]
      %v2166 = vld [vmem:[%s2125 + $0xa0] sm:$0xf]
      %v2167 = vld [vmem:[%s2125 + $0xa4] sm:$0xf]
      %v2168 = vld [vmem:[%s2125 + $0xa8] sm:$0xf]
      %v2169 = vld [vmem:[%s2125 + $0xac] sm:$0xf]
      %v2170 = vld [vmem:[%s2125 + $0xb0] sm:$0xf]
      %v2171 = vld [vmem:[%s2125 + $0xb4] sm:$0xf]
      %v2172 = vld [vmem:[%s2125 + $0xb8] sm:$0xf]
      %v2173 = vld [vmem:[%s2125 + $0xbc] sm:$0xf]
      %v2174 = vld [vmem:[%s2125 + $0xc0] sm:$0xf]
      %v2175 = vld [vmem:[%s2125 + $0xc4] sm:$0xf]
      %v2176 = vld [vmem:[%s2125 + $0xc8] sm:$0xf]
      %v2177 = vld [vmem:[%s2125 + $0xcc] sm:$0xf]
      %v2178 = vld [vmem:[%s2125 + $0xd0] sm:$0xf]
      %v2179 = vld [vmem:[%s2125 + $0xd4] sm:$0xf]
      %v2180 = vld [vmem:[%s2125 + $0xd8] sm:$0xf]
      %v2181 = vld [vmem:[%s2125 + $0xdc] sm:$0xf]
      %v2182 = vld [vmem:[%s2125 + $0xe0] sm:$0xf]
      %v2183 = vld [vmem:[%s2125 + $0xe4] sm:$0xf]
      %v2184 = vld [vmem:[%s2125 + $0xe8] sm:$0xf]
      %v2185 = vld [vmem:[%s2125 + $0xec] sm:$0xf]
      %v2186 = vld [vmem:[%s2125 + $0xf0] sm:$0xf]
      %v2187 = vld [vmem:[%s2125 + $0xf4] sm:$0xf]
      %v2188 = vld [vmem:[%s2125 + $0xf8] sm:$0xf]
      %v2189 = vld [vmem:[%s2125 + $0xfc] sm:$0xf]
      %v2190 = vld [vmem:[%s2125 + $0x100] sm:$0xf]
      %v2191 = vld [vmem:[%s2125 + $0x104] sm:$0xf]
      %v2192 = vld [vmem:[%s2125 + $0x108] sm:$0xf]
      %v2193 = vld [vmem:[%s2125 + $0x10c] sm:$0xf]
      %v2194 = vld [vmem:[%s2125 + $0x110] sm:$0xf]
      %v2195 = vld [vmem:[%s2125 + $0x114] sm:$0xf]
      %v2196 = vld [vmem:[%s2125 + $0x118] sm:$0xf]
      %v2197 = vld [vmem:[%s2125 + $0x11c] sm:$0xf]
      %v2198 = vld [vmem:[%s2125 + $0x120] sm:$0xf]
      %v2199 = vld [vmem:[%s2125 + $0x124] sm:$0xf]
      %v2200 = vld [vmem:[%s2125 + $0x128] sm:$0xf]
      %v2201 = vld [vmem:[%s2125 + $0x12c] sm:$0xf]
      %v2202 = vld [vmem:[%s2125 + $0x130] sm:$0xf]
      %v2203 = vld [vmem:[%s2125 + $0x134] sm:$0xf]
      %v2204 = vld [vmem:[%s2125 + $0x138] sm:$0xf]
      %v2205 = vld [vmem:[%s2125 + $0x13c] sm:$0xf]
      %v2206 = vld [vmem:[%s2125 + $0x140] sm:$0xf]
      %v2207 = vld [vmem:[%s2125 + $0x144] sm:$0xf]
      %v2208 = vld [vmem:[%s2125 + $0x148] sm:$0xf]
      %v2209 = vld [vmem:[%s2125 + $0x14c] sm:$0xf]
      %v2210 = vld [vmem:[%s2125 + $0x150] sm:$0xf]
      %v2211 = vld [vmem:[%s2125 + $0x154] sm:$0xf]
      %v2212 = vld [vmem:[%s2125 + $0x158] sm:$0xf]
      %v2213 = vld [vmem:[%s2125 + $0x15c] sm:$0xf]
      %v2214 = vld [vmem:[%s2125 + $0x160] sm:$0xf]
      %v2215 = vld [vmem:[%s2125 + $0x164] sm:$0xf]
      %v2216 = vld [vmem:[%s2125 + $0x168] sm:$0xf]
      %v2217 = vld [vmem:[%s2125 + $0x16c] sm:$0xf]
      %v2218 = vld [vmem:[%s2125 + $0x170] sm:$0xf]
      %v2219 = vld [vmem:[%s2125 + $0x174] sm:$0xf]
      %v2220 = vld [vmem:[%s2125 + $0x178] sm:$0xf]
      %v2221 = vld [vmem:[%s2125 + $0x17c] sm:$0xf]
      %v2222 = vld [vmem:[%s2125 + $0x180] sm:$0xf]
      %v2223 = vld [vmem:[%s2125 + $0x184] sm:$0xf]
      %v2224 = vld [vmem:[%s2125 + $0x188] sm:$0xf]
      %v2225 = vld [vmem:[%s2125 + $0x18c] sm:$0xf]
      %v2226 = vld [vmem:[%s2125 + $0x190] sm:$0xf]
      %v2227 = vld [vmem:[%s2125 + $0x194] sm:$0xf]
      %v2228 = vld [vmem:[%s2125 + $0x198] sm:$0xf]
      %v2229 = vld [vmem:[%s2125 + $0x19c] sm:$0xf]
      %v2230 = vld [vmem:[%s2125 + $0x1a0] sm:$0xf]
      %v2231 = vld [vmem:[%s2125 + $0x1a4] sm:$0xf]
      %v2232 = vld [vmem:[%s2125 + $0x1a8] sm:$0xf]
      %v2233 = vld [vmem:[%s2125 + $0x1ac] sm:$0xf]
      %v2234 = vld [vmem:[%s2125 + $0x1b0] sm:$0xf]
      %v2235 = vld [vmem:[%s2125 + $0x1b4] sm:$0xf]
      %v2236 = vld [vmem:[%s2125 + $0x1b8] sm:$0xf]
      %v2237 = vld [vmem:[%s2125 + $0x1bc] sm:$0xf]
      %v2238 = vld [vmem:[%s2125 + $0x1c0] sm:$0xf]
      %v2239 = vld [vmem:[%s2125 + $0x1c4] sm:$0xf]
      %v2240 = vld [vmem:[%s2125 + $0x1c8] sm:$0xf]
      %v2241 = vld [vmem:[%s2125 + $0x1cc] sm:$0xf]
      %v2242 = vld [vmem:[%s2125 + $0x1d0] sm:$0xf]
      %v2243 = vld [vmem:[%s2125 + $0x1d4] sm:$0xf]
      %v2244 = vld [vmem:[%s2125 + $0x1d8] sm:$0xf]
      %v2245 = vld [vmem:[%s2125 + $0x1dc] sm:$0xf]
      %v2246 = vld [vmem:[%s2125 + $0x1e0] sm:$0xf]
      %v2247 = vld [vmem:[%s2125 + $0x1e4] sm:$0xf]
      %v2248 = vld [vmem:[%s2125 + $0x1e8] sm:$0xf]
      %v2249 = vld [vmem:[%s2125 + $0x1ec] sm:$0xf]
      %v2250 = vld [vmem:[%s2125 + $0x1f0] sm:$0xf]
      %v2251 = vld [vmem:[%s2125 + $0x1f4] sm:$0xf]
      %v2252 = vld [vmem:[%s2125 + $0x1f8] sm:$0xf]
      %v2253 = vld [vmem:[%s2125 + $0x1fc] sm:$0xf]
      %s2254 = scalar_lea.vmem %s2, 16
      %v2255 = vld [vmem:[%s2254] sm:$0xf]
      %v2256 = vld [vmem:[%s2254 + $0x4] sm:$0x3]
      %v2385 = vunpack.c.l.b16 %v2126
      %v2386 = vunpack.c.l.b16 %v2127
      %v2387 = vunpack.c.l.b16 %v2128
      %v2388 = vunpack.c.l.b16 %v2129
      %v2389 = vunpack.c.l.b16 %v2130
      %v2390 = vunpack.c.l.b16 %v2131
      %v2391 = vunpack.c.l.b16 %v2132
      %v2392 = vunpack.c.l.b16 %v2133
      %v2393 = vunpack.c.l.b16 %v2134
      %v2394 = vunpack.c.l.b16 %v2135
      %v2395 = vunpack.c.l.b16 %v2136
      %v2396 = vunpack.c.l.b16 %v2137
      %v2397 = vunpack.c.l.b16 %v2138
      %v2398 = vunpack.c.l.b16 %v2139
      %v2399 = vunpack.c.l.b16 %v2140
      %v2400 = vunpack.c.l.b16 %v2141
      %v2401 = vunpack.c.l.b16 %v2142
      %v2402 = vunpack.c.l.b16 %v2143
      %v2403 = vunpack.c.l.b16 %v2144
      %v2404 = vunpack.c.l.b16 %v2145
      %v2405 = vunpack.c.l.b16 %v2146
      %v2406 = vunpack.c.l.b16 %v2147
      %v2407 = vunpack.c.l.b16 %v2148
      %v2408 = vunpack.c.l.b16 %v2149
      %v2409 = vunpack.c.l.b16 %v2150
      %v2410 = vunpack.c.l.b16 %v2151
      %v2411 = vunpack.c.l.b16 %v2152
      %v2412 = vunpack.c.l.b16 %v2153
      %v2413 = vunpack.c.l.b16 %v2154
      %v2414 = vunpack.c.l.b16 %v2155
      %v2415 = vunpack.c.l.b16 %v2156
      %v2416 = vunpack.c.l.b16 %v2157
      %v2417 = vunpack.c.l.b16 %v2158
      %v2418 = vunpack.c.l.b16 %v2159
      %v2419 = vunpack.c.l.b16 %v2160
      %v2420 = vunpack.c.l.b16 %v2161
      %v2421 = vunpack.c.l.b16 %v2162
      %v2422 = vunpack.c.l.b16 %v2163
      %v2423 = vunpack.c.l.b16 %v2164
      %v2424 = vunpack.c.l.b16 %v2165
      %v2425 = vunpack.c.l.b16 %v2166
      %v2426 = vunpack.c.l.b16 %v2167
      %v2427 = vunpack.c.l.b16 %v2168
      %v2428 = vunpack.c.l.b16 %v2169
      %v2429 = vunpack.c.l.b16 %v2170
      %v2430 = vunpack.c.l.b16 %v2171
      %v2431 = vunpack.c.l.b16 %v2172
      %v2432 = vunpack.c.l.b16 %v2173
      %v2433 = vunpack.c.l.b16 %v2174
      %v2434 = vunpack.c.l.b16 %v2175
      %v2435 = vunpack.c.l.b16 %v2176
      %v2436 = vunpack.c.l.b16 %v2177
      %v2437 = vunpack.c.l.b16 %v2178
      %v2438 = vunpack.c.l.b16 %v2179
      %v2439 = vunpack.c.l.b16 %v2180
      %v2440 = vunpack.c.l.b16 %v2181
      %v2441 = vunpack.c.l.b16 %v2182
      %v2442 = vunpack.c.l.b16 %v2183
      %v2443 = vunpack.c.l.b16 %v2184
      %v2444 = vunpack.c.l.b16 %v2185
      %v2445 = vunpack.c.l.b16 %v2186
      %v2446 = vunpack.c.l.b16 %v2187
      %v2447 = vunpack.c.l.b16 %v2188
      %v2448 = vunpack.c.l.b16 %v2189
      %v2449 = vunpack.c.l.b16 %v2190
      %v2450 = vunpack.c.l.b16 %v2191
      %v2451 = vunpack.c.l.b16 %v2192
      %v2452 = vunpack.c.l.b16 %v2193
      %v2453 = vunpack.c.l.b16 %v2194
      %v2454 = vunpack.c.l.b16 %v2195
      %v2455 = vunpack.c.l.b16 %v2196
      %v2456 = vunpack.c.l.b16 %v2197
      %v2457 = vunpack.c.l.b16 %v2198
      %v2458 = vunpack.c.l.b16 %v2199
      %v2459 = vunpack.c.l.b16 %v2200
      %v2460 = vunpack.c.l.b16 %v2201
      %v2461 = vunpack.c.l.b16 %v2202
      %v2462 = vunpack.c.l.b16 %v2203
      %v2463 = vunpack.c.l.b16 %v2204
      %v2464 = vunpack.c.l.b16 %v2205
      %v2465 = vunpack.c.l.b16 %v2206
      %v2466 = vunpack.c.l.b16 %v2207
      %v2467 = vunpack.c.l.b16 %v2208
      %v2468 = vunpack.c.l.b16 %v2209
      %v2469 = vunpack.c.l.b16 %v2210
      %v2470 = vunpack.c.l.b16 %v2211
      %v2471 = vunpack.c.l.b16 %v2212
      %v2472 = vunpack.c.l.b16 %v2213
      %v2473 = vunpack.c.l.b16 %v2214
      %v2474 = vunpack.c.l.b16 %v2215
      %v2475 = vunpack.c.l.b16 %v2216
      %v2476 = vunpack.c.l.b16 %v2217
      %v2477 = vunpack.c.l.b16 %v2218
      %v2478 = vunpack.c.l.b16 %v2219
      %v2479 = vunpack.c.l.b16 %v2220
      %v2480 = vunpack.c.l.b16 %v2221
      %v2481 = vunpack.c.l.b16 %v2222
      %v2482 = vunpack.c.l.b16 %v2223
      %v2483 = vunpack.c.l.b16 %v2224
      %v2484 = vunpack.c.l.b16 %v2225
      %v2485 = vunpack.c.l.b16 %v2226
      %v2486 = vunpack.c.l.b16 %v2227
      %v2487 = vunpack.c.l.b16 %v2228
      %v2488 = vunpack.c.l.b16 %v2229
      %v2489 = vunpack.c.l.b16 %v2230
      %v2490 = vunpack.c.l.b16 %v2231
      %v2491 = vunpack.c.l.b16 %v2232
      %v2492 = vunpack.c.l.b16 %v2233
      %v2493 = vunpack.c.l.b16 %v2234
      %v2494 = vunpack.c.l.b16 %v2235
      %v2495 = vunpack.c.l.b16 %v2236
      %v2496 = vunpack.c.l.b16 %v2237
      %v2497 = vunpack.c.l.b16 %v2238
      %v2498 = vunpack.c.l.b16 %v2239
      %v2499 = vunpack.c.l.b16 %v2240
      %v2500 = vunpack.c.l.b16 %v2241
      %v2501 = vunpack.c.l.b16 %v2242
      %v2502 = vunpack.c.l.b16 %v2243
      %v2503 = vunpack.c.l.b16 %v2244
      %v2504 = vunpack.c.l.b16 %v2245
      %v2505 = vunpack.c.l.b16 %v2246
      %v2506 = vunpack.c.l.b16 %v2247
      %v2507 = vunpack.c.l.b16 %v2248
      %v2508 = vunpack.c.l.b16 %v2249
      %v2509 = vunpack.c.l.b16 %v2250
      %v2510 = vunpack.c.l.b16 %v2251
      %v2511 = vunpack.c.l.b16 %v2252
      %v2512 = vunpack.c.l.b16 %v2253
      %v2513 = vpack.c.b16 %v2386, %v2385
      %v2514 = vpack.c.b16 %v2388, %v2387
      %v2515 = vpack.c.b16 %v2390, %v2389
      %v2516 = vpack.c.b16 %v2392, %v2391
      %v2517 = vpack.c.b16 %v2394, %v2393
      %v2518 = vpack.c.b16 %v2396, %v2395
      %v2519 = vpack.c.b16 %v2398, %v2397
      %v2520 = vpack.c.b16 %v2400, %v2399
      %v2521 = vpack.c.b16 %v2402, %v2401
      %v2522 = vpack.c.b16 %v2404, %v2403
      %v2523 = vpack.c.b16 %v2406, %v2405
      %v2524 = vpack.c.b16 %v2408, %v2407
      %v2525 = vpack.c.b16 %v2410, %v2409
      %v2526 = vpack.c.b16 %v2412, %v2411
      %v2527 = vpack.c.b16 %v2414, %v2413
      %v2528 = vpack.c.b16 %v2416, %v2415
      %v2529 = vpack.c.b16 %v2418, %v2417
      %v2530 = vpack.c.b16 %v2420, %v2419
      %v2531 = vpack.c.b16 %v2422, %v2421
      %v2532 = vpack.c.b16 %v2424, %v2423
      %v2533 = vpack.c.b16 %v2426, %v2425
      %v2534 = vpack.c.b16 %v2428, %v2427
      %v2535 = vpack.c.b16 %v2430, %v2429
      %v2536 = vpack.c.b16 %v2432, %v2431
      %v2537 = vpack.c.b16 %v2434, %v2433
      %v2538 = vpack.c.b16 %v2436, %v2435
      %v2539 = vpack.c.b16 %v2438, %v2437
      %v2540 = vpack.c.b16 %v2440, %v2439
      %v2541 = vpack.c.b16 %v2442, %v2441
      %v2542 = vpack.c.b16 %v2444, %v2443
      %v2543 = vpack.c.b16 %v2446, %v2445
      %v2544 = vpack.c.b16 %v2448, %v2447
      %v2545 = vpack.c.b16 %v2450, %v2449
      %v2546 = vpack.c.b16 %v2452, %v2451
      %v2547 = vpack.c.b16 %v2454, %v2453
      %v2548 = vpack.c.b16 %v2456, %v2455
      %v2549 = vpack.c.b16 %v2458, %v2457
      %v2550 = vpack.c.b16 %v2460, %v2459
      %v2551 = vpack.c.b16 %v2462, %v2461
      %v2552 = vpack.c.b16 %v2464, %v2463
      %v2553 = vpack.c.b16 %v2466, %v2465
      %v2554 = vpack.c.b16 %v2468, %v2467
      %v2555 = vpack.c.b16 %v2470, %v2469
      %v2556 = vpack.c.b16 %v2472, %v2471
      %v2557 = vpack.c.b16 %v2474, %v2473
      %v2558 = vpack.c.b16 %v2476, %v2475
      %v2559 = vpack.c.b16 %v2478, %v2477
      %v2560 = vpack.c.b16 %v2480, %v2479
      %v2561 = vpack.c.b16 %v2482, %v2481
      %v2562 = vpack.c.b16 %v2484, %v2483
      %v2563 = vpack.c.b16 %v2486, %v2485
      %v2564 = vpack.c.b16 %v2488, %v2487
      %v2565 = vpack.c.b16 %v2490, %v2489
      %v2566 = vpack.c.b16 %v2492, %v2491
      %v2567 = vpack.c.b16 %v2494, %v2493
      %v2568 = vpack.c.b16 %v2496, %v2495
      %v2569 = vpack.c.b16 %v2498, %v2497
      %v2570 = vpack.c.b16 %v2500, %v2499
      %v2571 = vpack.c.b16 %v2502, %v2501
      %v2572 = vpack.c.b16 %v2504, %v2503
      %v2573 = vpack.c.b16 %v2506, %v2505
      %v2574 = vpack.c.b16 %v2508, %v2507
      %v2575 = vpack.c.b16 %v2510, %v2509
      %v2576 = vpack.c.b16 %v2512, %v2511
      %v2579 = vunpack.c.l.b16 %v2255
      %v2580 = vunpack.c.l.b16 %v2256
      %v2581 = vpack.c.b16 %v2580, %v2579
      %v2583 = vsel %vm746, %v2513, 0
      %v2586 = vsel %vm746, %v2514, 0
      %v2589 = vsel %vm746, %v2515, 0
      %v2592 = vsel %vm746, %v2516, 0
      %v2595 = vsel %vm746, %v2517, 0
      %v2598 = vsel %vm746, %v2518, 0
      %v2601 = vsel %vm746, %v2519, 0
      %v2604 = vsel %vm746, %v2520, 0
      %v2607 = vsel %vm746, %v2521, 0
      %v2610 = vsel %vm746, %v2522, 0
      %v2613 = vsel %vm746, %v2523, 0
      %v2616 = vsel %vm746, %v2524, 0
      %v2619 = vsel %vm746, %v2525, 0
      %v2622 = vsel %vm746, %v2526, 0
      %v2625 = vsel %vm746, %v2527, 0
      %v2628 = vsel %vm746, %v2528, 0
      %v2631 = vsel %vm746, %v2529, 0
      %v2634 = vsel %vm746, %v2530, 0
      %v2637 = vsel %vm746, %v2531, 0
      %v2640 = vsel %vm746, %v2532, 0
      %v2643 = vsel %vm746, %v2533, 0
      %v2646 = vsel %vm746, %v2534, 0
      %v2649 = vsel %vm746, %v2535, 0
      %v2652 = vsel %vm746, %v2536, 0
      %v2655 = vsel %vm746, %v2537, 0
      %v2658 = vsel %vm746, %v2538, 0
      %v2661 = vsel %vm746, %v2539, 0
      %v2664 = vsel %vm746, %v2540, 0
      %v2667 = vsel %vm746, %v2541, 0
      %v2670 = vsel %vm746, %v2542, 0
      %v2673 = vsel %vm746, %v2543, 0
      %v2676 = vsel %vm746, %v2544, 0
      %v2679 = vsel %vm746, %v2545, 0
      %v2682 = vsel %vm746, %v2546, 0
      %v2685 = vsel %vm746, %v2547, 0
      %v2688 = vsel %vm746, %v2548, 0
      %v2691 = vsel %vm746, %v2549, 0
      %v2694 = vsel %vm746, %v2550, 0
      %v2697 = vsel %vm746, %v2551, 0
      %v2700 = vsel %vm746, %v2552, 0
      %v2703 = vsel %vm746, %v2553, 0
      %v2706 = vsel %vm746, %v2554, 0
      %v2709 = vsel %vm746, %v2555, 0
      %v2712 = vsel %vm746, %v2556, 0
      %v2715 = vsel %vm746, %v2557, 0
      %v2718 = vsel %vm746, %v2558, 0
      %v2721 = vsel %vm746, %v2559, 0
      %v2724 = vsel %vm746, %v2560, 0
      %v2727 = vsel %vm746, %v2561, 0
      %v2730 = vsel %vm746, %v2562, 0
      %v2733 = vsel %vm746, %v2563, 0
      %v2736 = vsel %vm746, %v2564, 0
      %v2739 = vsel %vm746, %v2565, 0
      %v2742 = vsel %vm746, %v2566, 0
      %v2745 = vsel %vm746, %v2567, 0
      %v2748 = vsel %vm746, %v2568, 0
      %v2751 = vsel %vm746, %v2569, 0
      %v2754 = vsel %vm746, %v2570, 0
      %v2757 = vsel %vm746, %v2571, 0
      %v2760 = vsel %vm746, %v2572, 0
      %v2763 = vsel %vm746, %v2573, 0
      %v2766 = vsel %vm746, %v2574, 0
      %v2769 = vsel %vm746, %v2575, 0
      %v2772 = vsel %vm746, %v2576, 0
      %v2775 = vsel %vm939, %v2581, 0
      %2777 = vmatpush.bf16.msra.mxu0 0
      %2778 = vmatpush.bf16.msra.mxu0 0
      %2779 = vmatpush.bf16.msra.mxu0 0
      %2780 = vmatpush.bf16.msra.mxu0 0
      %2781 = vmatpush.bf16.msra.mxu0 0
      %2782 = vmatpush.bf16.msra.mxu0 0
      %2783 = vmatpush.bf16.msra.mxu0 0
      %2784 = vmatpush.bf16.msra.mxu0 %v2775
      %2785 = vmatmul.bf16.gmra.mxu0 %v2583
      %v2786 = vpop.f32.mrf.mxu0
      %v2787 = vadd.f32 0.0, %v2786
      %v2788 = vpop.f32.mrf.mxu0
      %v2789 = vadd.f32 0.0, %v2788
      %2790 = vmatmul.bf16.gmra.mxu0 %v2586
      %v2791 = vpop.f32.mrf.mxu0
      %v2792 = vadd.f32 0.0, %v2791
      %v2793 = vpop.f32.mrf.mxu0
      %v2794 = vadd.f32 0.0, %v2793
      %2795 = vmatmul.bf16.gmra.mxu0 %v2589
      %v2796 = vpop.f32.mrf.mxu0
      %v2797 = vadd.f32 0.0, %v2796
      %v2798 = vpop.f32.mrf.mxu0
      %v2799 = vadd.f32 0.0, %v2798
      %2800 = vmatmul.bf16.gmra.mxu0 %v2592
      %v2801 = vpop.f32.mrf.mxu0
      %v2802 = vadd.f32 0.0, %v2801
      %v2803 = vpop.f32.mrf.mxu0
      %v2804 = vadd.f32 0.0, %v2803
      %2805 = vmatmul.bf16.gmra.mxu0 %v2595
      %v2806 = vpop.f32.mrf.mxu0
      %v2807 = vadd.f32 0.0, %v2806
      %v2808 = vpop.f32.mrf.mxu0
      %v2809 = vadd.f32 0.0, %v2808
      %2810 = vmatmul.bf16.gmra.mxu0 %v2598
      %v2811 = vpop.f32.mrf.mxu0
      %v2812 = vadd.f32 0.0, %v2811
      %v2813 = vpop.f32.mrf.mxu0
      %v2814 = vadd.f32 0.0, %v2813
      %2815 = vmatmul.bf16.gmra.mxu0 %v2601
      %v2816 = vpop.f32.mrf.mxu0
      %v2817 = vadd.f32 0.0, %v2816
      %v2818 = vpop.f32.mrf.mxu0
      %v2819 = vadd.f32 0.0, %v2818
      %2820 = vmatmul.bf16.gmra.mxu0 %v2604
      %v2821 = vpop.f32.mrf.mxu0
      %v2822 = vadd.f32 0.0, %v2821
      %v2823 = vpop.f32.mrf.mxu0
      %v2824 = vadd.f32 0.0, %v2823
      %2825 = vmatmul.bf16.gmra.mxu0 %v2607
      %v2826 = vpop.f32.mrf.mxu0
      %v2827 = vadd.f32 0.0, %v2826
      %v2828 = vpop.f32.mrf.mxu0
      %v2829 = vadd.f32 0.0, %v2828
      %2830 = vmatmul.bf16.gmra.mxu0 %v2610
      %v2831 = vpop.f32.mrf.mxu0
      %v2832 = vadd.f32 0.0, %v2831
      %v2833 = vpop.f32.mrf.mxu0
      %v2834 = vadd.f32 0.0, %v2833
      %2835 = vmatmul.bf16.gmra.mxu0 %v2613
      %v2836 = vpop.f32.mrf.mxu0
      %v2837 = vadd.f32 0.0, %v2836
      %v2838 = vpop.f32.mrf.mxu0
      %v2839 = vadd.f32 0.0, %v2838
      %2840 = vmatmul.bf16.gmra.mxu0 %v2616
      %v2841 = vpop.f32.mrf.mxu0
      %v2842 = vadd.f32 0.0, %v2841
      %v2843 = vpop.f32.mrf.mxu0
      %v2844 = vadd.f32 0.0, %v2843
      %2845 = vmatmul.bf16.gmra.mxu0 %v2619
      %v2846 = vpop.f32.mrf.mxu0
      %v2847 = vadd.f32 0.0, %v2846
      %v2848 = vpop.f32.mrf.mxu0
      %v2849 = vadd.f32 0.0, %v2848
      %2850 = vmatmul.bf16.gmra.mxu0 %v2622
      %v2851 = vpop.f32.mrf.mxu0
      %v2852 = vadd.f32 0.0, %v2851
      %v2853 = vpop.f32.mrf.mxu0
      %v2854 = vadd.f32 0.0, %v2853
      %2855 = vmatmul.bf16.gmra.mxu0 %v2625
      %v2856 = vpop.f32.mrf.mxu0
      %v2857 = vadd.f32 0.0, %v2856
      %v2858 = vpop.f32.mrf.mxu0
      %v2859 = vadd.f32 0.0, %v2858
      %2860 = vmatmul.bf16.gmra.mxu0 %v2628
      %v2861 = vpop.f32.mrf.mxu0
      %v2862 = vadd.f32 0.0, %v2861
      %v2863 = vpop.f32.mrf.mxu0
      %v2864 = vadd.f32 0.0, %v2863
      %2865 = vmatmul.bf16.gmra.mxu0 %v2631
      %v2866 = vpop.f32.mrf.mxu0
      %v2867 = vadd.f32 0.0, %v2866
      %v2868 = vpop.f32.mrf.mxu0
      %v2869 = vadd.f32 0.0, %v2868
      %2870 = vmatmul.bf16.gmra.mxu0 %v2634
      %v2871 = vpop.f32.mrf.mxu0
      %v2872 = vadd.f32 0.0, %v2871
      %v2873 = vpop.f32.mrf.mxu0
      %v2874 = vadd.f32 0.0, %v2873
      %2875 = vmatmul.bf16.gmra.mxu0 %v2637
      %v2876 = vpop.f32.mrf.mxu0
      %v2877 = vadd.f32 0.0, %v2876
      %v2878 = vpop.f32.mrf.mxu0
      %v2879 = vadd.f32 0.0, %v2878
      %2880 = vmatmul.bf16.gmra.mxu0 %v2640
      %v2881 = vpop.f32.mrf.mxu0
      %v2882 = vadd.f32 0.0, %v2881
      %v2883 = vpop.f32.mrf.mxu0
      %v2884 = vadd.f32 0.0, %v2883
      %2885 = vmatmul.bf16.gmra.mxu0 %v2643
      %v2886 = vpop.f32.mrf.mxu0
      %v2887 = vadd.f32 0.0, %v2886
      %v2888 = vpop.f32.mrf.mxu0
      %v2889 = vadd.f32 0.0, %v2888
      %2890 = vmatmul.bf16.gmra.mxu0 %v2646
      %v2891 = vpop.f32.mrf.mxu0
      %v2892 = vadd.f32 0.0, %v2891
      %v2893 = vpop.f32.mrf.mxu0
      %v2894 = vadd.f32 0.0, %v2893
      %2895 = vmatmul.bf16.gmra.mxu0 %v2649
      %v2896 = vpop.f32.mrf.mxu0
      %v2897 = vadd.f32 0.0, %v2896
      %v2898 = vpop.f32.mrf.mxu0
      %v2899 = vadd.f32 0.0, %v2898
      %2900 = vmatmul.bf16.gmra.mxu0 %v2652
      %v2901 = vpop.f32.mrf.mxu0
      %v2902 = vadd.f32 0.0, %v2901
      %v2903 = vpop.f32.mrf.mxu0
      %v2904 = vadd.f32 0.0, %v2903
      %2905 = vmatmul.bf16.gmra.mxu0 %v2655
      %v2906 = vpop.f32.mrf.mxu0
      %v2907 = vadd.f32 0.0, %v2906
      %v2908 = vpop.f32.mrf.mxu0
      %v2909 = vadd.f32 0.0, %v2908
      %2910 = vmatmul.bf16.gmra.mxu0 %v2658
      %v2911 = vpop.f32.mrf.mxu0
      %v2912 = vadd.f32 0.0, %v2911
      %v2913 = vpop.f32.mrf.mxu0
      %v2914 = vadd.f32 0.0, %v2913
      %2915 = vmatmul.bf16.gmra.mxu0 %v2661
      %v2916 = vpop.f32.mrf.mxu0
      %v2917 = vadd.f32 0.0, %v2916
      %v2918 = vpop.f32.mrf.mxu0
      %v2919 = vadd.f32 0.0, %v2918
      %2920 = vmatmul.bf16.gmra.mxu0 %v2664
      %v2921 = vpop.f32.mrf.mxu0
      %v2922 = vadd.f32 0.0, %v2921
      %v2923 = vpop.f32.mrf.mxu0
      %v2924 = vadd.f32 0.0, %v2923
      %2925 = vmatmul.bf16.gmra.mxu0 %v2667
      %v2926 = vpop.f32.mrf.mxu0
      %v2927 = vadd.f32 0.0, %v2926
      %v2928 = vpop.f32.mrf.mxu0
      %v2929 = vadd.f32 0.0, %v2928
      %2930 = vmatmul.bf16.gmra.mxu0 %v2670
      %v2931 = vpop.f32.mrf.mxu0
      %v2932 = vadd.f32 0.0, %v2931
      %v2933 = vpop.f32.mrf.mxu0
      %v2934 = vadd.f32 0.0, %v2933
      %2935 = vmatmul.bf16.gmra.mxu0 %v2673
      %v2936 = vpop.f32.mrf.mxu0
      %v2937 = vadd.f32 0.0, %v2936
      %v2938 = vpop.f32.mrf.mxu0
      %v2939 = vadd.f32 0.0, %v2938
      %2940 = vmatmul.bf16.gmra.mxu0 %v2676
      %v2941 = vpop.f32.mrf.mxu0
      %v2942 = vadd.f32 0.0, %v2941
      %v2943 = vpop.f32.mrf.mxu0
      %v2944 = vadd.f32 0.0, %v2943
      %2945 = vmatmul.bf16.gmra.mxu0 %v2679
      %v2946 = vpop.f32.mrf.mxu0
      %v2947 = vadd.f32 0.0, %v2946
      %v2948 = vpop.f32.mrf.mxu0
      %v2949 = vadd.f32 0.0, %v2948
      %2950 = vmatmul.bf16.gmra.mxu0 %v2682
      %v2951 = vpop.f32.mrf.mxu0
      %v2952 = vadd.f32 0.0, %v2951
      %v2953 = vpop.f32.mrf.mxu0
      %v2954 = vadd.f32 0.0, %v2953
      %2955 = vmatmul.bf16.gmra.mxu0 %v2685
      %v2956 = vpop.f32.mrf.mxu0
      %v2957 = vadd.f32 0.0, %v2956
      %v2958 = vpop.f32.mrf.mxu0
      %v2959 = vadd.f32 0.0, %v2958
      %2960 = vmatmul.bf16.gmra.mxu0 %v2688
      %v2961 = vpop.f32.mrf.mxu0
      %v2962 = vadd.f32 0.0, %v2961
      %v2963 = vpop.f32.mrf.mxu0
      %v2964 = vadd.f32 0.0, %v2963
      %2965 = vmatmul.bf16.gmra.mxu0 %v2691
      %v2966 = vpop.f32.mrf.mxu0
      %v2967 = vadd.f32 0.0, %v2966
      %v2968 = vpop.f32.mrf.mxu0
      %v2969 = vadd.f32 0.0, %v2968
      %2970 = vmatmul.bf16.gmra.mxu0 %v2694
      %v2971 = vpop.f32.mrf.mxu0
      %v2972 = vadd.f32 0.0, %v2971
      %v2973 = vpop.f32.mrf.mxu0
      %v2974 = vadd.f32 0.0, %v2973
      %2975 = vmatmul.bf16.gmra.mxu0 %v2697
      %v2976 = vpop.f32.mrf.mxu0
      %v2977 = vadd.f32 0.0, %v2976
      %v2978 = vpop.f32.mrf.mxu0
      %v2979 = vadd.f32 0.0, %v2978
      %2980 = vmatmul.bf16.gmra.mxu0 %v2700
      %v2981 = vpop.f32.mrf.mxu0
      %v2982 = vadd.f32 0.0, %v2981
      %v2983 = vpop.f32.mrf.mxu0
      %v2984 = vadd.f32 0.0, %v2983
      %2985 = vmatmul.bf16.gmra.mxu0 %v2703
      %v2986 = vpop.f32.mrf.mxu0
      %v2987 = vadd.f32 0.0, %v2986
      %v2988 = vpop.f32.mrf.mxu0
      %v2989 = vadd.f32 0.0, %v2988
      %2990 = vmatmul.bf16.gmra.mxu0 %v2706
      %v2991 = vpop.f32.mrf.mxu0
      %v2992 = vadd.f32 0.0, %v2991
      %v2993 = vpop.f32.mrf.mxu0
      %v2994 = vadd.f32 0.0, %v2993
      %2995 = vmatmul.bf16.gmra.mxu0 %v2709
      %v2996 = vpop.f32.mrf.mxu0
      %v2997 = vadd.f32 0.0, %v2996
      %v2998 = vpop.f32.mrf.mxu0
      %v2999 = vadd.f32 0.0, %v2998
      %3000 = vmatmul.bf16.gmra.mxu0 %v2712
      %v3001 = vpop.f32.mrf.mxu0
      %v3002 = vadd.f32 0.0, %v3001
      %v3003 = vpop.f32.mrf.mxu0
      %v3004 = vadd.f32 0.0, %v3003
      %3005 = vmatmul.bf16.gmra.mxu0 %v2715
      %v3006 = vpop.f32.mrf.mxu0
      %v3007 = vadd.f32 0.0, %v3006
      %v3008 = vpop.f32.mrf.mxu0
      %v3009 = vadd.f32 0.0, %v3008
      %3010 = vmatmul.bf16.gmra.mxu0 %v2718
      %v3011 = vpop.f32.mrf.mxu0
      %v3012 = vadd.f32 0.0, %v3011
      %v3013 = vpop.f32.mrf.mxu0
      %v3014 = vadd.f32 0.0, %v3013
      %3015 = vmatmul.bf16.gmra.mxu0 %v2721
      %v3016 = vpop.f32.mrf.mxu0
      %v3017 = vadd.f32 0.0, %v3016
      %v3018 = vpop.f32.mrf.mxu0
      %v3019 = vadd.f32 0.0, %v3018
      %3020 = vmatmul.bf16.gmra.mxu0 %v2724
      %v3021 = vpop.f32.mrf.mxu0
      %v3022 = vadd.f32 0.0, %v3021
      %v3023 = vpop.f32.mrf.mxu0
      %v3024 = vadd.f32 0.0, %v3023
      %3025 = vmatmul.bf16.gmra.mxu0 %v2727
      %v3026 = vpop.f32.mrf.mxu0
      %v3027 = vadd.f32 0.0, %v3026
      %v3028 = vpop.f32.mrf.mxu0
      %v3029 = vadd.f32 0.0, %v3028
      %3030 = vmatmul.bf16.gmra.mxu0 %v2730
      %v3031 = vpop.f32.mrf.mxu0
      %v3032 = vadd.f32 0.0, %v3031
      %v3033 = vpop.f32.mrf.mxu0
      %v3034 = vadd.f32 0.0, %v3033
      %3035 = vmatmul.bf16.gmra.mxu0 %v2733
      %v3036 = vpop.f32.mrf.mxu0
      %v3037 = vadd.f32 0.0, %v3036
      %v3038 = vpop.f32.mrf.mxu0
      %v3039 = vadd.f32 0.0, %v3038
      %3040 = vmatmul.bf16.gmra.mxu0 %v2736
      %v3041 = vpop.f32.mrf.mxu0
      %v3042 = vadd.f32 0.0, %v3041
      %v3043 = vpop.f32.mrf.mxu0
      %v3044 = vadd.f32 0.0, %v3043
      %3045 = vmatmul.bf16.gmra.mxu0 %v2739
      %v3046 = vpop.f32.mrf.mxu0
      %v3047 = vadd.f32 0.0, %v3046
      %v3048 = vpop.f32.mrf.mxu0
      %v3049 = vadd.f32 0.0, %v3048
      %3050 = vmatmul.bf16.gmra.mxu0 %v2742
      %v3051 = vpop.f32.mrf.mxu0
      %v3052 = vadd.f32 0.0, %v3051
      %v3053 = vpop.f32.mrf.mxu0
      %v3054 = vadd.f32 0.0, %v3053
      %3055 = vmatmul.bf16.gmra.mxu0 %v2745
      %v3056 = vpop.f32.mrf.mxu0
      %v3057 = vadd.f32 0.0, %v3056
      %v3058 = vpop.f32.mrf.mxu0
      %v3059 = vadd.f32 0.0, %v3058
      %3060 = vmatmul.bf16.gmra.mxu0 %v2748
      %v3061 = vpop.f32.mrf.mxu0
      %v3062 = vadd.f32 0.0, %v3061
      %v3063 = vpop.f32.mrf.mxu0
      %v3064 = vadd.f32 0.0, %v3063
      %3065 = vmatmul.bf16.gmra.mxu0 %v2751
      %v3066 = vpop.f32.mrf.mxu0
      %v3067 = vadd.f32 0.0, %v3066
      %v3068 = vpop.f32.mrf.mxu0
      %v3069 = vadd.f32 0.0, %v3068
      %3070 = vmatmul.bf16.gmra.mxu0 %v2754
      %v3071 = vpop.f32.mrf.mxu0
      %v3072 = vadd.f32 0.0, %v3071
      %v3073 = vpop.f32.mrf.mxu0
      %v3074 = vadd.f32 0.0, %v3073
      %3075 = vmatmul.bf16.gmra.mxu0 %v2757
      %v3076 = vpop.f32.mrf.mxu0
      %v3077 = vadd.f32 0.0, %v3076
      %v3078 = vpop.f32.mrf.mxu0
      %v3079 = vadd.f32 0.0, %v3078
      %3080 = vmatmul.bf16.gmra.mxu0 %v2760
      %v3081 = vpop.f32.mrf.mxu0
      %v3082 = vadd.f32 0.0, %v3081
      %v3083 = vpop.f32.mrf.mxu0
      %v3084 = vadd.f32 0.0, %v3083
      %3085 = vmatmul.bf16.gmra.mxu0 %v2763
      %v3086 = vpop.f32.mrf.mxu0
      %v3087 = vadd.f32 0.0, %v3086
      %v3088 = vpop.f32.mrf.mxu0
      %v3089 = vadd.f32 0.0, %v3088
      %3090 = vmatmul.bf16.gmra.mxu0 %v2766
      %v3091 = vpop.f32.mrf.mxu0
      %v3092 = vadd.f32 0.0, %v3091
      %v3093 = vpop.f32.mrf.mxu0
      %v3094 = vadd.f32 0.0, %v3093
      %3095 = vmatmul.bf16.gmra.mxu0 %v2769
      %v3096 = vpop.f32.mrf.mxu0
      %v3097 = vadd.f32 0.0, %v3096
      %v3098 = vpop.f32.mrf.mxu0
      %v3099 = vadd.f32 0.0, %v3098
      %3100 = vmatmul.bf16.gmra.mxu0 %v2772
      %v3101 = vpop.f32.mrf.mxu0
      %v3102 = vadd.f32 0.0, %v3101
      %v3103 = vpop.f32.mrf.mxu0
      %v3104 = vadd.f32 0.0, %v3103
      %3105 = vdwg.mxu0
      %v3106 = vadd.f32 %v1802, %v2787
      %v3107 = vadd.f32 %v1804, %v2789
      %v3108 = vadd.f32 %v1807, %v2792
      %v3109 = vadd.f32 %v1809, %v2794
      %v3110 = vadd.f32 %v1812, %v2797
      %v3111 = vadd.f32 %v1814, %v2799
      %v3112 = vadd.f32 %v1817, %v2802
      %v3113 = vadd.f32 %v1819, %v2804
      %v3114 = vadd.f32 %v1822, %v2807
      %v3115 = vadd.f32 %v1824, %v2809
      %v3116 = vadd.f32 %v1827, %v2812
      %v3117 = vadd.f32 %v1829, %v2814
      %v3118 = vadd.f32 %v1832, %v2817
      %v3119 = vadd.f32 %v1834, %v2819
      %v3120 = vadd.f32 %v1837, %v2822
      %v3121 = vadd.f32 %v1839, %v2824
      %v3122 = vadd.f32 %v1842, %v2827
      %v3123 = vadd.f32 %v1844, %v2829
      %v3124 = vadd.f32 %v1847, %v2832
      %v3125 = vadd.f32 %v1849, %v2834
      %v3126 = vadd.f32 %v1852, %v2837
      %v3127 = vadd.f32 %v1854, %v2839
      %v3128 = vadd.f32 %v1857, %v2842
      %v3129 = vadd.f32 %v1859, %v2844
      %v3130 = vadd.f32 %v1862, %v2847
      %v3131 = vadd.f32 %v1864, %v2849
      %v3132 = vadd.f32 %v1867, %v2852
      %v3133 = vadd.f32 %v1869, %v2854
      %v3134 = vadd.f32 %v1872, %v2857
      %v3135 = vadd.f32 %v1874, %v2859
      %v3136 = vadd.f32 %v1877, %v2862
      %v3137 = vadd.f32 %v1879, %v2864
      %v3138 = vadd.f32 %v1882, %v2867
      %v3139 = vadd.f32 %v1884, %v2869
      %v3140 = vadd.f32 %v1887, %v2872
      %v3141 = vadd.f32 %v1889, %v2874
      %v3142 = vadd.f32 %v1892, %v2877
      %v3143 = vadd.f32 %v1894, %v2879
      %v3144 = vadd.f32 %v1897, %v2882
      %v3145 = vadd.f32 %v1899, %v2884
      %v3146 = vadd.f32 %v1902, %v2887
      %v3147 = vadd.f32 %v1904, %v2889
      %v3148 = vadd.f32 %v1907, %v2892
      %v3149 = vadd.f32 %v1909, %v2894
      %v3150 = vadd.f32 %v1912, %v2897
      %v3151 = vadd.f32 %v1914, %v2899
      %v3152 = vadd.f32 %v1917, %v2902
      %v3153 = vadd.f32 %v1919, %v2904
      %v3154 = vadd.f32 %v1922, %v2907
      %v3155 = vadd.f32 %v1924, %v2909
      %v3156 = vadd.f32 %v1927, %v2912
      %v3157 = vadd.f32 %v1929, %v2914
      %v3158 = vadd.f32 %v1932, %v2917
      %v3159 = vadd.f32 %v1934, %v2919
      %v3160 = vadd.f32 %v1937, %v2922
      %v3161 = vadd.f32 %v1939, %v2924
      %v3162 = vadd.f32 %v1942, %v2927
      %v3163 = vadd.f32 %v1944, %v2929
      %v3164 = vadd.f32 %v1947, %v2932
      %v3165 = vadd.f32 %v1949, %v2934
      %v3166 = vadd.f32 %v1952, %v2937
      %v3167 = vadd.f32 %v1954, %v2939
      %v3168 = vadd.f32 %v1957, %v2942
      %v3169 = vadd.f32 %v1959, %v2944
      %v3170 = vadd.f32 %v1962, %v2947
      %v3171 = vadd.f32 %v1964, %v2949
      %v3172 = vadd.f32 %v1967, %v2952
      %v3173 = vadd.f32 %v1969, %v2954
      %v3174 = vadd.f32 %v1972, %v2957
      %v3175 = vadd.f32 %v1974, %v2959
      %v3176 = vadd.f32 %v1977, %v2962
      %v3177 = vadd.f32 %v1979, %v2964
      %v3178 = vadd.f32 %v1982, %v2967
      %v3179 = vadd.f32 %v1984, %v2969
      %v3180 = vadd.f32 %v1987, %v2972
      %v3181 = vadd.f32 %v1989, %v2974
      %v3182 = vadd.f32 %v1992, %v2977
      %v3183 = vadd.f32 %v1994, %v2979
      %v3184 = vadd.f32 %v1997, %v2982
      %v3185 = vadd.f32 %v1999, %v2984
      %v3186 = vadd.f32 %v2002, %v2987
      %v3187 = vadd.f32 %v2004, %v2989
      %v3188 = vadd.f32 %v2007, %v2992
      %v3189 = vadd.f32 %v2009, %v2994
      %v3190 = vadd.f32 %v2012, %v2997
      %v3191 = vadd.f32 %v2014, %v2999
      %v3192 = vadd.f32 %v2017, %v3002
      %v3193 = vadd.f32 %v2019, %v3004
      %v3194 = vadd.f32 %v2022, %v3007
      %v3195 = vadd.f32 %v2024, %v3009
      %v3196 = vadd.f32 %v2027, %v3012
      %v3197 = vadd.f32 %v2029, %v3014
      %v3198 = vadd.f32 %v2032, %v3017
      %v3199 = vadd.f32 %v2034, %v3019
      %v3200 = vadd.f32 %v2037, %v3022
      %v3201 = vadd.f32 %v2039, %v3024
      %v3202 = vadd.f32 %v2042, %v3027
      %v3203 = vadd.f32 %v2044, %v3029
      %v3204 = vadd.f32 %v2047, %v3032
      %v3205 = vadd.f32 %v2049, %v3034
      %v3206 = vadd.f32 %v2052, %v3037
      %v3207 = vadd.f32 %v2054, %v3039
      %v3208 = vadd.f32 %v2057, %v3042
      %v3209 = vadd.f32 %v2059, %v3044
      %v3210 = vadd.f32 %v2062, %v3047
      %v3211 = vadd.f32 %v2064, %v3049
      %v3212 = vadd.f32 %v2067, %v3052
      %v3213 = vadd.f32 %v2069, %v3054
      %v3214 = vadd.f32 %v2072, %v3057
      %v3215 = vadd.f32 %v2074, %v3059
      %v3216 = vadd.f32 %v2077, %v3062
      %v3217 = vadd.f32 %v2079, %v3064
      %v3218 = vadd.f32 %v2082, %v3067
      %v3219 = vadd.f32 %v2084, %v3069
      %v3220 = vadd.f32 %v2087, %v3072
      %v3221 = vadd.f32 %v2089, %v3074
      %v3222 = vadd.f32 %v2092, %v3077
      %v3223 = vadd.f32 %v2094, %v3079
      %v3224 = vadd.f32 %v2097, %v3082
      %v3225 = vadd.f32 %v2099, %v3084
      %v3226 = vadd.f32 %v2102, %v3087
      %v3227 = vadd.f32 %v2104, %v3089
      %v3228 = vadd.f32 %v2107, %v3092
      %v3229 = vadd.f32 %v2109, %v3094
      %v3230 = vadd.f32 %v2112, %v3097
      %v3231 = vadd.f32 %v2114, %v3099
      %v3232 = vadd.f32 %v2117, %v3102
      %v3233 = vadd.f32 %v2119, %v3104
      %s3234 = smul.addr %s2122, 4
      %s3235 = scalar_lea.vmem %s1, %s3234
      %v3236 = vld [vmem:[%s3235] sm:$0xf]
      %v3237 = vld [vmem:[%s3235 + $0x4] sm:$0xf]
      %v3238 = vld [vmem:[%s3235 + $0x8] sm:$0xf]
      %v3239 = vld [vmem:[%s3235 + $0xc] sm:$0xf]
      %v3240 = vld [vmem:[%s3235 + $0x10] sm:$0xf]
      %v3241 = vld [vmem:[%s3235 + $0x14] sm:$0xf]
      %v3242 = vld [vmem:[%s3235 + $0x18] sm:$0xf]
      %v3243 = vld [vmem:[%s3235 + $0x1c] sm:$0xf]
      %v3244 = vld [vmem:[%s3235 + $0x20] sm:$0xf]
      %v3245 = vld [vmem:[%s3235 + $0x24] sm:$0xf]
      %v3246 = vld [vmem:[%s3235 + $0x28] sm:$0xf]
      %v3247 = vld [vmem:[%s3235 + $0x2c] sm:$0xf]
      %v3248 = vld [vmem:[%s3235 + $0x30] sm:$0xf]
      %v3249 = vld [vmem:[%s3235 + $0x34] sm:$0xf]
      %v3250 = vld [vmem:[%s3235 + $0x38] sm:$0xf]
      %v3251 = vld [vmem:[%s3235 + $0x3c] sm:$0xf]
      %v3252 = vld [vmem:[%s3235 + $0x40] sm:$0xf]
      %v3253 = vld [vmem:[%s3235 + $0x44] sm:$0xf]
      %v3254 = vld [vmem:[%s3235 + $0x48] sm:$0xf]
      %v3255 = vld [vmem:[%s3235 + $0x4c] sm:$0xf]
      %v3256 = vld [vmem:[%s3235 + $0x50] sm:$0xf]
      %v3257 = vld [vmem:[%s3235 + $0x54] sm:$0xf]
      %v3258 = vld [vmem:[%s3235 + $0x58] sm:$0xf]
      %v3259 = vld [vmem:[%s3235 + $0x5c] sm:$0xf]
      %v3260 = vld [vmem:[%s3235 + $0x60] sm:$0xf]
      %v3261 = vld [vmem:[%s3235 + $0x64] sm:$0xf]
      %v3262 = vld [vmem:[%s3235 + $0x68] sm:$0xf]
      %v3263 = vld [vmem:[%s3235 + $0x6c] sm:$0xf]
      %v3264 = vld [vmem:[%s3235 + $0x70] sm:$0xf]
      %v3265 = vld [vmem:[%s3235 + $0x74] sm:$0xf]
      %v3266 = vld [vmem:[%s3235 + $0x78] sm:$0xf]
      %v3267 = vld [vmem:[%s3235 + $0x7c] sm:$0xf]
      %v3268 = vld [vmem:[%s3235 + $0x80] sm:$0xf]
      %v3269 = vld [vmem:[%s3235 + $0x84] sm:$0xf]
      %v3270 = vld [vmem:[%s3235 + $0x88] sm:$0xf]
      %v3271 = vld [vmem:[%s3235 + $0x8c] sm:$0xf]
      %v3272 = vld [vmem:[%s3235 + $0x90] sm:$0xf]
      %v3273 = vld [vmem:[%s3235 + $0x94] sm:$0xf]
      %v3274 = vld [vmem:[%s3235 + $0x98] sm:$0xf]
      %v3275 = vld [vmem:[%s3235 + $0x9c] sm:$0xf]
      %v3276 = vld [vmem:[%s3235 + $0xa0] sm:$0xf]
      %v3277 = vld [vmem:[%s3235 + $0xa4] sm:$0xf]
      %v3278 = vld [vmem:[%s3235 + $0xa8] sm:$0xf]
      %v3279 = vld [vmem:[%s3235 + $0xac] sm:$0xf]
      %v3280 = vld [vmem:[%s3235 + $0xb0] sm:$0xf]
      %v3281 = vld [vmem:[%s3235 + $0xb4] sm:$0xf]
      %v3282 = vld [vmem:[%s3235 + $0xb8] sm:$0xf]
      %v3283 = vld [vmem:[%s3235 + $0xbc] sm:$0xf]
      %v3284 = vld [vmem:[%s3235 + $0xc0] sm:$0xf]
      %v3285 = vld [vmem:[%s3235 + $0xc4] sm:$0xf]
      %v3286 = vld [vmem:[%s3235 + $0xc8] sm:$0xf]
      %v3287 = vld [vmem:[%s3235 + $0xcc] sm:$0xf]
      %v3288 = vld [vmem:[%s3235 + $0xd0] sm:$0xf]
      %v3289 = vld [vmem:[%s3235 + $0xd4] sm:$0xf]
      %v3290 = vld [vmem:[%s3235 + $0xd8] sm:$0xf]
      %v3291 = vld [vmem:[%s3235 + $0xdc] sm:$0xf]
      %v3292 = vld [vmem:[%s3235 + $0xe0] sm:$0xf]
      %v3293 = vld [vmem:[%s3235 + $0xe4] sm:$0xf]
      %v3294 = vld [vmem:[%s3235 + $0xe8] sm:$0xf]
      %v3295 = vld [vmem:[%s3235 + $0xec] sm:$0xf]
      %v3296 = vld [vmem:[%s3235 + $0xf0] sm:$0xf]
      %v3297 = vld [vmem:[%s3235 + $0xf4] sm:$0xf]
      %v3298 = vld [vmem:[%s3235 + $0xf8] sm:$0xf]
      %v3299 = vld [vmem:[%s3235 + $0xfc] sm:$0xf]
      %v3300 = vld [vmem:[%s3235 + $0x100] sm:$0xf]
      %v3301 = vld [vmem:[%s3235 + $0x104] sm:$0xf]
      %v3302 = vld [vmem:[%s3235 + $0x108] sm:$0xf]
      %v3303 = vld [vmem:[%s3235 + $0x10c] sm:$0xf]
      %v3304 = vld [vmem:[%s3235 + $0x110] sm:$0xf]
      %v3305 = vld [vmem:[%s3235 + $0x114] sm:$0xf]
      %v3306 = vld [vmem:[%s3235 + $0x118] sm:$0xf]
      %v3307 = vld [vmem:[%s3235 + $0x11c] sm:$0xf]
      %v3308 = vld [vmem:[%s3235 + $0x120] sm:$0xf]
      %v3309 = vld [vmem:[%s3235 + $0x124] sm:$0xf]
      %v3310 = vld [vmem:[%s3235 + $0x128] sm:$0xf]
      %v3311 = vld [vmem:[%s3235 + $0x12c] sm:$0xf]
      %v3312 = vld [vmem:[%s3235 + $0x130] sm:$0xf]
      %v3313 = vld [vmem:[%s3235 + $0x134] sm:$0xf]
      %v3314 = vld [vmem:[%s3235 + $0x138] sm:$0xf]
      %v3315 = vld [vmem:[%s3235 + $0x13c] sm:$0xf]
      %v3316 = vld [vmem:[%s3235 + $0x140] sm:$0xf]
      %v3317 = vld [vmem:[%s3235 + $0x144] sm:$0xf]
      %v3318 = vld [vmem:[%s3235 + $0x148] sm:$0xf]
      %v3319 = vld [vmem:[%s3235 + $0x14c] sm:$0xf]
      %v3320 = vld [vmem:[%s3235 + $0x150] sm:$0xf]
      %v3321 = vld [vmem:[%s3235 + $0x154] sm:$0xf]
      %v3322 = vld [vmem:[%s3235 + $0x158] sm:$0xf]
      %v3323 = vld [vmem:[%s3235 + $0x15c] sm:$0xf]
      %v3324 = vld [vmem:[%s3235 + $0x160] sm:$0xf]
      %v3325 = vld [vmem:[%s3235 + $0x164] sm:$0xf]
      %v3326 = vld [vmem:[%s3235 + $0x168] sm:$0xf]
      %v3327 = vld [vmem:[%s3235 + $0x16c] sm:$0xf]
      %v3328 = vld [vmem:[%s3235 + $0x170] sm:$0xf]
      %v3329 = vld [vmem:[%s3235 + $0x174] sm:$0xf]
      %v3330 = vld [vmem:[%s3235 + $0x178] sm:$0xf]
      %v3331 = vld [vmem:[%s3235 + $0x17c] sm:$0xf]
      %v3332 = vld [vmem:[%s3235 + $0x180] sm:$0xf]
      %v3333 = vld [vmem:[%s3235 + $0x184] sm:$0xf]
      %v3334 = vld [vmem:[%s3235 + $0x188] sm:$0xf]
      %v3335 = vld [vmem:[%s3235 + $0x18c] sm:$0xf]
      %v3336 = vld [vmem:[%s3235 + $0x190] sm:$0xf]
      %v3337 = vld [vmem:[%s3235 + $0x194] sm:$0xf]
      %v3338 = vld [vmem:[%s3235 + $0x198] sm:$0xf]
      %v3339 = vld [vmem:[%s3235 + $0x19c] sm:$0xf]
      %v3340 = vld [vmem:[%s3235 + $0x1a0] sm:$0xf]
      %v3341 = vld [vmem:[%s3235 + $0x1a4] sm:$0xf]
      %v3342 = vld [vmem:[%s3235 + $0x1a8] sm:$0xf]
      %v3343 = vld [vmem:[%s3235 + $0x1ac] sm:$0xf]
      %v3344 = vld [vmem:[%s3235 + $0x1b0] sm:$0xf]
      %v3345 = vld [vmem:[%s3235 + $0x1b4] sm:$0xf]
      %v3346 = vld [vmem:[%s3235 + $0x1b8] sm:$0xf]
      %v3347 = vld [vmem:[%s3235 + $0x1bc] sm:$0xf]
      %v3348 = vld [vmem:[%s3235 + $0x1c0] sm:$0xf]
      %v3349 = vld [vmem:[%s3235 + $0x1c4] sm:$0xf]
      %v3350 = vld [vmem:[%s3235 + $0x1c8] sm:$0xf]
      %v3351 = vld [vmem:[%s3235 + $0x1cc] sm:$0xf]
      %v3352 = vld [vmem:[%s3235 + $0x1d0] sm:$0xf]
      %v3353 = vld [vmem:[%s3235 + $0x1d4] sm:$0xf]
      %v3354 = vld [vmem:[%s3235 + $0x1d8] sm:$0xf]
      %v3355 = vld [vmem:[%s3235 + $0x1dc] sm:$0xf]
      %v3356 = vld [vmem:[%s3235 + $0x1e0] sm:$0xf]
      %v3357 = vld [vmem:[%s3235 + $0x1e4] sm:$0xf]
      %v3358 = vld [vmem:[%s3235 + $0x1e8] sm:$0xf]
      %v3359 = vld [vmem:[%s3235 + $0x1ec] sm:$0xf]
      %v3360 = vld [vmem:[%s3235 + $0x1f0] sm:$0xf]
      %v3361 = vld [vmem:[%s3235 + $0x1f4] sm:$0xf]
      %v3362 = vld [vmem:[%s3235 + $0x1f8] sm:$0xf]
      %v3363 = vld [vmem:[%s3235 + $0x1fc] sm:$0xf]
      %s3364 = scalar_lea.vmem %s2, 24
      %v3365 = vld [vmem:[%s3364] sm:$0xf]
      %v3366 = vld [vmem:[%s3364 + $0x4] sm:$0x3]
      %v3495 = vunpack.c.l.b16 %v3236
      %v3496 = vunpack.c.l.b16 %v3237
      %v3497 = vunpack.c.l.b16 %v3238
      %v3498 = vunpack.c.l.b16 %v3239
      %v3499 = vunpack.c.l.b16 %v3240
      %v3500 = vunpack.c.l.b16 %v3241
      %v3501 = vunpack.c.l.b16 %v3242
      %v3502 = vunpack.c.l.b16 %v3243
      %v3503 = vunpack.c.l.b16 %v3244
      %v3504 = vunpack.c.l.b16 %v3245
      %v3505 = vunpack.c.l.b16 %v3246
      %v3506 = vunpack.c.l.b16 %v3247
      %v3507 = vunpack.c.l.b16 %v3248
      %v3508 = vunpack.c.l.b16 %v3249
      %v3509 = vunpack.c.l.b16 %v3250
      %v3510 = vunpack.c.l.b16 %v3251
      %v3511 = vunpack.c.l.b16 %v3252
      %v3512 = vunpack.c.l.b16 %v3253
      %v3513 = vunpack.c.l.b16 %v3254
      %v3514 = vunpack.c.l.b16 %v3255
      %v3515 = vunpack.c.l.b16 %v3256
      %v3516 = vunpack.c.l.b16 %v3257
      %v3517 = vunpack.c.l.b16 %v3258
      %v3518 = vunpack.c.l.b16 %v3259
      %v3519 = vunpack.c.l.b16 %v3260
      %v3520 = vunpack.c.l.b16 %v3261
      %v3521 = vunpack.c.l.b16 %v3262
      %v3522 = vunpack.c.l.b16 %v3263
      %v3523 = vunpack.c.l.b16 %v3264
      %v3524 = vunpack.c.l.b16 %v3265
      %v3525 = vunpack.c.l.b16 %v3266
      %v3526 = vunpack.c.l.b16 %v3267
      %v3527 = vunpack.c.l.b16 %v3268
      %v3528 = vunpack.c.l.b16 %v3269
      %v3529 = vunpack.c.l.b16 %v3270
      %v3530 = vunpack.c.l.b16 %v3271
      %v3531 = vunpack.c.l.b16 %v3272
      %v3532 = vunpack.c.l.b16 %v3273
      %v3533 = vunpack.c.l.b16 %v3274
      %v3534 = vunpack.c.l.b16 %v3275
      %v3535 = vunpack.c.l.b16 %v3276
      %v3536 = vunpack.c.l.b16 %v3277
      %v3537 = vunpack.c.l.b16 %v3278
      %v3538 = vunpack.c.l.b16 %v3279
      %v3539 = vunpack.c.l.b16 %v3280
      %v3540 = vunpack.c.l.b16 %v3281
      %v3541 = vunpack.c.l.b16 %v3282
      %v3542 = vunpack.c.l.b16 %v3283
      %v3543 = vunpack.c.l.b16 %v3284
      %v3544 = vunpack.c.l.b16 %v3285
      %v3545 = vunpack.c.l.b16 %v3286
      %v3546 = vunpack.c.l.b16 %v3287
      %v3547 = vunpack.c.l.b16 %v3288
      %v3548 = vunpack.c.l.b16 %v3289
      %v3549 = vunpack.c.l.b16 %v3290
      %v3550 = vunpack.c.l.b16 %v3291
      %v3551 = vunpack.c.l.b16 %v3292
      %v3552 = vunpack.c.l.b16 %v3293
      %v3553 = vunpack.c.l.b16 %v3294
      %v3554 = vunpack.c.l.b16 %v3295
      %v3555 = vunpack.c.l.b16 %v3296
      %v3556 = vunpack.c.l.b16 %v3297
      %v3557 = vunpack.c.l.b16 %v3298
      %v3558 = vunpack.c.l.b16 %v3299
      %v3559 = vunpack.c.l.b16 %v3300
      %v3560 = vunpack.c.l.b16 %v3301
      %v3561 = vunpack.c.l.b16 %v3302
      %v3562 = vunpack.c.l.b16 %v3303
      %v3563 = vunpack.c.l.b16 %v3304
      %v3564 = vunpack.c.l.b16 %v3305
      %v3565 = vunpack.c.l.b16 %v3306
      %v3566 = vunpack.c.l.b16 %v3307
      %v3567 = vunpack.c.l.b16 %v3308
      %v3568 = vunpack.c.l.b16 %v3309
      %v3569 = vunpack.c.l.b16 %v3310
      %v3570 = vunpack.c.l.b16 %v3311
      %v3571 = vunpack.c.l.b16 %v3312
      %v3572 = vunpack.c.l.b16 %v3313
      %v3573 = vunpack.c.l.b16 %v3314
      %v3574 = vunpack.c.l.b16 %v3315
      %v3575 = vunpack.c.l.b16 %v3316
      %v3576 = vunpack.c.l.b16 %v3317
      %v3577 = vunpack.c.l.b16 %v3318
      %v3578 = vunpack.c.l.b16 %v3319
      %v3579 = vunpack.c.l.b16 %v3320
      %v3580 = vunpack.c.l.b16 %v3321
      %v3581 = vunpack.c.l.b16 %v3322
      %v3582 = vunpack.c.l.b16 %v3323
      %v3583 = vunpack.c.l.b16 %v3324
      %v3584 = vunpack.c.l.b16 %v3325
      %v3585 = vunpack.c.l.b16 %v3326
      %v3586 = vunpack.c.l.b16 %v3327
      %v3587 = vunpack.c.l.b16 %v3328
      %v3588 = vunpack.c.l.b16 %v3329
      %v3589 = vunpack.c.l.b16 %v3330
      %v3590 = vunpack.c.l.b16 %v3331
      %v3591 = vunpack.c.l.b16 %v3332
      %v3592 = vunpack.c.l.b16 %v3333
      %v3593 = vunpack.c.l.b16 %v3334
      %v3594 = vunpack.c.l.b16 %v3335
      %v3595 = vunpack.c.l.b16 %v3336
      %v3596 = vunpack.c.l.b16 %v3337
      %v3597 = vunpack.c.l.b16 %v3338
      %v3598 = vunpack.c.l.b16 %v3339
      %v3599 = vunpack.c.l.b16 %v3340
      %v3600 = vunpack.c.l.b16 %v3341
      %v3601 = vunpack.c.l.b16 %v3342
      %v3602 = vunpack.c.l.b16 %v3343
      %v3603 = vunpack.c.l.b16 %v3344
      %v3604 = vunpack.c.l.b16 %v3345
      %v3605 = vunpack.c.l.b16 %v3346
      %v3606 = vunpack.c.l.b16 %v3347
      %v3607 = vunpack.c.l.b16 %v3348
      %v3608 = vunpack.c.l.b16 %v3349
      %v3609 = vunpack.c.l.b16 %v3350
      %v3610 = vunpack.c.l.b16 %v3351
      %v3611 = vunpack.c.l.b16 %v3352
      %v3612 = vunpack.c.l.b16 %v3353
      %v3613 = vunpack.c.l.b16 %v3354
      %v3614 = vunpack.c.l.b16 %v3355
      %v3615 = vunpack.c.l.b16 %v3356
      %v3616 = vunpack.c.l.b16 %v3357
      %v3617 = vunpack.c.l.b16 %v3358
      %v3618 = vunpack.c.l.b16 %v3359
      %v3619 = vunpack.c.l.b16 %v3360
      %v3620 = vunpack.c.l.b16 %v3361
      %v3621 = vunpack.c.l.b16 %v3362
      %v3622 = vunpack.c.l.b16 %v3363
      %v3623 = vpack.c.b16 %v3496, %v3495
      %v3624 = vpack.c.b16 %v3498, %v3497
      %v3625 = vpack.c.b16 %v3500, %v3499
      %v3626 = vpack.c.b16 %v3502, %v3501
      %v3627 = vpack.c.b16 %v3504, %v3503
      %v3628 = vpack.c.b16 %v3506, %v3505
      %v3629 = vpack.c.b16 %v3508, %v3507
      %v3630 = vpack.c.b16 %v3510, %v3509
      %v3631 = vpack.c.b16 %v3512, %v3511
      %v3632 = vpack.c.b16 %v3514, %v3513
      %v3633 = vpack.c.b16 %v3516, %v3515
      %v3634 = vpack.c.b16 %v3518, %v3517
      %v3635 = vpack.c.b16 %v3520, %v3519
      %v3636 = vpack.c.b16 %v3522, %v3521
      %v3637 = vpack.c.b16 %v3524, %v3523
      %v3638 = vpack.c.b16 %v3526, %v3525
      %v3639 = vpack.c.b16 %v3528, %v3527
      %v3640 = vpack.c.b16 %v3530, %v3529
      %v3641 = vpack.c.b16 %v3532, %v3531
      %v3642 = vpack.c.b16 %v3534, %v3533
      %v3643 = vpack.c.b16 %v3536, %v3535
      %v3644 = vpack.c.b16 %v3538, %v3537
      %v3645 = vpack.c.b16 %v3540, %v3539
      %v3646 = vpack.c.b16 %v3542, %v3541
      %v3647 = vpack.c.b16 %v3544, %v3543
      %v3648 = vpack.c.b16 %v3546, %v3545
      %v3649 = vpack.c.b16 %v3548, %v3547
      %v3650 = vpack.c.b16 %v3550, %v3549
      %v3651 = vpack.c.b16 %v3552, %v3551
      %v3652 = vpack.c.b16 %v3554, %v3553
      %v3653 = vpack.c.b16 %v3556, %v3555
      %v3654 = vpack.c.b16 %v3558, %v3557
      %v3655 = vpack.c.b16 %v3560, %v3559
      %v3656 = vpack.c.b16 %v3562, %v3561
      %v3657 = vpack.c.b16 %v3564, %v3563
      %v3658 = vpack.c.b16 %v3566, %v3565
      %v3659 = vpack.c.b16 %v3568, %v3567
      %v3660 = vpack.c.b16 %v3570, %v3569
      %v3661 = vpack.c.b16 %v3572, %v3571
      %v3662 = vpack.c.b16 %v3574, %v3573
      %v3663 = vpack.c.b16 %v3576, %v3575
      %v3664 = vpack.c.b16 %v3578, %v3577
      %v3665 = vpack.c.b16 %v3580, %v3579
      %v3666 = vpack.c.b16 %v3582, %v3581
      %v3667 = vpack.c.b16 %v3584, %v3583
      %v3668 = vpack.c.b16 %v3586, %v3585
      %v3669 = vpack.c.b16 %v3588, %v3587
      %v3670 = vpack.c.b16 %v3590, %v3589
      %v3671 = vpack.c.b16 %v3592, %v3591
      %v3672 = vpack.c.b16 %v3594, %v3593
      %v3673 = vpack.c.b16 %v3596, %v3595
      %v3674 = vpack.c.b16 %v3598, %v3597
      %v3675 = vpack.c.b16 %v3600, %v3599
      %v3676 = vpack.c.b16 %v3602, %v3601
      %v3677 = vpack.c.b16 %v3604, %v3603
      %v3678 = vpack.c.b16 %v3606, %v3605
      %v3679 = vpack.c.b16 %v3608, %v3607
      %v3680 = vpack.c.b16 %v3610, %v3609
      %v3681 = vpack.c.b16 %v3612, %v3611
      %v3682 = vpack.c.b16 %v3614, %v3613
      %v3683 = vpack.c.b16 %v3616, %v3615
      %v3684 = vpack.c.b16 %v3618, %v3617
      %v3685 = vpack.c.b16 %v3620, %v3619
      %v3686 = vpack.c.b16 %v3622, %v3621
      %v3689 = vunpack.c.l.b16 %v3365
      %v3690 = vunpack.c.l.b16 %v3366
      %v3691 = vpack.c.b16 %v3690, %v3689
      %v3693 = vsel %vm746, %v3623, 0
      %v3696 = vsel %vm746, %v3624, 0
      %v3699 = vsel %vm746, %v3625, 0
      %v3702 = vsel %vm746, %v3626, 0
      %v3705 = vsel %vm746, %v3627, 0
      %v3708 = vsel %vm746, %v3628, 0
      %v3711 = vsel %vm746, %v3629, 0
      %v3714 = vsel %vm746, %v3630, 0
      %v3717 = vsel %vm746, %v3631, 0
      %v3720 = vsel %vm746, %v3632, 0
      %v3723 = vsel %vm746, %v3633, 0
      %v3726 = vsel %vm746, %v3634, 0
      %v3729 = vsel %vm746, %v3635, 0
      %v3732 = vsel %vm746, %v3636, 0
      %v3735 = vsel %vm746, %v3637, 0
      %v3738 = vsel %vm746, %v3638, 0
      %v3741 = vsel %vm746, %v3639, 0
      %v3744 = vsel %vm746, %v3640, 0
      %v3747 = vsel %vm746, %v3641, 0
      %v3750 = vsel %vm746, %v3642, 0
      %v3753 = vsel %vm746, %v3643, 0
      %v3756 = vsel %vm746, %v3644, 0
      %v3759 = vsel %vm746, %v3645, 0
      %v3762 = vsel %vm746, %v3646, 0
      %v3765 = vsel %vm746, %v3647, 0
      %v3768 = vsel %vm746, %v3648, 0
      %v3771 = vsel %vm746, %v3649, 0
      %v3774 = vsel %vm746, %v3650, 0
      %v3777 = vsel %vm746, %v3651, 0
      %v3780 = vsel %vm746, %v3652, 0
      %v3783 = vsel %vm746, %v3653, 0
      %v3786 = vsel %vm746, %v3654, 0
      %v3789 = vsel %vm746, %v3655, 0
      %v3792 = vsel %vm746, %v3656, 0
      %v3795 = vsel %vm746, %v3657, 0
      %v3798 = vsel %vm746, %v3658, 0
      %v3801 = vsel %vm746, %v3659, 0
      %v3804 = vsel %vm746, %v3660, 0
      %v3807 = vsel %vm746, %v3661, 0
      %v3810 = vsel %vm746, %v3662, 0
      %v3813 = vsel %vm746, %v3663, 0
      %v3816 = vsel %vm746, %v3664, 0
      %v3819 = vsel %vm746, %v3665, 0
      %v3822 = vsel %vm746, %v3666, 0
      %v3825 = vsel %vm746, %v3667, 0
      %v3828 = vsel %vm746, %v3668, 0
      %v3831 = vsel %vm746, %v3669, 0
      %v3834 = vsel %vm746, %v3670, 0
      %v3837 = vsel %vm746, %v3671, 0
      %v3840 = vsel %vm746, %v3672, 0
      %v3843 = vsel %vm746, %v3673, 0
      %v3846 = vsel %vm746, %v3674, 0
      %v3849 = vsel %vm746, %v3675, 0
      %v3852 = vsel %vm746, %v3676, 0
      %v3855 = vsel %vm746, %v3677, 0
      %v3858 = vsel %vm746, %v3678, 0
      %v3861 = vsel %vm746, %v3679, 0
      %v3864 = vsel %vm746, %v3680, 0
      %v3867 = vsel %vm746, %v3681, 0
      %v3870 = vsel %vm746, %v3682, 0
      %v3873 = vsel %vm746, %v3683, 0
      %v3876 = vsel %vm746, %v3684, 0
      %v3879 = vsel %vm746, %v3685, 0
      %v3882 = vsel %vm746, %v3686, 0
      %v3885 = vsel %vm939, %v3691, 0
      %3887 = vmatpush.bf16.msra.mxu0 0
      %3888 = vmatpush.bf16.msra.mxu0 0
      %3889 = vmatpush.bf16.msra.mxu0 0
      %3890 = vmatpush.bf16.msra.mxu0 0
      %3891 = vmatpush.bf16.msra.mxu0 0
      %3892 = vmatpush.bf16.msra.mxu0 0
      %3893 = vmatpush.bf16.msra.mxu0 0
      %3894 = vmatpush.bf16.msra.mxu0 %v3885
      %3895 = vmatmul.bf16.gmra.mxu0 %v3693
      %v3896 = vpop.f32.mrf.mxu0
      %v3897 = vadd.f32 0.0, %v3896
      %v3898 = vpop.f32.mrf.mxu0
      %v3899 = vadd.f32 0.0, %v3898
      %3900 = vmatmul.bf16.gmra.mxu0 %v3696
      %v3901 = vpop.f32.mrf.mxu0
      %v3902 = vadd.f32 0.0, %v3901
      %v3903 = vpop.f32.mrf.mxu0
      %v3904 = vadd.f32 0.0, %v3903
      %3905 = vmatmul.bf16.gmra.mxu0 %v3699
      %v3906 = vpop.f32.mrf.mxu0
      %v3907 = vadd.f32 0.0, %v3906
      %v3908 = vpop.f32.mrf.mxu0
      %v3909 = vadd.f32 0.0, %v3908
      %3910 = vmatmul.bf16.gmra.mxu0 %v3702
      %v3911 = vpop.f32.mrf.mxu0
      %v3912 = vadd.f32 0.0, %v3911
      %v3913 = vpop.f32.mrf.mxu0
      %v3914 = vadd.f32 0.0, %v3913
      %3915 = vmatmul.bf16.gmra.mxu0 %v3705
      %v3916 = vpop.f32.mrf.mxu0
      %v3917 = vadd.f32 0.0, %v3916
      %v3918 = vpop.f32.mrf.mxu0
      %v3919 = vadd.f32 0.0, %v3918
      %3920 = vmatmul.bf16.gmra.mxu0 %v3708
      %v3921 = vpop.f32.mrf.mxu0
      %v3922 = vadd.f32 0.0, %v3921
      %v3923 = vpop.f32.mrf.mxu0
      %v3924 = vadd.f32 0.0, %v3923
      %3925 = vmatmul.bf16.gmra.mxu0 %v3711
      %v3926 = vpop.f32.mrf.mxu0
      %v3927 = vadd.f32 0.0, %v3926
      %v3928 = vpop.f32.mrf.mxu0
      %v3929 = vadd.f32 0.0, %v3928
      %3930 = vmatmul.bf16.gmra.mxu0 %v3714
      %v3931 = vpop.f32.mrf.mxu0
      %v3932 = vadd.f32 0.0, %v3931
      %v3933 = vpop.f32.mrf.mxu0
      %v3934 = vadd.f32 0.0, %v3933
      %3935 = vmatmul.bf16.gmra.mxu0 %v3717
      %v3936 = vpop.f32.mrf.mxu0
      %v3937 = vadd.f32 0.0, %v3936
      %v3938 = vpop.f32.mrf.mxu0
      %v3939 = vadd.f32 0.0, %v3938
      %3940 = vmatmul.bf16.gmra.mxu0 %v3720
      %v3941 = vpop.f32.mrf.mxu0
      %v3942 = vadd.f32 0.0, %v3941
      %v3943 = vpop.f32.mrf.mxu0
      %v3944 = vadd.f32 0.0, %v3943
      %3945 = vmatmul.bf16.gmra.mxu0 %v3723
      %v3946 = vpop.f32.mrf.mxu0
      %v3947 = vadd.f32 0.0, %v3946
      %v3948 = vpop.f32.mrf.mxu0
      %v3949 = vadd.f32 0.0, %v3948
      %3950 = vmatmul.bf16.gmra.mxu0 %v3726
      %v3951 = vpop.f32.mrf.mxu0
      %v3952 = vadd.f32 0.0, %v3951
      %v3953 = vpop.f32.mrf.mxu0
      %v3954 = vadd.f32 0.0, %v3953
      %3955 = vmatmul.bf16.gmra.mxu0 %v3729
      %v3956 = vpop.f32.mrf.mxu0
      %v3957 = vadd.f32 0.0, %v3956
      %v3958 = vpop.f32.mrf.mxu0
      %v3959 = vadd.f32 0.0, %v3958
      %3960 = vmatmul.bf16.gmra.mxu0 %v3732
      %v3961 = vpop.f32.mrf.mxu0
      %v3962 = vadd.f32 0.0, %v3961
      %v3963 = vpop.f32.mrf.mxu0
      %v3964 = vadd.f32 0.0, %v3963
      %3965 = vmatmul.bf16.gmra.mxu0 %v3735
      %v3966 = vpop.f32.mrf.mxu0
      %v3967 = vadd.f32 0.0, %v3966
      %v3968 = vpop.f32.mrf.mxu0
      %v3969 = vadd.f32 0.0, %v3968
      %3970 = vmatmul.bf16.gmra.mxu0 %v3738
      %v3971 = vpop.f32.mrf.mxu0
      %v3972 = vadd.f32 0.0, %v3971
      %v3973 = vpop.f32.mrf.mxu0
      %v3974 = vadd.f32 0.0, %v3973
      %3975 = vmatmul.bf16.gmra.mxu0 %v3741
      %v3976 = vpop.f32.mrf.mxu0
      %v3977 = vadd.f32 0.0, %v3976
      %v3978 = vpop.f32.mrf.mxu0
      %v3979 = vadd.f32 0.0, %v3978
      %3980 = vmatmul.bf16.gmra.mxu0 %v3744
      %v3981 = vpop.f32.mrf.mxu0
      %v3982 = vadd.f32 0.0, %v3981
      %v3983 = vpop.f32.mrf.mxu0
      %v3984 = vadd.f32 0.0, %v3983
      %3985 = vmatmul.bf16.gmra.mxu0 %v3747
      %v3986 = vpop.f32.mrf.mxu0
      %v3987 = vadd.f32 0.0, %v3986
      %v3988 = vpop.f32.mrf.mxu0
      %v3989 = vadd.f32 0.0, %v3988
      %3990 = vmatmul.bf16.gmra.mxu0 %v3750
      %v3991 = vpop.f32.mrf.mxu0
      %v3992 = vadd.f32 0.0, %v3991
      %v3993 = vpop.f32.mrf.mxu0
      %v3994 = vadd.f32 0.0, %v3993
      %3995 = vmatmul.bf16.gmra.mxu0 %v3753
      %v3996 = vpop.f32.mrf.mxu0
      %v3997 = vadd.f32 0.0, %v3996
      %v3998 = vpop.f32.mrf.mxu0
      %v3999 = vadd.f32 0.0, %v3998
      %4000 = vmatmul.bf16.gmra.mxu0 %v3756
      %v4001 = vpop.f32.mrf.mxu0
      %v4002 = vadd.f32 0.0, %v4001
      %v4003 = vpop.f32.mrf.mxu0
      %v4004 = vadd.f32 0.0, %v4003
      %4005 = vmatmul.bf16.gmra.mxu0 %v3759
      %v4006 = vpop.f32.mrf.mxu0
      %v4007 = vadd.f32 0.0, %v4006
      %v4008 = vpop.f32.mrf.mxu0
      %v4009 = vadd.f32 0.0, %v4008
      %4010 = vmatmul.bf16.gmra.mxu0 %v3762
      %v4011 = vpop.f32.mrf.mxu0
      %v4012 = vadd.f32 0.0, %v4011
      %v4013 = vpop.f32.mrf.mxu0
      %v4014 = vadd.f32 0.0, %v4013
      %4015 = vmatmul.bf16.gmra.mxu0 %v3765
      %v4016 = vpop.f32.mrf.mxu0
      %v4017 = vadd.f32 0.0, %v4016
      %v4018 = vpop.f32.mrf.mxu0
      %v4019 = vadd.f32 0.0, %v4018
      %4020 = vmatmul.bf16.gmra.mxu0 %v3768
      %v4021 = vpop.f32.mrf.mxu0
      %v4022 = vadd.f32 0.0, %v4021
      %v4023 = vpop.f32.mrf.mxu0
      %v4024 = vadd.f32 0.0, %v4023
      %4025 = vmatmul.bf16.gmra.mxu0 %v3771
      %v4026 = vpop.f32.mrf.mxu0
      %v4027 = vadd.f32 0.0, %v4026
      %v4028 = vpop.f32.mrf.mxu0
      %v4029 = vadd.f32 0.0, %v4028
      %4030 = vmatmul.bf16.gmra.mxu0 %v3774
      %v4031 = vpop.f32.mrf.mxu0
      %v4032 = vadd.f32 0.0, %v4031
      %v4033 = vpop.f32.mrf.mxu0
      %v4034 = vadd.f32 0.0, %v4033
      %4035 = vmatmul.bf16.gmra.mxu0 %v3777
      %v4036 = vpop.f32.mrf.mxu0
      %v4037 = vadd.f32 0.0, %v4036
      %v4038 = vpop.f32.mrf.mxu0
      %v4039 = vadd.f32 0.0, %v4038
      %4040 = vmatmul.bf16.gmra.mxu0 %v3780
      %v4041 = vpop.f32.mrf.mxu0
      %v4042 = vadd.f32 0.0, %v4041
      %v4043 = vpop.f32.mrf.mxu0
      %v4044 = vadd.f32 0.0, %v4043
      %4045 = vmatmul.bf16.gmra.mxu0 %v3783
      %v4046 = vpop.f32.mrf.mxu0
      %v4047 = vadd.f32 0.0, %v4046
      %v4048 = vpop.f32.mrf.mxu0
      %v4049 = vadd.f32 0.0, %v4048
      %4050 = vmatmul.bf16.gmra.mxu0 %v3786
      %v4051 = vpop.f32.mrf.mxu0
      %v4052 = vadd.f32 0.0, %v4051
      %v4053 = vpop.f32.mrf.mxu0
      %v4054 = vadd.f32 0.0, %v4053
      %4055 = vmatmul.bf16.gmra.mxu0 %v3789
      %v4056 = vpop.f32.mrf.mxu0
      %v4057 = vadd.f32 0.0, %v4056
      %v4058 = vpop.f32.mrf.mxu0
      %v4059 = vadd.f32 0.0, %v4058
      %4060 = vmatmul.bf16.gmra.mxu0 %v3792
      %v4061 = vpop.f32.mrf.mxu0
      %v4062 = vadd.f32 0.0, %v4061
      %v4063 = vpop.f32.mrf.mxu0
      %v4064 = vadd.f32 0.0, %v4063
      %4065 = vmatmul.bf16.gmra.mxu0 %v3795
      %v4066 = vpop.f32.mrf.mxu0
      %v4067 = vadd.f32 0.0, %v4066
      %v4068 = vpop.f32.mrf.mxu0
      %v4069 = vadd.f32 0.0, %v4068
      %4070 = vmatmul.bf16.gmra.mxu0 %v3798
      %v4071 = vpop.f32.mrf.mxu0
      %v4072 = vadd.f32 0.0, %v4071
      %v4073 = vpop.f32.mrf.mxu0
      %v4074 = vadd.f32 0.0, %v4073
      %4075 = vmatmul.bf16.gmra.mxu0 %v3801
      %v4076 = vpop.f32.mrf.mxu0
      %v4077 = vadd.f32 0.0, %v4076
      %v4078 = vpop.f32.mrf.mxu0
      %v4079 = vadd.f32 0.0, %v4078
      %4080 = vmatmul.bf16.gmra.mxu0 %v3804
      %v4081 = vpop.f32.mrf.mxu0
      %v4082 = vadd.f32 0.0, %v4081
      %v4083 = vpop.f32.mrf.mxu0
      %v4084 = vadd.f32 0.0, %v4083
      %4085 = vmatmul.bf16.gmra.mxu0 %v3807
      %v4086 = vpop.f32.mrf.mxu0
      %v4087 = vadd.f32 0.0, %v4086
      %v4088 = vpop.f32.mrf.mxu0
      %v4089 = vadd.f32 0.0, %v4088
      %4090 = vmatmul.bf16.gmra.mxu0 %v3810
      %v4091 = vpop.f32.mrf.mxu0
      %v4092 = vadd.f32 0.0, %v4091
      %v4093 = vpop.f32.mrf.mxu0
      %v4094 = vadd.f32 0.0, %v4093
      %4095 = vmatmul.bf16.gmra.mxu0 %v3813
      %v4096 = vpop.f32.mrf.mxu0
      %v4097 = vadd.f32 0.0, %v4096
      %v4098 = vpop.f32.mrf.mxu0
      %v4099 = vadd.f32 0.0, %v4098
      %4100 = vmatmul.bf16.gmra.mxu0 %v3816
      %v4101 = vpop.f32.mrf.mxu0
      %v4102 = vadd.f32 0.0, %v4101
      %v4103 = vpop.f32.mrf.mxu0
      %v4104 = vadd.f32 0.0, %v4103
      %4105 = vmatmul.bf16.gmra.mxu0 %v3819
      %v4106 = vpop.f32.mrf.mxu0
      %v4107 = vadd.f32 0.0, %v4106
      %v4108 = vpop.f32.mrf.mxu0
      %v4109 = vadd.f32 0.0, %v4108
      %4110 = vmatmul.bf16.gmra.mxu0 %v3822
      %v4111 = vpop.f32.mrf.mxu0
      %v4112 = vadd.f32 0.0, %v4111
      %v4113 = vpop.f32.mrf.mxu0
      %v4114 = vadd.f32 0.0, %v4113
      %4115 = vmatmul.bf16.gmra.mxu0 %v3825
      %v4116 = vpop.f32.mrf.mxu0
      %v4117 = vadd.f32 0.0, %v4116
      %v4118 = vpop.f32.mrf.mxu0
      %v4119 = vadd.f32 0.0, %v4118
      %4120 = vmatmul.bf16.gmra.mxu0 %v3828
      %v4121 = vpop.f32.mrf.mxu0
      %v4122 = vadd.f32 0.0, %v4121
      %v4123 = vpop.f32.mrf.mxu0
      %v4124 = vadd.f32 0.0, %v4123
      %4125 = vmatmul.bf16.gmra.mxu0 %v3831
      %v4126 = vpop.f32.mrf.mxu0
      %v4127 = vadd.f32 0.0, %v4126
      %v4128 = vpop.f32.mrf.mxu0
      %v4129 = vadd.f32 0.0, %v4128
      %4130 = vmatmul.bf16.gmra.mxu0 %v3834
      %v4131 = vpop.f32.mrf.mxu0
      %v4132 = vadd.f32 0.0, %v4131
      %v4133 = vpop.f32.mrf.mxu0
      %v4134 = vadd.f32 0.0, %v4133
      %4135 = vmatmul.bf16.gmra.mxu0 %v3837
      %v4136 = vpop.f32.mrf.mxu0
      %v4137 = vadd.f32 0.0, %v4136
      %v4138 = vpop.f32.mrf.mxu0
      %v4139 = vadd.f32 0.0, %v4138
      %4140 = vmatmul.bf16.gmra.mxu0 %v3840
      %v4141 = vpop.f32.mrf.mxu0
      %v4142 = vadd.f32 0.0, %v4141
      %v4143 = vpop.f32.mrf.mxu0
      %v4144 = vadd.f32 0.0, %v4143
      %4145 = vmatmul.bf16.gmra.mxu0 %v3843
      %v4146 = vpop.f32.mrf.mxu0
      %v4147 = vadd.f32 0.0, %v4146
      %v4148 = vpop.f32.mrf.mxu0
      %v4149 = vadd.f32 0.0, %v4148
      %4150 = vmatmul.bf16.gmra.mxu0 %v3846
      %v4151 = vpop.f32.mrf.mxu0
      %v4152 = vadd.f32 0.0, %v4151
      %v4153 = vpop.f32.mrf.mxu0
      %v4154 = vadd.f32 0.0, %v4153
      %4155 = vmatmul.bf16.gmra.mxu0 %v3849
      %v4156 = vpop.f32.mrf.mxu0
      %v4157 = vadd.f32 0.0, %v4156
      %v4158 = vpop.f32.mrf.mxu0
      %v4159 = vadd.f32 0.0, %v4158
      %4160 = vmatmul.bf16.gmra.mxu0 %v3852
      %v4161 = vpop.f32.mrf.mxu0
      %v4162 = vadd.f32 0.0, %v4161
      %v4163 = vpop.f32.mrf.mxu0
      %v4164 = vadd.f32 0.0, %v4163
      %4165 = vmatmul.bf16.gmra.mxu0 %v3855
      %v4166 = vpop.f32.mrf.mxu0
      %v4167 = vadd.f32 0.0, %v4166
      %v4168 = vpop.f32.mrf.mxu0
      %v4169 = vadd.f32 0.0, %v4168
      %4170 = vmatmul.bf16.gmra.mxu0 %v3858
      %v4171 = vpop.f32.mrf.mxu0
      %v4172 = vadd.f32 0.0, %v4171
      %v4173 = vpop.f32.mrf.mxu0
      %v4174 = vadd.f32 0.0, %v4173
      %4175 = vmatmul.bf16.gmra.mxu0 %v3861
      %v4176 = vpop.f32.mrf.mxu0
      %v4177 = vadd.f32 0.0, %v4176
      %v4178 = vpop.f32.mrf.mxu0
      %v4179 = vadd.f32 0.0, %v4178
      %4180 = vmatmul.bf16.gmra.mxu0 %v3864
      %v4181 = vpop.f32.mrf.mxu0
      %v4182 = vadd.f32 0.0, %v4181
      %v4183 = vpop.f32.mrf.mxu0
      %v4184 = vadd.f32 0.0, %v4183
      %4185 = vmatmul.bf16.gmra.mxu0 %v3867
      %v4186 = vpop.f32.mrf.mxu0
      %v4187 = vadd.f32 0.0, %v4186
      %v4188 = vpop.f32.mrf.mxu0
      %v4189 = vadd.f32 0.0, %v4188
      %4190 = vmatmul.bf16.gmra.mxu0 %v3870
      %v4191 = vpop.f32.mrf.mxu0
      %v4192 = vadd.f32 0.0, %v4191
      %v4193 = vpop.f32.mrf.mxu0
      %v4194 = vadd.f32 0.0, %v4193
      %4195 = vmatmul.bf16.gmra.mxu0 %v3873
      %v4196 = vpop.f32.mrf.mxu0
      %v4197 = vadd.f32 0.0, %v4196
      %v4198 = vpop.f32.mrf.mxu0
      %v4199 = vadd.f32 0.0, %v4198
      %4200 = vmatmul.bf16.gmra.mxu0 %v3876
      %v4201 = vpop.f32.mrf.mxu0
      %v4202 = vadd.f32 0.0, %v4201
      %v4203 = vpop.f32.mrf.mxu0
      %v4204 = vadd.f32 0.0, %v4203
      %4205 = vmatmul.bf16.gmra.mxu0 %v3879
      %v4206 = vpop.f32.mrf.mxu0
      %v4207 = vadd.f32 0.0, %v4206
      %v4208 = vpop.f32.mrf.mxu0
      %v4209 = vadd.f32 0.0, %v4208
      %4210 = vmatmul.bf16.gmra.mxu0 %v3882
      %v4211 = vpop.f32.mrf.mxu0
      %v4212 = vadd.f32 0.0, %v4211
      %v4213 = vpop.f32.mrf.mxu0
      %v4214 = vadd.f32 0.0, %v4213
      %4215 = vdwg.mxu0
      %v4216 = vadd.f32 %v3106, %v3897
      %v4217 = vadd.f32 %v3107, %v3899
      %v4218 = vadd.f32 %v3108, %v3902
      %v4219 = vadd.f32 %v3109, %v3904
      %v4220 = vadd.f32 %v3110, %v3907
      %v4221 = vadd.f32 %v3111, %v3909
      %v4222 = vadd.f32 %v3112, %v3912
      %v4223 = vadd.f32 %v3113, %v3914
      %v4224 = vadd.f32 %v3114, %v3917
      %v4225 = vadd.f32 %v3115, %v3919
      %v4226 = vadd.f32 %v3116, %v3922
      %v4227 = vadd.f32 %v3117, %v3924
      %v4228 = vadd.f32 %v3118, %v3927
      %v4229 = vadd.f32 %v3119, %v3929
      %v4230 = vadd.f32 %v3120, %v3932
      %v4231 = vadd.f32 %v3121, %v3934
      %v4232 = vadd.f32 %v3122, %v3937
      %v4233 = vadd.f32 %v3123, %v3939
      %v4234 = vadd.f32 %v3124, %v3942
      %v4235 = vadd.f32 %v3125, %v3944
      %v4236 = vadd.f32 %v3126, %v3947
      %v4237 = vadd.f32 %v3127, %v3949
      %v4238 = vadd.f32 %v3128, %v3952
      %v4239 = vadd.f32 %v3129, %v3954
      %v4240 = vadd.f32 %v3130, %v3957
      %v4241 = vadd.f32 %v3131, %v3959
      %v4242 = vadd.f32 %v3132, %v3962
      %v4243 = vadd.f32 %v3133, %v3964
      %v4244 = vadd.f32 %v3134, %v3967
      %v4245 = vadd.f32 %v3135, %v3969
      %v4246 = vadd.f32 %v3136, %v3972
      %v4247 = vadd.f32 %v3137, %v3974
      %v4248 = vadd.f32 %v3138, %v3977
      %v4249 = vadd.f32 %v3139, %v3979
      %v4250 = vadd.f32 %v3140, %v3982
      %v4251 = vadd.f32 %v3141, %v3984
      %v4252 = vadd.f32 %v3142, %v3987
      %v4253 = vadd.f32 %v3143, %v3989
      %v4254 = vadd.f32 %v3144, %v3992
      %v4255 = vadd.f32 %v3145, %v3994
      %v4256 = vadd.f32 %v3146, %v3997
      %v4257 = vadd.f32 %v3147, %v3999
      %v4258 = vadd.f32 %v3148, %v4002
      %v4259 = vadd.f32 %v3149, %v4004
      %v4260 = vadd.f32 %v3150, %v4007
      %v4261 = vadd.f32 %v3151, %v4009
      %v4262 = vadd.f32 %v3152, %v4012
      %v4263 = vadd.f32 %v3153, %v4014
      %v4264 = vadd.f32 %v3154, %v4017
      %v4265 = vadd.f32 %v3155, %v4019
      %v4266 = vadd.f32 %v3156, %v4022
      %v4267 = vadd.f32 %v3157, %v4024
      %v4268 = vadd.f32 %v3158, %v4027
      %v4269 = vadd.f32 %v3159, %v4029
      %v4270 = vadd.f32 %v3160, %v4032
      %v4271 = vadd.f32 %v3161, %v4034
      %v4272 = vadd.f32 %v3162, %v4037
      %v4273 = vadd.f32 %v3163, %v4039
      %v4274 = vadd.f32 %v3164, %v4042
      %v4275 = vadd.f32 %v3165, %v4044
      %v4276 = vadd.f32 %v3166, %v4047
      %v4277 = vadd.f32 %v3167, %v4049
      %v4278 = vadd.f32 %v3168, %v4052
      %v4279 = vadd.f32 %v3169, %v4054
      %v4280 = vadd.f32 %v3170, %v4057
      %v4281 = vadd.f32 %v3171, %v4059
      %v4282 = vadd.f32 %v3172, %v4062
      %v4283 = vadd.f32 %v3173, %v4064
      %v4284 = vadd.f32 %v3174, %v4067
      %v4285 = vadd.f32 %v3175, %v4069
      %v4286 = vadd.f32 %v3176, %v4072
      %v4287 = vadd.f32 %v3177, %v4074
      %v4288 = vadd.f32 %v3178, %v4077
      %v4289 = vadd.f32 %v3179, %v4079
      %v4290 = vadd.f32 %v3180, %v4082
      %v4291 = vadd.f32 %v3181, %v4084
      %v4292 = vadd.f32 %v3182, %v4087
      %v4293 = vadd.f32 %v3183, %v4089
      %v4294 = vadd.f32 %v3184, %v4092
      %v4295 = vadd.f32 %v3185, %v4094
      %v4296 = vadd.f32 %v3186, %v4097
      %v4297 = vadd.f32 %v3187, %v4099
      %v4298 = vadd.f32 %v3188, %v4102
      %v4299 = vadd.f32 %v3189, %v4104
      %v4300 = vadd.f32 %v3190, %v4107
      %v4301 = vadd.f32 %v3191, %v4109
      %v4302 = vadd.f32 %v3192, %v4112
      %v4303 = vadd.f32 %v3193, %v4114
      %v4304 = vadd.f32 %v3194, %v4117
      %v4305 = vadd.f32 %v3195, %v4119
      %v4306 = vadd.f32 %v3196, %v4122
      %v4307 = vadd.f32 %v3197, %v4124
      %v4308 = vadd.f32 %v3198, %v4127
      %v4309 = vadd.f32 %v3199, %v4129
      %v4310 = vadd.f32 %v3200, %v4132
      %v4311 = vadd.f32 %v3201, %v4134
      %v4312 = vadd.f32 %v3202, %v4137
      %v4313 = vadd.f32 %v3203, %v4139
      %v4314 = vadd.f32 %v3204, %v4142
      %v4315 = vadd.f32 %v3205, %v4144
      %v4316 = vadd.f32 %v3206, %v4147
      %v4317 = vadd.f32 %v3207, %v4149
      %v4318 = vadd.f32 %v3208, %v4152
      %v4319 = vadd.f32 %v3209, %v4154
      %v4320 = vadd.f32 %v3210, %v4157
      %v4321 = vadd.f32 %v3211, %v4159
      %v4322 = vadd.f32 %v3212, %v4162
      %v4323 = vadd.f32 %v3213, %v4164
      %v4324 = vadd.f32 %v3214, %v4167
      %v4325 = vadd.f32 %v3215, %v4169
      %v4326 = vadd.f32 %v3216, %v4172
      %v4327 = vadd.f32 %v3217, %v4174
      %v4328 = vadd.f32 %v3218, %v4177
      %v4329 = vadd.f32 %v3219, %v4179
      %v4330 = vadd.f32 %v3220, %v4182
      %v4331 = vadd.f32 %v3221, %v4184
      %v4332 = vadd.f32 %v3222, %v4187
      %v4333 = vadd.f32 %v3223, %v4189
      %v4334 = vadd.f32 %v3224, %v4192
      %v4335 = vadd.f32 %v3225, %v4194
      %v4336 = vadd.f32 %v3226, %v4197
      %v4337 = vadd.f32 %v3227, %v4199
      %v4338 = vadd.f32 %v3228, %v4202
      %v4339 = vadd.f32 %v3229, %v4204
      %v4340 = vadd.f32 %v3230, %v4207
      %v4341 = vadd.f32 %v3231, %v4209
      %v4342 = vadd.f32 %v3232, %v4212
      %v4343 = vadd.f32 %v3233, %v4214
      %v4344 = vmul.f32 %v4216, 0.2
      %v4345 = vmul.f32 %v4217, 0.2
      %v4346 = vmul.f32 %v4218, 0.2
      %v4347 = vmul.f32 %v4219, 0.2
      %v4348 = vmul.f32 %v4220, 0.2
      %v4349 = vmul.f32 %v4221, 0.2
      %v4350 = vmul.f32 %v4222, 0.2
      %v4351 = vmul.f32 %v4223, 0.2
      %v4352 = vmul.f32 %v4224, 0.2
      %v4353 = vmul.f32 %v4225, 0.2
      %v4354 = vmul.f32 %v4226, 0.2
      %v4355 = vmul.f32 %v4227, 0.2
      %v4356 = vmul.f32 %v4228, 0.2
      %v4357 = vmul.f32 %v4229, 0.2
      %v4358 = vmul.f32 %v4230, 0.2
      %v4359 = vmul.f32 %v4231, 0.2
      %v4360 = vmul.f32 %v4232, 0.2
      %v4361 = vmul.f32 %v4233, 0.2
      %v4362 = vmul.f32 %v4234, 0.2
      %v4363 = vmul.f32 %v4235, 0.2
      %v4364 = vmul.f32 %v4236, 0.2
      %v4365 = vmul.f32 %v4237, 0.2
      %v4366 = vmul.f32 %v4238, 0.2
      %v4367 = vmul.f32 %v4239, 0.2
      %v4368 = vmul.f32 %v4240, 0.2
      %v4369 = vmul.f32 %v4241, 0.2
      %v4370 = vmul.f32 %v4242, 0.2
      %v4371 = vmul.f32 %v4243, 0.2
      %v4372 = vmul.f32 %v4244, 0.2
      %v4373 = vmul.f32 %v4245, 0.2
      %v4374 = vmul.f32 %v4246, 0.2
      %v4375 = vmul.f32 %v4247, 0.2
      %v4376 = vmul.f32 %v4248, 0.2
      %v4377 = vmul.f32 %v4249, 0.2
      %v4378 = vmul.f32 %v4250, 0.2
      %v4379 = vmul.f32 %v4251, 0.2
      %v4380 = vmul.f32 %v4252, 0.2
      %v4381 = vmul.f32 %v4253, 0.2
      %v4382 = vmul.f32 %v4254, 0.2
      %v4383 = vmul.f32 %v4255, 0.2
      %v4384 = vmul.f32 %v4256, 0.2
      %v4385 = vmul.f32 %v4257, 0.2
      %v4386 = vmul.f32 %v4258, 0.2
      %v4387 = vmul.f32 %v4259, 0.2
      %v4388 = vmul.f32 %v4260, 0.2
      %v4389 = vmul.f32 %v4261, 0.2
      %v4390 = vmul.f32 %v4262, 0.2
      %v4391 = vmul.f32 %v4263, 0.2
      %v4392 = vmul.f32 %v4264, 0.2
      %v4393 = vmul.f32 %v4265, 0.2
      %v4394 = vmul.f32 %v4266, 0.2
      %v4395 = vmul.f32 %v4267, 0.2
      %v4396 = vmul.f32 %v4268, 0.2
      %v4397 = vmul.f32 %v4269, 0.2
      %v4398 = vmul.f32 %v4270, 0.2
      %v4399 = vmul.f32 %v4271, 0.2
      %v4400 = vmul.f32 %v4272, 0.2
      %v4401 = vmul.f32 %v4273, 0.2
      %v4402 = vmul.f32 %v4274, 0.2
      %v4403 = vmul.f32 %v4275, 0.2
      %v4404 = vmul.f32 %v4276, 0.2
      %v4405 = vmul.f32 %v4277, 0.2
      %v4406 = vmul.f32 %v4278, 0.2
      %v4407 = vmul.f32 %v4279, 0.2
      %v4408 = vmul.f32 %v4280, 0.2
      %v4409 = vmul.f32 %v4281, 0.2
      %v4410 = vmul.f32 %v4282, 0.2
      %v4411 = vmul.f32 %v4283, 0.2
      %v4412 = vmul.f32 %v4284, 0.2
      %v4413 = vmul.f32 %v4285, 0.2
      %v4414 = vmul.f32 %v4286, 0.2
      %v4415 = vmul.f32 %v4287, 0.2
      %v4416 = vmul.f32 %v4288, 0.2
      %v4417 = vmul.f32 %v4289, 0.2
      %v4418 = vmul.f32 %v4290, 0.2
      %v4419 = vmul.f32 %v4291, 0.2
      %v4420 = vmul.f32 %v4292, 0.2
      %v4421 = vmul.f32 %v4293, 0.2
      %v4422 = vmul.f32 %v4294, 0.2
      %v4423 = vmul.f32 %v4295, 0.2
      %v4424 = vmul.f32 %v4296, 0.2
      %v4425 = vmul.f32 %v4297, 0.2
      %v4426 = vmul.f32 %v4298, 0.2
      %v4427 = vmul.f32 %v4299, 0.2
      %v4428 = vmul.f32 %v4300, 0.2
      %v4429 = vmul.f32 %v4301, 0.2
      %v4430 = vmul.f32 %v4302, 0.2
      %v4431 = vmul.f32 %v4303, 0.2
      %v4432 = vmul.f32 %v4304, 0.2
      %v4433 = vmul.f32 %v4305, 0.2
      %v4434 = vmul.f32 %v4306, 0.2
      %v4435 = vmul.f32 %v4307, 0.2
      %v4436 = vmul.f32 %v4308, 0.2
      %v4437 = vmul.f32 %v4309, 0.2
      %v4438 = vmul.f32 %v4310, 0.2
      %v4439 = vmul.f32 %v4311, 0.2
      %v4440 = vmul.f32 %v4312, 0.2
      %v4441 = vmul.f32 %v4313, 0.2
      %v4442 = vmul.f32 %v4314, 0.2
      %v4443 = vmul.f32 %v4315, 0.2
      %v4444 = vmul.f32 %v4316, 0.2
      %v4445 = vmul.f32 %v4317, 0.2
      %v4446 = vmul.f32 %v4318, 0.2
      %v4447 = vmul.f32 %v4319, 0.2
      %v4448 = vmul.f32 %v4320, 0.2
      %v4449 = vmul.f32 %v4321, 0.2
      %v4450 = vmul.f32 %v4322, 0.2
      %v4451 = vmul.f32 %v4323, 0.2
      %v4452 = vmul.f32 %v4324, 0.2
      %v4453 = vmul.f32 %v4325, 0.2
      %v4454 = vmul.f32 %v4326, 0.2
      %v4455 = vmul.f32 %v4327, 0.2
      %v4456 = vmul.f32 %v4328, 0.2
      %v4457 = vmul.f32 %v4329, 0.2
      %v4458 = vmul.f32 %v4330, 0.2
      %v4459 = vmul.f32 %v4331, 0.2
      %v4460 = vmul.f32 %v4332, 0.2
      %v4461 = vmul.f32 %v4333, 0.2
      %v4462 = vmul.f32 %v4334, 0.2
      %v4463 = vmul.f32 %v4335, 0.2
      %v4464 = vmul.f32 %v4336, 0.2
      %v4465 = vmul.f32 %v4337, 0.2
      %v4466 = vmul.f32 %v4338, 0.2
      %v4467 = vmul.f32 %v4339, 0.2
      %v4468 = vmul.f32 %v4340, 0.2
      %v4469 = vmul.f32 %v4341, 0.2
      %v4470 = vmul.f32 %v4342, 0.2
      %v4471 = vmul.f32 %v4343, 0.2
      %v4472 = vmax.f32 %v4216, %v4344
      %v4473 = vmax.f32 %v4217, %v4345
      %v4474 = vmax.f32 %v4218, %v4346
      %v4475 = vmax.f32 %v4219, %v4347
      %v4476 = vmax.f32 %v4220, %v4348
      %v4477 = vmax.f32 %v4221, %v4349
      %v4478 = vmax.f32 %v4222, %v4350
      %v4479 = vmax.f32 %v4223, %v4351
      %v4480 = vmax.f32 %v4224, %v4352
      %v4481 = vmax.f32 %v4225, %v4353
      %v4482 = vmax.f32 %v4226, %v4354
      %v4483 = vmax.f32 %v4227, %v4355
      %v4484 = vmax.f32 %v4228, %v4356
      %v4485 = vmax.f32 %v4229, %v4357
      %v4486 = vmax.f32 %v4230, %v4358
      %v4487 = vmax.f32 %v4231, %v4359
      %v4488 = vmax.f32 %v4232, %v4360
      %v4489 = vmax.f32 %v4233, %v4361
      %v4490 = vmax.f32 %v4234, %v4362
      %v4491 = vmax.f32 %v4235, %v4363
      %v4492 = vmax.f32 %v4236, %v4364
      %v4493 = vmax.f32 %v4237, %v4365
      %v4494 = vmax.f32 %v4238, %v4366
      %v4495 = vmax.f32 %v4239, %v4367
      %v4496 = vmax.f32 %v4240, %v4368
      %v4497 = vmax.f32 %v4241, %v4369
      %v4498 = vmax.f32 %v4242, %v4370
      %v4499 = vmax.f32 %v4243, %v4371
      %v4500 = vmax.f32 %v4244, %v4372
      %v4501 = vmax.f32 %v4245, %v4373
      %v4502 = vmax.f32 %v4246, %v4374
      %v4503 = vmax.f32 %v4247, %v4375
      %v4504 = vmax.f32 %v4248, %v4376
      %v4505 = vmax.f32 %v4249, %v4377
      %v4506 = vmax.f32 %v4250, %v4378
      %v4507 = vmax.f32 %v4251, %v4379
      %v4508 = vmax.f32 %v4252, %v4380
      %v4509 = vmax.f32 %v4253, %v4381
      %v4510 = vmax.f32 %v4254, %v4382
      %v4511 = vmax.f32 %v4255, %v4383
      %v4512 = vmax.f32 %v4256, %v4384
      %v4513 = vmax.f32 %v4257, %v4385
      %v4514 = vmax.f32 %v4258, %v4386
      %v4515 = vmax.f32 %v4259, %v4387
      %v4516 = vmax.f32 %v4260, %v4388
      %v4517 = vmax.f32 %v4261, %v4389
      %v4518 = vmax.f32 %v4262, %v4390
      %v4519 = vmax.f32 %v4263, %v4391
      %v4520 = vmax.f32 %v4264, %v4392
      %v4521 = vmax.f32 %v4265, %v4393
      %v4522 = vmax.f32 %v4266, %v4394
      %v4523 = vmax.f32 %v4267, %v4395
      %v4524 = vmax.f32 %v4268, %v4396
      %v4525 = vmax.f32 %v4269, %v4397
      %v4526 = vmax.f32 %v4270, %v4398
      %v4527 = vmax.f32 %v4271, %v4399
      %v4528 = vmax.f32 %v4272, %v4400
      %v4529 = vmax.f32 %v4273, %v4401
      %v4530 = vmax.f32 %v4274, %v4402
      %v4531 = vmax.f32 %v4275, %v4403
      %v4532 = vmax.f32 %v4276, %v4404
      %v4533 = vmax.f32 %v4277, %v4405
      %v4534 = vmax.f32 %v4278, %v4406
      %v4535 = vmax.f32 %v4279, %v4407
      %v4536 = vmax.f32 %v4280, %v4408
      %v4537 = vmax.f32 %v4281, %v4409
      %v4538 = vmax.f32 %v4282, %v4410
      %v4539 = vmax.f32 %v4283, %v4411
      %v4540 = vmax.f32 %v4284, %v4412
      %v4541 = vmax.f32 %v4285, %v4413
      %v4542 = vmax.f32 %v4286, %v4414
      %v4543 = vmax.f32 %v4287, %v4415
      %v4544 = vmax.f32 %v4288, %v4416
      %v4545 = vmax.f32 %v4289, %v4417
      %v4546 = vmax.f32 %v4290, %v4418
      %v4547 = vmax.f32 %v4291, %v4419
      %v4548 = vmax.f32 %v4292, %v4420
      %v4549 = vmax.f32 %v4293, %v4421
      %v4550 = vmax.f32 %v4294, %v4422
      %v4551 = vmax.f32 %v4295, %v4423
      %v4552 = vmax.f32 %v4296, %v4424
      %v4553 = vmax.f32 %v4297, %v4425
      %v4554 = vmax.f32 %v4298, %v4426
      %v4555 = vmax.f32 %v4299, %v4427
      %v4556 = vmax.f32 %v4300, %v4428
      %v4557 = vmax.f32 %v4301, %v4429
      %v4558 = vmax.f32 %v4302, %v4430
      %v4559 = vmax.f32 %v4303, %v4431
      %v4560 = vmax.f32 %v4304, %v4432
      %v4561 = vmax.f32 %v4305, %v4433
      %v4562 = vmax.f32 %v4306, %v4434
      %v4563 = vmax.f32 %v4307, %v4435
      %v4564 = vmax.f32 %v4308, %v4436
      %v4565 = vmax.f32 %v4309, %v4437
      %v4566 = vmax.f32 %v4310, %v4438
      %v4567 = vmax.f32 %v4311, %v4439
      %v4568 = vmax.f32 %v4312, %v4440
      %v4569 = vmax.f32 %v4313, %v4441
      %v4570 = vmax.f32 %v4314, %v4442
      %v4571 = vmax.f32 %v4315, %v4443
      %v4572 = vmax.f32 %v4316, %v4444
      %v4573 = vmax.f32 %v4317, %v4445
      %v4574 = vmax.f32 %v4318, %v4446
      %v4575 = vmax.f32 %v4319, %v4447
      %v4576 = vmax.f32 %v4320, %v4448
      %v4577 = vmax.f32 %v4321, %v4449
      %v4578 = vmax.f32 %v4322, %v4450
      %v4579 = vmax.f32 %v4323, %v4451
      %v4580 = vmax.f32 %v4324, %v4452
      %v4581 = vmax.f32 %v4325, %v4453
      %v4582 = vmax.f32 %v4326, %v4454
      %v4583 = vmax.f32 %v4327, %v4455
      %v4584 = vmax.f32 %v4328, %v4456
      %v4585 = vmax.f32 %v4329, %v4457
      %v4586 = vmax.f32 %v4330, %v4458
      %v4587 = vmax.f32 %v4331, %v4459
      %v4588 = vmax.f32 %v4332, %v4460
      %v4589 = vmax.f32 %v4333, %v4461
      %v4590 = vmax.f32 %v4334, %v4462
      %v4591 = vmax.f32 %v4335, %v4463
      %v4592 = vmax.f32 %v4336, %v4464
      %v4593 = vmax.f32 %v4337, %v4465
      %v4594 = vmax.f32 %v4338, %v4466
      %v4595 = vmax.f32 %v4339, %v4467
      %v4596 = vmax.f32 %v4340, %v4468
      %v4597 = vmax.f32 %v4341, %v4469
      %v4598 = vmax.f32 %v4342, %v4470
      %v4599 = vmax.f32 %v4343, %v4471
      %v4600 = vpack.c.bf16 %v4472, %v4472
      %v4601 = vpack.c.bf16 %v4473, %v4473
      %v4602 = vpack.c.bf16 %v4474, %v4474
      %v4603 = vpack.c.bf16 %v4475, %v4475
      %v4604 = vpack.c.bf16 %v4476, %v4476
      %v4605 = vpack.c.bf16 %v4477, %v4477
      %v4606 = vpack.c.bf16 %v4478, %v4478
      %v4607 = vpack.c.bf16 %v4479, %v4479
      %v4608 = vpack.c.bf16 %v4480, %v4480
      %v4609 = vpack.c.bf16 %v4481, %v4481
      %v4610 = vpack.c.bf16 %v4482, %v4482
      %v4611 = vpack.c.bf16 %v4483, %v4483
      %v4612 = vpack.c.bf16 %v4484, %v4484
      %v4613 = vpack.c.bf16 %v4485, %v4485
      %v4614 = vpack.c.bf16 %v4486, %v4486
      %v4615 = vpack.c.bf16 %v4487, %v4487
      %v4616 = vpack.c.bf16 %v4488, %v4488
      %v4617 = vpack.c.bf16 %v4489, %v4489
      %v4618 = vpack.c.bf16 %v4490, %v4490
      %v4619 = vpack.c.bf16 %v4491, %v4491
      %v4620 = vpack.c.bf16 %v4492, %v4492
      %v4621 = vpack.c.bf16 %v4493, %v4493
      %v4622 = vpack.c.bf16 %v4494, %v4494
      %v4623 = vpack.c.bf16 %v4495, %v4495
      %v4624 = vpack.c.bf16 %v4496, %v4496
      %v4625 = vpack.c.bf16 %v4497, %v4497
      %v4626 = vpack.c.bf16 %v4498, %v4498
      %v4627 = vpack.c.bf16 %v4499, %v4499
      %v4628 = vpack.c.bf16 %v4500, %v4500
      %v4629 = vpack.c.bf16 %v4501, %v4501
      %v4630 = vpack.c.bf16 %v4502, %v4502
      %v4631 = vpack.c.bf16 %v4503, %v4503
      %v4632 = vpack.c.bf16 %v4504, %v4504
      %v4633 = vpack.c.bf16 %v4505, %v4505
      %v4634 = vpack.c.bf16 %v4506, %v4506
      %v4635 = vpack.c.bf16 %v4507, %v4507
      %v4636 = vpack.c.bf16 %v4508, %v4508
      %v4637 = vpack.c.bf16 %v4509, %v4509
      %v4638 = vpack.c.bf16 %v4510, %v4510
      %v4639 = vpack.c.bf16 %v4511, %v4511
      %v4640 = vpack.c.bf16 %v4512, %v4512
      %v4641 = vpack.c.bf16 %v4513, %v4513
      %v4642 = vpack.c.bf16 %v4514, %v4514
      %v4643 = vpack.c.bf16 %v4515, %v4515
      %v4644 = vpack.c.bf16 %v4516, %v4516
      %v4645 = vpack.c.bf16 %v4517, %v4517
      %v4646 = vpack.c.bf16 %v4518, %v4518
      %v4647 = vpack.c.bf16 %v4519, %v4519
      %v4648 = vpack.c.bf16 %v4520, %v4520
      %v4649 = vpack.c.bf16 %v4521, %v4521
      %v4650 = vpack.c.bf16 %v4522, %v4522
      %v4651 = vpack.c.bf16 %v4523, %v4523
      %v4652 = vpack.c.bf16 %v4524, %v4524
      %v4653 = vpack.c.bf16 %v4525, %v4525
      %v4654 = vpack.c.bf16 %v4526, %v4526
      %v4655 = vpack.c.bf16 %v4527, %v4527
      %v4656 = vpack.c.bf16 %v4528, %v4528
      %v4657 = vpack.c.bf16 %v4529, %v4529
      %v4658 = vpack.c.bf16 %v4530, %v4530
      %v4659 = vpack.c.bf16 %v4531, %v4531
      %v4660 = vpack.c.bf16 %v4532, %v4532
      %v4661 = vpack.c.bf16 %v4533, %v4533
      %v4662 = vpack.c.bf16 %v4534, %v4534
      %v4663 = vpack.c.bf16 %v4535, %v4535
      %v4664 = vpack.c.bf16 %v4536, %v4536
      %v4665 = vpack.c.bf16 %v4537, %v4537
      %v4666 = vpack.c.bf16 %v4538, %v4538
      %v4667 = vpack.c.bf16 %v4539, %v4539
      %v4668 = vpack.c.bf16 %v4540, %v4540
      %v4669 = vpack.c.bf16 %v4541, %v4541
      %v4670 = vpack.c.bf16 %v4542, %v4542
      %v4671 = vpack.c.bf16 %v4543, %v4543
      %v4672 = vpack.c.bf16 %v4544, %v4544
      %v4673 = vpack.c.bf16 %v4545, %v4545
      %v4674 = vpack.c.bf16 %v4546, %v4546
      %v4675 = vpack.c.bf16 %v4547, %v4547
      %v4676 = vpack.c.bf16 %v4548, %v4548
      %v4677 = vpack.c.bf16 %v4549, %v4549
      %v4678 = vpack.c.bf16 %v4550, %v4550
      %v4679 = vpack.c.bf16 %v4551, %v4551
      %v4680 = vpack.c.bf16 %v4552, %v4552
      %v4681 = vpack.c.bf16 %v4553, %v4553
      %v4682 = vpack.c.bf16 %v4554, %v4554
      %v4683 = vpack.c.bf16 %v4555, %v4555
      %v4684 = vpack.c.bf16 %v4556, %v4556
      %v4685 = vpack.c.bf16 %v4557, %v4557
      %v4686 = vpack.c.bf16 %v4558, %v4558
      %v4687 = vpack.c.bf16 %v4559, %v4559
      %v4688 = vpack.c.bf16 %v4560, %v4560
      %v4689 = vpack.c.bf16 %v4561, %v4561
      %v4690 = vpack.c.bf16 %v4562, %v4562
      %v4691 = vpack.c.bf16 %v4563, %v4563
      %v4692 = vpack.c.bf16 %v4564, %v4564
      %v4693 = vpack.c.bf16 %v4565, %v4565
      %v4694 = vpack.c.bf16 %v4566, %v4566
      %v4695 = vpack.c.bf16 %v4567, %v4567
      %v4696 = vpack.c.bf16 %v4568, %v4568
      %v4697 = vpack.c.bf16 %v4569, %v4569
      %v4698 = vpack.c.bf16 %v4570, %v4570
      %v4699 = vpack.c.bf16 %v4571, %v4571
      %v4700 = vpack.c.bf16 %v4572, %v4572
      %v4701 = vpack.c.bf16 %v4573, %v4573
      %v4702 = vpack.c.bf16 %v4574, %v4574
      %v4703 = vpack.c.bf16 %v4575, %v4575
      %v4704 = vpack.c.bf16 %v4576, %v4576
      %v4705 = vpack.c.bf16 %v4577, %v4577
      %v4706 = vpack.c.bf16 %v4578, %v4578
      %v4707 = vpack.c.bf16 %v4579, %v4579
      %v4708 = vpack.c.bf16 %v4580, %v4580
      %v4709 = vpack.c.bf16 %v4581, %v4581
      %v4710 = vpack.c.bf16 %v4582, %v4582
      %v4711 = vpack.c.bf16 %v4583, %v4583
      %v4712 = vpack.c.bf16 %v4584, %v4584
      %v4713 = vpack.c.bf16 %v4585, %v4585
      %v4714 = vpack.c.bf16 %v4586, %v4586
      %v4715 = vpack.c.bf16 %v4587, %v4587
      %v4716 = vpack.c.bf16 %v4588, %v4588
      %v4717 = vpack.c.bf16 %v4589, %v4589
      %v4718 = vpack.c.bf16 %v4590, %v4590
      %v4719 = vpack.c.bf16 %v4591, %v4591
      %v4720 = vpack.c.bf16 %v4592, %v4592
      %v4721 = vpack.c.bf16 %v4593, %v4593
      %v4722 = vpack.c.bf16 %v4594, %v4594
      %v4723 = vpack.c.bf16 %v4595, %v4595
      %v4724 = vpack.c.bf16 %v4596, %v4596
      %v4725 = vpack.c.bf16 %v4597, %v4597
      %v4726 = vpack.c.bf16 %v4598, %v4598
      %v4727 = vpack.c.bf16 %v4599, %v4599
      %vm4728 = vcmask 60416
      %4729 = vst.msk [vmem:[%s150] sm:$0xf] %vm4728, %v4600
      %4730 = vst.msk [vmem:[%s150 + $0x4] sm:$0xf] %vm4728, %v4601
      %4731 = vst.msk [vmem:[%s150 + $0x8] sm:$0xf] %vm4728, %v4602
      %4732 = vst.msk [vmem:[%s150 + $0xc] sm:$0xf] %vm4728, %v4603
      %4733 = vst.msk [vmem:[%s150 + $0x10] sm:$0xf] %vm4728, %v4604
      %4734 = vst.msk [vmem:[%s150 + $0x14] sm:$0xf] %vm4728, %v4605
      %4735 = vst.msk [vmem:[%s150 + $0x18] sm:$0xf] %vm4728, %v4606
      %4736 = vst.msk [vmem:[%s150 + $0x1c] sm:$0xf] %vm4728, %v4607
      %4737 = vst.msk [vmem:[%s150 + $0x20] sm:$0xf] %vm4728, %v4608
      %4738 = vst.msk [vmem:[%s150 + $0x24] sm:$0xf] %vm4728, %v4609
      %4739 = vst.msk [vmem:[%s150 + $0x28] sm:$0xf] %vm4728, %v4610
      %4740 = vst.msk [vmem:[%s150 + $0x2c] sm:$0xf] %vm4728, %v4611
      %4741 = vst.msk [vmem:[%s150 + $0x30] sm:$0xf] %vm4728, %v4612
      %4742 = vst.msk [vmem:[%s150 + $0x34] sm:$0xf] %vm4728, %v4613
      %4743 = vst.msk [vmem:[%s150 + $0x38] sm:$0xf] %vm4728, %v4614
      %4744 = vst.msk [vmem:[%s150 + $0x3c] sm:$0xf] %vm4728, %v4615
      %4745 = vst.msk [vmem:[%s150 + $0x40] sm:$0xf] %vm4728, %v4616
      %4746 = vst.msk [vmem:[%s150 + $0x44] sm:$0xf] %vm4728, %v4617
      %4747 = vst.msk [vmem:[%s150 + $0x48] sm:$0xf] %vm4728, %v4618
      %4748 = vst.msk [vmem:[%s150 + $0x4c] sm:$0xf] %vm4728, %v4619
      %4749 = vst.msk [vmem:[%s150 + $0x50] sm:$0xf] %vm4728, %v4620
      %4750 = vst.msk [vmem:[%s150 + $0x54] sm:$0xf] %vm4728, %v4621
      %4751 = vst.msk [vmem:[%s150 + $0x58] sm:$0xf] %vm4728, %v4622
      %4752 = vst.msk [vmem:[%s150 + $0x5c] sm:$0xf] %vm4728, %v4623
      %4753 = vst.msk [vmem:[%s150 + $0x60] sm:$0xf] %vm4728, %v4624
      %4754 = vst.msk [vmem:[%s150 + $0x64] sm:$0xf] %vm4728, %v4625
      %4755 = vst.msk [vmem:[%s150 + $0x68] sm:$0xf] %vm4728, %v4626
      %4756 = vst.msk [vmem:[%s150 + $0x6c] sm:$0xf] %vm4728, %v4627
      %4757 = vst.msk [vmem:[%s150 + $0x70] sm:$0xf] %vm4728, %v4628
      %4758 = vst.msk [vmem:[%s150 + $0x74] sm:$0xf] %vm4728, %v4629
      %4759 = vst.msk [vmem:[%s150 + $0x78] sm:$0xf] %vm4728, %v4630
      %4760 = vst.msk [vmem:[%s150 + $0x7c] sm:$0xf] %vm4728, %v4631
      %4761 = vst.msk [vmem:[%s150 + $0x80] sm:$0xf] %vm4728, %v4632
      %4762 = vst.msk [vmem:[%s150 + $0x84] sm:$0xf] %vm4728, %v4633
      %4763 = vst.msk [vmem:[%s150 + $0x88] sm:$0xf] %vm4728, %v4634
      %4764 = vst.msk [vmem:[%s150 + $0x8c] sm:$0xf] %vm4728, %v4635
      %4765 = vst.msk [vmem:[%s150 + $0x90] sm:$0xf] %vm4728, %v4636
      %4766 = vst.msk [vmem:[%s150 + $0x94] sm:$0xf] %vm4728, %v4637
      %4767 = vst.msk [vmem:[%s150 + $0x98] sm:$0xf] %vm4728, %v4638
      %4768 = vst.msk [vmem:[%s150 + $0x9c] sm:$0xf] %vm4728, %v4639
      %4769 = vst.msk [vmem:[%s150 + $0xa0] sm:$0xf] %vm4728, %v4640
      %4770 = vst.msk [vmem:[%s150 + $0xa4] sm:$0xf] %vm4728, %v4641
      %4771 = vst.msk [vmem:[%s150 + $0xa8] sm:$0xf] %vm4728, %v4642
      %4772 = vst.msk [vmem:[%s150 + $0xac] sm:$0xf] %vm4728, %v4643
      %4773 = vst.msk [vmem:[%s150 + $0xb0] sm:$0xf] %vm4728, %v4644
      %4774 = vst.msk [vmem:[%s150 + $0xb4] sm:$0xf] %vm4728, %v4645
      %4775 = vst.msk [vmem:[%s150 + $0xb8] sm:$0xf] %vm4728, %v4646
      %4776 = vst.msk [vmem:[%s150 + $0xbc] sm:$0xf] %vm4728, %v4647
      %4777 = vst.msk [vmem:[%s150 + $0xc0] sm:$0xf] %vm4728, %v4648
      %4778 = vst.msk [vmem:[%s150 + $0xc4] sm:$0xf] %vm4728, %v4649
      %4779 = vst.msk [vmem:[%s150 + $0xc8] sm:$0xf] %vm4728, %v4650
      %4780 = vst.msk [vmem:[%s150 + $0xcc] sm:$0xf] %vm4728, %v4651
      %4781 = vst.msk [vmem:[%s150 + $0xd0] sm:$0xf] %vm4728, %v4652
      %4782 = vst.msk [vmem:[%s150 + $0xd4] sm:$0xf] %vm4728, %v4653
      %4783 = vst.msk [vmem:[%s150 + $0xd8] sm:$0xf] %vm4728, %v4654
      %4784 = vst.msk [vmem:[%s150 + $0xdc] sm:$0xf] %vm4728, %v4655
      %4785 = vst.msk [vmem:[%s150 + $0xe0] sm:$0xf] %vm4728, %v4656
      %4786 = vst.msk [vmem:[%s150 + $0xe4] sm:$0xf] %vm4728, %v4657
      %4787 = vst.msk [vmem:[%s150 + $0xe8] sm:$0xf] %vm4728, %v4658
      %4788 = vst.msk [vmem:[%s150 + $0xec] sm:$0xf] %vm4728, %v4659
      %4789 = vst.msk [vmem:[%s150 + $0xf0] sm:$0xf] %vm4728, %v4660
      %4790 = vst.msk [vmem:[%s150 + $0xf4] sm:$0xf] %vm4728, %v4661
      %4791 = vst.msk [vmem:[%s150 + $0xf8] sm:$0xf] %vm4728, %v4662
      %4792 = vst.msk [vmem:[%s150 + $0xfc] sm:$0xf] %vm4728, %v4663
      %4793 = vst.msk [vmem:[%s150 + $0x100] sm:$0xf] %vm4728, %v4664
      %4794 = vst.msk [vmem:[%s150 + $0x104] sm:$0xf] %vm4728, %v4665
      %4795 = vst.msk [vmem:[%s150 + $0x108] sm:$0xf] %vm4728, %v4666
      %4796 = vst.msk [vmem:[%s150 + $0x10c] sm:$0xf] %vm4728, %v4667
      %4797 = vst.msk [vmem:[%s150 + $0x110] sm:$0xf] %vm4728, %v4668
      %4798 = vst.msk [vmem:[%s150 + $0x114] sm:$0xf] %vm4728, %v4669
      %4799 = vst.msk [vmem:[%s150 + $0x118] sm:$0xf] %vm4728, %v4670
      %4800 = vst.msk [vmem:[%s150 + $0x11c] sm:$0xf] %vm4728, %v4671
      %4801 = vst.msk [vmem:[%s150 + $0x120] sm:$0xf] %vm4728, %v4672
      %4802 = vst.msk [vmem:[%s150 + $0x124] sm:$0xf] %vm4728, %v4673
      %4803 = vst.msk [vmem:[%s150 + $0x128] sm:$0xf] %vm4728, %v4674
      %4804 = vst.msk [vmem:[%s150 + $0x12c] sm:$0xf] %vm4728, %v4675
      %4805 = vst.msk [vmem:[%s150 + $0x130] sm:$0xf] %vm4728, %v4676
      %4806 = vst.msk [vmem:[%s150 + $0x134] sm:$0xf] %vm4728, %v4677
      %4807 = vst.msk [vmem:[%s150 + $0x138] sm:$0xf] %vm4728, %v4678
      %4808 = vst.msk [vmem:[%s150 + $0x13c] sm:$0xf] %vm4728, %v4679
      %4809 = vst.msk [vmem:[%s150 + $0x140] sm:$0xf] %vm4728, %v4680
      %4810 = vst.msk [vmem:[%s150 + $0x144] sm:$0xf] %vm4728, %v4681
      %4811 = vst.msk [vmem:[%s150 + $0x148] sm:$0xf] %vm4728, %v4682
      %4812 = vst.msk [vmem:[%s150 + $0x14c] sm:$0xf] %vm4728, %v4683
      %4813 = vst.msk [vmem:[%s150 + $0x150] sm:$0xf] %vm4728, %v4684
      %4814 = vst.msk [vmem:[%s150 + $0x154] sm:$0xf] %vm4728, %v4685
      %4815 = vst.msk [vmem:[%s150 + $0x158] sm:$0xf] %vm4728, %v4686
      %4816 = vst.msk [vmem:[%s150 + $0x15c] sm:$0xf] %vm4728, %v4687
      %4817 = vst.msk [vmem:[%s150 + $0x160] sm:$0xf] %vm4728, %v4688
      %4818 = vst.msk [vmem:[%s150 + $0x164] sm:$0xf] %vm4728, %v4689
      %4819 = vst.msk [vmem:[%s150 + $0x168] sm:$0xf] %vm4728, %v4690
      %4820 = vst.msk [vmem:[%s150 + $0x16c] sm:$0xf] %vm4728, %v4691
      %4821 = vst.msk [vmem:[%s150 + $0x170] sm:$0xf] %vm4728, %v4692
      %4822 = vst.msk [vmem:[%s150 + $0x174] sm:$0xf] %vm4728, %v4693
      %4823 = vst.msk [vmem:[%s150 + $0x178] sm:$0xf] %vm4728, %v4694
      %4824 = vst.msk [vmem:[%s150 + $0x17c] sm:$0xf] %vm4728, %v4695
      %4825 = vst.msk [vmem:[%s150 + $0x180] sm:$0xf] %vm4728, %v4696
      %4826 = vst.msk [vmem:[%s150 + $0x184] sm:$0xf] %vm4728, %v4697
      %4827 = vst.msk [vmem:[%s150 + $0x188] sm:$0xf] %vm4728, %v4698
      %4828 = vst.msk [vmem:[%s150 + $0x18c] sm:$0xf] %vm4728, %v4699
      %4829 = vst.msk [vmem:[%s150 + $0x190] sm:$0xf] %vm4728, %v4700
      %4830 = vst.msk [vmem:[%s150 + $0x194] sm:$0xf] %vm4728, %v4701
      %4831 = vst.msk [vmem:[%s150 + $0x198] sm:$0xf] %vm4728, %v4702
      %4832 = vst.msk [vmem:[%s150 + $0x19c] sm:$0xf] %vm4728, %v4703
      %4833 = vst.msk [vmem:[%s150 + $0x1a0] sm:$0xf] %vm4728, %v4704
      %4834 = vst.msk [vmem:[%s150 + $0x1a4] sm:$0xf] %vm4728, %v4705
      %4835 = vst.msk [vmem:[%s150 + $0x1a8] sm:$0xf] %vm4728, %v4706
      %4836 = vst.msk [vmem:[%s150 + $0x1ac] sm:$0xf] %vm4728, %v4707
      %4837 = vst.msk [vmem:[%s150 + $0x1b0] sm:$0xf] %vm4728, %v4708
      %4838 = vst.msk [vmem:[%s150 + $0x1b4] sm:$0xf] %vm4728, %v4709
      %4839 = vst.msk [vmem:[%s150 + $0x1b8] sm:$0xf] %vm4728, %v4710
      %4840 = vst.msk [vmem:[%s150 + $0x1bc] sm:$0xf] %vm4728, %v4711
      %4841 = vst.msk [vmem:[%s150 + $0x1c0] sm:$0xf] %vm4728, %v4712
      %4842 = vst.msk [vmem:[%s150 + $0x1c4] sm:$0xf] %vm4728, %v4713
      %4843 = vst.msk [vmem:[%s150 + $0x1c8] sm:$0xf] %vm4728, %v4714
      %4844 = vst.msk [vmem:[%s150 + $0x1cc] sm:$0xf] %vm4728, %v4715
      %4845 = vst.msk [vmem:[%s150 + $0x1d0] sm:$0xf] %vm4728, %v4716
      %4846 = vst.msk [vmem:[%s150 + $0x1d4] sm:$0xf] %vm4728, %v4717
      %4847 = vst.msk [vmem:[%s150 + $0x1d8] sm:$0xf] %vm4728, %v4718
      %4848 = vst.msk [vmem:[%s150 + $0x1dc] sm:$0xf] %vm4728, %v4719
      %4849 = vst.msk [vmem:[%s150 + $0x1e0] sm:$0xf] %vm4728, %v4720
      %4850 = vst.msk [vmem:[%s150 + $0x1e4] sm:$0xf] %vm4728, %v4721
      %4851 = vst.msk [vmem:[%s150 + $0x1e8] sm:$0xf] %vm4728, %v4722
      %4852 = vst.msk [vmem:[%s150 + $0x1ec] sm:$0xf] %vm4728, %v4723
      %4853 = vst.msk [vmem:[%s150 + $0x1f0] sm:$0xf] %vm4728, %v4724
      %4854 = vst.msk [vmem:[%s150 + $0x1f4] sm:$0xf] %vm4728, %v4725
      %4855 = vst.msk [vmem:[%s150 + $0x1f8] sm:$0xf] %vm4728, %v4726
      %4856 = vst.msk [vmem:[%s150 + $0x1fc] sm:$0xf] %vm4728, %v4727
      %s4857 = smul.u32 128, %s14
      %p4858 = scmp.lt.s32.totalorder %s4857, 255
      %s4859 = scalar_select %p4858, %s4857, 255
      %s4860 = smul.addr %s4859, 4
      %s4861 = scalar_lea.vmem %s3, %s4860
      // Predicated region
      $region33: #{discriminator_forward.4} parent=31 // pred_check
        %p4862 = pneg %p95
      $region34: #{discriminator_forward.4} parent=31 // pred_check_branch
        %4864 = sbr.rel (%p4862) target = $region36
      $region35: #{discriminator_forward.4} parent=31 // pred_region
        %s4865 = smul.u32 128, %s14
      $region36: #{discriminator_forward.4} parent=31 // pred_fallthru
        _
    $region32: #{discriminator_forward.4} parent=5 // pred_fallthru
      _
    %p4866 = scmp.le.s32.totalorder 2, %s9
    // Predicated region
    $region37: #{discriminator_forward.4} parent=5 // pred_check
      %p4867 = pneg %p4866
    $region38: #{discriminator_forward.4} parent=5 // pred_check_branch
      %4869 = sbr.rel (%p4867) target = $region40
    $region39: #{discriminator_forward.4} parent=5 // pred_region
      %s4870 = ssub.s32 %s9, 2
      // Predicated region
      $region41: #{discriminator_forward.4} parent=39 // pred_check
        %p4871 = pneg %p101
      $region42: #{discriminator_forward.4} parent=39 // pred_check_branch
        %4873 = sbr.rel (%p4871) target = $region44
      $region43: #{discriminator_forward.4} parent=39 // pred_region
        %s4874 = smul.u32 128, %s15
        %p4875 = scmp.lt.s32.totalorder %s4874, 255
        %s4876 = scalar_select %p4875, %s4874, 255
        %s4877 = smul.addr %s4876, 4
        %s4878 = scalar_lea.vmem %s3, %s4877
      $region44: #{discriminator_forward.4} parent=39 // pred_fallthru
        _
    $region40: #{discriminator_forward.4} parent=5 // pred_fallthru
      _
  $region6: #{discriminator_forward.4} parent=0 // loop_footer
    %s13 = sadd.s32 1, %s9
  $region7: #{discriminator_forward.4} parent=0 // loop_footer_branch
    %8 = sbr.rel target = $region3
  $region8: #{discriminator_forward.4} parent=0 // loop_exit
    _

// kernel: discriminator_forward.6
$region0: #{discriminator_forward.6}
  #allocation0 [shape = 'u32[]', space=smem, size = 0x4, offset = 0x4, fixed_abs, tag = 'smem constant byte address 0x4 - core index']
  #allocation1 [shape = 'u32[72,128]{1,0:T(1,128)}', space=vmem, size = 0x9000, scoped, tag = 'internal scratch']
  %s0 = inlined_call_operand.vmem [shape: bf16[144,64], index: 0, kind: input, shape index: {}]
  %s1 = inlined_call_operand.vmem [shape: bf16[144,64], index: 1, kind: input, shape index: {}]
  %s2 = inlined_call_operand.vmem [shape: bf16[4,64,32], index: 2, kind: input, shape index: {}]
  %s3 = inlined_call_operand.vmem [shape: f32[1,32], index: 3, kind: input, shape index: {}]
  %s4 = inlined_call_operand.vmem [shape: f32[1,32], index: 4, kind: input, shape index: {}]
  %s5 = inlined_call_operand.vmem [shape: bf16[128,32], index: 5, kind: output, shape index: {}]
  %s6 = sld [smem:[#allocation0]]
  $region30: #{discriminator_forward.6} parent=0
    _
  %s8 = ssub.s32 1, %s6
  %s9 = scalar_select 0, %s8, %s6
  // Predicated region
  $region2: #{discriminator_forward.6} parent=0 // pred_check
    _
  $region3: #{discriminator_forward.6} parent=0 // pred_check_branch
    %11 = sbr.rel (0) target = $region5
  $region4: #{discriminator_forward.6} parent=0 // pred_region
    _
  $region5: #{discriminator_forward.6} parent=0 // pred_fallthru
    _
  // Predicated region
  $region6: #{discriminator_forward.6} parent=0 // pred_check
    _
  $region7: #{discriminator_forward.6} parent=0 // pred_check_branch
    %13 = sbr.rel (0) target = $region9
  $region8: #{discriminator_forward.6} parent=0 // pred_region
    _
  $region9: #{discriminator_forward.6} parent=0 // pred_fallthru
    _
  // Predicated region
  $region10: #{discriminator_forward.6} parent=0 // pred_check
    _
  $region11: #{discriminator_forward.6} parent=0 // pred_check_branch
    %15 = sbr.rel (0) target = $region13
  $region12: #{discriminator_forward.6} parent=0 // pred_region
    _
  $region13: #{discriminator_forward.6} parent=0 // pred_fallthru
    _
  // Predicated region
  $region14: #{discriminator_forward.6} parent=0 // pred_check
    _
  $region15: #{discriminator_forward.6} parent=0 // pred_check_branch
    %17 = sbr.rel (0) target = $region17
  $region16: #{discriminator_forward.6} parent=0 // pred_region
    _
  $region17: #{discriminator_forward.6} parent=0 // pred_fallthru
    _
  // Predicated region
  $region18: #{discriminator_forward.6} parent=0 // pred_check
    _
  $region19: #{discriminator_forward.6} parent=0 // pred_check_branch
    %19 = sbr.rel (0) target = $region21
  $region20: #{discriminator_forward.6} parent=0 // pred_region
    _
  $region21: #{discriminator_forward.6} parent=0 // pred_fallthru
    _
  %v21 = vld [vmem:[%s0] sm:$0xf]
  %v22 = vld [vmem:[%s0 + $0x4] sm:$0xf]
  %v23 = vld [vmem:[%s0 + $0x8] sm:$0xf]
  %v24 = vld [vmem:[%s0 + $0xc] sm:$0xf]
  %v25 = vld [vmem:[%s0 + $0x10] sm:$0xf]
  %v26 = vld [vmem:[%s0 + $0x14] sm:$0xf]
  %v27 = vld [vmem:[%s0 + $0x18] sm:$0xf]
  %v28 = vld [vmem:[%s0 + $0x1c] sm:$0xf]
  %v29 = vld [vmem:[%s0 + $0x20] sm:$0xf]
  %v30 = vld [vmem:[%s0 + $0x24] sm:$0xf]
  %v31 = vld [vmem:[%s0 + $0x28] sm:$0xf]
  %v32 = vld [vmem:[%s0 + $0x2c] sm:$0xf]
  %v33 = vld [vmem:[%s0 + $0x30] sm:$0xf]
  %v34 = vld [vmem:[%s0 + $0x34] sm:$0xf]
  %v35 = vld [vmem:[%s0 + $0x38] sm:$0xf]
  %v36 = vld [vmem:[%s0 + $0x3c] sm:$0xf]
  %v37 = vld [vmem:[%s2] sm:$0xf]
  %v38 = vld [vmem:[%s2 + $0x4] sm:$0xf]
  %v39 = vld [vmem:[%s2 + $0x8] sm:$0xf]
  %v40 = vld [vmem:[%s2 + $0xc] sm:$0xf]
  %v41 = vld [vmem:[%s2 + $0x10] sm:$0xf]
  %v42 = vld [vmem:[%s2 + $0x14] sm:$0xf]
  %v43 = vld [vmem:[%s2 + $0x18] sm:$0xf]
  %v44 = vld [vmem:[%s2 + $0x1c] sm:$0xf]
  %v45 = vld [vmem:[%s1] sm:$0xf]
  %v46 = vld [vmem:[%s1 + $0x4] sm:$0xf]
  %v47 = vld [vmem:[%s1 + $0x8] sm:$0xf]
  %v48 = vld [vmem:[%s1 + $0xc] sm:$0xf]
  %v49 = vld [vmem:[%s1 + $0x10] sm:$0xf]
  %v50 = vld [vmem:[%s1 + $0x14] sm:$0xf]
  %v51 = vld [vmem:[%s1 + $0x18] sm:$0xf]
  %v52 = vld [vmem:[%s1 + $0x1c] sm:$0xf]
  %v53 = vld [vmem:[%s1 + $0x20] sm:$0xf]
  %v54 = vld [vmem:[%s1 + $0x24] sm:$0xf]
  %v55 = vld [vmem:[%s1 + $0x28] sm:$0xf]
  %v56 = vld [vmem:[%s1 + $0x2c] sm:$0xf]
  %v57 = vld [vmem:[%s1 + $0x30] sm:$0xf]
  %v58 = vld [vmem:[%s1 + $0x34] sm:$0xf]
  %v59 = vld [vmem:[%s1 + $0x38] sm:$0xf]
  %v60 = vld [vmem:[%s1 + $0x3c] sm:$0xf]
  %s61 = scalar_lea.vmem %s2, 32
  %v62 = vld [vmem:[%s61] sm:$0xf]
  %v63 = vld [vmem:[%s61 + $0x4] sm:$0xf]
  %v64 = vld [vmem:[%s61 + $0x8] sm:$0xf]
  %v65 = vld [vmem:[%s61 + $0xc] sm:$0xf]
  %v66 = vld [vmem:[%s61 + $0x10] sm:$0xf]
  %v67 = vld [vmem:[%s61 + $0x14] sm:$0xf]
  %v68 = vld [vmem:[%s61 + $0x18] sm:$0xf]
  %v69 = vld [vmem:[%s61 + $0x1c] sm:$0xf]
  %v86 = vunpack.c.l.b16 %v45
  %v87 = vunpack.c.l.b16 %v46
  %v88 = vunpack.c.l.b16 %v47
  %v89 = vunpack.c.l.b16 %v48
  %v90 = vunpack.c.l.b16 %v49
  %v91 = vunpack.c.l.b16 %v50
  %v92 = vunpack.c.l.b16 %v51
  %v93 = vunpack.c.l.b16 %v52
  %v94 = vunpack.c.l.b16 %v53
  %v95 = vunpack.c.l.b16 %v54
  %v96 = vunpack.c.l.b16 %v55
  %v97 = vunpack.c.l.b16 %v56
  %v98 = vunpack.c.l.b16 %v57
  %v99 = vunpack.c.l.b16 %v58
  %v100 = vunpack.c.l.b16 %v59
  %v101 = vunpack.c.l.b16 %v60
  %v102 = vpack.c.b16 %v87, %v86
  %v103 = vpack.c.b16 %v89, %v88
  %v104 = vpack.c.b16 %v91, %v90
  %v105 = vpack.c.b16 %v93, %v92
  %v106 = vpack.c.b16 %v95, %v94
  %v107 = vpack.c.b16 %v97, %v96
  %v108 = vpack.c.b16 %v99, %v98
  %v109 = vpack.c.b16 %v101, %v100
  %v118 = vunpack.c.l.b16 %v62
  %v119 = vunpack.c.l.b16 %v63
  %v120 = vunpack.c.l.b16 %v64
  %v121 = vunpack.c.l.b16 %v65
  %v122 = vunpack.c.l.b16 %v66
  %v123 = vunpack.c.l.b16 %v67
  %v124 = vunpack.c.l.b16 %v68
  %v125 = vunpack.c.l.b16 %v69
  %v126 = vpack.c.b16 %v119, %v118
  %v127 = vpack.c.b16 %v121, %v120
  %v128 = vpack.c.b16 %v123, %v122
  %v129 = vpack.c.b16 %v125, %v124
  %vm134 = vcmask 523264
  %v136 = vsel %vm134, %v102, 0
  %v139 = vsel %vm134, %v103, 0
  %v142 = vsel %vm134, %v104, 0
  %v145 = vsel %vm134, %v105, 0
  %v148 = vsel %vm134, %v106, 0
  %v151 = vsel %vm134, %v107, 0
  %v154 = vsel %vm134, %v108, 0
  %v157 = vsel %vm134, %v109, 0
  %159 = vmatpush.bf16.msra.mxu0 0
  %160 = vmatpush.bf16.msra.mxu0 0
  %161 = vmatpush.bf16.msra.mxu0 0
  %162 = vmatpush.bf16.msra.mxu0 0
  %163 = vmatpush.bf16.msra.mxu0 %v129
  %164 = vmatpush.bf16.msra.mxu0 %v128
  %165 = vmatpush.bf16.msra.mxu0 %v127
  %166 = vmatpush.bf16.msra.mxu0 %v126
  %167 = vmatmul.bf16.gmra.mxu0 %v136
  %v168 = vpop.f32.mrf.mxu0
  %v169 = vadd.f32 0.0, %v168
  %v170 = vpop.f32.mrf.mxu0
  %v171 = vadd.f32 0.0, %v170
  %172 = vmatmul.bf16.gmra.mxu0 %v139
  %v173 = vpop.f32.mrf.mxu0
  %v174 = vadd.f32 0.0, %v173
  %v175 = vpop.f32.mrf.mxu0
  %v176 = vadd.f32 0.0, %v175
  %177 = vmatmul.bf16.gmra.mxu0 %v142
  %v178 = vpop.f32.mrf.mxu0
  %v179 = vadd.f32 0.0, %v178
  %v180 = vpop.f32.mrf.mxu0
  %v181 = vadd.f32 0.0, %v180
  %182 = vmatmul.bf16.gmra.mxu0 %v145
  %v183 = vpop.f32.mrf.mxu0
  %v184 = vadd.f32 0.0, %v183
  %v185 = vpop.f32.mrf.mxu0
  %v186 = vadd.f32 0.0, %v185
  %187 = vmatmul.bf16.gmra.mxu0 %v148
  %v188 = vpop.f32.mrf.mxu0
  %v189 = vadd.f32 0.0, %v188
  %v190 = vpop.f32.mrf.mxu0
  %v191 = vadd.f32 0.0, %v190
  %192 = vmatmul.bf16.gmra.mxu0 %v151
  %v193 = vpop.f32.mrf.mxu0
  %v194 = vadd.f32 0.0, %v193
  %v195 = vpop.f32.mrf.mxu0
  %v196 = vadd.f32 0.0, %v195
  %197 = vmatmul.bf16.gmra.mxu0 %v154
  %v198 = vpop.f32.mrf.mxu0
  %v199 = vadd.f32 0.0, %v198
  %v200 = vpop.f32.mrf.mxu0
  %v201 = vadd.f32 0.0, %v200
  %202 = vmatmul.bf16.gmra.mxu0 %v157
  %v203 = vpop.f32.mrf.mxu0
  %v204 = vadd.f32 0.0, %v203
  %v205 = vpop.f32.mrf.mxu0
  %v206 = vadd.f32 0.0, %v205
  %207 = vdwg.mxu0
  %v224 = vunpack.c.l.b16 %v21
  %v225 = vunpack.c.l.b16 %v22
  %v226 = vunpack.c.l.b16 %v23
  %v227 = vunpack.c.l.b16 %v24
  %v228 = vunpack.c.l.b16 %v25
  %v229 = vunpack.c.l.b16 %v26
  %v230 = vunpack.c.l.b16 %v27
  %v231 = vunpack.c.l.b16 %v28
  %v232 = vunpack.c.l.b16 %v29
  %v233 = vunpack.c.l.b16 %v30
  %v234 = vunpack.c.l.b16 %v31
  %v235 = vunpack.c.l.b16 %v32
  %v236 = vunpack.c.l.b16 %v33
  %v237 = vunpack.c.l.b16 %v34
  %v238 = vunpack.c.l.b16 %v35
  %v239 = vunpack.c.l.b16 %v36
  %v240 = vpack.c.b16 %v225, %v224
  %v241 = vpack.c.b16 %v227, %v226
  %v242 = vpack.c.b16 %v229, %v228
  %v243 = vpack.c.b16 %v231, %v230
  %v244 = vpack.c.b16 %v233, %v232
  %v245 = vpack.c.b16 %v235, %v234
  %v246 = vpack.c.b16 %v237, %v236
  %v247 = vpack.c.b16 %v239, %v238
  %v256 = vunpack.c.l.b16 %v37
  %v257 = vunpack.c.l.b16 %v38
  %v258 = vunpack.c.l.b16 %v39
  %v259 = vunpack.c.l.b16 %v40
  %v260 = vunpack.c.l.b16 %v41
  %v261 = vunpack.c.l.b16 %v42
  %v262 = vunpack.c.l.b16 %v43
  %v263 = vunpack.c.l.b16 %v44
  %v264 = vpack.c.b16 %v257, %v256
  %v265 = vpack.c.b16 %v259, %v258
  %v266 = vpack.c.b16 %v261, %v260
  %v267 = vpack.c.b16 %v263, %v262
  %v273 = vsel %vm134, %v240, 0
  %v276 = vsel %vm134, %v241, 0
  %v279 = vsel %vm134, %v242, 0
  %v282 = vsel %vm134, %v243, 0
  %v285 = vsel %vm134, %v244, 0
  %v288 = vsel %vm134, %v245, 0
  %v291 = vsel %vm134, %v246, 0
  %v294 = vsel %vm134, %v247, 0
  %296 = vmatpush.bf16.msra.mxu0 0
  %297 = vmatpush.bf16.msra.mxu0 0
  %298 = vmatpush.bf16.msra.mxu0 0
  %299 = vmatpush.bf16.msra.mxu0 0
  %300 = vmatpush.bf16.msra.mxu0 %v267
  %301 = vmatpush.bf16.msra.mxu0 %v266
  %302 = vmatpush.bf16.msra.mxu0 %v265
  %303 = vmatpush.bf16.msra.mxu0 %v264
  %304 = vmatmul.bf16.gmra.mxu0 %v273
  %v305 = vpop.f32.mrf.mxu0
  %v306 = vadd.f32 %v169, %v305
  %v307 = vpop.f32.mrf.mxu0
  %v308 = vadd.f32 %v171, %v307
  %309 = vmatmul.bf16.gmra.mxu0 %v276
  %v310 = vpop.f32.mrf.mxu0
  %v311 = vadd.f32 %v174, %v310
  %v312 = vpop.f32.mrf.mxu0
  %v313 = vadd.f32 %v176, %v312
  %314 = vmatmul.bf16.gmra.mxu0 %v279
  %v315 = vpop.f32.mrf.mxu0
  %v316 = vadd.f32 %v179, %v315
  %v317 = vpop.f32.mrf.mxu0
  %v318 = vadd.f32 %v181, %v317
  %319 = vmatmul.bf16.gmra.mxu0 %v282
  %v320 = vpop.f32.mrf.mxu0
  %v321 = vadd.f32 %v184, %v320
  %v322 = vpop.f32.mrf.mxu0
  %v323 = vadd.f32 %v186, %v322
  %324 = vmatmul.bf16.gmra.mxu0 %v285
  %v325 = vpop.f32.mrf.mxu0
  %v326 = vadd.f32 %v189, %v325
  %v327 = vpop.f32.mrf.mxu0
  %v328 = vadd.f32 %v191, %v327
  %329 = vmatmul.bf16.gmra.mxu0 %v288
  %v330 = vpop.f32.mrf.mxu0
  %v331 = vadd.f32 %v194, %v330
  %v332 = vpop.f32.mrf.mxu0
  %v333 = vadd.f32 %v196, %v332
  %334 = vmatmul.bf16.gmra.mxu0 %v291
  %v335 = vpop.f32.mrf.mxu0
  %v336 = vadd.f32 %v199, %v335
  %v337 = vpop.f32.mrf.mxu0
  %v338 = vadd.f32 %v201, %v337
  %339 = vmatmul.bf16.gmra.mxu0 %v294
  %v340 = vpop.f32.mrf.mxu0
  %v341 = vadd.f32 %v204, %v340
  %v342 = vpop.f32.mrf.mxu0
  %v343 = vadd.f32 %v206, %v342
  %344 = vdwg.mxu0
  %v345 = vld [vmem:[%s0 + $0x8] sm:$0xf]
  %v346 = vld [vmem:[%s0 + $0xc] sm:$0xf]
  %v347 = vld [vmem:[%s0 + $0x10] sm:$0xf]
  %v348 = vld [vmem:[%s0 + $0x14] sm:$0xf]
  %v349 = vld [vmem:[%s0 + $0x18] sm:$0xf]
  %v350 = vld [vmem:[%s0 + $0x1c] sm:$0xf]
  %v351 = vld [vmem:[%s0 + $0x20] sm:$0xf]
  %v352 = vld [vmem:[%s0 + $0x24] sm:$0xf]
  %v353 = vld [vmem:[%s0 + $0x28] sm:$0xf]
  %v354 = vld [vmem:[%s0 + $0x2c] sm:$0xf]
  %v355 = vld [vmem:[%s0 + $0x30] sm:$0xf]
  %v356 = vld [vmem:[%s0 + $0x34] sm:$0xf]
  %v357 = vld [vmem:[%s0 + $0x38] sm:$0xf]
  %v358 = vld [vmem:[%s0 + $0x3c] sm:$0xf]
  %v359 = vld [vmem:[%s0 + $0x40] sm:$0xf]
  %v360 = vld [vmem:[%s0 + $0x44] sm:$0xf]
  %s361 = scalar_lea.vmem %s2, 64
  %v362 = vld [vmem:[%s361] sm:$0xf]
  %v363 = vld [vmem:[%s361 + $0x4] sm:$0xf]
  %v364 = vld [vmem:[%s361 + $0x8] sm:$0xf]
  %v365 = vld [vmem:[%s361 + $0xc] sm:$0xf]
  %v366 = vld [vmem:[%s361 + $0x10] sm:$0xf]
  %v367 = vld [vmem:[%s361 + $0x14] sm:$0xf]
  %v368 = vld [vmem:[%s361 + $0x18] sm:$0xf]
  %v369 = vld [vmem:[%s361 + $0x1c] sm:$0xf]
  %v386 = vunpack.c.l.b16 %v345
  %v387 = vunpack.c.l.b16 %v346
  %v388 = vunpack.c.l.b16 %v347
  %v389 = vunpack.c.l.b16 %v348
  %v390 = vunpack.c.l.b16 %v349
  %v391 = vunpack.c.l.b16 %v350
  %v392 = vunpack.c.l.b16 %v351
  %v393 = vunpack.c.l.b16 %v352
  %v394 = vunpack.c.l.b16 %v353
  %v395 = vunpack.c.l.b16 %v354
  %v396 = vunpack.c.l.b16 %v355
  %v397 = vunpack.c.l.b16 %v356
  %v398 = vunpack.c.l.b16 %v357
  %v399 = vunpack.c.l.b16 %v358
  %v400 = vunpack.c.l.b16 %v359
  %v401 = vunpack.c.l.b16 %v360
  %v402 = vpack.c.b16 %v387, %v386
  %v403 = vpack.c.b16 %v389, %v388
  %v404 = vpack.c.b16 %v391, %v390
  %v405 = vpack.c.b16 %v393, %v392
  %v406 = vpack.c.b16 %v395, %v394
  %v407 = vpack.c.b16 %v397, %v396
  %v408 = vpack.c.b16 %v399, %v398
  %v409 = vpack.c.b16 %v401, %v400
  %v418 = vunpack.c.l.b16 %v362
  %v419 = vunpack.c.l.b16 %v363
  %v420 = vunpack.c.l.b16 %v364
  %v421 = vunpack.c.l.b16 %v365
  %v422 = vunpack.c.l.b16 %v366
  %v423 = vunpack.c.l.b16 %v367
  %v424 = vunpack.c.l.b16 %v368
  %v425 = vunpack.c.l.b16 %v369
  %v426 = vpack.c.b16 %v419, %v418
  %v427 = vpack.c.b16 %v421, %v420
  %v428 = vpack.c.b16 %v423, %v422
  %v429 = vpack.c.b16 %v425, %v424
  %v435 = vsel %vm134, %v402, 0
  %v438 = vsel %vm134, %v403, 0
  %v441 = vsel %vm134, %v404, 0
  %v444 = vsel %vm134, %v405, 0
  %v447 = vsel %vm134, %v406, 0
  %v450 = vsel %vm134, %v407, 0
  %v453 = vsel %vm134, %v408, 0
  %v456 = vsel %vm134, %v409, 0
  %458 = vmatpush.bf16.msra.mxu0 0
  %459 = vmatpush.bf16.msra.mxu0 0
  %460 = vmatpush.bf16.msra.mxu0 0
  %461 = vmatpush.bf16.msra.mxu0 0
  %462 = vmatpush.bf16.msra.mxu0 %v429
  %463 = vmatpush.bf16.msra.mxu0 %v428
  %464 = vmatpush.bf16.msra.mxu0 %v427
  %465 = vmatpush.bf16.msra.mxu0 %v426
  %466 = vmatmul.bf16.gmra.mxu0 %v435
  %v467 = vpop.f32.mrf.mxu0
  %v468 = vadd.f32 0.0, %v467
  %v469 = vpop.f32.mrf.mxu0
  %v470 = vadd.f32 0.0, %v469
  %471 = vmatmul.bf16.gmra.mxu0 %v438
  %v472 = vpop.f32.mrf.mxu0
  %v473 = vadd.f32 0.0, %v472
  %v474 = vpop.f32.mrf.mxu0
  %v475 = vadd.f32 0.0, %v474
  %476 = vmatmul.bf16.gmra.mxu0 %v441
  %v477 = vpop.f32.mrf.mxu0
  %v478 = vadd.f32 0.0, %v477
  %v479 = vpop.f32.mrf.mxu0
  %v480 = vadd.f32 0.0, %v479
  %481 = vmatmul.bf16.gmra.mxu0 %v444
  %v482 = vpop.f32.mrf.mxu0
  %v483 = vadd.f32 0.0, %v482
  %v484 = vpop.f32.mrf.mxu0
  %v485 = vadd.f32 0.0, %v484
  %486 = vmatmul.bf16.gmra.mxu0 %v447
  %v487 = vpop.f32.mrf.mxu0
  %v488 = vadd.f32 0.0, %v487
  %v489 = vpop.f32.mrf.mxu0
  %v490 = vadd.f32 0.0, %v489
  %491 = vmatmul.bf16.gmra.mxu0 %v450
  %v492 = vpop.f32.mrf.mxu0
  %v493 = vadd.f32 0.0, %v492
  %v494 = vpop.f32.mrf.mxu0
  %v495 = vadd.f32 0.0, %v494
  %496 = vmatmul.bf16.gmra.mxu0 %v453
  %v497 = vpop.f32.mrf.mxu0
  %v498 = vadd.f32 0.0, %v497
  %v499 = vpop.f32.mrf.mxu0
  %v500 = vadd.f32 0.0, %v499
  %501 = vmatmul.bf16.gmra.mxu0 %v456
  %v502 = vpop.f32.mrf.mxu0
  %v503 = vadd.f32 0.0, %v502
  %v504 = vpop.f32.mrf.mxu0
  %v505 = vadd.f32 0.0, %v504
  %506 = vdwg.mxu0
  %v507 = vadd.f32 %v306, %v468
  %v508 = vadd.f32 %v308, %v470
  %v509 = vadd.f32 %v311, %v473
  %v510 = vadd.f32 %v313, %v475
  %v511 = vadd.f32 %v316, %v478
  %v512 = vadd.f32 %v318, %v480
  %v513 = vadd.f32 %v321, %v483
  %v514 = vadd.f32 %v323, %v485
  %v515 = vadd.f32 %v326, %v488
  %v516 = vadd.f32 %v328, %v490
  %v517 = vadd.f32 %v331, %v493
  %v518 = vadd.f32 %v333, %v495
  %v519 = vadd.f32 %v336, %v498
  %v520 = vadd.f32 %v338, %v500
  %v521 = vadd.f32 %v341, %v503
  %v522 = vadd.f32 %v343, %v505
  %v523 = vld [vmem:[%s1 + $0x8] sm:$0xf]
  %v524 = vld [vmem:[%s1 + $0xc] sm:$0xf]
  %v525 = vld [vmem:[%s1 + $0x10] sm:$0xf]
  %v526 = vld [vmem:[%s1 + $0x14] sm:$0xf]
  %v527 = vld [vmem:[%s1 + $0x18] sm:$0xf]
  %v528 = vld [vmem:[%s1 + $0x1c] sm:$0xf]
  %v529 = vld [vmem:[%s1 + $0x20] sm:$0xf]
  %v530 = vld [vmem:[%s1 + $0x24] sm:$0xf]
  %v531 = vld [vmem:[%s1 + $0x28] sm:$0xf]
  %v532 = vld [vmem:[%s1 + $0x2c] sm:$0xf]
  %v533 = vld [vmem:[%s1 + $0x30] sm:$0xf]
  %v534 = vld [vmem:[%s1 + $0x34] sm:$0xf]
  %v535 = vld [vmem:[%s1 + $0x38] sm:$0xf]
  %v536 = vld [vmem:[%s1 + $0x3c] sm:$0xf]
  %v537 = vld [vmem:[%s1 + $0x40] sm:$0xf]
  %v538 = vld [vmem:[%s1 + $0x44] sm:$0xf]
  %s539 = scalar_lea.vmem %s2, 96
  %v540 = vld [vmem:[%s539] sm:$0xf]
  %v541 = vld [vmem:[%s539 + $0x4] sm:$0xf]
  %v542 = vld [vmem:[%s539 + $0x8] sm:$0xf]
  %v543 = vld [vmem:[%s539 + $0xc] sm:$0xf]
  %v544 = vld [vmem:[%s539 + $0x10] sm:$0xf]
  %v545 = vld [vmem:[%s539 + $0x14] sm:$0xf]
  %v546 = vld [vmem:[%s539 + $0x18] sm:$0xf]
  %v547 = vld [vmem:[%s539 + $0x1c] sm:$0xf]
  %v564 = vunpack.c.l.b16 %v523
  %v565 = vunpack.c.l.b16 %v524
  %v566 = vunpack.c.l.b16 %v525
  %v567 = vunpack.c.l.b16 %v526
  %v568 = vunpack.c.l.b16 %v527
  %v569 = vunpack.c.l.b16 %v528
  %v570 = vunpack.c.l.b16 %v529
  %v571 = vunpack.c.l.b16 %v530
  %v572 = vunpack.c.l.b16 %v531
  %v573 = vunpack.c.l.b16 %v532
  %v574 = vunpack.c.l.b16 %v533
  %v575 = vunpack.c.l.b16 %v534
  %v576 = vunpack.c.l.b16 %v535
  %v577 = vunpack.c.l.b16 %v536
  %v578 = vunpack.c.l.b16 %v537
  %v579 = vunpack.c.l.b16 %v538
  %v580 = vpack.c.b16 %v565, %v564
  %v581 = vpack.c.b16 %v567, %v566
  %v582 = vpack.c.b16 %v569, %v568
  %v583 = vpack.c.b16 %v571, %v570
  %v584 = vpack.c.b16 %v573, %v572
  %v585 = vpack.c.b16 %v575, %v574
  %v586 = vpack.c.b16 %v577, %v576
  %v587 = vpack.c.b16 %v579, %v578
  %v596 = vunpack.c.l.b16 %v540
  %v597 = vunpack.c.l.b16 %v541
  %v598 = vunpack.c.l.b16 %v542
  %v599 = vunpack.c.l.b16 %v543
  %v600 = vunpack.c.l.b16 %v544
  %v601 = vunpack.c.l.b16 %v545
  %v602 = vunpack.c.l.b16 %v546
  %v603 = vunpack.c.l.b16 %v547
  %v604 = vpack.c.b16 %v597, %v596
  %v605 = vpack.c.b16 %v599, %v598
  %v606 = vpack.c.b16 %v601, %v600
  %v607 = vpack.c.b16 %v603, %v602
  %v613 = vsel %vm134, %v580, 0
  %v616 = vsel %vm134, %v581, 0
  %v619 = vsel %vm134, %v582, 0
  %v622 = vsel %vm134, %v583, 0
  %v625 = vsel %vm134, %v584, 0
  %v628 = vsel %vm134, %v585, 0
  %v631 = vsel %vm134, %v586, 0
  %v634 = vsel %vm134, %v587, 0
  %636 = vmatpush.bf16.msra.mxu0 0
  %637 = vmatpush.bf16.msra.mxu0 0
  %638 = vmatpush.bf16.msra.mxu0 0
  %639 = vmatpush.bf16.msra.mxu0 0
  %640 = vmatpush.bf16.msra.mxu0 %v607
  %641 = vmatpush.bf16.msra.mxu0 %v606
  %642 = vmatpush.bf16.msra.mxu0 %v605
  %643 = vmatpush.bf16.msra.mxu0 %v604
  %644 = vmatmul.bf16.gmra.mxu0 %v613
  %v645 = vpop.f32.mrf.mxu0
  %v646 = vadd.f32 0.0, %v645
  %v647 = vpop.f32.mrf.mxu0
  %v648 = vadd.f32 0.0, %v647
  %649 = vmatmul.bf16.gmra.mxu0 %v616
  %v650 = vpop.f32.mrf.mxu0
  %v651 = vadd.f32 0.0, %v650
  %v652 = vpop.f32.mrf.mxu0
  %v653 = vadd.f32 0.0, %v652
  %654 = vmatmul.bf16.gmra.mxu0 %v619
  %v655 = vpop.f32.mrf.mxu0
  %v656 = vadd.f32 0.0, %v655
  %v657 = vpop.f32.mrf.mxu0
  %v658 = vadd.f32 0.0, %v657
  %659 = vmatmul.bf16.gmra.mxu0 %v622
  %v660 = vpop.f32.mrf.mxu0
  %v661 = vadd.f32 0.0, %v660
  %v662 = vpop.f32.mrf.mxu0
  %v663 = vadd.f32 0.0, %v662
  %664 = vmatmul.bf16.gmra.mxu0 %v625
  %v665 = vpop.f32.mrf.mxu0
  %v666 = vadd.f32 0.0, %v665
  %v667 = vpop.f32.mrf.mxu0
  %v668 = vadd.f32 0.0, %v667
  %669 = vmatmul.bf16.gmra.mxu0 %v628
  %v670 = vpop.f32.mrf.mxu0
  %v671 = vadd.f32 0.0, %v670
  %v672 = vpop.f32.mrf.mxu0
  %v673 = vadd.f32 0.0, %v672
  %674 = vmatmul.bf16.gmra.mxu0 %v631
  %v675 = vpop.f32.mrf.mxu0
  %v676 = vadd.f32 0.0, %v675
  %v677 = vpop.f32.mrf.mxu0
  %v678 = vadd.f32 0.0, %v677
  %679 = vmatmul.bf16.gmra.mxu0 %v634
  %v680 = vpop.f32.mrf.mxu0
  %v681 = vadd.f32 0.0, %v680
  %v682 = vpop.f32.mrf.mxu0
  %v683 = vadd.f32 0.0, %v682
  %684 = vdwg.mxu0
  %v685 = vadd.f32 %v507, %v646
  %v686 = vadd.f32 %v508, %v648
  %v687 = vadd.f32 %v509, %v651
  %v688 = vadd.f32 %v510, %v653
  %v689 = vadd.f32 %v511, %v656
  %v690 = vadd.f32 %v512, %v658
  %v691 = vadd.f32 %v513, %v661
  %v692 = vadd.f32 %v514, %v663
  %v693 = vadd.f32 %v515, %v666
  %v694 = vadd.f32 %v516, %v668
  %v695 = vadd.f32 %v517, %v671
  %v696 = vadd.f32 %v518, %v673
  %v697 = vadd.f32 %v519, %v676
  %v698 = vadd.f32 %v520, %v678
  %v699 = vadd.f32 %v521, %v681
  %v700 = vadd.f32 %v522, %v683
  %v701 = vld [vmem:[%s3] sm:$0x1]
  %v702 = vld [vmem:[%s4] sm:$0x1]
  %vm703 = vcmask 261120
  %v704 = vsel %vm703, %v685, 0.0
  %v705 = vsel %vm703, %v686, 0.0
  %v706 = vadd.f32 %v704, %v705
  %v707 = vsel %vm703, %v687, 0.0
  %v708 = vadd.f32 %v706, %v707
  %v709 = vsel %vm703, %v688, 0.0
  %v710 = vadd.f32 %v708, %v709
  %v711 = vsel %vm703, %v689, 0.0
  %v712 = vadd.f32 %v710, %v711
  %v713 = vsel %vm703, %v690, 0.0
  %v714 = vadd.f32 %v712, %v713
  %v715 = vsel %vm703, %v691, 0.0
  %v716 = vadd.f32 %v714, %v715
  %v717 = vsel %vm703, %v692, 0.0
  %v718 = vadd.f32 %v716, %v717
  %v719 = vsel %vm703, %v693, 0.0
  %v720 = vadd.f32 %v718, %v719
  %v721 = vsel %vm703, %v694, 0.0
  %v722 = vadd.f32 %v720, %v721
  %v723 = vsel %vm703, %v695, 0.0
  %v724 = vadd.f32 %v722, %v723
  %v725 = vsel %vm703, %v696, 0.0
  %v726 = vadd.f32 %v724, %v725
  %v727 = vsel %vm703, %v697, 0.0
  %v728 = vadd.f32 %v726, %v727
  %v729 = vsel %vm703, %v698, 0.0
  %v730 = vadd.f32 %v728, %v729
  %v731 = vsel %vm703, %v699, 0.0
  %v732 = vadd.f32 %v730, %v731
  %v733 = vsel %vm703, %v700, 0.0
  %v734 = vadd.f32 %v732, %v733
  %v735 = vrot.slane %v734, 4
  %v736 = vadd.f32 %v734, %v735
  %v737 = vrot.slane %v736, 2
  %v738 = vadd.f32 %v736, %v737
  %v739 = vrot.slane %v738, 1
  %v740 = vadd.f32 %v738, %v739
  %v741 = vmul.f32 %v740, 0.0078125
  %v742 = vmul.f32 %v685, %v685
  %v743 = vmul.f32 %v686, %v686
  %v744 = vmul.f32 %v687, %v687
  %v745 = vmul.f32 %v688, %v688
  %v746 = vmul.f32 %v689, %v689
  %v747 = vmul.f32 %v690, %v690
  %v748 = vmul.f32 %v691, %v691
  %v749 = vmul.f32 %v692, %v692
  %v750 = vmul.f32 %v693, %v693
  %v751 = vmul.f32 %v694, %v694
  %v752 = vmul.f32 %v695, %v695
  %v753 = vmul.f32 %v696, %v696
  %v754 = vmul.f32 %v697, %v697
  %v755 = vmul.f32 %v698, %v698
  %v756 = vmul.f32 %v699, %v699
  %v757 = vmul.f32 %v700, %v700
  %v758 = vsel %vm703, %v742, 0.0
  %v759 = vsel %vm703, %v743, 0.0
  %v760 = vadd.f32 %v758, %v759
  %v761 = vsel %vm703, %v744, 0.0
  %v762 = vadd.f32 %v760, %v761
  %v763 = vsel %vm703, %v745, 0.0
  %v764 = vadd.f32 %v762, %v763
  %v765 = vsel %vm703, %v746, 0.0
  %v766 = vadd.f32 %v764, %v765
  %v767 = vsel %vm703, %v747, 0.0
  %v768 = vadd.f32 %v766, %v767
  %v769 = vsel %vm703, %v748, 0.0
  %v770 = vadd.f32 %v768, %v769
  %v771 = vsel %vm703, %v749, 0.0
  %v772 = vadd.f32 %v770, %v771
  %v773 = vsel %vm703, %v750, 0.0
  %v774 = vadd.f32 %v772, %v773
  %v775 = vsel %vm703, %v751, 0.0
  %v776 = vadd.f32 %v774, %v775
  %v777 = vsel %vm703, %v752, 0.0
  %v778 = vadd.f32 %v776, %v777
  %v779 = vsel %vm703, %v753, 0.0
  %v780 = vadd.f32 %v778, %v779
  %v781 = vsel %vm703, %v754, 0.0
  %v782 = vadd.f32 %v780, %v781
  %v783 = vsel %vm703, %v755, 0.0
  %v784 = vadd.f32 %v782, %v783
  %v785 = vsel %vm703, %v756, 0.0
  %v786 = vadd.f32 %v784, %v785
  %v787 = vsel %vm703, %v757, 0.0
  %v788 = vadd.f32 %v786, %v787
  %v789 = vrot.slane %v788, 4
  %v790 = vadd.f32 %v788, %v789
  %v791 = vrot.slane %v790, 2
  %v792 = vadd.f32 %v790, %v791
  %v793 = vrot.slane %v792, 1
  %v794 = vadd.f32 %v792, %v793
  %v795 = vmul.f32 %v794, 0.0078125
  %v796 = vmul.f32 %v741, %v741
  %v797 = vsub.f32 %v795, %v796
  %v798 = vmax.f32 %v797, 0.0
  %v799 = vadd.f32 %v798, 1e-05
  %v800 = vrsqrt.pop %v799
  %v801 = vmul.f32 %v800, %v799
  %v802 = vmul.f32 %v801, %v800
  %v803 = vmul.f32 0.5, %v802
  %v804 = vsub.f32 1.5, %v803
  %v805 = vmul.f32 %v800, %v804
  %vm806 = vweird.f32 %v799
  %vm807 = vweird.f32 %v800
  %vm808 = vmor %vm806, %vm807
  %v809 = vsel %vm808, %v800, %v805
  %v810 = vmul.f32 %v701, %v809
  %v811 = vmul.f32 %v741, %v810
  %v812 = vsub.f32 %v702, %v811
  %v814 = vperm.slane %v810, 0
  %v816 = vmul.f32 %v685, %v814
  %v817 = vmul.f32 %v686, %v814
  %v818 = vmul.f32 %v687, %v814
  %v819 = vmul.f32 %v688, %v814
  %v820 = vmul.f32 %v689, %v814
  %v821 = vmul.f32 %v690, %v814
  %v822 = vmul.f32 %v691, %v814
  %v823 = vmul.f32 %v692, %v814
  %v824 = vmul.f32 %v693, %v814
  %v825 = vmul.f32 %v694, %v814
  %v826 = vmul.f32 %v695, %v814
  %v827 = vmul.f32 %v696, %v814
  %v828 = vmul.f32 %v697, %v814
  %v829 = vmul.f32 %v698, %v814
  %v830 = vmul.f32 %v699, %v814
  %v831 = vmul.f32 %v700, %v814
  %v833 = vperm.slane %v812, 0
  %v835 = vadd.f32 %v816, %v833
  %v836 = vadd.f32 %v817, %v833
  %v837 = vadd.f32 %v818, %v833
  %v838 = vadd.f32 %v819, %v833
  %v839 = vadd.f32 %v820, %v833
  %v840 = vadd.f32 %v821, %v833
  %v841 = vadd.f32 %v822, %v833
  %v842 = vadd.f32 %v823, %v833
  %v843 = vadd.f32 %v824, %v833
  %v844 = vadd.f32 %v825, %v833
  %v845 = vadd.f32 %v826, %v833
  %v846 = vadd.f32 %v827, %v833
  %v847 = vadd.f32 %v828, %v833
  %v848 = vadd.f32 %v829, %v833
  %v849 = vadd.f32 %v830, %v833
  %v850 = vadd.f32 %v831, %v833
  %v851 = vmul.f32 %v835, 0.2
  %v852 = vmul.f32 %v836, 0.2
  %v853 = vmul.f32 %v837, 0.2
  %v854 = vmul.f32 %v838, 0.2
  %v855 = vmul.f32 %v839, 0.2
  %v856 = vmul.f32 %v840, 0.2
  %v857 = vmul.f32 %v841, 0.2
  %v858 = vmul.f32 %v842, 0.2
  %v859 = vmul.f32 %v843, 0.2
  %v860 = vmul.f32 %v844, 0.2
  %v861 = vmul.f32 %v845, 0.2
  %v862 = vmul.f32 %v846, 0.2
  %v863 = vmul.f32 %v847, 0.2
  %v864 = vmul.f32 %v848, 0.2
  %v865 = vmul.f32 %v849, 0.2
  %v866 = vmul.f32 %v850, 0.2
  %v867 = vmax.f32 %v835, %v851
  %v868 = vmax.f32 %v836, %v852
  %v869 = vmax.f32 %v837, %v853
  %v870 = vmax.f32 %v838, %v854
  %v871 = vmax.f32 %v839, %v855
  %v872 = vmax.f32 %v840, %v856
  %v873 = vmax.f32 %v841, %v857
  %v874 = vmax.f32 %v842, %v858
  %v875 = vmax.f32 %v843, %v859
  %v876 = vmax.f32 %v844, %v860
  %v877 = vmax.f32 %v845, %v861
  %v878 = vmax.f32 %v846, %v862
  %v879 = vmax.f32 %v847, %v863
  %v880 = vmax.f32 %v848, %v864
  %v881 = vmax.f32 %v849, %v865
  %v882 = vmax.f32 %v850, %v866
  %v883 = vpack.c.bf16 %v867, %v867
  %v884 = vpack.c.bf16 %v868, %v868
  %v885 = vpack.c.bf16 %v869, %v869
  %v886 = vpack.c.bf16 %v870, %v870
  %v887 = vpack.c.bf16 %v871, %v871
  %v888 = vpack.c.bf16 %v872, %v872
  %v889 = vpack.c.bf16 %v873, %v873
  %v890 = vpack.c.bf16 %v874, %v874
  %v891 = vpack.c.bf16 %v875, %v875
  %v892 = vpack.c.bf16 %v876, %v876
  %v893 = vpack.c.bf16 %v877, %v877
  %v894 = vpack.c.bf16 %v878, %v878
  %v895 = vpack.c.bf16 %v879, %v879
  %v896 = vpack.c.bf16 %v880, %v880
  %v897 = vpack.c.bf16 %v881, %v881
  %v898 = vpack.c.bf16 %v882, %v882
  %vm899 = vcmask 257024
  %900 = vst.msk [vmem:[%s5] sm:$0xf] %vm899, %v883
  %901 = vst.msk [vmem:[%s5 + $0x4] sm:$0xf] %vm899, %v884
  %902 = vst.msk [vmem:[%s5 + $0x8] sm:$0xf] %vm899, %v885
  %903 = vst.msk [vmem:[%s5 + $0xc] sm:$0xf] %vm899, %v886
  %904 = vst.msk [vmem:[%s5 + $0x10] sm:$0xf] %vm899, %v887
  %905 = vst.msk [vmem:[%s5 + $0x14] sm:$0xf] %vm899, %v888
  %906 = vst.msk [vmem:[%s5 + $0x18] sm:$0xf] %vm899, %v889
  %907 = vst.msk [vmem:[%s5 + $0x1c] sm:$0xf] %vm899, %v890
  %908 = vst.msk [vmem:[%s5 + $0x20] sm:$0xf] %vm899, %v891
  %909 = vst.msk [vmem:[%s5 + $0x24] sm:$0xf] %vm899, %v892
  %910 = vst.msk [vmem:[%s5 + $0x28] sm:$0xf] %vm899, %v893
  %911 = vst.msk [vmem:[%s5 + $0x2c] sm:$0xf] %vm899, %v894
  %912 = vst.msk [vmem:[%s5 + $0x30] sm:$0xf] %vm899, %v895
  %913 = vst.msk [vmem:[%s5 + $0x34] sm:$0xf] %vm899, %v896
  %914 = vst.msk [vmem:[%s5 + $0x38] sm:$0xf] %vm899, %v897
  %915 = vst.msk [vmem:[%s5 + $0x3c] sm:$0xf] %vm899, %v898
  // Predicated region
  $region22: #{discriminator_forward.6} parent=0 // pred_check
    _
  $region23: #{discriminator_forward.6} parent=0 // pred_check_branch
    %917 = sbr.rel (0) target = $region25
  $region24: #{discriminator_forward.6} parent=0 // pred_region
    _
  $region25: #{discriminator_forward.6} parent=0 // pred_fallthru
    _
  // Predicated region
  $region26: #{discriminator_forward.6} parent=0 // pred_check
    _
  $region27: #{discriminator_forward.6} parent=0 // pred_check_branch
    %919 = sbr.rel (0) target = $region29
  $region28: #{discriminator_forward.6} parent=0 // pred_region
    _
  $region29: #{discriminator_forward.6} parent=0 // pred_fallthru
    _

// kernel: discriminator_forward.5
$region0: #{discriminator_forward.5}
  #allocation0 [shape = 'u32[]', space=smem, size = 0x4, offset = 0x4, fixed_abs, tag = 'smem constant byte address 0x4 - core index']
  #allocation1 [shape = 'u32[72,128]{1,0:T(1,128)}', space=vmem, size = 0x9000, scoped, tag = 'internal scratch']
  %s0 = inlined_call_operand.vmem [shape: bf16[544,32], index: 0, kind: input, shape index: {}]
  %s1 = inlined_call_operand.vmem [shape: bf16[544,32], index: 1, kind: input, shape index: {}]
  %s2 = inlined_call_operand.vmem [shape: bf16[4,32,16], index: 2, kind: input, shape index: {}]
  %s3 = inlined_call_operand.vmem [shape: f32[1,16], index: 3, kind: input, shape index: {}]
  %s4 = inlined_call_operand.vmem [shape: f32[1,16], index: 4, kind: input, shape index: {}]
  %s5 = inlined_call_operand.vmem [shape: bf16[512,16], index: 5, kind: output, shape index: {}]
  %s6 = sld [smem:[#allocation0]]
  $region30: #{discriminator_forward.5} parent=0
    _
  %s8 = ssub.s32 1, %s6
  %s9 = scalar_select 0, %s8, %s6
  // Predicated region
  $region2: #{discriminator_forward.5} parent=0 // pred_check
    _
  $region3: #{discriminator_forward.5} parent=0 // pred_check_branch
    %11 = sbr.rel (0) target = $region5
  $region4: #{discriminator_forward.5} parent=0 // pred_region
    _
  $region5: #{discriminator_forward.5} parent=0 // pred_fallthru
    _
  // Predicated region
  $region6: #{discriminator_forward.5} parent=0 // pred_check
    _
  $region7: #{discriminator_forward.5} parent=0 // pred_check_branch
    %13 = sbr.rel (0) target = $region9
  $region8: #{discriminator_forward.5} parent=0 // pred_region
    _
  $region9: #{discriminator_forward.5} parent=0 // pred_fallthru
    _
  // Predicated region
  $region10: #{discriminator_forward.5} parent=0 // pred_check
    _
  $region11: #{discriminator_forward.5} parent=0 // pred_check_branch
    %15 = sbr.rel (0) target = $region13
  $region12: #{discriminator_forward.5} parent=0 // pred_region
    _
  $region13: #{discriminator_forward.5} parent=0 // pred_fallthru
    _
  // Predicated region
  $region14: #{discriminator_forward.5} parent=0 // pred_check
    _
  $region15: #{discriminator_forward.5} parent=0 // pred_check_branch
    %17 = sbr.rel (0) target = $region17
  $region16: #{discriminator_forward.5} parent=0 // pred_region
    _
  $region17: #{discriminator_forward.5} parent=0 // pred_fallthru
    _
  // Predicated region
  $region18: #{discriminator_forward.5} parent=0 // pred_check
    _
  $region19: #{discriminator_forward.5} parent=0 // pred_check_branch
    %19 = sbr.rel (0) target = $region21
  $region20: #{discriminator_forward.5} parent=0 // pred_region
    _
  $region21: #{discriminator_forward.5} parent=0 // pred_fallthru
    _
  %v21 = vld [vmem:[%s0] sm:$0xf]
  %v22 = vld [vmem:[%s0 + $0x4] sm:$0xf]
  %v23 = vld [vmem:[%s0 + $0x8] sm:$0xf]
  %v24 = vld [vmem:[%s0 + $0xc] sm:$0xf]
  %v25 = vld [vmem:[%s0 + $0x10] sm:$0xf]
  %v26 = vld [vmem:[%s0 + $0x14] sm:$0xf]
  %v27 = vld [vmem:[%s0 + $0x18] sm:$0xf]
  %v28 = vld [vmem:[%s0 + $0x1c] sm:$0xf]
  %v29 = vld [vmem:[%s0 + $0x20] sm:$0xf]
  %v30 = vld [vmem:[%s0 + $0x24] sm:$0xf]
  %v31 = vld [vmem:[%s0 + $0x28] sm:$0xf]
  %v32 = vld [vmem:[%s0 + $0x2c] sm:$0xf]
  %v33 = vld [vmem:[%s0 + $0x30] sm:$0xf]
  %v34 = vld [vmem:[%s0 + $0x34] sm:$0xf]
  %v35 = vld [vmem:[%s0 + $0x38] sm:$0xf]
  %v36 = vld [vmem:[%s0 + $0x3c] sm:$0xf]
  %v37 = vld [vmem:[%s0 + $0x40] sm:$0xf]
  %v38 = vld [vmem:[%s0 + $0x44] sm:$0xf]
  %v39 = vld [vmem:[%s0 + $0x48] sm:$0xf]
  %v40 = vld [vmem:[%s0 + $0x4c] sm:$0xf]
  %v41 = vld [vmem:[%s0 + $0x50] sm:$0xf]
  %v42 = vld [vmem:[%s0 + $0x54] sm:$0xf]
  %v43 = vld [vmem:[%s0 + $0x58] sm:$0xf]
  %v44 = vld [vmem:[%s0 + $0x5c] sm:$0xf]
  %v45 = vld [vmem:[%s0 + $0x60] sm:$0xf]
  %v46 = vld [vmem:[%s0 + $0x64] sm:$0xf]
  %v47 = vld [vmem:[%s0 + $0x68] sm:$0xf]
  %v48 = vld [vmem:[%s0 + $0x6c] sm:$0xf]
  %v49 = vld [vmem:[%s0 + $0x70] sm:$0xf]
  %v50 = vld [vmem:[%s0 + $0x74] sm:$0xf]
  %v51 = vld [vmem:[%s0 + $0x78] sm:$0xf]
  %v52 = vld [vmem:[%s0 + $0x7c] sm:$0xf]
  %v53 = vld [vmem:[%s0 + $0x80] sm:$0xf]
  %v54 = vld [vmem:[%s0 + $0x84] sm:$0xf]
  %v55 = vld [vmem:[%s0 + $0x88] sm:$0xf]
  %v56 = vld [vmem:[%s0 + $0x8c] sm:$0xf]
  %v57 = vld [vmem:[%s0 + $0x90] sm:$0xf]
  %v58 = vld [vmem:[%s0 + $0x94] sm:$0xf]
  %v59 = vld [vmem:[%s0 + $0x98] sm:$0xf]
  %v60 = vld [vmem:[%s0 + $0x9c] sm:$0xf]
  %v61 = vld [vmem:[%s0 + $0xa0] sm:$0xf]
  %v62 = vld [vmem:[%s0 + $0xa4] sm:$0xf]
  %v63 = vld [vmem:[%s0 + $0xa8] sm:$0xf]
  %v64 = vld [vmem:[%s0 + $0xac] sm:$0xf]
  %v65 = vld [vmem:[%s0 + $0xb0] sm:$0xf]
  %v66 = vld [vmem:[%s0 + $0xb4] sm:$0xf]
  %v67 = vld [vmem:[%s0 + $0xb8] sm:$0xf]
  %v68 = vld [vmem:[%s0 + $0xbc] sm:$0xf]
  %v69 = vld [vmem:[%s0 + $0xc0] sm:$0xf]
  %v70 = vld [vmem:[%s0 + $0xc4] sm:$0xf]
  %v71 = vld [vmem:[%s0 + $0xc8] sm:$0xf]
  %v72 = vld [vmem:[%s0 + $0xcc] sm:$0xf]
  %v73 = vld [vmem:[%s0 + $0xd0] sm:$0xf]
  %v74 = vld [vmem:[%s0 + $0xd4] sm:$0xf]
  %v75 = vld [vmem:[%s0 + $0xd8] sm:$0xf]
  %v76 = vld [vmem:[%s0 + $0xdc] sm:$0xf]
  %v77 = vld [vmem:[%s0 + $0xe0] sm:$0xf]
  %v78 = vld [vmem:[%s0 + $0xe4] sm:$0xf]
  %v79 = vld [vmem:[%s0 + $0xe8] sm:$0xf]
  %v80 = vld [vmem:[%s0 + $0xec] sm:$0xf]
  %v81 = vld [vmem:[%s0 + $0xf0] sm:$0xf]
  %v82 = vld [vmem:[%s0 + $0xf4] sm:$0xf]
  %v83 = vld [vmem:[%s0 + $0xf8] sm:$0xf]
  %v84 = vld [vmem:[%s0 + $0xfc] sm:$0xf]
  %v85 = vld [vmem:[%s2] sm:$0xf]
  %v86 = vld [vmem:[%s2 + $0x4] sm:$0xf]
  %v87 = vld [vmem:[%s2 + $0x8] sm:$0xf]
  %v88 = vld [vmem:[%s2 + $0xc] sm:$0xf]
  %v89 = vld [vmem:[%s1] sm:$0xf]
  %v90 = vld [vmem:[%s1 + $0x4] sm:$0xf]
  %v91 = vld [vmem:[%s1 + $0x8] sm:$0xf]
  %v92 = vld [vmem:[%s1 + $0xc] sm:$0xf]
  %v93 = vld [vmem:[%s1 + $0x10] sm:$0xf]
  %v94 = vld [vmem:[%s1 + $0x14] sm:$0xf]
  %v95 = vld [vmem:[%s1 + $0x18] sm:$0xf]
  %v96 = vld [vmem:[%s1 + $0x1c] sm:$0xf]
  %v97 = vld [vmem:[%s1 + $0x20] sm:$0xf]
  %v98 = vld [vmem:[%s1 + $0x24] sm:$0xf]
  %v99 = vld [vmem:[%s1 + $0x28] sm:$0xf]
  %v100 = vld [vmem:[%s1 + $0x2c] sm:$0xf]
  %v101 = vld [vmem:[%s1 + $0x30] sm:$0xf]
  %v102 = vld [vmem:[%s1 + $0x34] sm:$0xf]
  %v103 = vld [vmem:[%s1 + $0x38] sm:$0xf]
  %v104 = vld [vmem:[%s1 + $0x3c] sm:$0xf]
  %v105 = vld [vmem:[%s1 + $0x40] sm:$0xf]
  %v106 = vld [vmem:[%s1 + $0x44] sm:$0xf]
  %v107 = vld [vmem:[%s1 + $0x48] sm:$0xf]
  %v108 = vld [vmem:[%s1 + $0x4c] sm:$0xf]
  %v109 = vld [vmem:[%s1 + $0x50] sm:$0xf]
  %v110 = vld [vmem:[%s1 + $0x54] sm:$0xf]
  %v111 = vld [vmem:[%s1 + $0x58] sm:$0xf]
  %v112 = vld [vmem:[%s1 + $0x5c] sm:$0xf]
  %v113 = vld [vmem:[%s1 + $0x60] sm:$0xf]
  %v114 = vld [vmem:[%s1 + $0x64] sm:$0xf]
  %v115 = vld [vmem:[%s1 + $0x68] sm:$0xf]
  %v116 = vld [vmem:[%s1 + $0x6c] sm:$0xf]
  %v117 = vld [vmem:[%s1 + $0x70] sm:$0xf]
  %v118 = vld [vmem:[%s1 + $0x74] sm:$0xf]
  %v119 = vld [vmem:[%s1 + $0x78] sm:$0xf]
  %v120 = vld [vmem:[%s1 + $0x7c] sm:$0xf]
  %v121 = vld [vmem:[%s1 + $0x80] sm:$0xf]
  %v122 = vld [vmem:[%s1 + $0x84] sm:$0xf]
  %v123 = vld [vmem:[%s1 + $0x88] sm:$0xf]
  %v124 = vld [vmem:[%s1 + $0x8c] sm:$0xf]
  %v125 = vld [vmem:[%s1 + $0x90] sm:$0xf]
  %v126 = vld [vmem:[%s1 + $0x94] sm:$0xf]
  %v127 = vld [vmem:[%s1 + $0x98] sm:$0xf]
  %v128 = vld [vmem:[%s1 + $0x9c] sm:$0xf]
  %v129 = vld [vmem:[%s1 + $0xa0] sm:$0xf]
  %v130 = vld [vmem:[%s1 + $0xa4] sm:$0xf]
  %v131 = vld [vmem:[%s1 + $0xa8] sm:$0xf]
  %v132 = vld [vmem:[%s1 + $0xac] sm:$0xf]
  %v133 = vld [vmem:[%s1 + $0xb0] sm:$0xf]
  %v134 = vld [vmem:[%s1 + $0xb4] sm:$0xf]
  %v135 = vld [vmem:[%s1 + $0xb8] sm:$0xf]
  %v136 = vld [vmem:[%s1 + $0xbc] sm:$0xf]
  %v137 = vld [vmem:[%s1 + $0xc0] sm:$0xf]
  %v138 = vld [vmem:[%s1 + $0xc4] sm:$0xf]
  %v139 = vld [vmem:[%s1 + $0xc8] sm:$0xf]
  %v140 = vld [vmem:[%s1 + $0xcc] sm:$0xf]
  %v141 = vld [vmem:[%s1 + $0xd0] sm:$0xf]
  %v142 = vld [vmem:[%s1 + $0xd4] sm:$0xf]
  %v143 = vld [vmem:[%s1 + $0xd8] sm:$0xf]
  %v144 = vld [vmem:[%s1 + $0xdc] sm:$0xf]
  %v145 = vld [vmem:[%s1 + $0xe0] sm:$0xf]
  %v146 = vld [vmem:[%s1 + $0xe4] sm:$0xf]
  %v147 = vld [vmem:[%s1 + $0xe8] sm:$0xf]
  %v148 = vld [vmem:[%s1 + $0xec] sm:$0xf]
  %v149 = vld [vmem:[%s1 + $0xf0] sm:$0xf]
  %v150 = vld [vmem:[%s1 + $0xf4] sm:$0xf]
  %v151 = vld [vmem:[%s1 + $0xf8] sm:$0xf]
  %v152 = vld [vmem:[%s1 + $0xfc] sm:$0xf]
  %s153 = scalar_lea.vmem %s2, 16
  %v154 = vld [vmem:[%s153] sm:$0xf]
  %v155 = vld [vmem:[%s153 + $0x4] sm:$0xf]
  %v156 = vld [vmem:[%s153 + $0x8] sm:$0xf]
  %v157 = vld [vmem:[%s153 + $0xc] sm:$0xf]
  %v222 = vunpack.c.l.b16 %v89
  %v223 = vunpack.c.l.b16 %v90
  %v224 = vunpack.c.l.b16 %v91
  %v225 = vunpack.c.l.b16 %v92
  %v226 = vunpack.c.l.b16 %v93
  %v227 = vunpack.c.l.b16 %v94
  %v228 = vunpack.c.l.b16 %v95
  %v229 = vunpack.c.l.b16 %v96
  %v230 = vunpack.c.l.b16 %v97
  %v231 = vunpack.c.l.b16 %v98
  %v232 = vunpack.c.l.b16 %v99
  %v233 = vunpack.c.l.b16 %v100
  %v234 = vunpack.c.l.b16 %v101
  %v235 = vunpack.c.l.b16 %v102
  %v236 = vunpack.c.l.b16 %v103
  %v237 = vunpack.c.l.b16 %v104
  %v238 = vunpack.c.l.b16 %v105
  %v239 = vunpack.c.l.b16 %v106
  %v240 = vunpack.c.l.b16 %v107
  %v241 = vunpack.c.l.b16 %v108
  %v242 = vunpack.c.l.b16 %v109
  %v243 = vunpack.c.l.b16 %v110
  %v244 = vunpack.c.l.b16 %v111
  %v245 = vunpack.c.l.b16 %v112
  %v246 = vunpack.c.l.b16 %v113
  %v247 = vunpack.c.l.b16 %v114
  %v248 = vunpack.c.l.b16 %v115
  %v249 = vunpack.c.l.b16 %v116
  %v250 = vunpack.c.l.b16 %v117
  %v251 = vunpack.c.l.b16 %v118
  %v252 = vunpack.c.l.b16 %v119
  %v253 = vunpack.c.l.b16 %v120
  %v254 = vunpack.c.l.b16 %v121
  %v255 = vunpack.c.l.b16 %v122
  %v256 = vunpack.c.l.b16 %v123
  %v257 = vunpack.c.l.b16 %v124
  %v258 = vunpack.c.l.b16 %v125
  %v259 = vunpack.c.l.b16 %v126
  %v260 = vunpack.c.l.b16 %v127
  %v261 = vunpack.c.l.b16 %v128
  %v262 = vunpack.c.l.b16 %v129
  %v263 = vunpack.c.l.b16 %v130
  %v264 = vunpack.c.l.b16 %v131
  %v265 = vunpack.c.l.b16 %v132
  %v266 = vunpack.c.l.b16 %v133
  %v267 = vunpack.c.l.b16 %v134
  %v268 = vunpack.c.l.b16 %v135
  %v269 = vunpack.c.l.b16 %v136
  %v270 = vunpack.c.l.b16 %v137
  %v271 = vunpack.c.l.b16 %v138
  %v272 = vunpack.c.l.b16 %v139
  %v273 = vunpack.c.l.b16 %v140
  %v274 = vunpack.c.l.b16 %v141
  %v275 = vunpack.c.l.b16 %v142
  %v276 = vunpack.c.l.b16 %v143
  %v277 = vunpack.c.l.b16 %v144
  %v278 = vunpack.c.l.b16 %v145
  %v279 = vunpack.c.l.b16 %v146
  %v280 = vunpack.c.l.b16 %v147
  %v281 = vunpack.c.l.b16 %v148
  %v282 = vunpack.c.l.b16 %v149
  %v283 = vunpack.c.l.b16 %v150
  %v284 = vunpack.c.l.b16 %v151
  %v285 = vunpack.c.l.b16 %v152
  %v286 = vpack.c.b16 %v223, %v222
  %v287 = vpack.c.b16 %v225, %v224
  %v288 = vpack.c.b16 %v227, %v226
  %v289 = vpack.c.b16 %v229, %v228
  %v290 = vpack.c.b16 %v231, %v230
  %v291 = vpack.c.b16 %v233, %v232
  %v292 = vpack.c.b16 %v235, %v234
  %v293 = vpack.c.b16 %v237, %v236
  %v294 = vpack.c.b16 %v239, %v238
  %v295 = vpack.c.b16 %v241, %v240
  %v296 = vpack.c.b16 %v243, %v242
  %v297 = vpack.c.b16 %v245, %v244
  %v298 = vpack.c.b16 %v247, %v246
  %v299 = vpack.c.b16 %v249, %v248
  %v300 = vpack.c.b16 %v251, %v250
  %v301 = vpack.c.b16 %v253, %v252
  %v302 = vpack.c.b16 %v255, %v254
  %v303 = vpack.c.b16 %v257, %v256
  %v304 = vpack.c.b16 %v259, %v258
  %v305 = vpack.c.b16 %v261, %v260
  %v306 = vpack.c.b16 %v263, %v262
  %v307 = vpack.c.b16 %v265, %v264
  %v308 = vpack.c.b16 %v267, %v266
  %v309 = vpack.c.b16 %v269, %v268
  %v310 = vpack.c.b16 %v271, %v270
  %v311 = vpack.c.b16 %v273, %v272
  %v312 = vpack.c.b16 %v275, %v274
  %v313 = vpack.c.b16 %v277, %v276
  %v314 = vpack.c.b16 %v279, %v278
  %v315 = vpack.c.b16 %v281, %v280
  %v316 = vpack.c.b16 %v283, %v282
  %v317 = vpack.c.b16 %v285, %v284
  %v322 = vunpack.c.l.b16 %v154
  %v323 = vunpack.c.l.b16 %v155
  %v324 = vunpack.c.l.b16 %v156
  %v325 = vunpack.c.l.b16 %v157
  %v326 = vpack.c.b16 %v323, %v322
  %v327 = vpack.c.b16 %v325, %v324
  %vm330 = vcmask 261120
  %v332 = vsel %vm330, %v286, 0
  %v335 = vsel %vm330, %v287, 0
  %v338 = vsel %vm330, %v288, 0
  %v341 = vsel %vm330, %v289, 0
  %v344 = vsel %vm330, %v290, 0
  %v347 = vsel %vm330, %v291, 0
  %v350 = vsel %vm330, %v292, 0
  %v353 = vsel %vm330, %v293, 0
  %v356 = vsel %vm330, %v294, 0
  %v359 = vsel %vm330, %v295, 0
  %v362 = vsel %vm330, %v296, 0
  %v365 = vsel %vm330, %v297, 0
  %v368 = vsel %vm330, %v298, 0
  %v371 = vsel %vm330, %v299, 0
  %v374 = vsel %vm330, %v300, 0
  %v377 = vsel %vm330, %v301, 0
  %v380 = vsel %vm330, %v302, 0
  %v383 = vsel %vm330, %v303, 0
  %v386 = vsel %vm330, %v304, 0
  %v389 = vsel %vm330, %v305, 0
  %v392 = vsel %vm330, %v306, 0
  %v395 = vsel %vm330, %v307, 0
  %v398 = vsel %vm330, %v308, 0
  %v401 = vsel %vm330, %v309, 0
  %v404 = vsel %vm330, %v310, 0
  %v407 = vsel %vm330, %v311, 0
  %v410 = vsel %vm330, %v312, 0
  %v413 = vsel %vm330, %v313, 0
  %v416 = vsel %vm330, %v314, 0
  %v419 = vsel %vm330, %v315, 0
  %v422 = vsel %vm330, %v316, 0
  %v425 = vsel %vm330, %v317, 0
  %427 = vmatpush.bf16.msra.mxu0 0
  %428 = vmatpush.bf16.msra.mxu0 0
  %429 = vmatpush.bf16.msra.mxu0 0
  %430 = vmatpush.bf16.msra.mxu0 0
  %431 = vmatpush.bf16.msra.mxu0 0
  %432 = vmatpush.bf16.msra.mxu0 0
  %433 = vmatpush.bf16.msra.mxu0 %v327
  %434 = vmatpush.bf16.msra.mxu0 %v326
  %435 = vmatmul.bf16.gmra.mxu0 %v332
  %v436 = vpop.f32.mrf.mxu0
  %v437 = vadd.f32 0.0, %v436
  %v438 = vpop.f32.mrf.mxu0
  %v439 = vadd.f32 0.0, %v438
  %440 = vmatmul.bf16.gmra.mxu0 %v335
  %v441 = vpop.f32.mrf.mxu0
  %v442 = vadd.f32 0.0, %v441
  %v443 = vpop.f32.mrf.mxu0
  %v444 = vadd.f32 0.0, %v443
  %445 = vmatmul.bf16.gmra.mxu0 %v338
  %v446 = vpop.f32.mrf.mxu0
  %v447 = vadd.f32 0.0, %v446
  %v448 = vpop.f32.mrf.mxu0
  %v449 = vadd.f32 0.0, %v448
  %450 = vmatmul.bf16.gmra.mxu0 %v341
  %v451 = vpop.f32.mrf.mxu0
  %v452 = vadd.f32 0.0, %v451
  %v453 = vpop.f32.mrf.mxu0
  %v454 = vadd.f32 0.0, %v453
  %455 = vmatmul.bf16.gmra.mxu0 %v344
  %v456 = vpop.f32.mrf.mxu0
  %v457 = vadd.f32 0.0, %v456
  %v458 = vpop.f32.mrf.mxu0
  %v459 = vadd.f32 0.0, %v458
  %460 = vmatmul.bf16.gmra.mxu0 %v347
  %v461 = vpop.f32.mrf.mxu0
  %v462 = vadd.f32 0.0, %v461
  %v463 = vpop.f32.mrf.mxu0
  %v464 = vadd.f32 0.0, %v463
  %465 = vmatmul.bf16.gmra.mxu0 %v350
  %v466 = vpop.f32.mrf.mxu0
  %v467 = vadd.f32 0.0, %v466
  %v468 = vpop.f32.mrf.mxu0
  %v469 = vadd.f32 0.0, %v468
  %470 = vmatmul.bf16.gmra.mxu0 %v353
  %v471 = vpop.f32.mrf.mxu0
  %v472 = vadd.f32 0.0, %v471
  %v473 = vpop.f32.mrf.mxu0
  %v474 = vadd.f32 0.0, %v473
  %475 = vmatmul.bf16.gmra.mxu0 %v356
  %v476 = vpop.f32.mrf.mxu0
  %v477 = vadd.f32 0.0, %v476
  %v478 = vpop.f32.mrf.mxu0
  %v479 = vadd.f32 0.0, %v478
  %480 = vmatmul.bf16.gmra.mxu0 %v359
  %v481 = vpop.f32.mrf.mxu0
  %v482 = vadd.f32 0.0, %v481
  %v483 = vpop.f32.mrf.mxu0
  %v484 = vadd.f32 0.0, %v483
  %485 = vmatmul.bf16.gmra.mxu0 %v362
  %v486 = vpop.f32.mrf.mxu0
  %v487 = vadd.f32 0.0, %v486
  %v488 = vpop.f32.mrf.mxu0
  %v489 = vadd.f32 0.0, %v488
  %490 = vmatmul.bf16.gmra.mxu0 %v365
  %v491 = vpop.f32.mrf.mxu0
  %v492 = vadd.f32 0.0, %v491
  %v493 = vpop.f32.mrf.mxu0
  %v494 = vadd.f32 0.0, %v493
  %495 = vmatmul.bf16.gmra.mxu0 %v368
  %v496 = vpop.f32.mrf.mxu0
  %v497 = vadd.f32 0.0, %v496
  %v498 = vpop.f32.mrf.mxu0
  %v499 = vadd.f32 0.0, %v498
  %500 = vmatmul.bf16.gmra.mxu0 %v371
  %v501 = vpop.f32.mrf.mxu0
  %v502 = vadd.f32 0.0, %v501
  %v503 = vpop.f32.mrf.mxu0
  %v504 = vadd.f32 0.0, %v503
  %505 = vmatmul.bf16.gmra.mxu0 %v374
  %v506 = vpop.f32.mrf.mxu0
  %v507 = vadd.f32 0.0, %v506
  %v508 = vpop.f32.mrf.mxu0
  %v509 = vadd.f32 0.0, %v508
  %510 = vmatmul.bf16.gmra.mxu0 %v377
  %v511 = vpop.f32.mrf.mxu0
  %v512 = vadd.f32 0.0, %v511
  %v513 = vpop.f32.mrf.mxu0
  %v514 = vadd.f32 0.0, %v513
  %515 = vmatmul.bf16.gmra.mxu0 %v380
  %v516 = vpop.f32.mrf.mxu0
  %v517 = vadd.f32 0.0, %v516
  %v518 = vpop.f32.mrf.mxu0
  %v519 = vadd.f32 0.0, %v518
  %520 = vmatmul.bf16.gmra.mxu0 %v383
  %v521 = vpop.f32.mrf.mxu0
  %v522 = vadd.f32 0.0, %v521
  %v523 = vpop.f32.mrf.mxu0
  %v524 = vadd.f32 0.0, %v523
  %525 = vmatmul.bf16.gmra.mxu0 %v386
  %v526 = vpop.f32.mrf.mxu0
  %v527 = vadd.f32 0.0, %v526
  %v528 = vpop.f32.mrf.mxu0
  %v529 = vadd.f32 0.0, %v528
  %530 = vmatmul.bf16.gmra.mxu0 %v389
  %v531 = vpop.f32.mrf.mxu0
  %v532 = vadd.f32 0.0, %v531
  %v533 = vpop.f32.mrf.mxu0
  %v534 = vadd.f32 0.0, %v533
  %535 = vmatmul.bf16.gmra.mxu0 %v392
  %v536 = vpop.f32.mrf.mxu0
  %v537 = vadd.f32 0.0, %v536
  %v538 = vpop.f32.mrf.mxu0
  %v539 = vadd.f32 0.0, %v538
  %540 = vmatmul.bf16.gmra.mxu0 %v395
  %v541 = vpop.f32.mrf.mxu0
  %v542 = vadd.f32 0.0, %v541
  %v543 = vpop.f32.mrf.mxu0
  %v544 = vadd.f32 0.0, %v543
  %545 = vmatmul.bf16.gmra.mxu0 %v398
  %v546 = vpop.f32.mrf.mxu0
  %v547 = vadd.f32 0.0, %v546
  %v548 = vpop.f32.mrf.mxu0
  %v549 = vadd.f32 0.0, %v548
  %550 = vmatmul.bf16.gmra.mxu0 %v401
  %v551 = vpop.f32.mrf.mxu0
  %v552 = vadd.f32 0.0, %v551
  %v553 = vpop.f32.mrf.mxu0
  %v554 = vadd.f32 0.0, %v553
  %555 = vmatmul.bf16.gmra.mxu0 %v404
  %v556 = vpop.f32.mrf.mxu0
  %v557 = vadd.f32 0.0, %v556
  %v558 = vpop.f32.mrf.mxu0
  %v559 = vadd.f32 0.0, %v558
  %560 = vmatmul.bf16.gmra.mxu0 %v407
  %v561 = vpop.f32.mrf.mxu0
  %v562 = vadd.f32 0.0, %v561
  %v563 = vpop.f32.mrf.mxu0
  %v564 = vadd.f32 0.0, %v563
  %565 = vmatmul.bf16.gmra.mxu0 %v410
  %v566 = vpop.f32.mrf.mxu0
  %v567 = vadd.f32 0.0, %v566
  %v568 = vpop.f32.mrf.mxu0
  %v569 = vadd.f32 0.0, %v568
  %570 = vmatmul.bf16.gmra.mxu0 %v413
  %v571 = vpop.f32.mrf.mxu0
  %v572 = vadd.f32 0.0, %v571
  %v573 = vpop.f32.mrf.mxu0
  %v574 = vadd.f32 0.0, %v573
  %575 = vmatmul.bf16.gmra.mxu0 %v416
  %v576 = vpop.f32.mrf.mxu0
  %v577 = vadd.f32 0.0, %v576
  %v578 = vpop.f32.mrf.mxu0
  %v579 = vadd.f32 0.0, %v578
  %580 = vmatmul.bf16.gmra.mxu0 %v419
  %v581 = vpop.f32.mrf.mxu0
  %v582 = vadd.f32 0.0, %v581
  %v583 = vpop.f32.mrf.mxu0
  %v584 = vadd.f32 0.0, %v583
  %585 = vmatmul.bf16.gmra.mxu0 %v422
  %v586 = vpop.f32.mrf.mxu0
  %v587 = vadd.f32 0.0, %v586
  %v588 = vpop.f32.mrf.mxu0
  %v589 = vadd.f32 0.0, %v588
  %590 = vmatmul.bf16.gmra.mxu0 %v425
  %v591 = vpop.f32.mrf.mxu0
  %v592 = vadd.f32 0.0, %v591
  %v593 = vpop.f32.mrf.mxu0
  %v594 = vadd.f32 0.0, %v593
  %595 = vdwg.mxu0
  %v660 = vunpack.c.l.b16 %v21
  %v661 = vunpack.c.l.b16 %v22
  %v662 = vunpack.c.l.b16 %v23
  %v663 = vunpack.c.l.b16 %v24
  %v664 = vunpack.c.l.b16 %v25
  %v665 = vunpack.c.l.b16 %v26
  %v666 = vunpack.c.l.b16 %v27
  %v667 = vunpack.c.l.b16 %v28
  %v668 = vunpack.c.l.b16 %v29
  %v669 = vunpack.c.l.b16 %v30
  %v670 = vunpack.c.l.b16 %v31
  %v671 = vunpack.c.l.b16 %v32
  %v672 = vunpack.c.l.b16 %v33
  %v673 = vunpack.c.l.b16 %v34
  %v674 = vunpack.c.l.b16 %v35
  %v675 = vunpack.c.l.b16 %v36
  %v676 = vunpack.c.l.b16 %v37
  %v677 = vunpack.c.l.b16 %v38
  %v678 = vunpack.c.l.b16 %v39
  %v679 = vunpack.c.l.b16 %v40
  %v680 = vunpack.c.l.b16 %v41
  %v681 = vunpack.c.l.b16 %v42
  %v682 = vunpack.c.l.b16 %v43
  %v683 = vunpack.c.l.b16 %v44
  %v684 = vunpack.c.l.b16 %v45
  %v685 = vunpack.c.l.b16 %v46
  %v686 = vunpack.c.l.b16 %v47
  %v687 = vunpack.c.l.b16 %v48
  %v688 = vunpack.c.l.b16 %v49
  %v689 = vunpack.c.l.b16 %v50
  %v690 = vunpack.c.l.b16 %v51
  %v691 = vunpack.c.l.b16 %v52
  %v692 = vunpack.c.l.b16 %v53
  %v693 = vunpack.c.l.b16 %v54
  %v694 = vunpack.c.l.b16 %v55
  %v695 = vunpack.c.l.b16 %v56
  %v696 = vunpack.c.l.b16 %v57
  %v697 = vunpack.c.l.b16 %v58
  %v698 = vunpack.c.l.b16 %v59
  %v699 = vunpack.c.l.b16 %v60
  %v700 = vunpack.c.l.b16 %v61
  %v701 = vunpack.c.l.b16 %v62
  %v702 = vunpack.c.l.b16 %v63
  %v703 = vunpack.c.l.b16 %v64
  %v704 = vunpack.c.l.b16 %v65
  %v705 = vunpack.c.l.b16 %v66
  %v706 = vunpack.c.l.b16 %v67
  %v707 = vunpack.c.l.b16 %v68
  %v708 = vunpack.c.l.b16 %v69
  %v709 = vunpack.c.l.b16 %v70
  %v710 = vunpack.c.l.b16 %v71
  %v711 = vunpack.c.l.b16 %v72
  %v712 = vunpack.c.l.b16 %v73
  %v713 = vunpack.c.l.b16 %v74
  %v714 = vunpack.c.l.b16 %v75
  %v715 = vunpack.c.l.b16 %v76
  %v716 = vunpack.c.l.b16 %v77
  %v717 = vunpack.c.l.b16 %v78
  %v718 = vunpack.c.l.b16 %v79
  %v719 = vunpack.c.l.b16 %v80
  %v720 = vunpack.c.l.b16 %v81
  %v721 = vunpack.c.l.b16 %v82
  %v722 = vunpack.c.l.b16 %v83
  %v723 = vunpack.c.l.b16 %v84
  %v724 = vpack.c.b16 %v661, %v660
  %v725 = vpack.c.b16 %v663, %v662
  %v726 = vpack.c.b16 %v665, %v664
  %v727 = vpack.c.b16 %v667, %v666
  %v728 = vpack.c.b16 %v669, %v668
  %v729 = vpack.c.b16 %v671, %v670
  %v730 = vpack.c.b16 %v673, %v672
  %v731 = vpack.c.b16 %v675, %v674
  %v732 = vpack.c.b16 %v677, %v676
  %v733 = vpack.c.b16 %v679, %v678
  %v734 = vpack.c.b16 %v681, %v680
  %v735 = vpack.c.b16 %v683, %v682
  %v736 = vpack.c.b16 %v685, %v684
  %v737 = vpack.c.b16 %v687, %v686
  %v738 = vpack.c.b16 %v689, %v688
  %v739 = vpack.c.b16 %v691, %v690
  %v740 = vpack.c.b16 %v693, %v692
  %v741 = vpack.c.b16 %v695, %v694
  %v742 = vpack.c.b16 %v697, %v696
  %v743 = vpack.c.b16 %v699, %v698
  %v744 = vpack.c.b16 %v701, %v700
  %v745 = vpack.c.b16 %v703, %v702
  %v746 = vpack.c.b16 %v705, %v704
  %v747 = vpack.c.b16 %v707, %v706
  %v748 = vpack.c.b16 %v709, %v708
  %v749 = vpack.c.b16 %v711, %v710
  %v750 = vpack.c.b16 %v713, %v712
  %v751 = vpack.c.b16 %v715, %v714
  %v752 = vpack.c.b16 %v717, %v716
  %v753 = vpack.c.b16 %v719, %v718
  %v754 = vpack.c.b16 %v721, %v720
  %v755 = vpack.c.b16 %v723, %v722
  %v760 = vunpack.c.l.b16 %v85
  %v761 = vunpack.c.l.b16 %v86
  %v762 = vunpack.c.l.b16 %v87
  %v763 = vunpack.c.l.b16 %v88
  %v764 = vpack.c.b16 %v761, %v760
  %v765 = vpack.c.b16 %v763, %v762
  %v769 = vsel %vm330, %v724, 0
  %v772 = vsel %vm330, %v725, 0
  %v775 = vsel %vm330, %v726, 0
  %v778 = vsel %vm330, %v727, 0
  %v781 = vsel %vm330, %v728, 0
  %v784 = vsel %vm330, %v729, 0
  %v787 = vsel %vm330, %v730, 0
  %v790 = vsel %vm330, %v731, 0
  %v793 = vsel %vm330, %v732, 0
  %v796 = vsel %vm330, %v733, 0
  %v799 = vsel %vm330, %v734, 0
  %v802 = vsel %vm330, %v735, 0
  %v805 = vsel %vm330, %v736, 0
  %v808 = vsel %vm330, %v737, 0
  %v811 = vsel %vm330, %v738, 0
  %v814 = vsel %vm330, %v739, 0
  %v817 = vsel %vm330, %v740, 0
  %v820 = vsel %vm330, %v741, 0
  %v823 = vsel %vm330, %v742, 0
  %v826 = vsel %vm330, %v743, 0
  %v829 = vsel %vm330, %v744, 0
  %v832 = vsel %vm330, %v745, 0
  %v835 = vsel %vm330, %v746, 0
  %v838 = vsel %vm330, %v747, 0
  %v841 = vsel %vm330, %v748, 0
  %v844 = vsel %vm330, %v749, 0
  %v847 = vsel %vm330, %v750, 0
  %v850 = vsel %vm330, %v751, 0
  %v853 = vsel %vm330, %v752, 0
  %v856 = vsel %vm330, %v753, 0
  %v859 = vsel %vm330, %v754, 0
  %v862 = vsel %vm330, %v755, 0
  %864 = vmatpush.bf16.msra.mxu0 0
  %865 = vmatpush.bf16.msra.mxu0 0
  %866 = vmatpush.bf16.msra.mxu0 0
  %867 = vmatpush.bf16.msra.mxu0 0
  %868 = vmatpush.bf16.msra.mxu0 0
  %869 = vmatpush.bf16.msra.mxu0 0
  %870 = vmatpush.bf16.msra.mxu0 %v765
  %871 = vmatpush.bf16.msra.mxu0 %v764
  %872 = vmatmul.bf16.gmra.mxu0 %v769
  %v873 = vpop.f32.mrf.mxu0
  %v874 = vadd.f32 %v437, %v873
  %v875 = vpop.f32.mrf.mxu0
  %v876 = vadd.f32 %v439, %v875
  %877 = vmatmul.bf16.gmra.mxu0 %v772
  %v878 = vpop.f32.mrf.mxu0
  %v879 = vadd.f32 %v442, %v878
  %v880 = vpop.f32.mrf.mxu0
  %v881 = vadd.f32 %v444, %v880
  %882 = vmatmul.bf16.gmra.mxu0 %v775
  %v883 = vpop.f32.mrf.mxu0
  %v884 = vadd.f32 %v447, %v883
  %v885 = vpop.f32.mrf.mxu0
  %v886 = vadd.f32 %v449, %v885
  %887 = vmatmul.bf16.gmra.mxu0 %v778
  %v888 = vpop.f32.mrf.mxu0
  %v889 = vadd.f32 %v452, %v888
  %v890 = vpop.f32.mrf.mxu0
  %v891 = vadd.f32 %v454, %v890
  %892 = vmatmul.bf16.gmra.mxu0 %v781
  %v893 = vpop.f32.mrf.mxu0
  %v894 = vadd.f32 %v457, %v893
  %v895 = vpop.f32.mrf.mxu0
  %v896 = vadd.f32 %v459, %v895
  %897 = vmatmul.bf16.gmra.mxu0 %v784
  %v898 = vpop.f32.mrf.mxu0
  %v899 = vadd.f32 %v462, %v898
  %v900 = vpop.f32.mrf.mxu0
  %v901 = vadd.f32 %v464, %v900
  %902 = vmatmul.bf16.gmra.mxu0 %v787
  %v903 = vpop.f32.mrf.mxu0
  %v904 = vadd.f32 %v467, %v903
  %v905 = vpop.f32.mrf.mxu0
  %v906 = vadd.f32 %v469, %v905
  %907 = vmatmul.bf16.gmra.mxu0 %v790
  %v908 = vpop.f32.mrf.mxu0
  %v909 = vadd.f32 %v472, %v908
  %v910 = vpop.f32.mrf.mxu0
  %v911 = vadd.f32 %v474, %v910
  %912 = vmatmul.bf16.gmra.mxu0 %v793
  %v913 = vpop.f32.mrf.mxu0
  %v914 = vadd.f32 %v477, %v913
  %v915 = vpop.f32.mrf.mxu0
  %v916 = vadd.f32 %v479, %v915
  %917 = vmatmul.bf16.gmra.mxu0 %v796
  %v918 = vpop.f32.mrf.mxu0
  %v919 = vadd.f32 %v482, %v918
  %v920 = vpop.f32.mrf.mxu0
  %v921 = vadd.f32 %v484, %v920
  %922 = vmatmul.bf16.gmra.mxu0 %v799
  %v923 = vpop.f32.mrf.mxu0
  %v924 = vadd.f32 %v487, %v923
  %v925 = vpop.f32.mrf.mxu0
  %v926 = vadd.f32 %v489, %v925
  %927 = vmatmul.bf16.gmra.mxu0 %v802
  %v928 = vpop.f32.mrf.mxu0
  %v929 = vadd.f32 %v492, %v928
  %v930 = vpop.f32.mrf.mxu0
  %v931 = vadd.f32 %v494, %v930
  %932 = vmatmul.bf16.gmra.mxu0 %v805
  %v933 = vpop.f32.mrf.mxu0
  %v934 = vadd.f32 %v497, %v933
  %v935 = vpop.f32.mrf.mxu0
  %v936 = vadd.f32 %v499, %v935
  %937 = vmatmul.bf16.gmra.mxu0 %v808
  %v938 = vpop.f32.mrf.mxu0
  %v939 = vadd.f32 %v502, %v938
  %v940 = vpop.f32.mrf.mxu0
  %v941 = vadd.f32 %v504, %v940
  %942 = vmatmul.bf16.gmra.mxu0 %v811
  %v943 = vpop.f32.mrf.mxu0
  %v944 = vadd.f32 %v507, %v943
  %v945 = vpop.f32.mrf.mxu0
  %v946 = vadd.f32 %v509, %v945
  %947 = vmatmul.bf16.gmra.mxu0 %v814
  %v948 = vpop.f32.mrf.mxu0
  %v949 = vadd.f32 %v512, %v948
  %v950 = vpop.f32.mrf.mxu0
  %v951 = vadd.f32 %v514, %v950
  %952 = vmatmul.bf16.gmra.mxu0 %v817
  %v953 = vpop.f32.mrf.mxu0
  %v954 = vadd.f32 %v517, %v953
  %v955 = vpop.f32.mrf.mxu0
  %v956 = vadd.f32 %v519, %v955
  %957 = vmatmul.bf16.gmra.mxu0 %v820
  %v958 = vpop.f32.mrf.mxu0
  %v959 = vadd.f32 %v522, %v958
  %v960 = vpop.f32.mrf.mxu0
  %v961 = vadd.f32 %v524, %v960
  %962 = vmatmul.bf16.gmra.mxu0 %v823
  %v963 = vpop.f32.mrf.mxu0
  %v964 = vadd.f32 %v527, %v963
  %v965 = vpop.f32.mrf.mxu0
  %v966 = vadd.f32 %v529, %v965
  %967 = vmatmul.bf16.gmra.mxu0 %v826
  %v968 = vpop.f32.mrf.mxu0
  %v969 = vadd.f32 %v532, %v968
  %v970 = vpop.f32.mrf.mxu0
  %v971 = vadd.f32 %v534, %v970
  %972 = vmatmul.bf16.gmra.mxu0 %v829
  %v973 = vpop.f32.mrf.mxu0
  %v974 = vadd.f32 %v537, %v973
  %v975 = vpop.f32.mrf.mxu0
  %v976 = vadd.f32 %v539, %v975
  %977 = vmatmul.bf16.gmra.mxu0 %v832
  %v978 = vpop.f32.mrf.mxu0
  %v979 = vadd.f32 %v542, %v978
  %v980 = vpop.f32.mrf.mxu0
  %v981 = vadd.f32 %v544, %v980
  %982 = vmatmul.bf16.gmra.mxu0 %v835
  %v983 = vpop.f32.mrf.mxu0
  %v984 = vadd.f32 %v547, %v983
  %v985 = vpop.f32.mrf.mxu0
  %v986 = vadd.f32 %v549, %v985
  %987 = vmatmul.bf16.gmra.mxu0 %v838
  %v988 = vpop.f32.mrf.mxu0
  %v989 = vadd.f32 %v552, %v988
  %v990 = vpop.f32.mrf.mxu0
  %v991 = vadd.f32 %v554, %v990
  %992 = vmatmul.bf16.gmra.mxu0 %v841
  %v993 = vpop.f32.mrf.mxu0
  %v994 = vadd.f32 %v557, %v993
  %v995 = vpop.f32.mrf.mxu0
  %v996 = vadd.f32 %v559, %v995
  %997 = vmatmul.bf16.gmra.mxu0 %v844
  %v998 = vpop.f32.mrf.mxu0
  %v999 = vadd.f32 %v562, %v998
  %v1000 = vpop.f32.mrf.mxu0
  %v1001 = vadd.f32 %v564, %v1000
  %1002 = vmatmul.bf16.gmra.mxu0 %v847
  %v1003 = vpop.f32.mrf.mxu0
  %v1004 = vadd.f32 %v567, %v1003
  %v1005 = vpop.f32.mrf.mxu0
  %v1006 = vadd.f32 %v569, %v1005
  %1007 = vmatmul.bf16.gmra.mxu0 %v850
  %v1008 = vpop.f32.mrf.mxu0
  %v1009 = vadd.f32 %v572, %v1008
  %v1010 = vpop.f32.mrf.mxu0
  %v1011 = vadd.f32 %v574, %v1010
  %1012 = vmatmul.bf16.gmra.mxu0 %v853
  %v1013 = vpop.f32.mrf.mxu0
  %v1014 = vadd.f32 %v577, %v1013
  %v1015 = vpop.f32.mrf.mxu0
  %v1016 = vadd.f32 %v579, %v1015
  %1017 = vmatmul.bf16.gmra.mxu0 %v856
  %v1018 = vpop.f32.mrf.mxu0
  %v1019 = vadd.f32 %v582, %v1018
  %v1020 = vpop.f32.mrf.mxu0
  %v1021 = vadd.f32 %v584, %v1020
  %1022 = vmatmul.bf16.gmra.mxu0 %v859
  %v1023 = vpop.f32.mrf.mxu0
  %v1024 = vadd.f32 %v587, %v1023
  %v1025 = vpop.f32.mrf.mxu0
  %v1026 = vadd.f32 %v589, %v1025
  %1027 = vmatmul.bf16.gmra.mxu0 %v862
  %v1028 = vpop.f32.mrf.mxu0
  %v1029 = vadd.f32 %v592, %v1028
  %v1030 = vpop.f32.mrf.mxu0
  %v1031 = vadd.f32 %v594, %v1030
  %1032 = vdwg.mxu0
  %v1033 = vld [vmem:[%s0 + $0x10] sm:$0xf]
  %v1034 = vld [vmem:[%s0 + $0x14] sm:$0xf]
  %v1035 = vld [vmem:[%s0 + $0x18] sm:$0xf]
  %v1036 = vld [vmem:[%s0 + $0x1c] sm:$0xf]
  %v1037 = vld [vmem:[%s0 + $0x20] sm:$0xf]
  %v1038 = vld [vmem:[%s0 + $0x24] sm:$0xf]
  %v1039 = vld [vmem:[%s0 + $0x28] sm:$0xf]
  %v1040 = vld [vmem:[%s0 + $0x2c] sm:$0xf]
  %v1041 = vld [vmem:[%s0 + $0x30] sm:$0xf]
  %v1042 = vld [vmem:[%s0 + $0x34] sm:$0xf]
  %v1043 = vld [vmem:[%s0 + $0x38] sm:$0xf]
  %v1044 = vld [vmem:[%s0 + $0x3c] sm:$0xf]
  %v1045 = vld [vmem:[%s0 + $0x40] sm:$0xf]
  %v1046 = vld [vmem:[%s0 + $0x44] sm:$0xf]
  %v1047 = vld [vmem:[%s0 + $0x48] sm:$0xf]
  %v1048 = vld [vmem:[%s0 + $0x4c] sm:$0xf]
  %v1049 = vld [vmem:[%s0 + $0x50] sm:$0xf]
  %v1050 = vld [vmem:[%s0 + $0x54] sm:$0xf]
  %v1051 = vld [vmem:[%s0 + $0x58] sm:$0xf]
  %v1052 = vld [vmem:[%s0 + $0x5c] sm:$0xf]
  %v1053 = vld [vmem:[%s0 + $0x60] sm:$0xf]
  %v1054 = vld [vmem:[%s0 + $0x64] sm:$0xf]
  %v1055 = vld [vmem:[%s0 + $0x68] sm:$0xf]
  %v1056 = vld [vmem:[%s0 + $0x6c] sm:$0xf]
  %v1057 = vld [vmem:[%s0 + $0x70] sm:$0xf]
  %v1058 = vld [vmem:[%s0 + $0x74] sm:$0xf]
  %v1059 = vld [vmem:[%s0 + $0x78] sm:$0xf]
  %v1060 = vld [vmem:[%s0 + $0x7c] sm:$0xf]
  %v1061 = vld [vmem:[%s0 + $0x80] sm:$0xf]
  %v1062 = vld [vmem:[%s0 + $0x84] sm:$0xf]
  %v1063 = vld [vmem:[%s0 + $0x88] sm:$0xf]
  %v1064 = vld [vmem:[%s0 + $0x8c] sm:$0xf]
  %v1065 = vld [vmem:[%s0 + $0x90] sm:$0xf]
  %v1066 = vld [vmem:[%s0 + $0x94] sm:$0xf]
  %v1067 = vld [vmem:[%s0 + $0x98] sm:$0xf]
  %v1068 = vld [vmem:[%s0 + $0x9c] sm:$0xf]
  %v1069 = vld [vmem:[%s0 + $0xa0] sm:$0xf]
  %v1070 = vld [vmem:[%s0 + $0xa4] sm:$0xf]
  %v1071 = vld [vmem:[%s0 + $0xa8] sm:$0xf]
  %v1072 = vld [vmem:[%s0 + $0xac] sm:$0xf]
  %v1073 = vld [vmem:[%s0 + $0xb0] sm:$0xf]
  %v1074 = vld [vmem:[%s0 + $0xb4] sm:$0xf]
  %v1075 = vld [vmem:[%s0 + $0xb8] sm:$0xf]
  %v1076 = vld [vmem:[%s0 + $0xbc] sm:$0xf]
  %v1077 = vld [vmem:[%s0 + $0xc0] sm:$0xf]
  %v1078 = vld [vmem:[%s0 + $0xc4] sm:$0xf]
  %v1079 = vld [vmem:[%s0 + $0xc8] sm:$0xf]
  %v1080 = vld [vmem:[%s0 + $0xcc] sm:$0xf]
  %v1081 = vld [vmem:[%s0 + $0xd0] sm:$0xf]
  %v1082 = vld [vmem:[%s0 + $0xd4] sm:$0xf]
  %v1083 = vld [vmem:[%s0 + $0xd8] sm:$0xf]
  %v1084 = vld [vmem:[%s0 + $0xdc] sm:$0xf]
  %v1085 = vld [vmem:[%s0 + $0xe0] sm:$0xf]
  %v1086 = vld [vmem:[%s0 + $0xe4] sm:$0xf]
  %v1087 = vld [vmem:[%s0 + $0xe8] sm:$0xf]
  %v1088 = vld [vmem:[%s0 + $0xec] sm:$0xf]
  %v1089 = vld [vmem:[%s0 + $0xf0] sm:$0xf]
  %v1090 = vld [vmem:[%s0 + $0xf4] sm:$0xf]
  %v1091 = vld [vmem:[%s0 + $0xf8] sm:$0xf]
  %v1092 = vld [vmem:[%s0 + $0xfc] sm:$0xf]
  %v1093 = vld [vmem:[%s0 + $0x100] sm:$0xf]
  %v1094 = vld [vmem:[%s0 + $0x104] sm:$0xf]
  %v1095 = vld [vmem:[%s0 + $0x108] sm:$0xf]
  %v1096 = vld [vmem:[%s0 + $0x10c] sm:$0xf]
  %s1097 = scalar_lea.vmem %s2, 32
  %v1098 = vld [vmem:[%s1097] sm:$0xf]
  %v1099 = vld [vmem:[%s1097 + $0x4] sm:$0xf]
  %v1100 = vld [vmem:[%s1097 + $0x8] sm:$0xf]
  %v1101 = vld [vmem:[%s1097 + $0xc] sm:$0xf]
  %v1166 = vunpack.c.l.b16 %v1033
  %v1167 = vunpack.c.l.b16 %v1034
  %v1168 = vunpack.c.l.b16 %v1035
  %v1169 = vunpack.c.l.b16 %v1036
  %v1170 = vunpack.c.l.b16 %v1037
  %v1171 = vunpack.c.l.b16 %v1038
  %v1172 = vunpack.c.l.b16 %v1039
  %v1173 = vunpack.c.l.b16 %v1040
  %v1174 = vunpack.c.l.b16 %v1041
  %v1175 = vunpack.c.l.b16 %v1042
  %v1176 = vunpack.c.l.b16 %v1043
  %v1177 = vunpack.c.l.b16 %v1044
  %v1178 = vunpack.c.l.b16 %v1045
  %v1179 = vunpack.c.l.b16 %v1046
  %v1180 = vunpack.c.l.b16 %v1047
  %v1181 = vunpack.c.l.b16 %v1048
  %v1182 = vunpack.c.l.b16 %v1049
  %v1183 = vunpack.c.l.b16 %v1050
  %v1184 = vunpack.c.l.b16 %v1051
  %v1185 = vunpack.c.l.b16 %v1052
  %v1186 = vunpack.c.l.b16 %v1053
  %v1187 = vunpack.c.l.b16 %v1054
  %v1188 = vunpack.c.l.b16 %v1055
  %v1189 = vunpack.c.l.b16 %v1056
  %v1190 = vunpack.c.l.b16 %v1057
  %v1191 = vunpack.c.l.b16 %v1058
  %v1192 = vunpack.c.l.b16 %v1059
  %v1193 = vunpack.c.l.b16 %v1060
  %v1194 = vunpack.c.l.b16 %v1061
  %v1195 = vunpack.c.l.b16 %v1062
  %v1196 = vunpack.c.l.b16 %v1063
  %v1197 = vunpack.c.l.b16 %v1064
  %v1198 = vunpack.c.l.b16 %v1065
  %v1199 = vunpack.c.l.b16 %v1066
  %v1200 = vunpack.c.l.b16 %v1067
  %v1201 = vunpack.c.l.b16 %v1068
  %v1202 = vunpack.c.l.b16 %v1069
  %v1203 = vunpack.c.l.b16 %v1070
  %v1204 = vunpack.c.l.b16 %v1071
  %v1205 = vunpack.c.l.b16 %v1072
  %v1206 = vunpack.c.l.b16 %v1073
  %v1207 = vunpack.c.l.b16 %v1074
  %v1208 = vunpack.c.l.b16 %v1075
  %v1209 = vunpack.c.l.b16 %v1076
  %v1210 = vunpack.c.l.b16 %v1077
  %v1211 = vunpack.c.l.b16 %v1078
  %v1212 = vunpack.c.l.b16 %v1079
  %v1213 = vunpack.c.l.b16 %v1080
  %v1214 = vunpack.c.l.b16 %v1081
  %v1215 = vunpack.c.l.b16 %v1082
  %v1216 = vunpack.c.l.b16 %v1083
  %v1217 = vunpack.c.l.b16 %v1084
  %v1218 = vunpack.c.l.b16 %v1085
  %v1219 = vunpack.c.l.b16 %v1086
  %v1220 = vunpack.c.l.b16 %v1087
  %v1221 = vunpack.c.l.b16 %v1088
  %v1222 = vunpack.c.l.b16 %v1089
  %v1223 = vunpack.c.l.b16 %v1090
  %v1224 = vunpack.c.l.b16 %v1091
  %v1225 = vunpack.c.l.b16 %v1092
  %v1226 = vunpack.c.l.b16 %v1093
  %v1227 = vunpack.c.l.b16 %v1094
  %v1228 = vunpack.c.l.b16 %v1095
  %v1229 = vunpack.c.l.b16 %v1096
  %v1230 = vpack.c.b16 %v1167, %v1166
  %v1231 = vpack.c.b16 %v1169, %v1168
  %v1232 = vpack.c.b16 %v1171, %v1170
  %v1233 = vpack.c.b16 %v1173, %v1172
  %v1234 = vpack.c.b16 %v1175, %v1174
  %v1235 = vpack.c.b16 %v1177, %v1176
  %v1236 = vpack.c.b16 %v1179, %v1178
  %v1237 = vpack.c.b16 %v1181, %v1180
  %v1238 = vpack.c.b16 %v1183, %v1182
  %v1239 = vpack.c.b16 %v1185, %v1184
  %v1240 = vpack.c.b16 %v1187, %v1186
  %v1241 = vpack.c.b16 %v1189, %v1188
  %v1242 = vpack.c.b16 %v1191, %v1190
  %v1243 = vpack.c.b16 %v1193, %v1192
  %v1244 = vpack.c.b16 %v1195, %v1194
  %v1245 = vpack.c.b16 %v1197, %v1196
  %v1246 = vpack.c.b16 %v1199, %v1198
  %v1247 = vpack.c.b16 %v1201, %v1200
  %v1248 = vpack.c.b16 %v1203, %v1202
  %v1249 = vpack.c.b16 %v1205, %v1204
  %v1250 = vpack.c.b16 %v1207, %v1206
  %v1251 = vpack.c.b16 %v1209, %v1208
  %v1252 = vpack.c.b16 %v1211, %v1210
  %v1253 = vpack.c.b16 %v1213, %v1212
  %v1254 = vpack.c.b16 %v1215, %v1214
  %v1255 = vpack.c.b16 %v1217, %v1216
  %v1256 = vpack.c.b16 %v1219, %v1218
  %v1257 = vpack.c.b16 %v1221, %v1220
  %v1258 = vpack.c.b16 %v1223, %v1222
  %v1259 = vpack.c.b16 %v1225, %v1224
  %v1260 = vpack.c.b16 %v1227, %v1226
  %v1261 = vpack.c.b16 %v1229, %v1228
  %v1266 = vunpack.c.l.b16 %v1098
  %v1267 = vunpack.c.l.b16 %v1099
  %v1268 = vunpack.c.l.b16 %v1100
  %v1269 = vunpack.c.l.b16 %v1101
  %v1270 = vpack.c.b16 %v1267, %v1266
  %v1271 = vpack.c.b16 %v1269, %v1268
  %v1275 = vsel %vm330, %v1230, 0
  %v1278 = vsel %vm330, %v1231, 0
  %v1281 = vsel %vm330, %v1232, 0
  %v1284 = vsel %vm330, %v1233, 0
  %v1287 = vsel %vm330, %v1234, 0
  %v1290 = vsel %vm330, %v1235, 0
  %v1293 = vsel %vm330, %v1236, 0
  %v1296 = vsel %vm330, %v1237, 0
  %v1299 = vsel %vm330, %v1238, 0
  %v1302 = vsel %vm330, %v1239, 0
  %v1305 = vsel %vm330, %v1240, 0
  %v1308 = vsel %vm330, %v1241, 0
  %v1311 = vsel %vm330, %v1242, 0
  %v1314 = vsel %vm330, %v1243, 0
  %v1317 = vsel %vm330, %v1244, 0
  %v1320 = vsel %vm330, %v1245, 0
  %v1323 = vsel %vm330, %v1246, 0
  %v1326 = vsel %vm330, %v1247, 0
  %v1329 = vsel %vm330, %v1248, 0
  %v1332 = vsel %vm330, %v1249, 0
  %v1335 = vsel %vm330, %v1250, 0
  %v1338 = vsel %vm330, %v1251, 0
  %v1341 = vsel %vm330, %v1252, 0
  %v1344 = vsel %vm330, %v1253, 0
  %v1347 = vsel %vm330, %v1254, 0
  %v1350 = vsel %vm330, %v1255, 0
  %v1353 = vsel %vm330, %v1256, 0
  %v1356 = vsel %vm330, %v1257, 0
  %v1359 = vsel %vm330, %v1258, 0
  %v1362 = vsel %vm330, %v1259, 0
  %v1365 = vsel %vm330, %v1260, 0
  %v1368 = vsel %vm330, %v1261, 0
  %1370 = vmatpush.bf16.msra.mxu0 0
  %1371 = vmatpush.bf16.msra.mxu0 0
  %1372 = vmatpush.bf16.msra.mxu0 0
  %1373 = vmatpush.bf16.msra.mxu0 0
  %1374 = vmatpush.bf16.msra.mxu0 0
  %1375 = vmatpush.bf16.msra.mxu0 0
  %1376 = vmatpush.bf16.msra.mxu0 %v1271
  %1377 = vmatpush.bf16.msra.mxu0 %v1270
  %1378 = vmatmul.bf16.gmra.mxu0 %v1275
  %v1379 = vpop.f32.mrf.mxu0
  %v1380 = vadd.f32 0.0, %v1379
  %v1381 = vpop.f32.mrf.mxu0
  %v1382 = vadd.f32 0.0, %v1381
  %1383 = vmatmul.bf16.gmra.mxu0 %v1278
  %v1384 = vpop.f32.mrf.mxu0
  %v1385 = vadd.f32 0.0, %v1384
  %v1386 = vpop.f32.mrf.mxu0
  %v1387 = vadd.f32 0.0, %v1386
  %1388 = vmatmul.bf16.gmra.mxu0 %v1281
  %v1389 = vpop.f32.mrf.mxu0
  %v1390 = vadd.f32 0.0, %v1389
  %v1391 = vpop.f32.mrf.mxu0
  %v1392 = vadd.f32 0.0, %v1391
  %1393 = vmatmul.bf16.gmra.mxu0 %v1284
  %v1394 = vpop.f32.mrf.mxu0
  %v1395 = vadd.f32 0.0, %v1394
  %v1396 = vpop.f32.mrf.mxu0
  %v1397 = vadd.f32 0.0, %v1396
  %1398 = vmatmul.bf16.gmra.mxu0 %v1287
  %v1399 = vpop.f32.mrf.mxu0
  %v1400 = vadd.f32 0.0, %v1399
  %v1401 = vpop.f32.mrf.mxu0
  %v1402 = vadd.f32 0.0, %v1401
  %1403 = vmatmul.bf16.gmra.mxu0 %v1290
  %v1404 = vpop.f32.mrf.mxu0
  %v1405 = vadd.f32 0.0, %v1404
  %v1406 = vpop.f32.mrf.mxu0
  %v1407 = vadd.f32 0.0, %v1406
  %1408 = vmatmul.bf16.gmra.mxu0 %v1293
  %v1409 = vpop.f32.mrf.mxu0
  %v1410 = vadd.f32 0.0, %v1409
  %v1411 = vpop.f32.mrf.mxu0
  %v1412 = vadd.f32 0.0, %v1411
  %1413 = vmatmul.bf16.gmra.mxu0 %v1296
  %v1414 = vpop.f32.mrf.mxu0
  %v1415 = vadd.f32 0.0, %v1414
  %v1416 = vpop.f32.mrf.mxu0
  %v1417 = vadd.f32 0.0, %v1416
  %1418 = vmatmul.bf16.gmra.mxu0 %v1299
  %v1419 = vpop.f32.mrf.mxu0
  %v1420 = vadd.f32 0.0, %v1419
  %v1421 = vpop.f32.mrf.mxu0
  %v1422 = vadd.f32 0.0, %v1421
  %1423 = vmatmul.bf16.gmra.mxu0 %v1302
  %v1424 = vpop.f32.mrf.mxu0
  %v1425 = vadd.f32 0.0, %v1424
  %v1426 = vpop.f32.mrf.mxu0
  %v1427 = vadd.f32 0.0, %v1426
  %1428 = vmatmul.bf16.gmra.mxu0 %v1305
  %v1429 = vpop.f32.mrf.mxu0
  %v1430 = vadd.f32 0.0, %v1429
  %v1431 = vpop.f32.mrf.mxu0
  %v1432 = vadd.f32 0.0, %v1431
  %1433 = vmatmul.bf16.gmra.mxu0 %v1308
  %v1434 = vpop.f32.mrf.mxu0
  %v1435 = vadd.f32 0.0, %v1434
  %v1436 = vpop.f32.mrf.mxu0
  %v1437 = vadd.f32 0.0, %v1436
  %1438 = vmatmul.bf16.gmra.mxu0 %v1311
  %v1439 = vpop.f32.mrf.mxu0
  %v1440 = vadd.f32 0.0, %v1439
  %v1441 = vpop.f32.mrf.mxu0
  %v1442 = vadd.f32 0.0, %v1441
  %1443 = vmatmul.bf16.gmra.mxu0 %v1314
  %v1444 = vpop.f32.mrf.mxu0
  %v1445 = vadd.f32 0.0, %v1444
  %v1446 = vpop.f32.mrf.mxu0
  %v1447 = vadd.f32 0.0, %v1446
  %1448 = vmatmul.bf16.gmra.mxu0 %v1317
  %v1449 = vpop.f32.mrf.mxu0
  %v1450 = vadd.f32 0.0, %v1449
  %v1451 = vpop.f32.mrf.mxu0
  %v1452 = vadd.f32 0.0, %v1451
  %1453 = vmatmul.bf16.gmra.mxu0 %v1320
  %v1454 = vpop.f32.mrf.mxu0
  %v1455 = vadd.f32 0.0, %v1454
  %v1456 = vpop.f32.mrf.mxu0
  %v1457 = vadd.f32 0.0, %v1456
  %1458 = vmatmul.bf16.gmra.mxu0 %v1323
  %v1459 = vpop.f32.mrf.mxu0
  %v1460 = vadd.f32 0.0, %v1459
  %v1461 = vpop.f32.mrf.mxu0
  %v1462 = vadd.f32 0.0, %v1461
  %1463 = vmatmul.bf16.gmra.mxu0 %v1326
  %v1464 = vpop.f32.mrf.mxu0
  %v1465 = vadd.f32 0.0, %v1464
  %v1466 = vpop.f32.mrf.mxu0
  %v1467 = vadd.f32 0.0, %v1466
  %1468 = vmatmul.bf16.gmra.mxu0 %v1329
  %v1469 = vpop.f32.mrf.mxu0
  %v1470 = vadd.f32 0.0, %v1469
  %v1471 = vpop.f32.mrf.mxu0
  %v1472 = vadd.f32 0.0, %v1471
  %1473 = vmatmul.bf16.gmra.mxu0 %v1332
  %v1474 = vpop.f32.mrf.mxu0
  %v1475 = vadd.f32 0.0, %v1474
  %v1476 = vpop.f32.mrf.mxu0
  %v1477 = vadd.f32 0.0, %v1476
  %1478 = vmatmul.bf16.gmra.mxu0 %v1335
  %v1479 = vpop.f32.mrf.mxu0
  %v1480 = vadd.f32 0.0, %v1479
  %v1481 = vpop.f32.mrf.mxu0
  %v1482 = vadd.f32 0.0, %v1481
  %1483 = vmatmul.bf16.gmra.mxu0 %v1338
  %v1484 = vpop.f32.mrf.mxu0
  %v1485 = vadd.f32 0.0, %v1484
  %v1486 = vpop.f32.mrf.mxu0
  %v1487 = vadd.f32 0.0, %v1486
  %1488 = vmatmul.bf16.gmra.mxu0 %v1341
  %v1489 = vpop.f32.mrf.mxu0
  %v1490 = vadd.f32 0.0, %v1489
  %v1491 = vpop.f32.mrf.mxu0
  %v1492 = vadd.f32 0.0, %v1491
  %1493 = vmatmul.bf16.gmra.mxu0 %v1344
  %v1494 = vpop.f32.mrf.mxu0
  %v1495 = vadd.f32 0.0, %v1494
  %v1496 = vpop.f32.mrf.mxu0
  %v1497 = vadd.f32 0.0, %v1496
  %1498 = vmatmul.bf16.gmra.mxu0 %v1347
  %v1499 = vpop.f32.mrf.mxu0
  %v1500 = vadd.f32 0.0, %v1499
  %v1501 = vpop.f32.mrf.mxu0
  %v1502 = vadd.f32 0.0, %v1501
  %1503 = vmatmul.bf16.gmra.mxu0 %v1350
  %v1504 = vpop.f32.mrf.mxu0
  %v1505 = vadd.f32 0.0, %v1504
  %v1506 = vpop.f32.mrf.mxu0
  %v1507 = vadd.f32 0.0, %v1506
  %1508 = vmatmul.bf16.gmra.mxu0 %v1353
  %v1509 = vpop.f32.mrf.mxu0
  %v1510 = vadd.f32 0.0, %v1509
  %v1511 = vpop.f32.mrf.mxu0
  %v1512 = vadd.f32 0.0, %v1511
  %1513 = vmatmul.bf16.gmra.mxu0 %v1356
  %v1514 = vpop.f32.mrf.mxu0
  %v1515 = vadd.f32 0.0, %v1514
  %v1516 = vpop.f32.mrf.mxu0
  %v1517 = vadd.f32 0.0, %v1516
  %1518 = vmatmul.bf16.gmra.mxu0 %v1359
  %v1519 = vpop.f32.mrf.mxu0
  %v1520 = vadd.f32 0.0, %v1519
  %v1521 = vpop.f32.mrf.mxu0
  %v1522 = vadd.f32 0.0, %v1521
  %1523 = vmatmul.bf16.gmra.mxu0 %v1362
  %v1524 = vpop.f32.mrf.mxu0
  %v1525 = vadd.f32 0.0, %v1524
  %v1526 = vpop.f32.mrf.mxu0
  %v1527 = vadd.f32 0.0, %v1526
  %1528 = vmatmul.bf16.gmra.mxu0 %v1365
  %v1529 = vpop.f32.mrf.mxu0
  %v1530 = vadd.f32 0.0, %v1529
  %v1531 = vpop.f32.mrf.mxu0
  %v1532 = vadd.f32 0.0, %v1531
  %1533 = vmatmul.bf16.gmra.mxu0 %v1368
  %v1534 = vpop.f32.mrf.mxu0
  %v1535 = vadd.f32 0.0, %v1534
  %v1536 = vpop.f32.mrf.mxu0
  %v1537 = vadd.f32 0.0, %v1536
  %1538 = vdwg.mxu0
  %v1539 = vadd.f32 %v874, %v1380
  %v1540 = vadd.f32 %v876, %v1382
  %v1541 = vadd.f32 %v879, %v1385
  %v1542 = vadd.f32 %v881, %v1387
  %v1543 = vadd.f32 %v884, %v1390
  %v1544 = vadd.f32 %v886, %v1392
  %v1545 = vadd.f32 %v889, %v1395
  %v1546 = vadd.f32 %v891, %v1397
  %v1547 = vadd.f32 %v894, %v1400
  %v1548 = vadd.f32 %v896, %v1402
  %v1549 = vadd.f32 %v899, %v1405
  %v1550 = vadd.f32 %v901, %v1407
  %v1551 = vadd.f32 %v904, %v1410
  %v1552 = vadd.f32 %v906, %v1412
  %v1553 = vadd.f32 %v909, %v1415
  %v1554 = vadd.f32 %v911, %v1417
  %v1555 = vadd.f32 %v914, %v1420
  %v1556 = vadd.f32 %v916, %v1422
  %v1557 = vadd.f32 %v919, %v1425
  %v1558 = vadd.f32 %v921, %v1427
  %v1559 = vadd.f32 %v924, %v1430
  %v1560 = vadd.f32 %v926, %v1432
  %v1561 = vadd.f32 %v929, %v1435
  %v1562 = vadd.f32 %v931, %v1437
  %v1563 = vadd.f32 %v934, %v1440
  %v1564 = vadd.f32 %v936, %v1442
  %v1565 = vadd.f32 %v939, %v1445
  %v1566 = vadd.f32 %v941, %v1447
  %v1567 = vadd.f32 %v944, %v1450
  %v1568 = vadd.f32 %v946, %v1452
  %v1569 = vadd.f32 %v949, %v1455
  %v1570 = vadd.f32 %v951, %v1457
  %v1571 = vadd.f32 %v954, %v1460
  %v1572 = vadd.f32 %v956, %v1462
  %v1573 = vadd.f32 %v959, %v1465
  %v1574 = vadd.f32 %v961, %v1467
  %v1575 = vadd.f32 %v964, %v1470
  %v1576 = vadd.f32 %v966, %v1472
  %v1577 = vadd.f32 %v969, %v1475
  %v1578 = vadd.f32 %v971, %v1477
  %v1579 = vadd.f32 %v974, %v1480
  %v1580 = vadd.f32 %v976, %v1482
  %v1581 = vadd.f32 %v979, %v1485
  %v1582 = vadd.f32 %v981, %v1487
  %v1583 = vadd.f32 %v984, %v1490
  %v1584 = vadd.f32 %v986, %v1492
  %v1585 = vadd.f32 %v989, %v1495
  %v1586 = vadd.f32 %v991, %v1497
  %v1587 = vadd.f32 %v994, %v1500
  %v1588 = vadd.f32 %v996, %v1502
  %v1589 = vadd.f32 %v999, %v1505
  %v1590 = vadd.f32 %v1001, %v1507
  %v1591 = vadd.f32 %v1004, %v1510
  %v1592 = vadd.f32 %v1006, %v1512
  %v1593 = vadd.f32 %v1009, %v1515
  %v1594 = vadd.f32 %v1011, %v1517
  %v1595 = vadd.f32 %v1014, %v1520
  %v1596 = vadd.f32 %v1016, %v1522
  %v1597 = vadd.f32 %v1019, %v1525
  %v1598 = vadd.f32 %v1021, %v1527
  %v1599 = vadd.f32 %v1024, %v1530
  %v1600 = vadd.f32 %v1026, %v1532
  %v1601 = vadd.f32 %v1029, %v1535
  %v1602 = vadd.f32 %v1031, %v1537
  %v1603 = vld [vmem:[%s1 + $0x10] sm:$0xf]
  %v1604 = vld [vmem:[%s1 + $0x14] sm:$0xf]
  %v1605 = vld [vmem:[%s1 + $0x18] sm:$0xf]
  %v1606 = vld [vmem:[%s1 + $0x1c] sm:$0xf]
  %v1607 = vld [vmem:[%s1 + $0x20] sm:$0xf]
  %v1608 = vld [vmem:[%s1 + $0x24] sm:$0xf]
  %v1609 = vld [vmem:[%s1 + $0x28] sm:$0xf]
  %v1610 = vld [vmem:[%s1 + $0x2c] sm:$0xf]
  %v1611 = vld [vmem:[%s1 + $0x30] sm:$0xf]
  %v1612 = vld [vmem:[%s1 + $0x34] sm:$0xf]
  %v1613 = vld [vmem:[%s1 + $0x38] sm:$0xf]
  %v1614 = vld [vmem:[%s1 + $0x3c] sm:$0xf]
  %v1615 = vld [vmem:[%s1 + $0x40] sm:$0xf]
  %v1616 = vld [vmem:[%s1 + $0x44] sm:$0xf]
  %v1617 = vld [vmem:[%s1 + $0x48] sm:$0xf]
  %v1618 = vld [vmem:[%s1 + $0x4c] sm:$0xf]
  %v1619 = vld [vmem:[%s1 + $0x50] sm:$0xf]
  %v1620 = vld [vmem:[%s1 + $0x54] sm:$0xf]
  %v1621 = vld [vmem:[%s1 + $0x58] sm:$0xf]
  %v1622 = vld [vmem:[%s1 + $0x5c] sm:$0xf]
  %v1623 = vld [vmem:[%s1 + $0x60] sm:$0xf]
  %v1624 = vld [vmem:[%s1 + $0x64] sm:$0xf]
  %v1625 = vld [vmem:[%s1 + $0x68] sm:$0xf]
  %v1626 = vld [vmem:[%s1 + $0x6c] sm:$0xf]
  %v1627 = vld [vmem:[%s1 + $0x70] sm:$0xf]
  %v1628 = vld [vmem:[%s1 + $0x74] sm:$0xf]
  %v1629 = vld [vmem:[%s1 + $0x78] sm:$0xf]
  %v1630 = vld [vmem:[%s1 + $0x7c] sm:$0xf]
  %v1631 = vld [vmem:[%s1 + $0x80] sm:$0xf]
  %v1632 = vld [vmem:[%s1 + $0x84] sm:$0xf]
  %v1633 = vld [vmem:[%s1 + $0x88] sm:$0xf]
  %v1634 = vld [vmem:[%s1 + $0x8c] sm:$0xf]
  %v1635 = vld [vmem:[%s1 + $0x90] sm:$0xf]
  %v1636 = vld [vmem:[%s1 + $0x94] sm:$0xf]
  %v1637 = vld [vmem:[%s1 + $0x98] sm:$0xf]
  %v1638 = vld [vmem:[%s1 + $0x9c] sm:$0xf]
  %v1639 = vld [vmem:[%s1 + $0xa0] sm:$0xf]
  %v1640 = vld [vmem:[%s1 + $0xa4] sm:$0xf]
  %v1641 = vld [vmem:[%s1 + $0xa8] sm:$0xf]
  %v1642 = vld [vmem:[%s1 + $0xac] sm:$0xf]
  %v1643 = vld [vmem:[%s1 + $0xb0] sm:$0xf]
  %v1644 = vld [vmem:[%s1 + $0xb4] sm:$0xf]
  %v1645 = vld [vmem:[%s1 + $0xb8] sm:$0xf]
  %v1646 = vld [vmem:[%s1 + $0xbc] sm:$0xf]
  %v1647 = vld [vmem:[%s1 + $0xc0] sm:$0xf]
  %v1648 = vld [vmem:[%s1 + $0xc4] sm:$0xf]
  %v1649 = vld [vmem:[%s1 + $0xc8] sm:$0xf]
  %v1650 = vld [vmem:[%s1 + $0xcc] sm:$0xf]
  %v1651 = vld [vmem:[%s1 + $0xd0] sm:$0xf]
  %v1652 = vld [vmem:[%s1 + $0xd4] sm:$0xf]
  %v1653 = vld [vmem:[%s1 + $0xd8] sm:$0xf]
  %v1654 = vld [vmem:[%s1 + $0xdc] sm:$0xf]
  %v1655 = vld [vmem:[%s1 + $0xe0] sm:$0xf]
  %v1656 = vld [vmem:[%s1 + $0xe4] sm:$0xf]
  %v1657 = vld [vmem:[%s1 + $0xe8] sm:$0xf]
  %v1658 = vld [vmem:[%s1 + $0xec] sm:$0xf]
  %v1659 = vld [vmem:[%s1 + $0xf0] sm:$0xf]
  %v1660 = vld [vmem:[%s1 + $0xf4] sm:$0xf]
  %v1661 = vld [vmem:[%s1 + $0xf8] sm:$0xf]
  %v1662 = vld [vmem:[%s1 + $0xfc] sm:$0xf]
  %v1663 = vld [vmem:[%s1 + $0x100] sm:$0xf]
  %v1664 = vld [vmem:[%s1 + $0x104] sm:$0xf]
  %v1665 = vld [vmem:[%s1 + $0x108] sm:$0xf]
  %v1666 = vld [vmem:[%s1 + $0x10c] sm:$0xf]
  %s1667 = scalar_lea.vmem %s2, 48
  %v1668 = vld [vmem:[%s1667] sm:$0xf]
  %v1669 = vld [vmem:[%s1667 + $0x4] sm:$0xf]
  %v1670 = vld [vmem:[%s1667 + $0x8] sm:$0xf]
  %v1671 = vld [vmem:[%s1667 + $0xc] sm:$0xf]
  %v1736 = vunpack.c.l.b16 %v1603
  %v1737 = vunpack.c.l.b16 %v1604
  %v1738 = vunpack.c.l.b16 %v1605
  %v1739 = vunpack.c.l.b16 %v1606
  %v1740 = vunpack.c.l.b16 %v1607
  %v1741 = vunpack.c.l.b16 %v1608
  %v1742 = vunpack.c.l.b16 %v1609
  %v1743 = vunpack.c.l.b16 %v1610
  %v1744 = vunpack.c.l.b16 %v1611
  %v1745 = vunpack.c.l.b16 %v1612
  %v1746 = vunpack.c.l.b16 %v1613
  %v1747 = vunpack.c.l.b16 %v1614
  %v1748 = vunpack.c.l.b16 %v1615
  %v1749 = vunpack.c.l.b16 %v1616
  %v1750 = vunpack.c.l.b16 %v1617
  %v1751 = vunpack.c.l.b16 %v1618
  %v1752 = vunpack.c.l.b16 %v1619
  %v1753 = vunpack.c.l.b16 %v1620
  %v1754 = vunpack.c.l.b16 %v1621
  %v1755 = vunpack.c.l.b16 %v1622
  %v1756 = vunpack.c.l.b16 %v1623
  %v1757 = vunpack.c.l.b16 %v1624
  %v1758 = vunpack.c.l.b16 %v1625
  %v1759 = vunpack.c.l.b16 %v1626
  %v1760 = vunpack.c.l.b16 %v1627
  %v1761 = vunpack.c.l.b16 %v1628
  %v1762 = vunpack.c.l.b16 %v1629
  %v1763 = vunpack.c.l.b16 %v1630
  %v1764 = vunpack.c.l.b16 %v1631
  %v1765 = vunpack.c.l.b16 %v1632
  %v1766 = vunpack.c.l.b16 %v1633
  %v1767 = vunpack.c.l.b16 %v1634
  %v1768 = vunpack.c.l.b16 %v1635
  %v1769 = vunpack.c.l.b16 %v1636
  %v1770 = vunpack.c.l.b16 %v1637
  %v1771 = vunpack.c.l.b16 %v1638
  %v1772 = vunpack.c.l.b16 %v1639
  %v1773 = vunpack.c.l.b16 %v1640
  %v1774 = vunpack.c.l.b16 %v1641
  %v1775 = vunpack.c.l.b16 %v1642
  %v1776 = vunpack.c.l.b16 %v1643
  %v1777 = vunpack.c.l.b16 %v1644
  %v1778 = vunpack.c.l.b16 %v1645
  %v1779 = vunpack.c.l.b16 %v1646
  %v1780 = vunpack.c.l.b16 %v1647
  %v1781 = vunpack.c.l.b16 %v1648
  %v1782 = vunpack.c.l.b16 %v1649
  %v1783 = vunpack.c.l.b16 %v1650
  %v1784 = vunpack.c.l.b16 %v1651
  %v1785 = vunpack.c.l.b16 %v1652
  %v1786 = vunpack.c.l.b16 %v1653
  %v1787 = vunpack.c.l.b16 %v1654
  %v1788 = vunpack.c.l.b16 %v1655
  %v1789 = vunpack.c.l.b16 %v1656
  %v1790 = vunpack.c.l.b16 %v1657
  %v1791 = vunpack.c.l.b16 %v1658
  %v1792 = vunpack.c.l.b16 %v1659
  %v1793 = vunpack.c.l.b16 %v1660
  %v1794 = vunpack.c.l.b16 %v1661
  %v1795 = vunpack.c.l.b16 %v1662
  %v1796 = vunpack.c.l.b16 %v1663
  %v1797 = vunpack.c.l.b16 %v1664
  %v1798 = vunpack.c.l.b16 %v1665
  %v1799 = vunpack.c.l.b16 %v1666
  %v1800 = vpack.c.b16 %v1737, %v1736
  %v1801 = vpack.c.b16 %v1739, %v1738
  %v1802 = vpack.c.b16 %v1741, %v1740
  %v1803 = vpack.c.b16 %v1743, %v1742
  %v1804 = vpack.c.b16 %v1745, %v1744
  %v1805 = vpack.c.b16 %v1747, %v1746
  %v1806 = vpack.c.b16 %v1749, %v1748
  %v1807 = vpack.c.b16 %v1751, %v1750
  %v1808 = vpack.c.b16 %v1753, %v1752
  %v1809 = vpack.c.b16 %v1755, %v1754
  %v1810 = vpack.c.b16 %v1757, %v1756
  %v1811 = vpack.c.b16 %v1759, %v1758
  %v1812 = vpack.c.b16 %v1761, %v1760
  %v1813 = vpack.c.b16 %v1763, %v1762
  %v1814 = vpack.c.b16 %v1765, %v1764
  %v1815 = vpack.c.b16 %v1767, %v1766
  %v1816 = vpack.c.b16 %v1769, %v1768
  %v1817 = vpack.c.b16 %v1771, %v1770
  %v1818 = vpack.c.b16 %v1773, %v1772
  %v1819 = vpack.c.b16 %v1775, %v1774
  %v1820 = vpack.c.b16 %v1777, %v1776
  %v1821 = vpack.c.b16 %v1779, %v1778
  %v1822 = vpack.c.b16 %v1781, %v1780
  %v1823 = vpack.c.b16 %v1783, %v1782
  %v1824 = vpack.c.b16 %v1785, %v1784
  %v1825 = vpack.c.b16 %v1787, %v1786
  %v1826 = vpack.c.b16 %v1789, %v1788
  %v1827 = vpack.c.b16 %v1791, %v1790
  %v1828 = vpack.c.b16 %v1793, %v1792
  %v1829 = vpack.c.b16 %v1795, %v1794
  %v1830 = vpack.c.b16 %v1797, %v1796
  %v1831 = vpack.c.b16 %v1799, %v1798
  %v1836 = vunpack.c.l.b16 %v1668
  %v1837 = vunpack.c.l.b16 %v1669
  %v1838 = vunpack.c.l.b16 %v1670
  %v1839 = vunpack.c.l.b16 %v1671
  %v1840 = vpack.c.b16 %v1837, %v1836
  %v1841 = vpack.c.b16 %v1839, %v1838
  %v1845 = vsel %vm330, %v1800, 0
  %v1848 = vsel %vm330, %v1801, 0
  %v1851 = vsel %vm330, %v1802, 0
  %v1854 = vsel %vm330, %v1803, 0
  %v1857 = vsel %vm330, %v1804, 0
  %v1860 = vsel %vm330, %v1805, 0
  %v1863 = vsel %vm330, %v1806, 0
  %v1866 = vsel %vm330, %v1807, 0
  %v1869 = vsel %vm330, %v1808, 0
  %v1872 = vsel %vm330, %v1809, 0
  %v1875 = vsel %vm330, %v1810, 0
  %v1878 = vsel %vm330, %v1811, 0
  %v1881 = vsel %vm330, %v1812, 0
  %v1884 = vsel %vm330, %v1813, 0
  %v1887 = vsel %vm330, %v1814, 0
  %v1890 = vsel %vm330, %v1815, 0
  %v1893 = vsel %vm330, %v1816, 0
  %v1896 = vsel %vm330, %v1817, 0
  %v1899 = vsel %vm330, %v1818, 0
  %v1902 = vsel %vm330, %v1819, 0
  %v1905 = vsel %vm330, %v1820, 0
  %v1908 = vsel %vm330, %v1821, 0
  %v1911 = vsel %vm330, %v1822, 0
  %v1914 = vsel %vm330, %v1823, 0
  %v1917 = vsel %vm330, %v1824, 0
  %v1920 = vsel %vm330, %v1825, 0
  %v1923 = vsel %vm330, %v1826, 0
  %v1926 = vsel %vm330, %v1827, 0
  %v1929 = vsel %vm330, %v1828, 0
  %v1932 = vsel %vm330, %v1829, 0
  %v1935 = vsel %vm330, %v1830, 0
  %v1938 = vsel %vm330, %v1831, 0
  %1940 = vmatpush.bf16.msra.mxu0 0
  %1941 = vmatpush.bf16.msra.mxu0 0
  %1942 = vmatpush.bf16.msra.mxu0 0
  %1943 = vmatpush.bf16.msra.mxu0 0
  %1944 = vmatpush.bf16.msra.mxu0 0
  %1945 = vmatpush.bf16.msra.mxu0 0
  %1946 = vmatpush.bf16.msra.mxu0 %v1841
  %1947 = vmatpush.bf16.msra.mxu0 %v1840
  %1948 = vmatmul.bf16.gmra.mxu0 %v1845
  %v1949 = vpop.f32.mrf.mxu0
  %v1950 = vadd.f32 0.0, %v1949
  %v1951 = vpop.f32.mrf.mxu0
  %v1952 = vadd.f32 0.0, %v1951
  %1953 = vmatmul.bf16.gmra.mxu0 %v1848
  %v1954 = vpop.f32.mrf.mxu0
  %v1955 = vadd.f32 0.0, %v1954
  %v1956 = vpop.f32.mrf.mxu0
  %v1957 = vadd.f32 0.0, %v1956
  %1958 = vmatmul.bf16.gmra.mxu0 %v1851
  %v1959 = vpop.f32.mrf.mxu0
  %v1960 = vadd.f32 0.0, %v1959
  %v1961 = vpop.f32.mrf.mxu0
  %v1962 = vadd.f32 0.0, %v1961
  %1963 = vmatmul.bf16.gmra.mxu0 %v1854
  %v1964 = vpop.f32.mrf.mxu0
  %v1965 = vadd.f32 0.0, %v1964
  %v1966 = vpop.f32.mrf.mxu0
  %v1967 = vadd.f32 0.0, %v1966
  %1968 = vmatmul.bf16.gmra.mxu0 %v1857
  %v1969 = vpop.f32.mrf.mxu0
  %v1970 = vadd.f32 0.0, %v1969
  %v1971 = vpop.f32.mrf.mxu0
  %v1972 = vadd.f32 0.0, %v1971
  %1973 = vmatmul.bf16.gmra.mxu0 %v1860
  %v1974 = vpop.f32.mrf.mxu0
  %v1975 = vadd.f32 0.0, %v1974
  %v1976 = vpop.f32.mrf.mxu0
  %v1977 = vadd.f32 0.0, %v1976
  %1978 = vmatmul.bf16.gmra.mxu0 %v1863
  %v1979 = vpop.f32.mrf.mxu0
  %v1980 = vadd.f32 0.0, %v1979
  %v1981 = vpop.f32.mrf.mxu0
  %v1982 = vadd.f32 0.0, %v1981
  %1983 = vmatmul.bf16.gmra.mxu0 %v1866
  %v1984 = vpop.f32.mrf.mxu0
  %v1985 = vadd.f32 0.0, %v1984
  %v1986 = vpop.f32.mrf.mxu0
  %v1987 = vadd.f32 0.0, %v1986
  %1988 = vmatmul.bf16.gmra.mxu0 %v1869
  %v1989 = vpop.f32.mrf.mxu0
  %v1990 = vadd.f32 0.0, %v1989
  %v1991 = vpop.f32.mrf.mxu0
  %v1992 = vadd.f32 0.0, %v1991
  %1993 = vmatmul.bf16.gmra.mxu0 %v1872
  %v1994 = vpop.f32.mrf.mxu0
  %v1995 = vadd.f32 0.0, %v1994
  %v1996 = vpop.f32.mrf.mxu0
  %v1997 = vadd.f32 0.0, %v1996
  %1998 = vmatmul.bf16.gmra.mxu0 %v1875
  %v1999 = vpop.f32.mrf.mxu0
  %v2000 = vadd.f32 0.0, %v1999
  %v2001 = vpop.f32.mrf.mxu0
  %v2002 = vadd.f32 0.0, %v2001
  %2003 = vmatmul.bf16.gmra.mxu0 %v1878
  %v2004 = vpop.f32.mrf.mxu0
  %v2005 = vadd.f32 0.0, %v2004
  %v2006 = vpop.f32.mrf.mxu0
  %v2007 = vadd.f32 0.0, %v2006
  %2008 = vmatmul.bf16.gmra.mxu0 %v1881
  %v2009 = vpop.f32.mrf.mxu0
  %v2010 = vadd.f32 0.0, %v2009
  %v2011 = vpop.f32.mrf.mxu0
  %v2012 = vadd.f32 0.0, %v2011
  %2013 = vmatmul.bf16.gmra.mxu0 %v1884
  %v2014 = vpop.f32.mrf.mxu0
  %v2015 = vadd.f32 0.0, %v2014
  %v2016 = vpop.f32.mrf.mxu0
  %v2017 = vadd.f32 0.0, %v2016
  %2018 = vmatmul.bf16.gmra.mxu0 %v1887
  %v2019 = vpop.f32.mrf.mxu0
  %v2020 = vadd.f32 0.0, %v2019
  %v2021 = vpop.f32.mrf.mxu0
  %v2022 = vadd.f32 0.0, %v2021
  %2023 = vmatmul.bf16.gmra.mxu0 %v1890
  %v2024 = vpop.f32.mrf.mxu0
  %v2025 = vadd.f32 0.0, %v2024
  %v2026 = vpop.f32.mrf.mxu0
  %v2027 = vadd.f32 0.0, %v2026
  %2028 = vmatmul.bf16.gmra.mxu0 %v1893
  %v2029 = vpop.f32.mrf.mxu0
  %v2030 = vadd.f32 0.0, %v2029
  %v2031 = vpop.f32.mrf.mxu0
  %v2032 = vadd.f32 0.0, %v2031
  %2033 = vmatmul.bf16.gmra.mxu0 %v1896
  %v2034 = vpop.f32.mrf.mxu0
  %v2035 = vadd.f32 0.0, %v2034
  %v2036 = vpop.f32.mrf.mxu0
  %v2037 = vadd.f32 0.0, %v2036
  %2038 = vmatmul.bf16.gmra.mxu0 %v1899
  %v2039 = vpop.f32.mrf.mxu0
  %v2040 = vadd.f32 0.0, %v2039
  %v2041 = vpop.f32.mrf.mxu0
  %v2042 = vadd.f32 0.0, %v2041
  %2043 = vmatmul.bf16.gmra.mxu0 %v1902
  %v2044 = vpop.f32.mrf.mxu0
  %v2045 = vadd.f32 0.0, %v2044
  %v2046 = vpop.f32.mrf.mxu0
  %v2047 = vadd.f32 0.0, %v2046
  %2048 = vmatmul.bf16.gmra.mxu0 %v1905
  %v2049 = vpop.f32.mrf.mxu0
  %v2050 = vadd.f32 0.0, %v2049
  %v2051 = vpop.f32.mrf.mxu0
  %v2052 = vadd.f32 0.0, %v2051
  %2053 = vmatmul.bf16.gmra.mxu0 %v1908
  %v2054 = vpop.f32.mrf.mxu0
  %v2055 = vadd.f32 0.0, %v2054
  %v2056 = vpop.f32.mrf.mxu0
  %v2057 = vadd.f32 0.0, %v2056
  %2058 = vmatmul.bf16.gmra.mxu0 %v1911
  %v2059 = vpop.f32.mrf.mxu0
  %v2060 = vadd.f32 0.0, %v2059
  %v2061 = vpop.f32.mrf.mxu0
  %v2062 = vadd.f32 0.0, %v2061
  %2063 = vmatmul.bf16.gmra.mxu0 %v1914
  %v2064 = vpop.f32.mrf.mxu0
  %v2065 = vadd.f32 0.0, %v2064
  %v2066 = vpop.f32.mrf.mxu0
  %v2067 = vadd.f32 0.0, %v2066
  %2068 = vmatmul.bf16.gmra.mxu0 %v1917
  %v2069 = vpop.f32.mrf.mxu0
  %v2070 = vadd.f32 0.0, %v2069
  %v2071 = vpop.f32.mrf.mxu0
  %v2072 = vadd.f32 0.0, %v2071
  %2073 = vmatmul.bf16.gmra.mxu0 %v1920
  %v2074 = vpop.f32.mrf.mxu0
  %v2075 = vadd.f32 0.0, %v2074
  %v2076 = vpop.f32.mrf.mxu0
  %v2077 = vadd.f32 0.0, %v2076
  %2078 = vmatmul.bf16.gmra.mxu0 %v1923
  %v2079 = vpop.f32.mrf.mxu0
  %v2080 = vadd.f32 0.0, %v2079
  %v2081 = vpop.f32.mrf.mxu0
  %v2082 = vadd.f32 0.0, %v2081
  %2083 = vmatmul.bf16.gmra.mxu0 %v1926
  %v2084 = vpop.f32.mrf.mxu0
  %v2085 = vadd.f32 0.0, %v2084
  %v2086 = vpop.f32.mrf.mxu0
  %v2087 = vadd.f32 0.0, %v2086
  %2088 = vmatmul.bf16.gmra.mxu0 %v1929
  %v2089 = vpop.f32.mrf.mxu0
  %v2090 = vadd.f32 0.0, %v2089
  %v2091 = vpop.f32.mrf.mxu0
  %v2092 = vadd.f32 0.0, %v2091
  %2093 = vmatmul.bf16.gmra.mxu0 %v1932
  %v2094 = vpop.f32.mrf.mxu0
  %v2095 = vadd.f32 0.0, %v2094
  %v2096 = vpop.f32.mrf.mxu0
  %v2097 = vadd.f32 0.0, %v2096
  %2098 = vmatmul.bf16.gmra.mxu0 %v1935
  %v2099 = vpop.f32.mrf.mxu0
  %v2100 = vadd.f32 0.0, %v2099
  %v2101 = vpop.f32.mrf.mxu0
  %v2102 = vadd.f32 0.0, %v2101
  %2103 = vmatmul.bf16.gmra.mxu0 %v1938
  %v2104 = vpop.f32.mrf.mxu0
  %v2105 = vadd.f32 0.0, %v2104
  %v2106 = vpop.f32.mrf.mxu0
  %v2107 = vadd.f32 0.0, %v2106
  %2108 = vdwg.mxu0
  %v2109 = vadd.f32 %v1539, %v1950
  %v2110 = vadd.f32 %v1540, %v1952
  %v2111 = vadd.f32 %v1541, %v1955
  %v2112 = vadd.f32 %v1542, %v1957
  %v2113 = vadd.f32 %v1543, %v1960
  %v2114 = vadd.f32 %v1544, %v1962
  %v2115 = vadd.f32 %v1545, %v1965
  %v2116 = vadd.f32 %v1546, %v1967
  %v2117 = vadd.f32 %v1547, %v1970
  %v2118 = vadd.f32 %v1548, %v1972
  %v2119 = vadd.f32 %v1549, %v1975
  %v2120 = vadd.f32 %v1550, %v1977
  %v2121 = vadd.f32 %v1551, %v1980
  %v2122 = vadd.f32 %v1552, %v1982
  %v2123 = vadd.f32 %v1553, %v1985
  %v2124 = vadd.f32 %v1554, %v1987
  %v2125 = vadd.f32 %v1555, %v1990
  %v2126 = vadd.f32 %v1556, %v1992
  %v2127 = vadd.f32 %v1557, %v1995
  %v2128 = vadd.f32 %v1558, %v1997
  %v2129 = vadd.f32 %v1559, %v2000
  %v2130 = vadd.f32 %v1560, %v2002
  %v2131 = vadd.f32 %v1561, %v2005
  %v2132 = vadd.f32 %v1562, %v2007
  %v2133 = vadd.f32 %v1563, %v2010
  %v2134 = vadd.f32 %v1564, %v2012
  %v2135 = vadd.f32 %v1565, %v2015
  %v2136 = vadd.f32 %v1566, %v2017
  %v2137 = vadd.f32 %v1567, %v2020
  %v2138 = vadd.f32 %v1568, %v2022
  %v2139 = vadd.f32 %v1569, %v2025
  %v2140 = vadd.f32 %v1570, %v2027
  %v2141 = vadd.f32 %v1571, %v2030
  %v2142 = vadd.f32 %v1572, %v2032
  %v2143 = vadd.f32 %v1573, %v2035
  %v2144 = vadd.f32 %v1574, %v2037
  %v2145 = vadd.f32 %v1575, %v2040
  %v2146 = vadd.f32 %v1576, %v2042
  %v2147 = vadd.f32 %v1577, %v2045
  %v2148 = vadd.f32 %v1578, %v2047
  %v2149 = vadd.f32 %v1579, %v2050
  %v2150 = vadd.f32 %v1580, %v2052
  %v2151 = vadd.f32 %v1581, %v2055
  %v2152 = vadd.f32 %v1582, %v2057
  %v2153 = vadd.f32 %v1583, %v2060
  %v2154 = vadd.f32 %v1584, %v2062
  %v2155 = vadd.f32 %v1585, %v2065
  %v2156 = vadd.f32 %v1586, %v2067
  %v2157 = vadd.f32 %v1587, %v2070
  %v2158 = vadd.f32 %v1588, %v2072
  %v2159 = vadd.f32 %v1589, %v2075
  %v2160 = vadd.f32 %v1590, %v2077
  %v2161 = vadd.f32 %v1591, %v2080
  %v2162 = vadd.f32 %v1592, %v2082
  %v2163 = vadd.f32 %v1593, %v2085
  %v2164 = vadd.f32 %v1594, %v2087
  %v2165 = vadd.f32 %v1595, %v2090
  %v2166 = vadd.f32 %v1596, %v2092
  %v2167 = vadd.f32 %v1597, %v2095
  %v2168 = vadd.f32 %v1598, %v2097
  %v2169 = vadd.f32 %v1599, %v2100
  %v2170 = vadd.f32 %v1600, %v2102
  %v2171 = vadd.f32 %v1601, %v2105
  %v2172 = vadd.f32 %v1602, %v2107
  %v2173 = vld [vmem:[%s3] sm:$0x1]
  %v2174 = vld [vmem:[%s4] sm:$0x1]
  %vm2175 = vcmask 130048
  %v2176 = vsel %vm2175, %v2109, 0.0
  %v2177 = vsel %vm2175, %v2110, 0.0
  %v2178 = vadd.f32 %v2176, %v2177
  %v2179 = vsel %vm2175, %v2111, 0.0
  %v2180 = vadd.f32 %v2178, %v2179
  %v2181 = vsel %vm2175, %v2112, 0.0
  %v2182 = vadd.f32 %v2180, %v2181
  %v2183 = vsel %vm2175, %v2113, 0.0
  %v2184 = vadd.f32 %v2182, %v2183
  %v2185 = vsel %vm2175, %v2114, 0.0
  %v2186 = vadd.f32 %v2184, %v2185
  %v2187 = vsel %vm2175, %v2115, 0.0
  %v2188 = vadd.f32 %v2186, %v2187
  %v2189 = vsel %vm2175, %v2116, 0.0
  %v2190 = vadd.f32 %v2188, %v2189
  %v2191 = vsel %vm2175, %v2117, 0.0
  %v2192 = vadd.f32 %v2190, %v2191
  %v2193 = vsel %vm2175, %v2118, 0.0
  %v2194 = vadd.f32 %v2192, %v2193
  %v2195 = vsel %vm2175, %v2119, 0.0
  %v2196 = vadd.f32 %v2194, %v2195
  %v2197 = vsel %vm2175, %v2120, 0.0
  %v2198 = vadd.f32 %v2196, %v2197
  %v2199 = vsel %vm2175, %v2121, 0.0
  %v2200 = vadd.f32 %v2198, %v2199
  %v2201 = vsel %vm2175, %v2122, 0.0
  %v2202 = vadd.f32 %v2200, %v2201
  %v2203 = vsel %vm2175, %v2123, 0.0
  %v2204 = vadd.f32 %v2202, %v2203
  %v2205 = vsel %vm2175, %v2124, 0.0
  %v2206 = vadd.f32 %v2204, %v2205
  %v2207 = vsel %vm2175, %v2125, 0.0
  %v2208 = vadd.f32 %v2206, %v2207
  %v2209 = vsel %vm2175, %v2126, 0.0
  %v2210 = vadd.f32 %v2208, %v2209
  %v2211 = vsel %vm2175, %v2127, 0.0
  %v2212 = vadd.f32 %v2210, %v2211
  %v2213 = vsel %vm2175, %v2128, 0.0
  %v2214 = vadd.f32 %v2212, %v2213
  %v2215 = vsel %vm2175, %v2129, 0.0
  %v2216 = vadd.f32 %v2214, %v2215
  %v2217 = vsel %vm2175, %v2130, 0.0
  %v2218 = vadd.f32 %v2216, %v2217
  %v2219 = vsel %vm2175, %v2131, 0.0
  %v2220 = vadd.f32 %v2218, %v2219
  %v2221 = vsel %vm2175, %v2132, 0.0
  %v2222 = vadd.f32 %v2220, %v2221
  %v2223 = vsel %vm2175, %v2133, 0.0
  %v2224 = vadd.f32 %v2222, %v2223
  %v2225 = vsel %vm2175, %v2134, 0.0
  %v2226 = vadd.f32 %v2224, %v2225
  %v2227 = vsel %vm2175, %v2135, 0.0
  %v2228 = vadd.f32 %v2226, %v2227
  %v2229 = vsel %vm2175, %v2136, 0.0
  %v2230 = vadd.f32 %v2228, %v2229
  %v2231 = vsel %vm2175, %v2137, 0.0
  %v2232 = vadd.f32 %v2230, %v2231
  %v2233 = vsel %vm2175, %v2138, 0.0
  %v2234 = vadd.f32 %v2232, %v2233
  %v2235 = vsel %vm2175, %v2139, 0.0
  %v2236 = vadd.f32 %v2234, %v2235
  %v2237 = vsel %vm2175, %v2140, 0.0
  %v2238 = vadd.f32 %v2236, %v2237
  %v2239 = vsel %vm2175, %v2141, 0.0
  %v2240 = vadd.f32 %v2238, %v2239
  %v2241 = vsel %vm2175, %v2142, 0.0
  %v2242 = vadd.f32 %v2240, %v2241
  %v2243 = vsel %vm2175, %v2143, 0.0
  %v2244 = vadd.f32 %v2242, %v2243
  %v2245 = vsel %vm2175, %v2144, 0.0
  %v2246 = vadd.f32 %v2244, %v2245
  %v2247 = vsel %vm2175, %v2145, 0.0
  %v2248 = vadd.f32 %v2246, %v2247
  %v2249 = vsel %vm2175, %v2146, 0.0
  %v2250 = vadd.f32 %v2248, %v2249
  %v2251 = vsel %vm2175, %v2147, 0.0
  %v2252 = vadd.f32 %v2250, %v2251
  %v2253 = vsel %vm2175, %v2148, 0.0
  %v2254 = vadd.f32 %v2252, %v2253
  %v2255 = vsel %vm2175, %v2149, 0.0
  %v2256 = vadd.f32 %v2254, %v2255
  %v2257 = vsel %vm2175, %v2150, 0.0
  %v2258 = vadd.f32 %v2256, %v2257
  %v2259 = vsel %vm2175, %v2151, 0.0
  %v2260 = vadd.f32 %v2258, %v2259
  %v2261 = vsel %vm2175, %v2152, 0.0
  %v2262 = vadd.f32 %v2260, %v2261
  %v2263 = vsel %vm2175, %v2153, 0.0
  %v2264 = vadd.f32 %v2262, %v2263
  %v2265 = vsel %vm2175, %v2154, 0.0
  %v2266 = vadd.f32 %v2264, %v2265
  %v2267 = vsel %vm2175, %v2155, 0.0
  %v2268 = vadd.f32 %v2266, %v2267
  %v2269 = vsel %vm2175, %v2156, 0.0
  %v2270 = vadd.f32 %v2268, %v2269
  %v2271 = vsel %vm2175, %v2157, 0.0
  %v2272 = vadd.f32 %v2270, %v2271
  %v2273 = vsel %vm2175, %v2158, 0.0
  %v2274 = vadd.f32 %v2272, %v2273
  %v2275 = vsel %vm2175, %v2159, 0.0
  %v2276 = vadd.f32 %v2274, %v2275
  %v2277 = vsel %vm2175, %v2160, 0.0
  %v2278 = vadd.f32 %v2276, %v2277
  %v2279 = vsel %vm2175, %v2161, 0.0
  %v2280 = vadd.f32 %v2278, %v2279
  %v2281 = vsel %vm2175, %v2162, 0.0
  %v2282 = vadd.f32 %v2280, %v2281
  %v2283 = vsel %vm2175, %v2163, 0.0
  %v2284 = vadd.f32 %v2282, %v2283
  %v2285 = vsel %vm2175, %v2164, 0.0
  %v2286 = vadd.f32 %v2284, %v2285
  %v2287 = vsel %vm2175, %v2165, 0.0
  %v2288 = vadd.f32 %v2286, %v2287
  %v2289 = vsel %vm2175, %v2166, 0.0
  %v2290 = vadd.f32 %v2288, %v2289
  %v2291 = vsel %vm2175, %v2167, 0.0
  %v2292 = vadd.f32 %v2290, %v2291
  %v2293 = vsel %vm2175, %v2168, 0.0
  %v2294 = vadd.f32 %v2292, %v2293
  %v2295 = vsel %vm2175, %v2169, 0.0
  %v2296 = vadd.f32 %v2294, %v2295
  %v2297 = vsel %vm2175, %v2170, 0.0
  %v2298 = vadd.f32 %v2296, %v2297
  %v2299 = vsel %vm2175, %v2171, 0.0
  %v2300 = vadd.f32 %v2298, %v2299
  %v2301 = vsel %vm2175, %v2172, 0.0
  %v2302 = vadd.f32 %v2300, %v2301
  %v2303 = vrot.slane %v2302, 4
  %v2304 = vadd.f32 %v2302, %v2303
  %v2305 = vrot.slane %v2304, 2
  %v2306 = vadd.f32 %v2304, %v2305
  %v2307 = vrot.slane %v2306, 1
  %v2308 = vadd.f32 %v2306, %v2307
  %v2309 = vmul.f32 %v2308, 0.001953125
  %v2310 = vmul.f32 %v2109, %v2109
  %v2311 = vmul.f32 %v2110, %v2110
  %v2312 = vmul.f32 %v2111, %v2111
  %v2313 = vmul.f32 %v2112, %v2112
  %v2314 = vmul.f32 %v2113, %v2113
  %v2315 = vmul.f32 %v2114, %v2114
  %v2316 = vmul.f32 %v2115, %v2115
  %v2317 = vmul.f32 %v2116, %v2116
  %v2318 = vmul.f32 %v2117, %v2117
  %v2319 = vmul.f32 %v2118, %v2118
  %v2320 = vmul.f32 %v2119, %v2119
  %v2321 = vmul.f32 %v2120, %v2120
  %v2322 = vmul.f32 %v2121, %v2121
  %v2323 = vmul.f32 %v2122, %v2122
  %v2324 = vmul.f32 %v2123, %v2123
  %v2325 = vmul.f32 %v2124, %v2124
  %v2326 = vmul.f32 %v2125, %v2125
  %v2327 = vmul.f32 %v2126, %v2126
  %v2328 = vmul.f32 %v2127, %v2127
  %v2329 = vmul.f32 %v2128, %v2128
  %v2330 = vmul.f32 %v2129, %v2129
  %v2331 = vmul.f32 %v2130, %v2130
  %v2332 = vmul.f32 %v2131, %v2131
  %v2333 = vmul.f32 %v2132, %v2132
  %v2334 = vmul.f32 %v2133, %v2133
  %v2335 = vmul.f32 %v2134, %v2134
  %v2336 = vmul.f32 %v2135, %v2135
  %v2337 = vmul.f32 %v2136, %v2136
  %v2338 = vmul.f32 %v2137, %v2137
  %v2339 = vmul.f32 %v2138, %v2138
  %v2340 = vmul.f32 %v2139, %v2139
  %v2341 = vmul.f32 %v2140, %v2140
  %v2342 = vmul.f32 %v2141, %v2141
  %v2343 = vmul.f32 %v2142, %v2142
  %v2344 = vmul.f32 %v2143, %v2143
  %v2345 = vmul.f32 %v2144, %v2144
  %v2346 = vmul.f32 %v2145, %v2145
  %v2347 = vmul.f32 %v2146, %v2146
  %v2348 = vmul.f32 %v2147, %v2147
  %v2349 = vmul.f32 %v2148, %v2148
  %v2350 = vmul.f32 %v2149, %v2149
  %v2351 = vmul.f32 %v2150, %v2150
  %v2352 = vmul.f32 %v2151, %v2151
  %v2353 = vmul.f32 %v2152, %v2152
  %v2354 = vmul.f32 %v2153, %v2153
  %v2355 = vmul.f32 %v2154, %v2154
  %v2356 = vmul.f32 %v2155, %v2155
  %v2357 = vmul.f32 %v2156, %v2156
  %v2358 = vmul.f32 %v2157, %v2157
  %v2359 = vmul.f32 %v2158, %v2158
  %v2360 = vmul.f32 %v2159, %v2159
  %v2361 = vmul.f32 %v2160, %v2160
  %v2362 = vmul.f32 %v2161, %v2161
  %v2363 = vmul.f32 %v2162, %v2162
  %v2364 = vmul.f32 %v2163, %v2163
  %v2365 = vmul.f32 %v2164, %v2164
  %v2366 = vmul.f32 %v2165, %v2165
  %v2367 = vmul.f32 %v2166, %v2166
  %v2368 = vmul.f32 %v2167, %v2167
  %v2369 = vmul.f32 %v2168, %v2168
  %v2370 = vmul.f32 %v2169, %v2169
  %v2371 = vmul.f32 %v2170, %v2170
  %v2372 = vmul.f32 %v2171, %v2171
  %v2373 = vmul.f32 %v2172, %v2172
  %v2374 = vsel %vm2175, %v2310, 0.0
  %v2375 = vsel %vm2175, %v2311, 0.0
  %v2376 = vadd.f32 %v2374, %v2375
  %v2377 = vsel %vm2175, %v2312, 0.0
  %v2378 = vadd.f32 %v2376, %v2377
  %v2379 = vsel %vm2175, %v2313, 0.0
  %v2380 = vadd.f32 %v2378, %v2379
  %v2381 = vsel %vm2175, %v2314, 0.0
  %v2382 = vadd.f32 %v2380, %v2381
  %v2383 = vsel %vm2175, %v2315, 0.0
  %v2384 = vadd.f32 %v2382, %v2383
  %v2385 = vsel %vm2175, %v2316, 0.0
  %v2386 = vadd.f32 %v2384, %v2385
  %v2387 = vsel %vm2175, %v2317, 0.0
  %v2388 = vadd.f32 %v2386, %v2387
  %v2389 = vsel %vm2175, %v2318, 0.0
  %v2390 = vadd.f32 %v2388, %v2389
  %v2391 = vsel %vm2175, %v2319, 0.0
  %v2392 = vadd.f32 %v2390, %v2391
  %v2393 = vsel %vm2175, %v2320, 0.0
  %v2394 = vadd.f32 %v2392, %v2393
  %v2395 = vsel %vm2175, %v2321, 0.0
  %v2396 = vadd.f32 %v2394, %v2395
  %v2397 = vsel %vm2175, %v2322, 0.0
  %v2398 = vadd.f32 %v2396, %v2397
  %v2399 = vsel %vm2175, %v2323, 0.0
  %v2400 = vadd.f32 %v2398, %v2399
  %v2401 = vsel %vm2175, %v2324, 0.0
  %v2402 = vadd.f32 %v2400, %v2401
  %v2403 = vsel %vm2175, %v2325, 0.0
  %v2404 = vadd.f32 %v2402, %v2403
  %v2405 = vsel %vm2175, %v2326, 0.0
  %v2406 = vadd.f32 %v2404, %v2405
  %v2407 = vsel %vm2175, %v2327, 0.0
  %v2408 = vadd.f32 %v2406, %v2407
  %v2409 = vsel %vm2175, %v2328, 0.0
  %v2410 = vadd.f32 %v2408, %v2409
  %v2411 = vsel %vm2175, %v2329, 0.0
  %v2412 = vadd.f32 %v2410, %v2411
  %v2413 = vsel %vm2175, %v2330, 0.0
  %v2414 = vadd.f32 %v2412, %v2413
  %v2415 = vsel %vm2175, %v2331, 0.0
  %v2416 = vadd.f32 %v2414, %v2415
  %v2417 = vsel %vm2175, %v2332, 0.0
  %v2418 = vadd.f32 %v2416, %v2417
  %v2419 = vsel %vm2175, %v2333, 0.0
  %v2420 = vadd.f32 %v2418, %v2419
  %v2421 = vsel %vm2175, %v2334, 0.0
  %v2422 = vadd.f32 %v2420, %v2421
  %v2423 = vsel %vm2175, %v2335, 0.0
  %v2424 = vadd.f32 %v2422, %v2423
  %v2425 = vsel %vm2175, %v2336, 0.0
  %v2426 = vadd.f32 %v2424, %v2425
  %v2427 = vsel %vm2175, %v2337, 0.0
  %v2428 = vadd.f32 %v2426, %v2427
  %v2429 = vsel %vm2175, %v2338, 0.0
  %v2430 = vadd.f32 %v2428, %v2429
  %v2431 = vsel %vm2175, %v2339, 0.0
  %v2432 = vadd.f32 %v2430, %v2431
  %v2433 = vsel %vm2175, %v2340, 0.0
  %v2434 = vadd.f32 %v2432, %v2433
  %v2435 = vsel %vm2175, %v2341, 0.0
  %v2436 = vadd.f32 %v2434, %v2435
  %v2437 = vsel %vm2175, %v2342, 0.0
  %v2438 = vadd.f32 %v2436, %v2437
  %v2439 = vsel %vm2175, %v2343, 0.0
  %v2440 = vadd.f32 %v2438, %v2439
  %v2441 = vsel %vm2175, %v2344, 0.0
  %v2442 = vadd.f32 %v2440, %v2441
  %v2443 = vsel %vm2175, %v2345, 0.0
  %v2444 = vadd.f32 %v2442, %v2443
  %v2445 = vsel %vm2175, %v2346, 0.0
  %v2446 = vadd.f32 %v2444, %v2445
  %v2447 = vsel %vm2175, %v2347, 0.0
  %v2448 = vadd.f32 %v2446, %v2447
  %v2449 = vsel %vm2175, %v2348, 0.0
  %v2450 = vadd.f32 %v2448, %v2449
  %v2451 = vsel %vm2175, %v2349, 0.0
  %v2452 = vadd.f32 %v2450, %v2451
  %v2453 = vsel %vm2175, %v2350, 0.0
  %v2454 = vadd.f32 %v2452, %v2453
  %v2455 = vsel %vm2175, %v2351, 0.0
  %v2456 = vadd.f32 %v2454, %v2455
  %v2457 = vsel %vm2175, %v2352, 0.0
  %v2458 = vadd.f32 %v2456, %v2457
  %v2459 = vsel %vm2175, %v2353, 0.0
  %v2460 = vadd.f32 %v2458, %v2459
  %v2461 = vsel %vm2175, %v2354, 0.0
  %v2462 = vadd.f32 %v2460, %v2461
  %v2463 = vsel %vm2175, %v2355, 0.0
  %v2464 = vadd.f32 %v2462, %v2463
  %v2465 = vsel %vm2175, %v2356, 0.0
  %v2466 = vadd.f32 %v2464, %v2465
  %v2467 = vsel %vm2175, %v2357, 0.0
  %v2468 = vadd.f32 %v2466, %v2467
  %v2469 = vsel %vm2175, %v2358, 0.0
  %v2470 = vadd.f32 %v2468, %v2469
  %v2471 = vsel %vm2175, %v2359, 0.0
  %v2472 = vadd.f32 %v2470, %v2471
  %v2473 = vsel %vm2175, %v2360, 0.0
  %v2474 = vadd.f32 %v2472, %v2473
  %v2475 = vsel %vm2175, %v2361, 0.0
  %v2476 = vadd.f32 %v2474, %v2475
  %v2477 = vsel %vm2175, %v2362, 0.0
  %v2478 = vadd.f32 %v2476, %v2477
  %v2479 = vsel %vm2175, %v2363, 0.0
  %v2480 = vadd.f32 %v2478, %v2479
  %v2481 = vsel %vm2175, %v2364, 0.0
  %v2482 = vadd.f32 %v2480, %v2481
  %v2483 = vsel %vm2175, %v2365, 0.0
  %v2484 = vadd.f32 %v2482, %v2483
  %v2485 = vsel %vm2175, %v2366, 0.0
  %v2486 = vadd.f32 %v2484, %v2485
  %v2487 = vsel %vm2175, %v2367, 0.0
  %v2488 = vadd.f32 %v2486, %v2487
  %v2489 = vsel %vm2175, %v2368, 0.0
  %v2490 = vadd.f32 %v2488, %v2489
  %v2491 = vsel %vm2175, %v2369, 0.0
  %v2492 = vadd.f32 %v2490, %v2491
  %v2493 = vsel %vm2175, %v2370, 0.0
  %v2494 = vadd.f32 %v2492, %v2493
  %v2495 = vsel %vm2175, %v2371, 0.0
  %v2496 = vadd.f32 %v2494, %v2495
  %v2497 = vsel %vm2175, %v2372, 0.0
  %v2498 = vadd.f32 %v2496, %v2497
  %v2499 = vsel %vm2175, %v2373, 0.0
  %v2500 = vadd.f32 %v2498, %v2499
  %v2501 = vrot.slane %v2500, 4
  %v2502 = vadd.f32 %v2500, %v2501
  %v2503 = vrot.slane %v2502, 2
  %v2504 = vadd.f32 %v2502, %v2503
  %v2505 = vrot.slane %v2504, 1
  %v2506 = vadd.f32 %v2504, %v2505
  %v2507 = vmul.f32 %v2506, 0.001953125
  %v2508 = vmul.f32 %v2309, %v2309
  %v2509 = vsub.f32 %v2507, %v2508
  %v2510 = vmax.f32 %v2509, 0.0
  %v2511 = vadd.f32 %v2510, 1e-05
  %v2512 = vrsqrt.pop %v2511
  %v2513 = vmul.f32 %v2512, %v2511
  %v2514 = vmul.f32 %v2513, %v2512
  %v2515 = vmul.f32 0.5, %v2514
  %v2516 = vsub.f32 1.5, %v2515
  %v2517 = vmul.f32 %v2512, %v2516
  %vm2518 = vweird.f32 %v2511
  %vm2519 = vweird.f32 %v2512
  %vm2520 = vmor %vm2518, %vm2519
  %v2521 = vsel %vm2520, %v2512, %v2517
  %v2522 = vmul.f32 %v2173, %v2521
  %v2523 = vmul.f32 %v2309, %v2522
  %v2524 = vsub.f32 %v2174, %v2523
  %v2526 = vperm.slane %v2522, 0
  %v2528 = vmul.f32 %v2109, %v2526
  %v2529 = vmul.f32 %v2110, %v2526
  %v2530 = vmul.f32 %v2111, %v2526
  %v2531 = vmul.f32 %v2112, %v2526
  %v2532 = vmul.f32 %v2113, %v2526
  %v2533 = vmul.f32 %v2114, %v2526
  %v2534 = vmul.f32 %v2115, %v2526
  %v2535 = vmul.f32 %v2116, %v2526
  %v2536 = vmul.f32 %v2117, %v2526
  %v2537 = vmul.f32 %v2118, %v2526
  %v2538 = vmul.f32 %v2119, %v2526
  %v2539 = vmul.f32 %v2120, %v2526
  %v2540 = vmul.f32 %v2121, %v2526
  %v2541 = vmul.f32 %v2122, %v2526
  %v2542 = vmul.f32 %v2123, %v2526
  %v2543 = vmul.f32 %v2124, %v2526
  %v2544 = vmul.f32 %v2125, %v2526
  %v2545 = vmul.f32 %v2126, %v2526
  %v2546 = vmul.f32 %v2127, %v2526
  %v2547 = vmul.f32 %v2128, %v2526
  %v2548 = vmul.f32 %v2129, %v2526
  %v2549 = vmul.f32 %v2130, %v2526
  %v2550 = vmul.f32 %v2131, %v2526
  %v2551 = vmul.f32 %v2132, %v2526
  %v2552 = vmul.f32 %v2133, %v2526
  %v2553 = vmul.f32 %v2134, %v2526
  %v2554 = vmul.f32 %v2135, %v2526
  %v2555 = vmul.f32 %v2136, %v2526
  %v2556 = vmul.f32 %v2137, %v2526
  %v2557 = vmul.f32 %v2138, %v2526
  %v2558 = vmul.f32 %v2139, %v2526
  %v2559 = vmul.f32 %v2140, %v2526
  %v2560 = vmul.f32 %v2141, %v2526
  %v2561 = vmul.f32 %v2142, %v2526
  %v2562 = vmul.f32 %v2143, %v2526
  %v2563 = vmul.f32 %v2144, %v2526
  %v2564 = vmul.f32 %v2145, %v2526
  %v2565 = vmul.f32 %v2146, %v2526
  %v2566 = vmul.f32 %v2147, %v2526
  %v2567 = vmul.f32 %v2148, %v2526
  %v2568 = vmul.f32 %v2149, %v2526
  %v2569 = vmul.f32 %v2150, %v2526
  %v2570 = vmul.f32 %v2151, %v2526
  %v2571 = vmul.f32 %v2152, %v2526
  %v2572 = vmul.f32 %v2153, %v2526
  %v2573 = vmul.f32 %v2154, %v2526
  %v2574 = vmul.f32 %v2155, %v2526
  %v2575 = vmul.f32 %v2156, %v2526
  %v2576 = vmul.f32 %v2157, %v2526
  %v2577 = vmul.f32 %v2158, %v2526
  %v2578 = vmul.f32 %v2159, %v2526
  %v2579 = vmul.f32 %v2160, %v2526
  %v2580 = vmul.f32 %v2161, %v2526
  %v2581 = vmul.f32 %v2162, %v2526
  %v2582 = vmul.f32 %v2163, %v2526
  %v2583 = vmul.f32 %v2164, %v2526
  %v2584 = vmul.f32 %v2165, %v2526
  %v2585 = vmul.f32 %v2166, %v2526
  %v2586 = vmul.f32 %v2167, %v2526
  %v2587 = vmul.f32 %v2168, %v2526
  %v2588 = vmul.f32 %v2169, %v2526
  %v2589 = vmul.f32 %v2170, %v2526
  %v2590 = vmul.f32 %v2171, %v2526
  %v2591 = vmul.f32 %v2172, %v2526
  %v2593 = vperm.slane %v2524, 0
  %v2595 = vadd.f32 %v2528, %v2593
  %v2596 = vadd.f32 %v2529, %v2593
  %v2597 = vadd.f32 %v2530, %v2593
  %v2598 = vadd.f32 %v2531, %v2593
  %v2599 = vadd.f32 %v2532, %v2593
  %v2600 = vadd.f32 %v2533, %v2593
  %v2601 = vadd.f32 %v2534, %v2593
  %v2602 = vadd.f32 %v2535, %v2593
  %v2603 = vadd.f32 %v2536, %v2593
  %v2604 = vadd.f32 %v2537, %v2593
  %v2605 = vadd.f32 %v2538, %v2593
  %v2606 = vadd.f32 %v2539, %v2593
  %v2607 = vadd.f32 %v2540, %v2593
  %v2608 = vadd.f32 %v2541, %v2593
  %v2609 = vadd.f32 %v2542, %v2593
  %v2610 = vadd.f32 %v2543, %v2593
  %v2611 = vadd.f32 %v2544, %v2593
  %v2612 = vadd.f32 %v2545, %v2593
  %v2613 = vadd.f32 %v2546, %v2593
  %v2614 = vadd.f32 %v2547, %v2593
  %v2615 = vadd.f32 %v2548, %v2593
  %v2616 = vadd.f32 %v2549, %v2593
  %v2617 = vadd.f32 %v2550, %v2593
  %v2618 = vadd.f32 %v2551, %v2593
  %v2619 = vadd.f32 %v2552, %v2593
  %v2620 = vadd.f32 %v2553, %v2593
  %v2621 = vadd.f32 %v2554, %v2593
  %v2622 = vadd.f32 %v2555, %v2593
  %v2623 = vadd.f32 %v2556, %v2593
  %v2624 = vadd.f32 %v2557, %v2593
  %v2625 = vadd.f32 %v2558, %v2593
  %v2626 = vadd.f32 %v2559, %v2593
  %v2627 = vadd.f32 %v2560, %v2593
  %v2628 = vadd.f32 %v2561, %v2593
  %v2629 = vadd.f32 %v2562, %v2593
  %v2630 = vadd.f32 %v2563, %v2593
  %v2631 = vadd.f32 %v2564, %v2593
  %v2632 = vadd.f32 %v2565, %v2593
  %v2633 = vadd.f32 %v2566, %v2593
  %v2634 = vadd.f32 %v2567, %v2593
  %v2635 = vadd.f32 %v2568, %v2593
  %v2636 = vadd.f32 %v2569, %v2593
  %v2637 = vadd.f32 %v2570, %v2593
  %v2638 = vadd.f32 %v2571, %v2593
  %v2639 = vadd.f32 %v2572, %v2593
  %v2640 = vadd.f32 %v2573, %v2593
  %v2641 = vadd.f32 %v2574, %v2593
  %v2642 = vadd.f32 %v2575, %v2593
  %v2643 = vadd.f32 %v2576, %v2593
  %v2644 = vadd.f32 %v2577, %v2593
  %v2645 = vadd.f32 %v2578, %v2593
  %v2646 = vadd.f32 %v2579, %v2593
  %v2647 = vadd.f32 %v2580, %v2593
  %v2648 = vadd.f32 %v2581, %v2593
  %v2649 = vadd.f32 %v2582, %v2593
  %v2650 = vadd.f32 %v2583, %v2593
  %v2651 = vadd.f32 %v2584, %v2593
  %v2652 = vadd.f32 %v2585, %v2593
  %v2653 = vadd.f32 %v2586, %v2593
  %v2654 = vadd.f32 %v2587, %v2593
  %v2655 = vadd.f32 %v2588, %v2593
  %v2656 = vadd.f32 %v2589, %v2593
  %v2657 = vadd.f32 %v2590, %v2593
  %v2658 = vadd.f32 %v2591, %v2593
  %v2659 = vmul.f32 %v2595, 0.2
  %v2660 = vmul.f32 %v2596, 0.2
  %v2661 = vmul.f32 %v2597, 0.2
  %v2662 = vmul.f32 %v2598, 0.2
  %v2663 = vmul.f32 %v2599, 0.2
  %v2664 = vmul.f32 %v2600, 0.2
  %v2665 = vmul.f32 %v2601, 0.2
  %v2666 = vmul.f32 %v2602, 0.2
  %v2667 = vmul.f32 %v2603, 0.2
  %v2668 = vmul.f32 %v2604, 0.2
  %v2669 = vmul.f32 %v2605, 0.2
  %v2670 = vmul.f32 %v2606, 0.2
  %v2671 = vmul.f32 %v2607, 0.2
  %v2672 = vmul.f32 %v2608, 0.2
  %v2673 = vmul.f32 %v2609, 0.2
  %v2674 = vmul.f32 %v2610, 0.2
  %v2675 = vmul.f32 %v2611, 0.2
  %v2676 = vmul.f32 %v2612, 0.2
  %v2677 = vmul.f32 %v2613, 0.2
  %v2678 = vmul.f32 %v2614, 0.2
  %v2679 = vmul.f32 %v2615, 0.2
  %v2680 = vmul.f32 %v2616, 0.2
  %v2681 = vmul.f32 %v2617, 0.2
  %v2682 = vmul.f32 %v2618, 0.2
  %v2683 = vmul.f32 %v2619, 0.2
  %v2684 = vmul.f32 %v2620, 0.2
  %v2685 = vmul.f32 %v2621, 0.2
  %v2686 = vmul.f32 %v2622, 0.2
  %v2687 = vmul.f32 %v2623, 0.2
  %v2688 = vmul.f32 %v2624, 0.2
  %v2689 = vmul.f32 %v2625, 0.2
  %v2690 = vmul.f32 %v2626, 0.2
  %v2691 = vmul.f32 %v2627, 0.2
  %v2692 = vmul.f32 %v2628, 0.2
  %v2693 = vmul.f32 %v2629, 0.2
  %v2694 = vmul.f32 %v2630, 0.2
  %v2695 = vmul.f32 %v2631, 0.2
  %v2696 = vmul.f32 %v2632, 0.2
  %v2697 = vmul.f32 %v2633, 0.2
  %v2698 = vmul.f32 %v2634, 0.2
  %v2699 = vmul.f32 %v2635, 0.2
  %v2700 = vmul.f32 %v2636, 0.2
  %v2701 = vmul.f32 %v2637, 0.2
  %v2702 = vmul.f32 %v2638, 0.2
  %v2703 = vmul.f32 %v2639, 0.2
  %v2704 = vmul.f32 %v2640, 0.2
  %v2705 = vmul.f32 %v2641, 0.2
  %v2706 = vmul.f32 %v2642, 0.2
  %v2707 = vmul.f32 %v2643, 0.2
  %v2708 = vmul.f32 %v2644, 0.2
  %v2709 = vmul.f32 %v2645, 0.2
  %v2710 = vmul.f32 %v2646, 0.2
  %v2711 = vmul.f32 %v2647, 0.2
  %v2712 = vmul.f32 %v2648, 0.2
  %v2713 = vmul.f32 %v2649, 0.2
  %v2714 = vmul.f32 %v2650, 0.2
  %v2715 = vmul.f32 %v2651, 0.2
  %v2716 = vmul.f32 %v2652, 0.2
  %v2717 = vmul.f32 %v2653, 0.2
  %v2718 = vmul.f32 %v2654, 0.2
  %v2719 = vmul.f32 %v2655, 0.2
  %v2720 = vmul.f32 %v2656, 0.2
  %v2721 = vmul.f32 %v2657, 0.2
  %v2722 = vmul.f32 %v2658, 0.2
  %v2723 = vmax.f32 %v2595, %v2659
  %v2724 = vmax.f32 %v2596, %v2660
  %v2725 = vmax.f32 %v2597, %v2661
  %v2726 = vmax.f32 %v2598, %v2662
  %v2727 = vmax.f32 %v2599, %v2663
  %v2728 = vmax.f32 %v2600, %v2664
  %v2729 = vmax.f32 %v2601, %v2665
  %v2730 = vmax.f32 %v2602, %v2666
  %v2731 = vmax.f32 %v2603, %v2667
  %v2732 = vmax.f32 %v2604, %v2668
  %v2733 = vmax.f32 %v2605, %v2669
  %v2734 = vmax.f32 %v2606, %v2670
  %v2735 = vmax.f32 %v2607, %v2671
  %v2736 = vmax.f32 %v2608, %v2672
  %v2737 = vmax.f32 %v2609, %v2673
  %v2738 = vmax.f32 %v2610, %v2674
  %v2739 = vmax.f32 %v2611, %v2675
  %v2740 = vmax.f32 %v2612, %v2676
  %v2741 = vmax.f32 %v2613, %v2677
  %v2742 = vmax.f32 %v2614, %v2678
  %v2743 = vmax.f32 %v2615, %v2679
  %v2744 = vmax.f32 %v2616, %v2680
  %v2745 = vmax.f32 %v2617, %v2681
  %v2746 = vmax.f32 %v2618, %v2682
  %v2747 = vmax.f32 %v2619, %v2683
  %v2748 = vmax.f32 %v2620, %v2684
  %v2749 = vmax.f32 %v2621, %v2685
  %v2750 = vmax.f32 %v2622, %v2686
  %v2751 = vmax.f32 %v2623, %v2687
  %v2752 = vmax.f32 %v2624, %v2688
  %v2753 = vmax.f32 %v2625, %v2689
  %v2754 = vmax.f32 %v2626, %v2690
  %v2755 = vmax.f32 %v2627, %v2691
  %v2756 = vmax.f32 %v2628, %v2692
  %v2757 = vmax.f32 %v2629, %v2693
  %v2758 = vmax.f32 %v2630, %v2694
  %v2759 = vmax.f32 %v2631, %v2695
  %v2760 = vmax.f32 %v2632, %v2696
  %v2761 = vmax.f32 %v2633, %v2697
  %v2762 = vmax.f32 %v2634, %v2698
  %v2763 = vmax.f32 %v2635, %v2699
  %v2764 = vmax.f32 %v2636, %v2700
  %v2765 = vmax.f32 %v2637, %v2701
  %v2766 = vmax.f32 %v2638, %v2702
  %v2767 = vmax.f32 %v2639, %v2703
  %v2768 = vmax.f32 %v2640, %v2704
  %v2769 = vmax.f32 %v2641, %v2705
  %v2770 = vmax.f32 %v2642, %v2706
  %v2771 = vmax.f32 %v2643, %v2707
  %v2772 = vmax.f32 %v2644, %v2708
  %v2773 = vmax.f32 %v2645, %v2709
  %v2774 = vmax.f32 %v2646, %v2710
  %v2775 = vmax.f32 %v2647, %v2711
  %v2776 = vmax.f32 %v2648, %v2712
  %v2777 = vmax.f32 %v2649, %v2713
  %v2778 = vmax.f32 %v2650, %v2714
  %v2779 = vmax.f32 %v2651, %v2715
  %v2780 = vmax.f32 %v2652, %v2716
  %v2781 = vmax.f32 %v2653, %v2717
  %v2782 = vmax.f32 %v2654, %v2718
  %v2783 = vmax.f32 %v2655, %v2719
  %v2784 = vmax.f32 %v2656, %v2720
  %v2785 = vmax.f32 %v2657, %v2721
  %v2786 = vmax.f32 %v2658, %v2722
  %v2787 = vpack.c.bf16 %v2723, %v2723
  %v2788 = vpack.c.bf16 %v2724, %v2724
  %v2789 = vpack.c.bf16 %v2725, %v2725
  %v2790 = vpack.c.bf16 %v2726, %v2726
  %v2791 = vpack.c.bf16 %v2727, %v2727
  %v2792 = vpack.c.bf16 %v2728, %v2728
  %v2793 = vpack.c.bf16 %v2729, %v2729
  %v2794 = vpack.c.bf16 %v2730, %v2730
  %v2795 = vpack.c.bf16 %v2731, %v2731
  %v2796 = vpack.c.bf16 %v2732, %v2732
  %v2797 = vpack.c.bf16 %v2733, %v2733
  %v2798 = vpack.c.bf16 %v2734, %v2734
  %v2799 = vpack.c.bf16 %v2735, %v2735
  %v2800 = vpack.c.bf16 %v2736, %v2736
  %v2801 = vpack.c.bf16 %v2737, %v2737
  %v2802 = vpack.c.bf16 %v2738, %v2738
  %v2803 = vpack.c.bf16 %v2739, %v2739
  %v2804 = vpack.c.bf16 %v2740, %v2740
  %v2805 = vpack.c.bf16 %v2741, %v2741
  %v2806 = vpack.c.bf16 %v2742, %v2742
  %v2807 = vpack.c.bf16 %v2743, %v2743
  %v2808 = vpack.c.bf16 %v2744, %v2744
  %v2809 = vpack.c.bf16 %v2745, %v2745
  %v2810 = vpack.c.bf16 %v2746, %v2746
  %v2811 = vpack.c.bf16 %v2747, %v2747
  %v2812 = vpack.c.bf16 %v2748, %v2748
  %v2813 = vpack.c.bf16 %v2749, %v2749
  %v2814 = vpack.c.bf16 %v2750, %v2750
  %v2815 = vpack.c.bf16 %v2751, %v2751
  %v2816 = vpack.c.bf16 %v2752, %v2752
  %v2817 = vpack.c.bf16 %v2753, %v2753
  %v2818 = vpack.c.bf16 %v2754, %v2754
  %v2819 = vpack.c.bf16 %v2755, %v2755
  %v2820 = vpack.c.bf16 %v2756, %v2756
  %v2821 = vpack.c.bf16 %v2757, %v2757
  %v2822 = vpack.c.bf16 %v2758, %v2758
  %v2823 = vpack.c.bf16 %v2759, %v2759
  %v2824 = vpack.c.bf16 %v2760, %v2760
  %v2825 = vpack.c.bf16 %v2761, %v2761
  %v2826 = vpack.c.bf16 %v2762, %v2762
  %v2827 = vpack.c.bf16 %v2763, %v2763
  %v2828 = vpack.c.bf16 %v2764, %v2764
  %v2829 = vpack.c.bf16 %v2765, %v2765
  %v2830 = vpack.c.bf16 %v2766, %v2766
  %v2831 = vpack.c.bf16 %v2767, %v2767
  %v2832 = vpack.c.bf16 %v2768, %v2768
  %v2833 = vpack.c.bf16 %v2769, %v2769
  %v2834 = vpack.c.bf16 %v2770, %v2770
  %v2835 = vpack.c.bf16 %v2771, %v2771
  %v2836 = vpack.c.bf16 %v2772, %v2772
  %v2837 = vpack.c.bf16 %v2773, %v2773
  %v2838 = vpack.c.bf16 %v2774, %v2774
  %v2839 = vpack.c.bf16 %v2775, %v2775
  %v2840 = vpack.c.bf16 %v2776, %v2776
  %v2841 = vpack.c.bf16 %v2777, %v2777
  %v2842 = vpack.c.bf16 %v2778, %v2778
  %v2843 = vpack.c.bf16 %v2779, %v2779
  %v2844 = vpack.c.bf16 %v2780, %v2780
  %v2845 = vpack.c.bf16 %v2781, %v2781
  %v2846 = vpack.c.bf16 %v2782, %v2782
  %v2847 = vpack.c.bf16 %v2783, %v2783
  %v2848 = vpack.c.bf16 %v2784, %v2784
  %v2849 = vpack.c.bf16 %v2785, %v2785
  %v2850 = vpack.c.bf16 %v2786, %v2786
  %vm2851 = vcmask 125952
  %2852 = vst.msk [vmem:[%s5] sm:$0xf] %vm2851, %v2787
  %2853 = vst.msk [vmem:[%s5 + $0x4] sm:$0xf] %vm2851, %v2788
  %2854 = vst.msk [vmem:[%s5 + $0x8] sm:$0xf] %vm2851, %v2789
  %2855 = vst.msk [vmem:[%s5 + $0xc] sm:$0xf] %vm2851, %v2790
  %2856 = vst.msk [vmem:[%s5 + $0x10] sm:$0xf] %vm2851, %v2791
  %2857 = vst.msk [vmem:[%s5 + $0x14] sm:$0xf] %vm2851, %v2792
  %2858 = vst.msk [vmem:[%s5 + $0x18] sm:$0xf] %vm2851, %v2793
  %2859 = vst.msk [vmem:[%s5 + $0x1c] sm:$0xf] %vm2851, %v2794
  %2860 = vst.msk [vmem:[%s5 + $0x20] sm:$0xf] %vm2851, %v2795
  %2861 = vst.msk [vmem:[%s5 + $0x24] sm:$0xf] %vm2851, %v2796
  %2862 = vst.msk [vmem:[%s5 + $0x28] sm:$0xf] %vm2851, %v2797
  %2863 = vst.msk [vmem:[%s5 + $0x2c] sm:$0xf] %vm2851, %v2798
  %2864 = vst.msk [vmem:[%s5 + $0x30] sm:$0xf] %vm2851, %v2799
  %2865 = vst.msk [vmem:[%s5 + $0x34] sm:$0xf] %vm2851, %v2800
  %2866 = vst.msk [vmem:[%s5 + $0x38] sm:$0xf] %vm2851, %v2801
  %2867 = vst.msk [vmem:[%s5 + $0x3c] sm:$0xf] %vm2851, %v2802
  %2868 = vst.msk [vmem:[%s5 + $0x40] sm:$0xf] %vm2851, %v2803
  %2869 = vst.msk [vmem:[%s5 + $0x44] sm:$0xf] %vm2851, %v2804
  %2870 = vst.msk [vmem:[%s5 + $0x48] sm:$0xf] %vm2851, %v2805
  %2871 = vst.msk [vmem:[%s5 + $0x4c] sm:$0xf] %vm2851, %v2806
  %2872 = vst.msk [vmem:[%s5 + $0x50] sm:$0xf] %vm2851, %v2807
  %2873 = vst.msk [vmem:[%s5 + $0x54] sm:$0xf] %vm2851, %v2808
  %2874 = vst.msk [vmem:[%s5 + $0x58] sm:$0xf] %vm2851, %v2809
  %2875 = vst.msk [vmem:[%s5 + $0x5c] sm:$0xf] %vm2851, %v2810
  %2876 = vst.msk [vmem:[%s5 + $0x60] sm:$0xf] %vm2851, %v2811
  %2877 = vst.msk [vmem:[%s5 + $0x64] sm:$0xf] %vm2851, %v2812
  %2878 = vst.msk [vmem:[%s5 + $0x68] sm:$0xf] %vm2851, %v2813
  %2879 = vst.msk [vmem:[%s5 + $0x6c] sm:$0xf] %vm2851, %v2814
  %2880 = vst.msk [vmem:[%s5 + $0x70] sm:$0xf] %vm2851, %v2815
  %2881 = vst.msk [vmem:[%s5 + $0x74] sm:$0xf] %vm2851, %v2816
  %2882 = vst.msk [vmem:[%s5 + $0x78] sm:$0xf] %vm2851, %v2817
  %2883 = vst.msk [vmem:[%s5 + $0x7c] sm:$0xf] %vm2851, %v2818
  %2884 = vst.msk [vmem:[%s5 + $0x80] sm:$0xf] %vm2851, %v2819
  %2885 = vst.msk [vmem:[%s5 + $0x84] sm:$0xf] %vm2851, %v2820
  %2886 = vst.msk [vmem:[%s5 + $0x88] sm:$0xf] %vm2851, %v2821
  %2887 = vst.msk [vmem:[%s5 + $0x8c] sm:$0xf] %vm2851, %v2822
  %2888 = vst.msk [vmem:[%s5 + $0x90] sm:$0xf] %vm2851, %v2823
  %2889 = vst.msk [vmem:[%s5 + $0x94] sm:$0xf] %vm2851, %v2824
  %2890 = vst.msk [vmem:[%s5 + $0x98] sm:$0xf] %vm2851, %v2825
  %2891 = vst.msk [vmem:[%s5 + $0x9c] sm:$0xf] %vm2851, %v2826
  %2892 = vst.msk [vmem:[%s5 + $0xa0] sm:$0xf] %vm2851, %v2827
  %2893 = vst.msk [vmem:[%s5 + $0xa4] sm:$0xf] %vm2851, %v2828
  %2894 = vst.msk [vmem:[%s5 + $0xa8] sm:$0xf] %vm2851, %v2829
  %2895 = vst.msk [vmem:[%s5 + $0xac] sm:$0xf] %vm2851, %v2830
  %2896 = vst.msk [vmem:[%s5 + $0xb0] sm:$0xf] %vm2851, %v2831
  %2897 = vst.msk [vmem:[%s5 + $0xb4] sm:$0xf] %vm2851, %v2832
  %2898 = vst.msk [vmem:[%s5 + $0xb8] sm:$0xf] %vm2851, %v2833
  %2899 = vst.msk [vmem:[%s5 + $0xbc] sm:$0xf] %vm2851, %v2834
  %2900 = vst.msk [vmem:[%s5 + $0xc0] sm:$0xf] %vm2851, %v2835
  %2901 = vst.msk [vmem:[%s5 + $0xc4] sm:$0xf] %vm2851, %v2836
  %2902 = vst.msk [vmem:[%s5 + $0xc8] sm:$0xf] %vm2851, %v2837
  %2903 = vst.msk [vmem:[%s5 + $0xcc] sm:$0xf] %vm2851, %v2838
  %2904 = vst.msk [vmem:[%s5 + $0xd0] sm:$0xf] %vm2851, %v2839
  %2905 = vst.msk [vmem:[%s5 + $0xd4] sm:$0xf] %vm2851, %v2840
  %2906 = vst.msk [vmem:[%s5 + $0xd8] sm:$0xf] %vm2851, %v2841
  %2907 = vst.msk [vmem:[%s5 + $0xdc] sm:$0xf] %vm2851, %v2842
  %2908 = vst.msk [vmem:[%s5 + $0xe0] sm:$0xf] %vm2851, %v2843
  %2909 = vst.msk [vmem:[%s5 + $0xe4] sm:$0xf] %vm2851, %v2844
  %2910 = vst.msk [vmem:[%s5 + $0xe8] sm:$0xf] %vm2851, %v2845
  %2911 = vst.msk [vmem:[%s5 + $0xec] sm:$0xf] %vm2851, %v2846
  %2912 = vst.msk [vmem:[%s5 + $0xf0] sm:$0xf] %vm2851, %v2847
  %2913 = vst.msk [vmem:[%s5 + $0xf4] sm:$0xf] %vm2851, %v2848
  %2914 = vst.msk [vmem:[%s5 + $0xf8] sm:$0xf] %vm2851, %v2849
  %2915 = vst.msk [vmem:[%s5 + $0xfc] sm:$0xf] %vm2851, %v2850
  // Predicated region
  $region22: #{discriminator_forward.5} parent=0 // pred_check
    _
  $region23: #{discriminator_forward.5} parent=0 // pred_check_branch
    %2917 = sbr.rel (0) target = $region25
  $region24: #{discriminator_forward.5} parent=0 // pred_region
    _
  $region25: #{discriminator_forward.5} parent=0 // pred_fallthru
    _
  // Predicated region
  $region26: #{discriminator_forward.5} parent=0 // pred_check
    _
  $region27: #{discriminator_forward.5} parent=0 // pred_check_branch
    %2919 = sbr.rel (0) target = $region29
  $region28: #{discriminator_forward.5} parent=0 // pred_region
    _
  $region29: #{discriminator_forward.5} parent=0 // pred_fallthru
    _

// kernel: squeeze.1
$region0: #{squeeze.1}
  %s0 = inlined_call_operand.vmem [shape: f32[32], index: 0, kind: input, shape index: {}]
  %s1 = inlined_call_operand.vmem [shape: f32[4,2,4], index: 1, kind: output, shape index: {}]
  $region1: #{squeeze.1} parent=0
    #allocation0 [shape = 'u8[16384]{0}', space=vmem, size = 0x4000, scoped, tag = 'scoped mem for output reshape']
    #allocation1 [shape = 'u8[4096]{0}', space=vmem, size = 0x1000, scoped, tag = 'scoped mem for input reshape']
    %s3 = ssub.s32 2, 1
    %v4 = vld [vmem:[%s0] sm:%s3]
    %5 = vst [vmem:[#allocation1] sm:%s3] %v4
    %v6 = vld [vmem:[#allocation1] sm:$0x1]
    %vm7 = vcmask 31744
    %8 = vst.msk [vmem:[#allocation0] sm:$0x1] %vm7, %v6
    %v9 = vld [vmem:[#allocation1] sm:$0x1]
    %10 = vrot.lane.b32.xlu0 %v9, 124
    %v11 = vpop.permute.xlu0 %10
    %vm12 = vcmask 31744
    %s13 = scalar_lea.vmem [#allocation0], 1
    %14 = vst.msk [vmem:[%s13] sm:$0x1] %vm12, %v11
    %v15 = vld [vmem:[#allocation1] sm:$0x1]
    %16 = vrot.lane.b32.xlu0 %v15, 120
    %v17 = vpop.permute.xlu0 %16
    %vm18 = vcmask 31744
    %s19 = scalar_lea.vmem [#allocation0], 8
    %20 = vst.msk [vmem:[%s19] sm:$0x1] %vm18, %v17
    %v21 = vld [vmem:[#allocation1] sm:$0x1]
    %22 = vrot.lane.b32.xlu0 %v21, 116
    %v23 = vpop.permute.xlu0 %22
    %vm24 = vcmask 31744
    %s25 = scalar_lea.vmem [#allocation0], 9
    %26 = vst.msk [vmem:[%s25] sm:$0x1] %vm24, %v23
    %v27 = vld [vmem:[#allocation1] sm:$0x1]
    %28 = vrot.lane.b32.xlu0 %v27, 112
    %v29 = vpop.permute.xlu0 %28
    %vm30 = vcmask 31744
    %s31 = scalar_lea.vmem [#allocation0], 16
    %32 = vst.msk [vmem:[%s31] sm:$0x1] %vm30, %v29
    %v33 = vld [vmem:[#allocation1] sm:$0x1]
    %34 = vrot.lane.b32.xlu0 %v33, 108
    %v35 = vpop.permute.xlu0 %34
    %vm36 = vcmask 31744
    %s37 = scalar_lea.vmem [#allocation0], 17
    %38 = vst.msk [vmem:[%s37] sm:$0x1] %vm36, %v35
    %v39 = vld [vmem:[#allocation1] sm:$0x1]
    %40 = vrot.lane.b32.xlu0 %v39, 104
    %v41 = vpop.permute.xlu0 %40
    %vm42 = vcmask 31744
    %s43 = scalar_lea.vmem [#allocation0], 24
    %44 = vst.msk [vmem:[%s43] sm:$0x1] %vm42, %v41
    %v45 = vld [vmem:[#allocation1] sm:$0x1]
    %46 = vrot.lane.b32.xlu0 %v45, 100
    %v47 = vpop.permute.xlu0 %46
    %vm48 = vcmask 31744
    %s49 = scalar_lea.vmem [#allocation0], 25
    %50 = vst.msk [vmem:[%s49] sm:$0x1] %vm48, %v47
    %s52 = ssub.s32 4, 1
    %v53 = vld [vmem:[#allocation0] sm:%s52]
    %s55 = ssub.s32 4, 1
    %56 = vst [vmem:[%s1] sm:%s55] %v53
    %s57 = scalar_lea.vmem [#allocation0], 8
    %v58 = vld [vmem:[%s57] sm:%s52]
    %s60 = ssub.s32 4, 1
    %s61 = scalar_lea.vmem %s1, 2
    %62 = vst [vmem:[%s61] sm:%s60] %v58
    %s63 = scalar_lea.vmem [#allocation0], 16
    %v64 = vld [vmem:[%s63] sm:%s52]
    %s66 = ssub.s32 4, 1
    %s67 = scalar_lea.vmem %s1, 4
    %68 = vst [vmem:[%s67] sm:%s66] %v64
    %s69 = scalar_lea.vmem [#allocation0], 24
    %v70 = vld [vmem:[%s69] sm:%s52]
    %s72 = ssub.s32 4, 1
    %s73 = scalar_lea.vmem %s1, 6
    %74 = vst [vmem:[%s73] sm:%s72] %v70

// kernel: discriminator_forward.7
$region0: #{discriminator_forward.7}
  #allocation0 [shape = 'u32[]', space=smem, size = 0x4, offset = 0x4, fixed_abs, tag = 'smem constant byte address 0x4 - core index']
  #allocation1 [shape = 'u32[72,128]{1,0:T(1,128)}', space=vmem, size = 0x9000, scoped, tag = 'internal scratch']
  %s0 = inlined_call_operand.vmem [shape: bf16[40,128], index: 0, kind: input, shape index: {}]
  %s1 = inlined_call_operand.vmem [shape: bf16[40,128], index: 1, kind: input, shape index: {}]
  %s2 = inlined_call_operand.vmem [shape: bf16[4,128,64], index: 2, kind: input, shape index: {}]
  %s3 = inlined_call_operand.vmem [shape: f32[1,64], index: 3, kind: input, shape index: {}]
  %s4 = inlined_call_operand.vmem [shape: f32[1,64], index: 4, kind: input, shape index: {}]
  %s5 = inlined_call_operand.vmem [shape: f32[32,64], index: 5, kind: input, shape index: {}]
  %s6 = inlined_call_operand.vmem [shape: f32[1,32,1], index: 6, kind: output, shape index: {}]
  %s7 = sld [smem:[#allocation0]]
  $region34: #{discriminator_forward.7} parent=0
    _
  %s9 = ssub.s32 1, %s7
  %s10 = scalar_select 0, %s9, %s7
  // Predicated region
  $region2: #{discriminator_forward.7} parent=0 // pred_check
    _
  $region3: #{discriminator_forward.7} parent=0 // pred_check_branch
    %12 = sbr.rel (0) target = $region5
  $region4: #{discriminator_forward.7} parent=0 // pred_region
    _
  $region5: #{discriminator_forward.7} parent=0 // pred_fallthru
    _
  // Predicated region
  $region6: #{discriminator_forward.7} parent=0 // pred_check
    _
  $region7: #{discriminator_forward.7} parent=0 // pred_check_branch
    %14 = sbr.rel (0) target = $region9
  $region8: #{discriminator_forward.7} parent=0 // pred_region
    _
  $region9: #{discriminator_forward.7} parent=0 // pred_fallthru
    _
  // Predicated region
  $region10: #{discriminator_forward.7} parent=0 // pred_check
    _
  $region11: #{discriminator_forward.7} parent=0 // pred_check_branch
    %16 = sbr.rel (0) target = $region13
  $region12: #{discriminator_forward.7} parent=0 // pred_region
    _
  $region13: #{discriminator_forward.7} parent=0 // pred_fallthru
    _
  // Predicated region
  $region14: #{discriminator_forward.7} parent=0 // pred_check
    _
  $region15: #{discriminator_forward.7} parent=0 // pred_check_branch
    %18 = sbr.rel (0) target = $region17
  $region16: #{discriminator_forward.7} parent=0 // pred_region
    _
  $region17: #{discriminator_forward.7} parent=0 // pred_fallthru
    _
  // Predicated region
  $region18: #{discriminator_forward.7} parent=0 // pred_check
    _
  $region19: #{discriminator_forward.7} parent=0 // pred_check_branch
    %20 = sbr.rel (0) target = $region21
  $region20: #{discriminator_forward.7} parent=0 // pred_region
    _
  $region21: #{discriminator_forward.7} parent=0 // pred_fallthru
    _
  // Predicated region
  $region22: #{discriminator_forward.7} parent=0 // pred_check
    _
  $region23: #{discriminator_forward.7} parent=0 // pred_check_branch
    %22 = sbr.rel (0) target = $region25
  $region24: #{discriminator_forward.7} parent=0 // pred_region
    _
  $region25: #{discriminator_forward.7} parent=0 // pred_fallthru
    _
  %v23 = vld [vmem:[%s0] sm:$0xf]
  %v24 = vld [vmem:[%s0 + $0x4] sm:$0xf]
  %v25 = vld [vmem:[%s0 + $0x8] sm:$0xf]
  %v26 = vld [vmem:[%s0 + $0xc] sm:$0xf]
  %v27 = vld [vmem:[%s2] sm:$0xf]
  %v28 = vld [vmem:[%s2 + $0x4] sm:$0xf]
  %v29 = vld [vmem:[%s2 + $0x8] sm:$0xf]
  %v30 = vld [vmem:[%s2 + $0xc] sm:$0xf]
  %v31 = vld [vmem:[%s2 + $0x10] sm:$0xf]
  %v32 = vld [vmem:[%s2 + $0x14] sm:$0xf]
  %v33 = vld [vmem:[%s2 + $0x18] sm:$0xf]
  %v34 = vld [vmem:[%s2 + $0x1c] sm:$0xf]
  %v35 = vld [vmem:[%s2 + $0x20] sm:$0xf]
  %v36 = vld [vmem:[%s2 + $0x24] sm:$0xf]
  %v37 = vld [vmem:[%s2 + $0x28] sm:$0xf]
  %v38 = vld [vmem:[%s2 + $0x2c] sm:$0xf]
  %v39 = vld [vmem:[%s2 + $0x30] sm:$0xf]
  %v40 = vld [vmem:[%s2 + $0x34] sm:$0xf]
  %v41 = vld [vmem:[%s2 + $0x38] sm:$0xf]
  %v42 = vld [vmem:[%s2 + $0x3c] sm:$0xf]
  %v43 = vld [vmem:[%s1] sm:$0xf]
  %v44 = vld [vmem:[%s1 + $0x4] sm:$0xf]
  %v45 = vld [vmem:[%s1 + $0x8] sm:$0xf]
  %v46 = vld [vmem:[%s1 + $0xc] sm:$0xf]
  %s47 = scalar_lea.vmem %s2, 64
  %v48 = vld [vmem:[%s47] sm:$0xf]
  %v49 = vld [vmem:[%s47 + $0x4] sm:$0xf]
  %v50 = vld [vmem:[%s47 + $0x8] sm:$0xf]
  %v51 = vld [vmem:[%s47 + $0xc] sm:$0xf]
  %v52 = vld [vmem:[%s47 + $0x10] sm:$0xf]
  %v53 = vld [vmem:[%s47 + $0x14] sm:$0xf]
  %v54 = vld [vmem:[%s47 + $0x18] sm:$0xf]
  %v55 = vld [vmem:[%s47 + $0x1c] sm:$0xf]
  %v56 = vld [vmem:[%s47 + $0x20] sm:$0xf]
  %v57 = vld [vmem:[%s47 + $0x24] sm:$0xf]
  %v58 = vld [vmem:[%s47 + $0x28] sm:$0xf]
  %v59 = vld [vmem:[%s47 + $0x2c] sm:$0xf]
  %v60 = vld [vmem:[%s47 + $0x30] sm:$0xf]
  %v61 = vld [vmem:[%s47 + $0x34] sm:$0xf]
  %v62 = vld [vmem:[%s47 + $0x38] sm:$0xf]
  %v63 = vld [vmem:[%s47 + $0x3c] sm:$0xf]
  %v68 = vunpack.c.l.b16 %v43
  %v69 = vunpack.c.l.b16 %v44
  %v70 = vunpack.c.l.b16 %v45
  %v71 = vunpack.c.l.b16 %v46
  %v72 = vpack.c.b16 %v69, %v68
  %v73 = vpack.c.b16 %v71, %v70
  %v92 = vunpack.c.l.b16 %v48
  %v93 = vunpack.c.l.b16 %v49
  %v94 = vunpack.c.l.b16 %v50
  %v95 = vunpack.c.l.b16 %v51
  %v96 = vunpack.c.l.b16 %v52
  %v97 = vunpack.c.l.b16 %v53
  %v98 = vunpack.c.l.b16 %v54
  %v99 = vunpack.c.l.b16 %v55
  %v100 = vunpack.c.l.b16 %v56
  %v101 = vunpack.c.l.b16 %v57
  %v102 = vunpack.c.l.b16 %v58
  %v103 = vunpack.c.l.b16 %v59
  %v104 = vunpack.c.l.b16 %v60
  %v105 = vunpack.c.l.b16 %v61
  %v106 = vunpack.c.l.b16 %v62
  %v107 = vunpack.c.l.b16 %v63
  %v108 = vpack.c.b16 %v93, %v92
  %v109 = vpack.c.b16 %v95, %v94
  %v110 = vpack.c.b16 %v97, %v96
  %v111 = vpack.c.b16 %v99, %v98
  %v112 = vpack.c.b16 %v101, %v100
  %v113 = vpack.c.b16 %v103, %v102
  %v114 = vpack.c.b16 %v105, %v104
  %v115 = vpack.c.b16 %v107, %v106
  %124 = vmatpush.bf16.msra.mxu0 %v115
  %125 = vmatpush.bf16.msra.mxu0 %v114
  %126 = vmatpush.bf16.msra.mxu0 %v113
  %127 = vmatpush.bf16.msra.mxu0 %v112
  %128 = vmatpush.bf16.msra.mxu0 %v111
  %129 = vmatpush.bf16.msra.mxu0 %v110
  %130 = vmatpush.bf16.msra.mxu0 %v109
  %131 = vmatpush.bf16.msra.mxu0 %v108
  %132 = vmatmul.bf16.gmra.mxu0 %v72
  %v133 = vpop.f32.mrf.mxu0
  %v134 = vadd.f32 0.0, %v133
  %v135 = vpop.f32.mrf.mxu0
  %v136 = vadd.f32 0.0, %v135
  %137 = vmatmul.bf16.gmra.mxu0 %v73
  %v138 = vpop.f32.mrf.mxu0
  %v139 = vadd.f32 0.0, %v138
  %v140 = vpop.f32.mrf.mxu0
  %v141 = vadd.f32 0.0, %v140
  %142 = vdwg.mxu0
  %v147 = vunpack.c.l.b16 %v23
  %v148 = vunpack.c.l.b16 %v24
  %v149 = vunpack.c.l.b16 %v25
  %v150 = vunpack.c.l.b16 %v26
  %v151 = vpack.c.b16 %v148, %v147
  %v152 = vpack.c.b16 %v150, %v149
  %v171 = vunpack.c.l.b16 %v27
  %v172 = vunpack.c.l.b16 %v28
  %v173 = vunpack.c.l.b16 %v29
  %v174 = vunpack.c.l.b16 %v30
  %v175 = vunpack.c.l.b16 %v31
  %v176 = vunpack.c.l.b16 %v32
  %v177 = vunpack.c.l.b16 %v33
  %v178 = vunpack.c.l.b16 %v34
  %v179 = vunpack.c.l.b16 %v35
  %v180 = vunpack.c.l.b16 %v36
  %v181 = vunpack.c.l.b16 %v37
  %v182 = vunpack.c.l.b16 %v38
  %v183 = vunpack.c.l.b16 %v39
  %v184 = vunpack.c.l.b16 %v40
  %v185 = vunpack.c.l.b16 %v41
  %v186 = vunpack.c.l.b16 %v42
  %v187 = vpack.c.b16 %v172, %v171
  %v188 = vpack.c.b16 %v174, %v173
  %v189 = vpack.c.b16 %v176, %v175
  %v190 = vpack.c.b16 %v178, %v177
  %v191 = vpack.c.b16 %v180, %v179
  %v192 = vpack.c.b16 %v182, %v181
  %v193 = vpack.c.b16 %v184, %v183
  %v194 = vpack.c.b16 %v186, %v185
  %203 = vmatpush.bf16.msra.mxu0 %v194
  %204 = vmatpush.bf16.msra.mxu0 %v193
  %205 = vmatpush.bf16.msra.mxu0 %v192
  %206 = vmatpush.bf16.msra.mxu0 %v191
  %207 = vmatpush.bf16.msra.mxu0 %v190
  %208 = vmatpush.bf16.msra.mxu0 %v189
  %209 = vmatpush.bf16.msra.mxu0 %v188
  %210 = vmatpush.bf16.msra.mxu0 %v187
  %211 = vmatmul.bf16.gmra.mxu0 %v151
  %v212 = vpop.f32.mrf.mxu0
  %v213 = vadd.f32 %v134, %v212
  %v214 = vpop.f32.mrf.mxu0
  %v215 = vadd.f32 %v136, %v214
  %216 = vmatmul.bf16.gmra.mxu0 %v152
  %v217 = vpop.f32.mrf.mxu0
  %v218 = vadd.f32 %v139, %v217
  %v219 = vpop.f32.mrf.mxu0
  %v220 = vadd.f32 %v141, %v219
  %221 = vdwg.mxu0
  %v222 = vld [vmem:[%s0 + $0x4] sm:$0xf]
  %v223 = vld [vmem:[%s0 + $0x8] sm:$0xf]
  %v224 = vld [vmem:[%s0 + $0xc] sm:$0xf]
  %v225 = vld [vmem:[%s0 + $0x10] sm:$0xf]
  %s226 = scalar_lea.vmem %s2, 128
  %v227 = vld [vmem:[%s226] sm:$0xf]
  %v228 = vld [vmem:[%s226 + $0x4] sm:$0xf]
  %v229 = vld [vmem:[%s226 + $0x8] sm:$0xf]
  %v230 = vld [vmem:[%s226 + $0xc] sm:$0xf]
  %v231 = vld [vmem:[%s226 + $0x10] sm:$0xf]
  %v232 = vld [vmem:[%s226 + $0x14] sm:$0xf]
  %v233 = vld [vmem:[%s226 + $0x18] sm:$0xf]
  %v234 = vld [vmem:[%s226 + $0x1c] sm:$0xf]
  %v235 = vld [vmem:[%s226 + $0x20] sm:$0xf]
  %v236 = vld [vmem:[%s226 + $0x24] sm:$0xf]
  %v237 = vld [vmem:[%s226 + $0x28] sm:$0xf]
  %v238 = vld [vmem:[%s226 + $0x2c] sm:$0xf]
  %v239 = vld [vmem:[%s226 + $0x30] sm:$0xf]
  %v240 = vld [vmem:[%s226 + $0x34] sm:$0xf]
  %v241 = vld [vmem:[%s226 + $0x38] sm:$0xf]
  %v242 = vld [vmem:[%s226 + $0x3c] sm:$0xf]
  %v247 = vunpack.c.l.b16 %v222
  %v248 = vunpack.c.l.b16 %v223
  %v249 = vunpack.c.l.b16 %v224
  %v250 = vunpack.c.l.b16 %v225
  %v251 = vpack.c.b16 %v248, %v247
  %v252 = vpack.c.b16 %v250, %v249
  %v271 = vunpack.c.l.b16 %v227
  %v272 = vunpack.c.l.b16 %v228
  %v273 = vunpack.c.l.b16 %v229
  %v274 = vunpack.c.l.b16 %v230
  %v275 = vunpack.c.l.b16 %v231
  %v276 = vunpack.c.l.b16 %v232
  %v277 = vunpack.c.l.b16 %v233
  %v278 = vunpack.c.l.b16 %v234
  %v279 = vunpack.c.l.b16 %v235
  %v280 = vunpack.c.l.b16 %v236
  %v281 = vunpack.c.l.b16 %v237
  %v282 = vunpack.c.l.b16 %v238
  %v283 = vunpack.c.l.b16 %v239
  %v284 = vunpack.c.l.b16 %v240
  %v285 = vunpack.c.l.b16 %v241
  %v286 = vunpack.c.l.b16 %v242
  %v287 = vpack.c.b16 %v272, %v271
  %v288 = vpack.c.b16 %v274, %v273
  %v289 = vpack.c.b16 %v276, %v275
  %v290 = vpack.c.b16 %v278, %v277
  %v291 = vpack.c.b16 %v280, %v279
  %v292 = vpack.c.b16 %v282, %v281
  %v293 = vpack.c.b16 %v284, %v283
  %v294 = vpack.c.b16 %v286, %v285
  %303 = vmatpush.bf16.msra.mxu0 %v294
  %304 = vmatpush.bf16.msra.mxu0 %v293
  %305 = vmatpush.bf16.msra.mxu0 %v292
  %306 = vmatpush.bf16.msra.mxu0 %v291
  %307 = vmatpush.bf16.msra.mxu0 %v290
  %308 = vmatpush.bf16.msra.mxu0 %v289
  %309 = vmatpush.bf16.msra.mxu0 %v288
  %310 = vmatpush.bf16.msra.mxu0 %v287
  %311 = vmatmul.bf16.gmra.mxu0 %v251
  %v312 = vpop.f32.mrf.mxu0
  %v313 = vadd.f32 0.0, %v312
  %v314 = vpop.f32.mrf.mxu0
  %v315 = vadd.f32 0.0, %v314
  %316 = vmatmul.bf16.gmra.mxu0 %v252
  %v317 = vpop.f32.mrf.mxu0
  %v318 = vadd.f32 0.0, %v317
  %v319 = vpop.f32.mrf.mxu0
  %v320 = vadd.f32 0.0, %v319
  %321 = vdwg.mxu0
  %v322 = vadd.f32 %v213, %v313
  %v323 = vadd.f32 %v215, %v315
  %v324 = vadd.f32 %v218, %v318
  %v325 = vadd.f32 %v220, %v320
  %v326 = vld [vmem:[%s1 + $0x4] sm:$0xf]
  %v327 = vld [vmem:[%s1 + $0x8] sm:$0xf]
  %v328 = vld [vmem:[%s1 + $0xc] sm:$0xf]
  %v329 = vld [vmem:[%s1 + $0x10] sm:$0xf]
  %s330 = scalar_lea.vmem %s2, 192
  %v331 = vld [vmem:[%s330] sm:$0xf]
  %v332 = vld [vmem:[%s330 + $0x4] sm:$0xf]
  %v333 = vld [vmem:[%s330 + $0x8] sm:$0xf]
  %v334 = vld [vmem:[%s330 + $0xc] sm:$0xf]
  %v335 = vld [vmem:[%s330 + $0x10] sm:$0xf]
  %v336 = vld [vmem:[%s330 + $0x14] sm:$0xf]
  %v337 = vld [vmem:[%s330 + $0x18] sm:$0xf]
  %v338 = vld [vmem:[%s330 + $0x1c] sm:$0xf]
  %v339 = vld [vmem:[%s330 + $0x20] sm:$0xf]
  %v340 = vld [vmem:[%s330 + $0x24] sm:$0xf]
  %v341 = vld [vmem:[%s330 + $0x28] sm:$0xf]
  %v342 = vld [vmem:[%s330 + $0x2c] sm:$0xf]
  %v343 = vld [vmem:[%s330 + $0x30] sm:$0xf]
  %v344 = vld [vmem:[%s330 + $0x34] sm:$0xf]
  %v345 = vld [vmem:[%s330 + $0x38] sm:$0xf]
  %v346 = vld [vmem:[%s330 + $0x3c] sm:$0xf]
  %v351 = vunpack.c.l.b16 %v326
  %v352 = vunpack.c.l.b16 %v327
  %v353 = vunpack.c.l.b16 %v328
  %v354 = vunpack.c.l.b16 %v329
  %v355 = vpack.c.b16 %v352, %v351
  %v356 = vpack.c.b16 %v354, %v353
  %v375 = vunpack.c.l.b16 %v331
  %v376 = vunpack.c.l.b16 %v332
  %v377 = vunpack.c.l.b16 %v333
  %v378 = vunpack.c.l.b16 %v334
  %v379 = vunpack.c.l.b16 %v335
  %v380 = vunpack.c.l.b16 %v336
  %v381 = vunpack.c.l.b16 %v337
  %v382 = vunpack.c.l.b16 %v338
  %v383 = vunpack.c.l.b16 %v339
  %v384 = vunpack.c.l.b16 %v340
  %v385 = vunpack.c.l.b16 %v341
  %v386 = vunpack.c.l.b16 %v342
  %v387 = vunpack.c.l.b16 %v343
  %v388 = vunpack.c.l.b16 %v344
  %v389 = vunpack.c.l.b16 %v345
  %v390 = vunpack.c.l.b16 %v346
  %v391 = vpack.c.b16 %v376, %v375
  %v392 = vpack.c.b16 %v378, %v377
  %v393 = vpack.c.b16 %v380, %v379
  %v394 = vpack.c.b16 %v382, %v381
  %v395 = vpack.c.b16 %v384, %v383
  %v396 = vpack.c.b16 %v386, %v385
  %v397 = vpack.c.b16 %v388, %v387
  %v398 = vpack.c.b16 %v390, %v389
  %407 = vmatpush.bf16.msra.mxu0 %v398
  %408 = vmatpush.bf16.msra.mxu0 %v397
  %409 = vmatpush.bf16.msra.mxu0 %v396
  %410 = vmatpush.bf16.msra.mxu0 %v395
  %411 = vmatpush.bf16.msra.mxu0 %v394
  %412 = vmatpush.bf16.msra.mxu0 %v393
  %413 = vmatpush.bf16.msra.mxu0 %v392
  %414 = vmatpush.bf16.msra.mxu0 %v391
  %415 = vmatmul.bf16.gmra.mxu0 %v355
  %v416 = vpop.f32.mrf.mxu0
  %v417 = vadd.f32 0.0, %v416
  %v418 = vpop.f32.mrf.mxu0
  %v419 = vadd.f32 0.0, %v418
  %420 = vmatmul.bf16.gmra.mxu0 %v356
  %v421 = vpop.f32.mrf.mxu0
  %v422 = vadd.f32 0.0, %v421
  %v423 = vpop.f32.mrf.mxu0
  %v424 = vadd.f32 0.0, %v423
  %425 = vdwg.mxu0
  %v426 = vadd.f32 %v322, %v417
  %v427 = vadd.f32 %v323, %v419
  %v428 = vadd.f32 %v324, %v422
  %v429 = vadd.f32 %v325, %v424
  %v430 = vld [vmem:[%s3] sm:$0x1]
  %v431 = vld [vmem:[%s4] sm:$0x1]
  %vm432 = vcmask 523264
  %v433 = vsel %vm432, %v426, 0.0
  %v434 = vsel %vm432, %v427, 0.0
  %v435 = vadd.f32 %v433, %v434
  %v436 = vsel %vm432, %v428, 0.0
  %v437 = vadd.f32 %v435, %v436
  %v438 = vsel %vm432, %v429, 0.0
  %v439 = vadd.f32 %v437, %v438
  %v440 = vrot.slane %v439, 4
  %v441 = vadd.f32 %v439, %v440
  %v442 = vrot.slane %v441, 2
  %v443 = vadd.f32 %v441, %v442
  %v444 = vrot.slane %v443, 1
  %v445 = vadd.f32 %v443, %v444
  %v446 = vmul.f32 %v445, 0.03125
  %v447 = vmul.f32 %v426, %v426
  %v448 = vmul.f32 %v427, %v427
  %v449 = vmul.f32 %v428, %v428
  %v450 = vmul.f32 %v429, %v429
  %v451 = vsel %vm432, %v447, 0.0
  %v452 = vsel %vm432, %v448, 0.0
  %v453 = vadd.f32 %v451, %v452
  %v454 = vsel %vm432, %v449, 0.0
  %v455 = vadd.f32 %v453, %v454
  %v456 = vsel %vm432, %v450, 0.0
  %v457 = vadd.f32 %v455, %v456
  %v458 = vrot.slane %v457, 4
  %v459 = vadd.f32 %v457, %v458
  %v460 = vrot.slane %v459, 2
  %v461 = vadd.f32 %v459, %v460
  %v462 = vrot.slane %v461, 1
  %v463 = vadd.f32 %v461, %v462
  %v464 = vmul.f32 %v463, 0.03125
  %v465 = vmul.f32 %v446, %v446
  %v466 = vsub.f32 %v464, %v465
  %v467 = vmax.f32 %v466, 0.0
  %v468 = vadd.f32 %v467, 1e-05
  %v469 = vrsqrt.pop %v468
  %v470 = vmul.f32 %v469, %v468
  %v471 = vmul.f32 %v470, %v469
  %v472 = vmul.f32 0.5, %v471
  %v473 = vsub.f32 1.5, %v472
  %v474 = vmul.f32 %v469, %v473
  %vm475 = vweird.f32 %v468
  %vm476 = vweird.f32 %v469
  %vm477 = vmor %vm475, %vm476
  %v478 = vsel %vm477, %v469, %v474
  %v479 = vmul.f32 %v430, %v478
  %v480 = vmul.f32 %v446, %v479
  %v481 = vsub.f32 %v431, %v480
  %v483 = vperm.slane %v479, 0
  %v485 = vmul.f32 %v426, %v483
  %v486 = vmul.f32 %v427, %v483
  %v487 = vmul.f32 %v428, %v483
  %v488 = vmul.f32 %v429, %v483
  %v490 = vperm.slane %v481, 0
  %v492 = vadd.f32 %v485, %v490
  %v493 = vadd.f32 %v486, %v490
  %v494 = vadd.f32 %v487, %v490
  %v495 = vadd.f32 %v488, %v490
  %v496 = vmul.f32 %v492, 0.2
  %v497 = vmul.f32 %v493, 0.2
  %v498 = vmul.f32 %v494, 0.2
  %v499 = vmul.f32 %v495, 0.2
  %v500 = vmax.f32 %v492, %v496
  %v501 = vmax.f32 %v493, %v497
  %v502 = vmax.f32 %v494, %v498
  %v503 = vmax.f32 %v495, %v499
  %v504 = vld [vmem:[%s5] sm:$0xff]
  %v505 = vld [vmem:[%s5 + $0x8] sm:$0xff]
  %v506 = vld [vmem:[%s5 + $0x10] sm:$0xff]
  %v507 = vld [vmem:[%s5 + $0x18] sm:$0xff]
  %v508 = vmul.f32 %v500, %v504
  %v509 = vmul.f32 %v501, %v505
  %v510 = vmul.f32 %v502, %v506
  %v511 = vmul.f32 %v503, %v507
  %v512 = vsel %vm432, %v508, 0.0
  %513 = vadd.xlane.f32.xlu0 %v512
  %v514 = vpop.xlane.xlu0 %513
  %v515 = vsel %vm432, %v509, 0.0
  %516 = vadd.xlane.f32.xlu0 %v515
  %v517 = vpop.xlane.xlu0 %516
  %v518 = vsel %vm432, %v510, 0.0
  %519 = vadd.xlane.f32.xlu0 %v518
  %v520 = vpop.xlane.xlu0 %519
  %v521 = vsel %vm432, %v511, 0.0
  %522 = vadd.xlane.f32.xlu0 %v521
  %v523 = vpop.xlane.xlu0 %522
  %vm524 = vcmask 7168
  %525 = vst.msk [vmem:[%s6] sm:$0xff] %vm524, %v514
  %526 = vst.msk [vmem:[%s6 + $0x8] sm:$0xff] %vm524, %v517
  %527 = vst.msk [vmem:[%s6 + $0x10] sm:$0xff] %vm524, %v520
  %528 = vst.msk [vmem:[%s6 + $0x18] sm:$0xff] %vm524, %v523
  // Predicated region
  $region26: #{discriminator_forward.7} parent=0 // pred_check
    _
  $region27: #{discriminator_forward.7} parent=0 // pred_check_branch
    %530 = sbr.rel (0) target = $region29
  $region28: #{discriminator_forward.7} parent=0 // pred_region
    _
  $region29: #{discriminator_forward.7} parent=0 // pred_fallthru
    _
  // Predicated region
  $region30: #{discriminator_forward.7} parent=0 // pred_check
    _
  $region31: #{discriminator_forward.7} parent=0 // pred_check_branch
    %532 = sbr.rel (0) target = $region33
  $region32: #{discriminator_forward.7} parent=0 // pred_region
    _
  $region33: #{discriminator_forward.7} parent=0 // pred_fallthru
    _

</llo_original>
